<compile_context>
chip_gen: v5e
topology: v5e:2x2
jax: 0.10.0
libtpu: 0.0.40
codegen_flags: <defaults>
</compile_context>

<pallas_src>
import jax
import jax.numpy as jnp
from jax import lax
from jax.experimental import pallas as pl
from jax.experimental.pallas import tpu as pltpu


def mnist_kernel(x_ref, w1_ref, b1_ref, w2_ref, b2_ref, wf_ref, bf_ref, o_ref):
    """Whole MNISTNet forward for one batch tile.

    Activation layout: spatial row on the leading (untiled) dim, batch tile on
    sublanes, (col, channel) packed on lanes.  Every reshape only merges/splits
    leading dims with the (multiple-of-8) sublane dim, and every GEMM operand
    is built from leading-dim slices plus one lane concat.
    """
    f32 = jnp.float32
    TB = o_ref.shape[0]                                   # batch tile (32)

    x = x_ref[...]                                        # (28, TB, 28)

    # ---- conv1 (1 -> 8, 5x5 valid): ONE banded GEMM, K=5*28=140, N=24*8=192 --
    xk = jnp.concatenate([x[kh:kh + 24] for kh in range(5)], axis=-1)
    xk = xk.reshape(24 * TB, 5 * 28)                      # rows (oh, b)
    y1 = jnp.dot(xk, w1_ref[...], preferred_element_type=f32) + b1_ref[...]
    y1 = jnp.maximum(y1, 0.0)                             # (24*TB, 192), lane = ow*8 + c

    # ---- maxpool 2x2: rows via leading-dim max, cols via 8-lane shifted max --
    t1 = jnp.max(y1.reshape(12, 2, TB, 192), axis=1)      # (12, TB, 192)
    x1 = jnp.maximum(t1[..., :184], t1[..., 8:])          # (12, TB, 184), valid lane = 16*pw + c

    # ---- conv2 (8 -> 16, 5x5 valid): ONE banded GEMM, K=5*184=920, N=8*16=128
    xk2 = jnp.concatenate([x1[kh:kh + 8] for kh in range(5)], axis=-1)
    xk2 = xk2.reshape(8 * TB, 5 * 184)                    # rows (oh2, b)
    y2 = jnp.dot(xk2, w2_ref[...], preferred_element_type=f32) + b2_ref[...]
    y2 = jnp.maximum(y2, 0.0)                             # (8*TB, 128), lane = ow2*16 + co

    # ---- maxpool 2x2 ---------------------------------------------------------
    t2 = jnp.max(y2.reshape(4, 2, TB, 128), axis=1)       # (4, TB, 128)
    x2 = jnp.maximum(t2[..., :112], t2[..., 16:])         # (4, TB, 112), valid lane = 32*w + co

    # ---- fc1 @ fc2 @ fc3 folded into a single K=448 dot (no ReLU between fcs)
    x2f = jnp.concatenate([x2[h] for h in range(4)], axis=-1)   # (TB, 448)
    out = jnp.dot(x2f, wf_ref[...], preferred_element_type=f32) + bf_ref[...]
    o_ref[...] = out.astype(o_ref.dtype)                  # (TB, 128); lanes 10.. stay 0


def _prepare_weights(params):
    """Plain-JAX weight re-layout (pure layout plumbing, done once per call)."""
    (w1, b1, w2, b2, wf1, bf1, wf2, bf2, wf3, bf3) = params
    f32 = jnp.float32
    hi = lax.Precision.HIGHEST

    # conv1 banded weight: w1b[kh*28 + iw, ow*8 + c] = w1[c,0,kh,iw-ow], 0<=iw-ow<5
    w1t = jnp.transpose(w1[:, 0].astype(f32), (1, 2, 0))                # (kh, kw, c)
    iw = jnp.arange(28)
    ow = jnp.arange(24)
    d1 = iw[:, None] - ow[None, :]                                      # (28, 24)
    v1 = (d1 >= 0) & (d1 <= 4)
    kh = jnp.arange(5)
    w1b = w1t[kh[:, None, None], jnp.clip(d1, 0, 4)[None, :, :], :]     # (5,28,24,8)
    w1b = (w1b * v1[None, :, :, None].astype(f32)).reshape(140, 192)
    b1t = jnp.tile(b1.astype(f32), 24).reshape(1, 192)

    # conv2 banded weight over the pooled, lane-strided x1 layout:
    #   w2b[kh*184 + l, ow2*16 + co] = w2[co, ci, kh, pw-ow2]
    #   where l = 16*pw + ci with ci < 8 and 0 <= pw-ow2 < 5; all other rows = 0.
    w2t = jnp.transpose(w2.astype(f32), (2, 3, 1, 0))                   # (kh, kw, ci, co)
    l2 = jnp.arange(184)
    pw = l2 // 16
    cp = l2 % 16
    ow2 = jnp.arange(8)
    d2 = pw[:, None] - ow2[None, :]                                     # (184, 8)
    v2 = (d2 >= 0) & (d2 <= 4) & (cp[:, None] < 8)
    w2b = w2t[kh[:, None, None], jnp.clip(d2, 0, 4)[None, :, :],
              jnp.clip(cp, 0, 7)[None, :, None], :]                     # (5,184,8,16)
    w2b = (w2b * v2[None, :, :, None].astype(f32)).reshape(920, 128)
    b2t = jnp.tile(b2.astype(f32), 8).reshape(1, 128)

    # fc1 @ fc2 @ fc3 folded (module has no ReLU between the fc layers),
    # remapped from torch's flatten order (c*16 + h*4 + w) to the kernel's
    # pooled layout (row = h*112 + 32*w + co), lane-padded 10 -> 128.
    wc = jnp.dot(jnp.dot(wf1.T.astype(f32), wf2.T.astype(f32), precision=hi),
                 wf3.T.astype(f32), precision=hi)                       # (256, 10)
    bc = jnp.dot(jnp.dot(bf1.astype(f32), wf2.T.astype(f32), precision=hi)
                 + bf2.astype(f32), wf3.T.astype(f32), precision=hi) + bf3.astype(f32)
    hh = jnp.arange(4)
    ww = jnp.arange(4)
    cc = jnp.arange(16)
    rows = (hh[:, None, None] * 112 + ww[None, :, None] * 32
            + cc[None, None, :]).reshape(-1)                            # (256,)
    feats = (cc[None, None, :] * 16 + hh[:, None, None] * 4
             + ww[None, :, None]).reshape(-1)                           # (256,)
    wfold = jnp.zeros((448, 128), f32).at[rows, :10].set(wc[feats])
    bfold = jnp.zeros((1, 128), f32).at[0, :10].set(bc)
    return w1b, b1t, w2b, b2t, wfold, bfold


def mnist_forward(x_nchw, params, *, batch_tile=32):
    B = x_nchw.shape[0]
    assert x_nchw.shape[1:] == (1, 28, 28), x_nchw.shape
    TB = batch_tile
    assert TB % 8 == 0 and B % TB == 0, (B, TB)
    nb = B // TB
    f32 = jnp.float32

    # Raw input, just transposed to (H, B, W): no im2col / no HBM amplification.
    x_t = jnp.transpose(x_nchw[:, 0, :, :].astype(f32), (1, 0, 2))      # (28, B, 28)

    w1b, b1t, w2b, b2t, wfold, bfold = _prepare_weights(params)

    flops = 2 * B * (24 * 140 * 192 + 8 * 920 * 128 + 448 * 128)
    bytes_accessed = 4 * (x_t.size + w1b.size + b1t.size + w2b.size + b2t.size
                          + wfold.size + bfold.size + B * 128)

    in_specs = [
        pl.BlockSpec((28, TB, 28), lambda i: (0, i, 0)),   # raw images
        pl.BlockSpec((140, 192), lambda i: (0, 0)),        # conv1 banded weight
        pl.BlockSpec((1, 192), lambda i: (0, 0)),          # conv1 bias (tiled)
        pl.BlockSpec((920, 128), lambda i: (0, 0)),        # conv2 banded weight
        pl.BlockSpec((1, 128), lambda i: (0, 0)),          # conv2 bias (tiled)
        pl.BlockSpec((448, 128), lambda i: (0, 0)),        # folded fc weight
        pl.BlockSpec((1, 128), lambda i: (0, 0)),          # folded fc bias
    ]
    out_specs = pl.BlockSpec((TB, 128), lambda i: (i, 0))

    logits_padded = pl.pallas_call(
        mnist_kernel,
        out_shape=jax.ShapeDtypeStruct((B, 128), f32),
        grid=(nb,),
        in_specs=in_specs,
        out_specs=out_specs,
        compiler_params=pltpu.CompilerParams(
            dimension_semantics=("parallel",),
            vmem_limit_bytes=32 * 1024 * 1024),
        cost_estimate=pl.CostEstimate(
            flops=flops, transcendentals=0, bytes_accessed=bytes_accessed),
    )(x_t, w1b, b1t, w2b, b2t, wfold, bfold)

    return logits_padded[:, :10]


def ref_forward(x, params):
    (w1, b1, w2, b2, wf1, bf1, wf2, bf2, wf3, bf3) = params
    dn = ('NCHW', 'OIHW', 'NCHW')
    hi = lax.Precision.HIGHEST
    y = lax.conv_general_dilated(x, w1, (1, 1), 'VALID',
                                 dimension_numbers=dn, precision=hi)
    y = jax.nn.relu(y + b1[None, :, None, None])
    y = lax.reduce_window(y, -jnp.inf, lax.max, (1, 1, 2, 2), (1, 1, 2, 2), 'VALID')
    y = lax.conv_general_dilated(y, w2, (1, 1), 'VALID',
                                 dimension_numbers=dn, precision=hi)
    y = jax.nn.relu(y + b2[None, :, None, None])
    y = lax.reduce_window(y, -jnp.inf, lax.max, (1, 1, 2, 2), (1, 1, 2, 2), 'VALID')
    y = y.reshape(y.shape[0], -1)                      # torch.nn.Flatten (C*H*W)
    y = jnp.dot(y, wf1.T, precision=hi) + bf1
    y = jnp.dot(y, wf2.T, precision=hi) + bf2
    y = jnp.dot(y, wf3.T, precision=hi) + bf3
    return y


if __name__ == "__main__":
    key = jax.random.PRNGKey(0)
    ks = jax.random.split(key, 11)
    # MNIST-shaped input (fc1 expects 256 = 16*4*4 => 28x28, 1 channel).
    # B = 64 = 2 grid steps of the TB=32 batch tile, so both v7x TCs get work.
    B = 64
    x = jax.random.normal(ks[0], (B, 1, 28, 28), jnp.float32)
    s = 0.05
    params = (
        s * jax.random.normal(ks[1], (8, 1, 5, 5), jnp.float32),    # conv1.weight
        s * jax.random.normal(ks[2], (8,), jnp.float32),            # conv1.bias
        s * jax.random.normal(ks[3], (16, 8, 5, 5), jnp.float32),   # conv2.weight
        s * jax.random.normal(ks[4], (16,), jnp.float32),           # conv2.bias
        s * jax.random.normal(ks[5], (128, 256), jnp.float32),      # fc1.weight
        s * jax.random.normal(ks[6], (128,), jnp.float32),          # fc1.bias
        s * jax.random.normal(ks[7], (64, 128), jnp.float32),       # fc2.weight
        s * jax.random.normal(ks[8], (64,), jnp.float32),           # fc2.bias
        s * jax.random.normal(ks[9], (10, 64), jnp.float32),        # fc3.weight
        s * jax.random.normal(ks[10], (10,), jnp.float32),          # fc3.bias
    )

    out = jax.block_until_ready(jax.jit(mnist_forward)(x, params))
    ref = jax.block_until_ready(ref_forward(x, params))

    assert out.shape == (B, 10), out.shape
    assert bool(jnp.allclose(out, ref, atol=5e-3, rtol=2e-2)), (
        f"max abs diff = {float(jnp.max(jnp.abs(out - ref)))}")
    print("KERNEL_OK")
</pallas_src>

<mosaic_0001>
module attributes {stable_mosaic.version = 11 : i64} {
  func.func @mnist_kernel(%arg0: i32, %arg1: memref<28x32x28xf32, #tpu.memory_space<vmem>>, %arg2: memref<140x192xf32, #tpu.memory_space<vmem>>, %arg3: memref<1x192xf32, #tpu.memory_space<vmem>>, %arg4: memref<920x128xf32, #tpu.memory_space<vmem>>, %arg5: memref<1x128xf32, #tpu.memory_space<vmem>>, %arg6: memref<448x128xf32, #tpu.memory_space<vmem>>, %arg7: memref<1x128xf32, #tpu.memory_space<vmem>>, %arg8: memref<32x128xf32, #tpu.memory_space<vmem>>) attributes {dimension_semantics = [#tpu.dimension_semantics<parallel>], iteration_bounds = array<i64: 2>, scalar_prefetch = 0 : i64, scratch_operands = 0 : i64, tpu.core_type = #tpu.core_type<tc>, window_params = [{transform_indices = @transform_0, window_bounds = array<i64: 28, 32, 28>}, {pipeline_mode = #tpu.pipeline_mode<synchronous>, transform_indices = @transform_1, window_bounds = array<i64: 140, 192>}, {pipeline_mode = #tpu.pipeline_mode<synchronous>, transform_indices = @transform_2, window_bounds = array<i64: 1, 192>}, {pipeline_mode = #tpu.pipeline_mode<synchronous>, transform_indices = @transform_3, window_bounds = array<i64: 920, 128>}, {pipeline_mode = #tpu.pipeline_mode<synchronous>, transform_indices = @transform_4, window_bounds = array<i64: 1, 128>}, {pipeline_mode = #tpu.pipeline_mode<synchronous>, transform_indices = @transform_5, window_bounds = array<i64: 448, 128>}, {pipeline_mode = #tpu.pipeline_mode<synchronous>, transform_indices = @transform_6, window_bounds = array<i64: 1, 128>}, {transform_indices = @transform_7, window_bounds = array<i64: 32, 128>}]} {
    %c0 = arith.constant 0 : index
    %c0_0 = arith.constant 0 : index
    %c0_1 = arith.constant 0 : index
    %0 = vector.load %arg1[%c0, %c0_0, %c0_1] : memref<28x32x28xf32, #tpu.memory_space<vmem>>, vector<28x32x28xf32>
    %1 = vector.extract_strided_slice %0 {offsets = [0, 0, 0], sizes = [24, 32, 28], strides = [1, 1, 1]} : vector<28x32x28xf32> to vector<24x32x28xf32>
    %2 = vector.extract_strided_slice %0 {offsets = [1, 0, 0], sizes = [24, 32, 28], strides = [1, 1, 1]} : vector<28x32x28xf32> to vector<24x32x28xf32>
    %3 = vector.extract_strided_slice %0 {offsets = [2, 0, 0], sizes = [24, 32, 28], strides = [1, 1, 1]} : vector<28x32x28xf32> to vector<24x32x28xf32>
    %4 = vector.extract_strided_slice %0 {offsets = [3, 0, 0], sizes = [24, 32, 28], strides = [1, 1, 1]} : vector<28x32x28xf32> to vector<24x32x28xf32>
    %5 = vector.extract_strided_slice %0 {offsets = [4, 0, 0], sizes = [24, 32, 28], strides = [1, 1, 1]} : vector<28x32x28xf32> to vector<24x32x28xf32>
    %6 = tpu.concatenate %1, %2, %3, %4, %5 in 2 : vector<24x32x28xf32>, vector<24x32x28xf32>, vector<24x32x28xf32>, vector<24x32x28xf32>, vector<24x32x28xf32> -> vector<24x32x140xf32>
    %7 = vector.shape_cast %6 : vector<24x32x140xf32> to vector<768x140xf32>
    %c0_2 = arith.constant 0 : index
    %c0_3 = arith.constant 0 : index
    %8 = vector.load %arg2[%c0_2, %c0_3] : memref<140x192xf32, #tpu.memory_space<vmem>>, vector<140x192xf32>
    %cst = arith.constant dense<0.000000e+00> : vector<768x192xf32>
    %9 = tpu.matmul %7, %8, %cst {dimension_numbers = #tpu.dot_dimension_numbers<[1], [0], [0], [1], [0, 0, 1, 1], [], []>} : vector<768x140xf32>, vector<140x192xf32>, vector<768x192xf32> -> vector<768x192xf32>
    %c0_4 = arith.constant 0 : index
    %c0_5 = arith.constant 0 : index
    %10 = vector.load %arg3[%c0_4, %c0_5] : memref<1x192xf32, #tpu.memory_space<vmem>>, vector<1x192xf32>
    %11 = vector.broadcast %10 : vector<1x192xf32> to vector<768x192xf32>
    %12 = arith.addf %9, %11 : vector<768x192xf32>
    %cst_6 = arith.constant 0.000000e+00 : f32
    %13 = vector.broadcast %cst_6 : f32 to vector<768x192xf32>
    %14 = arith.maximumf %12, %13 : vector<768x192xf32>
    %15 = vector.shape_cast %14 : vector<768x192xf32> to vector<12x2x32x192xf32>
    %cst_7 = arith.constant dense<0xFF800000> : vector<12x32x192xf32>
    %16 = vector.multi_reduction <maximumf>, %15, %cst_7 [1] : vector<12x2x32x192xf32> to vector<12x32x192xf32>
    %17 = vector.extract_strided_slice %16 {offsets = [0, 0, 0], sizes = [12, 32, 184], strides = [1, 1, 1]} : vector<12x32x192xf32> to vector<12x32x184xf32>
    %18 = vector.extract_strided_slice %16 {offsets = [0, 0, 8], sizes = [12, 32, 184], strides = [1, 1, 1]} : vector<12x32x192xf32> to vector<12x32x184xf32>
    %19 = arith.maximumf %17, %18 : vector<12x32x184xf32>
    %20 = vector.extract_strided_slice %19 {offsets = [0, 0, 0], sizes = [8, 32, 184], strides = [1, 1, 1]} : vector<12x32x184xf32> to vector<8x32x184xf32>
    %21 = vector.extract_strided_slice %19 {offsets = [1, 0, 0], sizes = [8, 32, 184], strides = [1, 1, 1]} : vector<12x32x184xf32> to vector<8x32x184xf32>
    %22 = vector.extract_strided_slice %19 {offsets = [2, 0, 0], sizes = [8, 32, 184], strides = [1, 1, 1]} : vector<12x32x184xf32> to vector<8x32x184xf32>
    %23 = vector.extract_strided_slice %19 {offsets = [3, 0, 0], sizes = [8, 32, 184], strides = [1, 1, 1]} : vector<12x32x184xf32> to vector<8x32x184xf32>
    %24 = vector.extract_strided_slice %19 {offsets = [4, 0, 0], sizes = [8, 32, 184], strides = [1, 1, 1]} : vector<12x32x184xf32> to vector<8x32x184xf32>
    %25 = tpu.concatenate %20, %21, %22, %23, %24 in 2 : vector<8x32x184xf32>, vector<8x32x184xf32>, vector<8x32x184xf32>, vector<8x32x184xf32>, vector<8x32x184xf32> -> vector<8x32x920xf32>
    %26 = vector.shape_cast %25 : vector<8x32x920xf32> to vector<256x920xf32>
    %c0_8 = arith.constant 0 : index
    %c0_9 = arith.constant 0 : index
    %27 = vector.load %arg4[%c0_8, %c0_9] : memref<920x128xf32, #tpu.memory_space<vmem>>, vector<920x128xf32>
    %cst_10 = arith.constant dense<0.000000e+00> : vector<256x128xf32>
    %28 = tpu.matmul %26, %27, %cst_10 {dimension_numbers = #tpu.dot_dimension_numbers<[1], [0], [0], [1], [0, 0, 1, 1], [], []>} : vector<256x920xf32>, vector<920x128xf32>, vector<256x128xf32> -> vector<256x128xf32>
    %c0_11 = arith.constant 0 : index
    %c0_12 = arith.constant 0 : index
    %29 = vector.load %arg5[%c0_11, %c0_12] : memref<1x128xf32, #tpu.memory_space<vmem>>, vector<1x128xf32>
    %30 = vector.broadcast %29 : vector<1x128xf32> to vector<256x128xf32>
    %31 = arith.addf %28, %30 : vector<256x128xf32>
    %cst_13 = arith.constant 0.000000e+00 : f32
    %32 = vector.broadcast %cst_13 : f32 to vector<256x128xf32>
    %33 = arith.maximumf %31, %32 : vector<256x128xf32>
    %34 = vector.shape_cast %33 : vector<256x128xf32> to vector<4x2x32x128xf32>
    %cst_14 = arith.constant dense<0xFF800000> : vector<4x32x128xf32>
    %35 = vector.multi_reduction <maximumf>, %34, %cst_14 [1] : vector<4x2x32x128xf32> to vector<4x32x128xf32>
    %36 = vector.extract_strided_slice %35 {offsets = [0, 0, 0], sizes = [4, 32, 112], strides = [1, 1, 1]} : vector<4x32x128xf32> to vector<4x32x112xf32>
    %37 = vector.extract_strided_slice %35 {offsets = [0, 0, 16], sizes = [4, 32, 112], strides = [1, 1, 1]} : vector<4x32x128xf32> to vector<4x32x112xf32>
    %38 = arith.maximumf %36, %37 : vector<4x32x112xf32>
    %39 = vector.extract_strided_slice %38 {offsets = [0, 0, 0], sizes = [1, 32, 112], strides = [1, 1, 1]} : vector<4x32x112xf32> to vector<1x32x112xf32>
    %40 = vector.shape_cast %39 : vector<1x32x112xf32> to vector<32x112xf32>
    %41 = vector.extract_strided_slice %38 {offsets = [1, 0, 0], sizes = [1, 32, 112], strides = [1, 1, 1]} : vector<4x32x112xf32> to vector<1x32x112xf32>
    %42 = vector.shape_cast %41 : vector<1x32x112xf32> to vector<32x112xf32>
    %43 = vector.extract_strided_slice %38 {offsets = [2, 0, 0], sizes = [1, 32, 112], strides = [1, 1, 1]} : vector<4x32x112xf32> to vector<1x32x112xf32>
    %44 = vector.shape_cast %43 : vector<1x32x112xf32> to vector<32x112xf32>
    %45 = vector.extract_strided_slice %38 {offsets = [3, 0, 0], sizes = [1, 32, 112], strides = [1, 1, 1]} : vector<4x32x112xf32> to vector<1x32x112xf32>
    %46 = vector.shape_cast %45 : vector<1x32x112xf32> to vector<32x112xf32>
    %47 = tpu.concatenate %40, %42, %44, %46 in 1 : vector<32x112xf32>, vector<32x112xf32>, vector<32x112xf32>, vector<32x112xf32> -> vector<32x448xf32>
    %c0_15 = arith.constant 0 : index
    %c0_16 = arith.constant 0 : index
    %48 = vector.load %arg6[%c0_15, %c0_16] : memref<448x128xf32, #tpu.memory_space<vmem>>, vector<448x128xf32>
    %cst_17 = arith.constant dense<0.000000e+00> : vector<32x128xf32>
    %49 = tpu.matmul %47, %48, %cst_17 {dimension_numbers = #tpu.dot_dimension_numbers<[1], [0], [0], [1], [0, 0, 1, 1], [], []>} : vector<32x448xf32>, vector<448x128xf32>, vector<32x128xf32> -> vector<32x128xf32>
    %c0_18 = arith.constant 0 : index
    %c0_19 = arith.constant 0 : index
    %50 = vector.load %arg7[%c0_18, %c0_19] : memref<1x128xf32, #tpu.memory_space<vmem>>, vector<1x128xf32>
    %51 = vector.broadcast %50 : vector<1x128xf32> to vector<32x128xf32>
    %52 = arith.addf %49, %51 : vector<32x128xf32>
    %c0_20 = arith.constant 0 : index
    %c0_21 = arith.constant 0 : index
    %53 = vector.load %arg8[%c0_20, %c0_21] : memref<32x128xf32, #tpu.memory_space<vmem>>, vector<32x128xf32>
    tpu.vector_store %arg8[%c0_20, %c0_21], %52 {strides = array<i32>} : memref<32x128xf32, #tpu.memory_space<vmem>>, vector<32x128xf32>,
    return
  }
  func.func @transform_0(%arg0: i32) -> (i32, i32, i32) {
    %c0_i32 = arith.constant 0 : i32
    %c0_i32_0 = arith.constant 0 : i32
    %c0_i32_1 = arith.constant 0 : i32
    return %c0_i32, %arg0, %c0_i32_0 : i32, i32, i32
  }
  func.func @transform_1(%arg0: i32) -> (i32, i32) {
    %c0_i32 = arith.constant 0 : i32
    %c0_i32_0 = arith.constant 0 : i32
    %c0_i32_1 = arith.constant 0 : i32
    return %c0_i32, %c0_i32_0 : i32, i32
  }
  func.func @transform_2(%arg0: i32) -> (i32, i32) {
    %c0_i32 = arith.constant 0 : i32
    %c0_i32_0 = arith.constant 0 : i32
    %c0_i32_1 = arith.constant 0 : i32
    return %c0_i32, %c0_i32_0 : i32, i32
  }
  func.func @transform_3(%arg0: i32) -> (i32, i32) {
    %c0_i32 = arith.constant 0 : i32
    %c0_i32_0 = arith.constant 0 : i32
    %c0_i32_1 = arith.constant 0 : i32
    return %c0_i32, %c0_i32_0 : i32, i32
  }
  func.func @transform_4(%arg0: i32) -> (i32, i32) {
    %c0_i32 = arith.constant 0 : i32
    %c0_i32_0 = arith.constant 0 : i32
    %c0_i32_1 = arith.constant 0 : i32
    return %c0_i32, %c0_i32_0 : i32, i32
  }
  func.func @transform_5(%arg0: i32) -> (i32, i32) {
    %c0_i32 = arith.constant 0 : i32
    %c0_i32_0 = arith.constant 0 : i32
    %c0_i32_1 = arith.constant 0 : i32
    return %c0_i32, %c0_i32_0 : i32, i32
  }
  func.func @transform_6(%arg0: i32) -> (i32, i32) {
    %c0_i32 = arith.constant 0 : i32
    %c0_i32_0 = arith.constant 0 : i32
    %c0_i32_1 = arith.constant 0 : i32
    return %c0_i32, %c0_i32_0 : i32, i32
  }
  func.func @transform_7(%arg0: i32) -> (i32, i32) {
    %c0_i32 = arith.constant 0 : i32
    %c0_i32_0 = arith.constant 0 : i32
    return %arg0, %c0_i32 : i32, i32
  }
}

</mosaic_0001>

<llo_original>
// kernel: tile.14
$region0: #{tile.14}
  %s0 = inlined_call_operand.vmem [shape: f32[24,8], index: 0, kind: input, shape index: {}]
  %s1 = inlined_call_operand.vmem [shape: f32[1,192], index: 1, kind: output, shape index: {}]
  $region1: #{tile.14} parent=0
    #allocation0 [shape = 'u8[8192]{0}', space=vmem, size = 0x2000, scoped, tag = 'scoped mem for output reshape']
    %s2 = smov 3
    %v3 = vld [vmem:[%s0] ss:$16 sm:%s2]
    %vm4 = vcmask 64512
    %5 = vst.msk [vmem:[#allocation0] ss:$8 sm:$0x3] %vm4, %v3
    %s6 = scalar_lea.vmem %s0, 15
    %v7 = vld [vmem:[%s6] sm:$0x1]
    %8 = vrot.lane.b32.xlu0 %v7, 120
    %v9 = vpop.permute.xlu0 %8
    %vm10 = vcmask 1048512
    %11 = vst.msk [vmem:[#allocation0] sm:$0x1] %vm10, %v9
    %s12 = scalar_lea.vmem %s0, 14
    %v13 = vld [vmem:[%s12] sm:$0x1]
    %14 = vrot.lane.b32.xlu0 %v13, 112
    %v15 = vpop.permute.xlu0 %14
    %vm16 = vcmask 982912
    %17 = vst.msk [vmem:[#allocation0] sm:$0x1] %vm16, %v15
    %s18 = scalar_lea.vmem %s0, 13
    %v19 = vld [vmem:[%s18] sm:$0x1]
    %20 = vrot.lane.b32.xlu0 %v19, 104
    %v21 = vpop.permute.xlu0 %20
    %vm22 = vcmask 917312
    %23 = vst.msk [vmem:[#allocation0] sm:$0x1] %vm22, %v21
    %s24 = scalar_lea.vmem %s0, 12
    %v25 = vld [vmem:[%s24] sm:$0x1]
    %26 = vrot.lane.b32.xlu0 %v25, 96
    %v27 = vpop.permute.xlu0 %26
    %vm28 = vcmask 851712
    %29 = vst.msk [vmem:[#allocation0] sm:$0x1] %vm28, %v27
    %s30 = scalar_lea.vmem %s0, 11
    %v31 = vld [vmem:[%s30] sm:$0x1]
    %32 = vrot.lane.b32.xlu0 %v31, 88
    %v33 = vpop.permute.xlu0 %32
    %vm34 = vcmask 786112
    %35 = vst.msk [vmem:[#allocation0] sm:$0x1] %vm34, %v33
    %s36 = scalar_lea.vmem %s0, 10
    %v37 = vld [vmem:[%s36] sm:$0x1]
    %38 = vrot.lane.b32.xlu0 %v37, 80
    %v39 = vpop.permute.xlu0 %38
    %vm40 = vcmask 720512
    %41 = vst.msk [vmem:[#allocation0] sm:$0x1] %vm40, %v39
    %s42 = scalar_lea.vmem %s0, 9
    %v43 = vld [vmem:[%s42] sm:$0x1]
    %44 = vrot.lane.b32.xlu0 %v43, 72
    %v45 = vpop.permute.xlu0 %44
    %vm46 = vcmask 654912
    %47 = vst.msk [vmem:[#allocation0] sm:$0x1] %vm46, %v45
    %s48 = scalar_lea.vmem %s0, 8
    %v49 = vld [vmem:[%s48] sm:$0x1]
    %50 = vrot.lane.b32.xlu0 %v49, 64
    %v51 = vpop.permute.xlu0 %50
    %vm52 = vcmask 589312
    %53 = vst.msk [vmem:[#allocation0] sm:$0x1] %vm52, %v51
    %s54 = scalar_lea.vmem %s0, 7
    %s55 = smov 3
    %v56 = vld [vmem:[%s54] ss:$16 sm:%s55]
    %57 = vrot.lane.b32.xlu0 %v56, 56
    %v58 = vpop.permute.xlu0 %57
    %vm59 = vcmask 523712
    %60 = vst.msk [vmem:[#allocation0] ss:$8 sm:$0x3] %vm59, %v58
    %s61 = scalar_lea.vmem %s0, 6
    %s62 = smov 3
    %v63 = vld [vmem:[%s61] ss:$16 sm:%s62]
    %64 = vrot.lane.b32.xlu0 %v63, 48
    %v65 = vpop.permute.xlu0 %64
    %vm66 = vcmask 458112
    %67 = vst.msk [vmem:[#allocation0] ss:$8 sm:$0x3] %vm66, %v65
    %s68 = scalar_lea.vmem %s0, 5
    %s69 = smov 3
    %v70 = vld [vmem:[%s68] ss:$16 sm:%s69]
    %71 = vrot.lane.b32.xlu0 %v70, 40
    %v72 = vpop.permute.xlu0 %71
    %vm73 = vcmask 392512
    %74 = vst.msk [vmem:[#allocation0] ss:$8 sm:$0x3] %vm73, %v72
    %s75 = scalar_lea.vmem %s0, 4
    %s76 = smov 3
    %v77 = vld [vmem:[%s75] ss:$16 sm:%s76]
    %78 = vrot.lane.b32.xlu0 %v77, 32
    %v79 = vpop.permute.xlu0 %78
    %vm80 = vcmask 326912
    %81 = vst.msk [vmem:[#allocation0] ss:$8 sm:$0x3] %vm80, %v79
    %s82 = scalar_lea.vmem %s0, 3
    %s83 = smov 3
    %v84 = vld [vmem:[%s82] ss:$16 sm:%s83]
    %85 = vrot.lane.b32.xlu0 %v84, 24
    %v86 = vpop.permute.xlu0 %85
    %vm87 = vcmask 261312
    %88 = vst.msk [vmem:[#allocation0] ss:$8 sm:$0x3] %vm87, %v86
    %s89 = scalar_lea.vmem %s0, 2
    %s90 = smov 3
    %v91 = vld [vmem:[%s89] ss:$16 sm:%s90]
    %92 = vrot.lane.b32.xlu0 %v91, 16
    %v93 = vpop.permute.xlu0 %92
    %vm94 = vcmask 195712
    %95 = vst.msk [vmem:[#allocation0] ss:$8 sm:$0x3] %vm94, %v93
    %s96 = scalar_lea.vmem %s0, 1
    %s97 = smov 3
    %v98 = vld [vmem:[%s96] ss:$16 sm:%s97]
    %99 = vrot.lane.b32.xlu0 %v98, 8
    %v100 = vpop.permute.xlu0 %99
    %vm101 = vcmask 130112
    %102 = vst.msk [vmem:[#allocation0] ss:$8 sm:$0x3] %vm101, %v100
    %s104 = ssub.s32 2, 1
    %v105 = vld [vmem:[#allocation0] sm:%s104]
    %s107 = ssub.s32 2, 1
    %108 = vst [vmem:[%s1] sm:%s107] %v105
    %s109 = scalar_lea.vmem [#allocation0], 8
    %v110 = vld [vmem:[%s109] sm:%s104]
    %s112 = ssub.s32 2, 1
    %s113 = scalar_lea.vmem %s1, 1
    %114 = vst [vmem:[%s113] sm:%s112] %v110

// kernel: tile.13
$region0: #{tile.13}
  #allocation0 [shape = 's32[1]{0}', space=sflag, size = 0x4, scoped, tag = 'scoped memory for tile.13']
  %s0 = inlined_call_operand.vmem [shape: f32[8], index: 0, kind: input, shape index: {}]
  %s1 = inlined_call_operand.vmem [shape: f32[24,8], index: 1, kind: output, shape index: {}]
  // Predicated region
  $region2: #{tile.13} parent=0 // pred_check
    _
  $region3: #{tile.13} parent=0 // pred_check_branch
    %3 = sbr.rel (0) target = $region5
  $region4: #{tile.13} parent=0 // pred_region
    _
  $region5: #{tile.13} parent=0 // pred_fallthru
    _
  %v4 = vld [vmem:[%s0] ss:$0 sm:$0xff]
  %5 = vst [vmem:[%s1] sm:$0xff] %v4
  %s6 = scalar_lea.vmem %s1, 8
  %7 = vst [vmem:[%s6] sm:$0xff] %v4
  %s8 = scalar_lea.vmem %s1, 16
  %9 = vst [vmem:[%s8] sm:$0xff] %v4

// kernel: tile.18
$region0: #{tile.18}
  #allocation0 [shape = 's32[1]{0}', space=sflag, size = 0x4, scoped, tag = 'scoped memory for tile.18']
  %s0 = inlined_call_operand.vmem [shape: f32[16], index: 0, kind: input, shape index: {}]
  %s1 = inlined_call_operand.vmem [shape: f32[8,16], index: 1, kind: output, shape index: {}]
  // Predicated region
  $region2: #{tile.18} parent=0 // pred_check
    _
  $region3: #{tile.18} parent=0 // pred_check_branch
    %3 = sbr.rel (0) target = $region5
  $region4: #{tile.18} parent=0 // pred_region
    _
  $region5: #{tile.18} parent=0 // pred_fallthru
    _
  %v4 = vld [vmem:[%s0] ss:$0 sm:$0xff]
  %5 = vst [vmem:[%s1] sm:$0xff] %v4

// kernel: tile.19
$region0: #{tile.19}
  %s0 = inlined_call_operand.vmem [shape: f32[8,16], index: 0, kind: input, shape index: {}]
  %s1 = inlined_call_operand.vmem [shape: f32[1,128], index: 1, kind: output, shape index: {}]
  $region1: #{tile.19} parent=0
    #allocation0 [shape = 'u8[4096]{0}', space=vmem, size = 0x1000, scoped, tag = 'scoped mem for output reshape']
    %v2 = vld [vmem:[%s0] sm:$0x1]
    %vm3 = vcmask 130048
    %4 = vst.msk [vmem:[#allocation0] sm:$0x1] %vm3, %v2
    %s5 = scalar_lea.vmem %s0, 7
    %v6 = vld [vmem:[%s5] sm:$0x1]
    %7 = vrot.lane.b32.xlu0 %v6, 112
    %v8 = vpop.permute.xlu0 %7
    %vm9 = vcmask 1048448
    %10 = vst.msk [vmem:[#allocation0] sm:$0x1] %vm9, %v8
    %s11 = scalar_lea.vmem %s0, 6
    %v12 = vld [vmem:[%s11] sm:$0x1]
    %13 = vrot.lane.b32.xlu0 %v12, 96
    %v14 = vpop.permute.xlu0 %13
    %vm15 = vcmask 917248
    %16 = vst.msk [vmem:[#allocation0] sm:$0x1] %vm15, %v14
    %s17 = scalar_lea.vmem %s0, 5
    %v18 = vld [vmem:[%s17] sm:$0x1]
    %19 = vrot.lane.b32.xlu0 %v18, 80
    %v20 = vpop.permute.xlu0 %19
    %vm21 = vcmask 786048
    %22 = vst.msk [vmem:[#allocation0] sm:$0x1] %vm21, %v20
    %s23 = scalar_lea.vmem %s0, 4
    %v24 = vld [vmem:[%s23] sm:$0x1]
    %25 = vrot.lane.b32.xlu0 %v24, 64
    %v26 = vpop.permute.xlu0 %25
    %vm27 = vcmask 654848
    %28 = vst.msk [vmem:[#allocation0] sm:$0x1] %vm27, %v26
    %s29 = scalar_lea.vmem %s0, 3
    %v30 = vld [vmem:[%s29] sm:$0x1]
    %31 = vrot.lane.b32.xlu0 %v30, 48
    %v32 = vpop.permute.xlu0 %31
    %vm33 = vcmask 523648
    %34 = vst.msk [vmem:[#allocation0] sm:$0x1] %vm33, %v32
    %s35 = scalar_lea.vmem %s0, 2
    %v36 = vld [vmem:[%s35] sm:$0x1]
    %37 = vrot.lane.b32.xlu0 %v36, 32
    %v38 = vpop.permute.xlu0 %37
    %vm39 = vcmask 392448
    %40 = vst.msk [vmem:[#allocation0] sm:$0x1] %vm39, %v38
    %s41 = scalar_lea.vmem %s0, 1
    %v42 = vld [vmem:[%s41] sm:$0x1]
    %43 = vrot.lane.b32.xlu0 %v42, 16
    %v44 = vpop.permute.xlu0 %43
    %vm45 = vcmask 261248
    %46 = vst.msk [vmem:[#allocation0] sm:$0x1] %vm45, %v44
    %s48 = ssub.s32 2, 1
    %v49 = vld [vmem:[#allocation0] sm:%s48]
    %s51 = ssub.s32 2, 1
    %52 = vst [vmem:[%s1] sm:%s51] %v49

// kernel: mnist_forward.1
$region0: #{mnist_forward.1}
  #allocation0 [shape = 'u32[]', space=smem, size = 0x4, offset = 0x4, fixed_abs, tag = 'smem constant byte address 0x4 - core index']
  #allocation1 [shape = 'u32[72,128]{1,0:T(1,128)}', space=vmem, size = 0x9000, scoped, tag = 'internal scratch']
  %s0 = inlined_call_operand.vmem [shape: f32[28,64,28], index: 0, kind: input, shape index: {}]
  %s1 = inlined_call_operand.vmem [shape: f32[140,192], index: 1, kind: input, shape index: {}]
  %s2 = inlined_call_operand.vmem [shape: f32[1,192], index: 2, kind: input, shape index: {}]
  %s3 = inlined_call_operand.vmem [shape: f32[920,128], index: 3, kind: input, shape index: {}]
  %s4 = inlined_call_operand.vmem [shape: f32[1,128], index: 4, kind: input, shape index: {}]
  %s5 = inlined_call_operand.vmem [shape: f32[448,128], index: 5, kind: input, shape index: {}]
  %s6 = inlined_call_operand.vmem [shape: f32[1,128], index: 6, kind: input, shape index: {}]
  %s7 = inlined_call_operand.vmem [shape: f32[64,128], index: 7, kind: output, shape index: {}]
  %s8 = sld [smem:[#allocation0]]
  $region99: #{mnist_forward.1} parent=0
    _
  %s10 = ssub.s32 1, %s8
  %s11 = scalar_select 0, %s10, %s8
  $region1: #{mnist_forward.1} parent=0
    #allocation2 [shape = 'u8[917504]{0}', space=vmem, size = 0xe0000, scoped, tag = 'input window, operand 0']
    loop: start=0, step=1, limit=4
    $region2: #{mnist_forward.1} parent=1 // loop_pre_header
      _
    $region3: #{mnist_forward.1} parent=1 // loop_header
      %s13 = sphi 0, %s17
      %p14 = scmp.ge.s32.totalorder %s13, 4
      %s23 = sphi 0, %s25
      %s26 = sphi 0, %s23
      %s27 = sphi 0, %s26
      %s43 = sphi 0, %s27
      %s47 = sphi 0, %s47
      %s49 = sphi 0, %s47
      %s50 = sphi 0, %s49
      %s64 = sphi 0, %s50
      %s68 = sphi 0, %s68
      %s70 = sphi 0, %s68
      %s71 = sphi 0, %s70
      %s85 = sphi 0, %s71
      %s89 = sphi 0, %s89
      %s91 = sphi 0, %s89
      %s92 = sphi 0, %s91
      %s106 = sphi 0, %s92
      %s110 = sphi 0, %s110
      %s112 = sphi 0, %s110
      %s113 = sphi 0, %s112
      %s127 = sphi 0, %s113
      %s131 = sphi 0, %s131
      %s133 = sphi 0, %s131
      %s134 = sphi 0, %s133
      %s148 = sphi 0, %s134
      %s152 = sphi 0, %s152
      %s154 = sphi 0, %s152
      %s155 = sphi 0, %s154
      %s169 = sphi 0, %s155
      %s175 = sphi 0, %s177
      %s178 = sphi 0, %s175
      %s179 = sphi 0, %s178
      %s195 = sphi 0, %s179
    $region4: #{mnist_forward.1} parent=1 // loop_header_branch
      %16 = sbr.rel (%p14) target = $region8
    $region5: #{mnist_forward.1} parent=1 // loop_body
      %s18 = ssub.s32 %s13, 1
      %s19 = ssub.s32 %s13, 2
      %s20 = sadd.s32 %s13, 1
      %s21 = ssub.s32 %s13, %s20
      %p22 = scmp.eq.s32.totalorder %s21, 0
      %s24 = sadd.s32 %s23, 1
      %s25 = scalar_select %p22, %s23, %s24
      %p28 = pneg %p22
      %p29 = scmp.eq.s32.totalorder %s13, 1
      %p30 = por %p28, %p29
      %p31 = scmp.ne.s32.totalorder %s23, %s26
      %p32 = scmp.eq.s32.totalorder %s13, 0
      %p33 = por %p31, %p32
      %p34 = scmp.ne.s32.totalorder %s23, %s26
      %p35 = scmp.eq.s32.totalorder %s18, 1
      %p36 = por %p34, %p35
      %p37 = scmp.ne.s32.totalorder %s26, %s27
      %p38 = scmp.eq.s32.totalorder %s18, 0
      %p39 = por %p37, %p38
      %p40 = scmp.ne.s32.totalorder %s26, %s27
      %p41 = scmp.eq.s32.totalorder %s19, 1
      %p42 = por %p40, %p41
      %p44 = scmp.ne.s32.totalorder %s27, %s43
      %p45 = scmp.eq.s32.totalorder %s19, 0
      %p46 = por %p44, %p45
      %s48 = sadd.s32 %s47, 1
      %p51 = scmp.eq.s32.totalorder %s13, 1
      %p52 = scmp.ne.s32.totalorder %s47, %s49
      %p53 = scmp.eq.s32.totalorder %s13, 0
      %p54 = por %p52, %p53
      %p55 = scmp.ne.s32.totalorder %s47, %s49
      %p56 = scmp.eq.s32.totalorder %s18, 1
      %p57 = por %p55, %p56
      %p58 = scmp.ne.s32.totalorder %s49, %s50
      %p59 = scmp.eq.s32.totalorder %s18, 0
      %p60 = por %p58, %p59
      %p61 = scmp.ne.s32.totalorder %s49, %s50
      %p62 = scmp.eq.s32.totalorder %s19, 1
      %p63 = por %p61, %p62
      %p65 = scmp.ne.s32.totalorder %s50, %s64
      %p66 = scmp.eq.s32.totalorder %s19, 0
      %p67 = por %p65, %p66
      %s69 = sadd.s32 %s68, 1
      %p72 = scmp.eq.s32.totalorder %s13, 1
      %p73 = scmp.ne.s32.totalorder %s68, %s70
      %p74 = scmp.eq.s32.totalorder %s13, 0
      %p75 = por %p73, %p74
      %p76 = scmp.ne.s32.totalorder %s68, %s70
      %p77 = scmp.eq.s32.totalorder %s18, 1
      %p78 = por %p76, %p77
      %p79 = scmp.ne.s32.totalorder %s70, %s71
      %p80 = scmp.eq.s32.totalorder %s18, 0
      %p81 = por %p79, %p80
      %p82 = scmp.ne.s32.totalorder %s70, %s71
      %p83 = scmp.eq.s32.totalorder %s19, 1
      %p84 = por %p82, %p83
      %p86 = scmp.ne.s32.totalorder %s71, %s85
      %p87 = scmp.eq.s32.totalorder %s19, 0
      %p88 = por %p86, %p87
      %s90 = sadd.s32 %s89, 1
      %p93 = scmp.eq.s32.totalorder %s13, 1
      %p94 = scmp.ne.s32.totalorder %s89, %s91
      %p95 = scmp.eq.s32.totalorder %s13, 0
      %p96 = por %p94, %p95
      %p97 = scmp.ne.s32.totalorder %s89, %s91
      %p98 = scmp.eq.s32.totalorder %s18, 1
      %p99 = por %p97, %p98
      %p100 = scmp.ne.s32.totalorder %s91, %s92
      %p101 = scmp.eq.s32.totalorder %s18, 0
      %p102 = por %p100, %p101
      %p103 = scmp.ne.s32.totalorder %s91, %s92
      %p104 = scmp.eq.s32.totalorder %s19, 1
      %p105 = por %p103, %p104
      %p107 = scmp.ne.s32.totalorder %s92, %s106
      %p108 = scmp.eq.s32.totalorder %s19, 0
      %p109 = por %p107, %p108
      %s111 = sadd.s32 %s110, 1
      %p114 = scmp.eq.s32.totalorder %s13, 1
      %p115 = scmp.ne.s32.totalorder %s110, %s112
      %p116 = scmp.eq.s32.totalorder %s13, 0
      %p117 = por %p115, %p116
      %p118 = scmp.ne.s32.totalorder %s110, %s112
      %p119 = scmp.eq.s32.totalorder %s18, 1
      %p120 = por %p118, %p119
      %p121 = scmp.ne.s32.totalorder %s112, %s113
      %p122 = scmp.eq.s32.totalorder %s18, 0
      %p123 = por %p121, %p122
      %p124 = scmp.ne.s32.totalorder %s112, %s113
      %p125 = scmp.eq.s32.totalorder %s19, 1
      %p126 = por %p124, %p125
      %p128 = scmp.ne.s32.totalorder %s113, %s127
      %p129 = scmp.eq.s32.totalorder %s19, 0
      %p130 = por %p128, %p129
      %s132 = sadd.s32 %s131, 1
      %p135 = scmp.eq.s32.totalorder %s13, 1
      %p136 = scmp.ne.s32.totalorder %s131, %s133
      %p137 = scmp.eq.s32.totalorder %s13, 0
      %p138 = por %p136, %p137
      %p139 = scmp.ne.s32.totalorder %s131, %s133
      %p140 = scmp.eq.s32.totalorder %s18, 1
      %p141 = por %p139, %p140
      %p142 = scmp.ne.s32.totalorder %s133, %s134
      %p143 = scmp.eq.s32.totalorder %s18, 0
      %p144 = por %p142, %p143
      %p145 = scmp.ne.s32.totalorder %s133, %s134
      %p146 = scmp.eq.s32.totalorder %s19, 1
      %p147 = por %p145, %p146
      %p149 = scmp.ne.s32.totalorder %s134, %s148
      %p150 = scmp.eq.s32.totalorder %s19, 0
      %p151 = por %p149, %p150
      %s153 = sadd.s32 %s152, 1
      %p156 = scmp.eq.s32.totalorder %s13, 1
      %p157 = scmp.ne.s32.totalorder %s152, %s154
      %p158 = scmp.eq.s32.totalorder %s13, 0
      %p159 = por %p157, %p158
      %p160 = scmp.ne.s32.totalorder %s152, %s154
      %p161 = scmp.eq.s32.totalorder %s18, 1
      %p162 = por %p160, %p161
      %p163 = scmp.ne.s32.totalorder %s154, %s155
      %p164 = scmp.eq.s32.totalorder %s18, 0
      %p165 = por %p163, %p164
      %p166 = scmp.ne.s32.totalorder %s154, %s155
      %p167 = scmp.eq.s32.totalorder %s19, 1
      %p168 = por %p166, %p167
      %p170 = scmp.ne.s32.totalorder %s155, %s169
      %p171 = scmp.eq.s32.totalorder %s19, 0
      %p172 = por %p170, %p171
      %s173 = ssub.s32 %s13, %s20
      %p174 = scmp.eq.s32.totalorder %s173, 0
      %s176 = sadd.s32 %s175, 1
      %s177 = scalar_select %p174, %s175, %s176
      %p180 = pneg %p174
      %p181 = scmp.eq.s32.totalorder %s13, 1
      %p182 = por %p180, %p181
      %p183 = scmp.ne.s32.totalorder %s175, %s178
      %p184 = scmp.eq.s32.totalorder %s13, 0
      %p185 = por %p183, %p184
      %p186 = scmp.ne.s32.totalorder %s175, %s178
      %p187 = scmp.eq.s32.totalorder %s18, 1
      %p188 = por %p186, %p187
      %p189 = scmp.ne.s32.totalorder %s178, %s179
      %p190 = scmp.eq.s32.totalorder %s18, 0
      %p191 = por %p189, %p190
      %p192 = scmp.ne.s32.totalorder %s178, %s179
      %p193 = scmp.eq.s32.totalorder %s19, 1
      %p194 = por %p192, %p193
      %p196 = scmp.ne.s32.totalorder %s179, %s195
      %p197 = scmp.eq.s32.totalorder %s19, 0
      %p198 = por %p196, %p197
      %p199 = scmp.le.s32.totalorder 1, %s13
      %p200 = scmp.lt.s32.totalorder %s13, 3
      %p201 = pnand %p199, %p200
      %p202 = pneg %p201
      // Predicated region
      $region9: #{mnist_forward.1} parent=5 // pred_check
        _
      $region10: #{mnist_forward.1} parent=5 // pred_check_branch
        %204 = sbr.rel (%p201) target = $region12
      $region11: #{mnist_forward.1} parent=5 // pred_region
        %s205 = ssub.s32 %s13, 1
        // Predicated region
        $region13: #{mnist_forward.1} parent=11 // pred_check
          %p206 = pneg %p60
        $region14: #{mnist_forward.1} parent=11 // pred_check_branch
          %208 = sbr.rel (%p206) target = $region16
        $region15: #{mnist_forward.1} parent=11 // pred_region
          _
        $region16: #{mnist_forward.1} parent=11 // pred_fallthru
          _
        // Predicated region
        $region17: #{mnist_forward.1} parent=11 // pred_check
          %p209 = pneg %p81
        $region18: #{mnist_forward.1} parent=11 // pred_check_branch
          %211 = sbr.rel (%p209) target = $region20
        $region19: #{mnist_forward.1} parent=11 // pred_region
          _
        $region20: #{mnist_forward.1} parent=11 // pred_fallthru
          _
        // Predicated region
        $region21: #{mnist_forward.1} parent=11 // pred_check
          %p212 = pneg %p102
        $region22: #{mnist_forward.1} parent=11 // pred_check_branch
          %214 = sbr.rel (%p212) target = $region24
        $region23: #{mnist_forward.1} parent=11 // pred_region
          _
        $region24: #{mnist_forward.1} parent=11 // pred_fallthru
          _
        // Predicated region
        $region25: #{mnist_forward.1} parent=11 // pred_check
          %p215 = pneg %p123
        $region26: #{mnist_forward.1} parent=11 // pred_check_branch
          %217 = sbr.rel (%p215) target = $region28
        $region27: #{mnist_forward.1} parent=11 // pred_region
          _
        $region28: #{mnist_forward.1} parent=11 // pred_fallthru
          _
        // Predicated region
        $region29: #{mnist_forward.1} parent=11 // pred_check
          %p218 = pneg %p144
        $region30: #{mnist_forward.1} parent=11 // pred_check_branch
          %220 = sbr.rel (%p218) target = $region32
        $region31: #{mnist_forward.1} parent=11 // pred_region
          _
        $region32: #{mnist_forward.1} parent=11 // pred_fallthru
          _
        // Predicated region
        $region33: #{mnist_forward.1} parent=11 // pred_check
          %p221 = pneg %p165
        $region34: #{mnist_forward.1} parent=11 // pred_check_branch
          %223 = sbr.rel (%p221) target = $region36
        $region35: #{mnist_forward.1} parent=11 // pred_region
          _
        $region36: #{mnist_forward.1} parent=11 // pred_fallthru
          _
      $region12: #{mnist_forward.1} parent=5 // pred_fallthru
        _
      %p224 = scmp.lt.s32.totalorder %s13, 2
      // Predicated region
      $region37: #{mnist_forward.1} parent=5 // pred_check
        %p225 = pneg %p224
      $region38: #{mnist_forward.1} parent=5 // pred_check_branch
        %227 = sbr.rel (%p225) target = $region40
      $region39: #{mnist_forward.1} parent=5 // pred_region
        // Predicated region
        $region41: #{mnist_forward.1} parent=39 // pred_check
          %p228 = pneg %p33
        $region42: #{mnist_forward.1} parent=39 // pred_check_branch
          %230 = sbr.rel (%p228) target = $region44
        $region43: #{mnist_forward.1} parent=39 // pred_region
          %s231 = sand.u32 %s23, 1
          %s232 = sand.u32 %s23, 1
          %s233 = smul.addr %s232, 896
          %s234 = scalar_lea.vmem [#allocation2], %s233
          %s235 = smul.u32 4, %s13
          %s236 = smul.addr %s235, 8
          %s237 = scalar_lea.vmem %s0, %s236
          // Predicated region
          $region45: #{mnist_forward.1} parent=43 // pred_check
            _
          $region46: #{mnist_forward.1} parent=43 // pred_check_branch
            %239 = sbr.rel (0) target = $region48
          $region47: #{mnist_forward.1} parent=43 // pred_region
            // Predicated region
            $region49: #{mnist_forward.1} parent=47 // pred_check
              _
            $region50: #{mnist_forward.1} parent=47 // pred_check_branch
              %241 = sbr.rel (0) target = $region52
            $region51: #{mnist_forward.1} parent=47 // pred_region
              // Predicated region
              $region64: #{mnist_forward.1} parent=51 // pred_check
                _
              $region65: #{mnist_forward.1} parent=51 // pred_check_branch
                %479 = sbr.rel (0) target = $region67
              $region66: #{mnist_forward.1} parent=51 // pred_region
                loop: start=0, step=1, limit=1
                $region68: #{mnist_forward.1} parent=66 // loop_pre_header
                  _
                $region69: #{mnist_forward.1} parent=66 // loop_header
                  %s481 = sphi 0, %s485
                  %p482 = scmp.ge.s32.totalorder %s481, 1
                  %s486 = sphi %s237, %s237
                  %s487 = sphi %s234, %s234
                $region70: #{mnist_forward.1} parent=66 // loop_header_branch
                  %484 = sbr.rel (%p482) target = $region74
                $region71: #{mnist_forward.1} parent=66 // loop_body
                  %v488 = vld [vmem:[%s486] sm:$0xff]
                  %489 = vst [vmem:[%s487] sm:$0xff] %v488
                  %v490 = vld [vmem:[%s486 + $0x8] sm:$0xff]
                  %491 = vst [vmem:[%s487 + $0x8] sm:$0xff] %v490
                  %v492 = vld [vmem:[%s486 + $0x10] sm:$0xff]
                  %493 = vst [vmem:[%s487 + $0x10] sm:$0xff] %v492
                  %v494 = vld [vmem:[%s486 + $0x18] sm:$0xff]
                  %495 = vst [vmem:[%s487 + $0x18] sm:$0xff] %v494
                  %v496 = vld [vmem:[%s486 + $0x40] sm:$0xff]
                  %497 = vst [vmem:[%s487 + $0x20] sm:$0xff] %v496
                  %v498 = vld [vmem:[%s486 + $0x48] sm:$0xff]
                  %499 = vst [vmem:[%s487 + $0x28] sm:$0xff] %v498
                  %v500 = vld [vmem:[%s486 + $0x50] sm:$0xff]
                  %501 = vst [vmem:[%s487 + $0x30] sm:$0xff] %v500
                  %v502 = vld [vmem:[%s486 + $0x58] sm:$0xff]
                  %503 = vst [vmem:[%s487 + $0x38] sm:$0xff] %v502
                  %v504 = vld [vmem:[%s486 + $0x80] sm:$0xff]
                  %505 = vst [vmem:[%s487 + $0x40] sm:$0xff] %v504
                  %v506 = vld [vmem:[%s486 + $0x88] sm:$0xff]
                  %507 = vst [vmem:[%s487 + $0x48] sm:$0xff] %v506
                  %v508 = vld [vmem:[%s486 + $0x90] sm:$0xff]
                  %509 = vst [vmem:[%s487 + $0x50] sm:$0xff] %v508
                  %v510 = vld [vmem:[%s486 + $0x98] sm:$0xff]
                  %511 = vst [vmem:[%s487 + $0x58] sm:$0xff] %v510
                  %v512 = vld [vmem:[%s486 + $0xc0] sm:$0xff]
                  %513 = vst [vmem:[%s487 + $0x60] sm:$0xff] %v512
                  %v514 = vld [vmem:[%s486 + $0xc8] sm:$0xff]
                  %515 = vst [vmem:[%s487 + $0x68] sm:$0xff] %v514
                  %v516 = vld [vmem:[%s486 + $0xd0] sm:$0xff]
                  %517 = vst [vmem:[%s487 + $0x70] sm:$0xff] %v516
                  %v518 = vld [vmem:[%s486 + $0xd8] sm:$0xff]
                  %519 = vst [vmem:[%s487 + $0x78] sm:$0xff] %v518
                  %v520 = vld [vmem:[%s486 + $0x100] sm:$0xff]
                  %521 = vst [vmem:[%s487 + $0x80] sm:$0xff] %v520
                  %v522 = vld [vmem:[%s486 + $0x108] sm:$0xff]
                  %523 = vst [vmem:[%s487 + $0x88] sm:$0xff] %v522
                  %v524 = vld [vmem:[%s486 + $0x110] sm:$0xff]
                  %525 = vst [vmem:[%s487 + $0x90] sm:$0xff] %v524
                  %v526 = vld [vmem:[%s486 + $0x118] sm:$0xff]
                  %527 = vst [vmem:[%s487 + $0x98] sm:$0xff] %v526
                  %v528 = vld [vmem:[%s486 + $0x140] sm:$0xff]
                  %529 = vst [vmem:[%s487 + $0xa0] sm:$0xff] %v528
                  %v530 = vld [vmem:[%s486 + $0x148] sm:$0xff]
                  %531 = vst [vmem:[%s487 + $0xa8] sm:$0xff] %v530
                  %v532 = vld [vmem:[%s486 + $0x150] sm:$0xff]
                  %533 = vst [vmem:[%s487 + $0xb0] sm:$0xff] %v532
                  %v534 = vld [vmem:[%s486 + $0x158] sm:$0xff]
                  %535 = vst [vmem:[%s487 + $0xb8] sm:$0xff] %v534
                  %v536 = vld [vmem:[%s486 + $0x180] sm:$0xff]
                  %537 = vst [vmem:[%s487 + $0xc0] sm:$0xff] %v536
                  %v538 = vld [vmem:[%s486 + $0x188] sm:$0xff]
                  %539 = vst [vmem:[%s487 + $0xc8] sm:$0xff] %v538
                  %v540 = vld [vmem:[%s486 + $0x190] sm:$0xff]
                  %541 = vst [vmem:[%s487 + $0xd0] sm:$0xff] %v540
                  %v542 = vld [vmem:[%s486 + $0x198] sm:$0xff]
                  %543 = vst [vmem:[%s487 + $0xd8] sm:$0xff] %v542
                  %v544 = vld [vmem:[%s486 + $0x1c0] sm:$0xff]
                  %545 = vst [vmem:[%s487 + $0xe0] sm:$0xff] %v544
                  %v546 = vld [vmem:[%s486 + $0x1c8] sm:$0xff]
                  %547 = vst [vmem:[%s487 + $0xe8] sm:$0xff] %v546
                  %v548 = vld [vmem:[%s486 + $0x1d0] sm:$0xff]
                  %549 = vst [vmem:[%s487 + $0xf0] sm:$0xff] %v548
                  %v550 = vld [vmem:[%s486 + $0x1d8] sm:$0xff]
                  %551 = vst [vmem:[%s487 + $0xf8] sm:$0xff] %v550
                  %v552 = vld [vmem:[%s486 + $0x200] sm:$0xff]
                  %553 = vst [vmem:[%s487 + $0x100] sm:$0xff] %v552
                  %v554 = vld [vmem:[%s486 + $0x208] sm:$0xff]
                  %555 = vst [vmem:[%s487 + $0x108] sm:$0xff] %v554
                  %v556 = vld [vmem:[%s486 + $0x210] sm:$0xff]
                  %557 = vst [vmem:[%s487 + $0x110] sm:$0xff] %v556
                  %v558 = vld [vmem:[%s486 + $0x218] sm:$0xff]
                  %559 = vst [vmem:[%s487 + $0x118] sm:$0xff] %v558
                  %v560 = vld [vmem:[%s486 + $0x240] sm:$0xff]
                  %561 = vst [vmem:[%s487 + $0x120] sm:$0xff] %v560
                  %v562 = vld [vmem:[%s486 + $0x248] sm:$0xff]
                  %563 = vst [vmem:[%s487 + $0x128] sm:$0xff] %v562
                  %v564 = vld [vmem:[%s486 + $0x250] sm:$0xff]
                  %565 = vst [vmem:[%s487 + $0x130] sm:$0xff] %v564
                  %v566 = vld [vmem:[%s486 + $0x258] sm:$0xff]
                  %567 = vst [vmem:[%s487 + $0x138] sm:$0xff] %v566
                  %v568 = vld [vmem:[%s486 + $0x280] sm:$0xff]
                  %569 = vst [vmem:[%s487 + $0x140] sm:$0xff] %v568
                  %v570 = vld [vmem:[%s486 + $0x288] sm:$0xff]
                  %571 = vst [vmem:[%s487 + $0x148] sm:$0xff] %v570
                  %v572 = vld [vmem:[%s486 + $0x290] sm:$0xff]
                  %573 = vst [vmem:[%s487 + $0x150] sm:$0xff] %v572
                  %v574 = vld [vmem:[%s486 + $0x298] sm:$0xff]
                  %575 = vst [vmem:[%s487 + $0x158] sm:$0xff] %v574
                  %v576 = vld [vmem:[%s486 + $0x2c0] sm:$0xff]
                  %577 = vst [vmem:[%s487 + $0x160] sm:$0xff] %v576
                  %v578 = vld [vmem:[%s486 + $0x2c8] sm:$0xff]
                  %579 = vst [vmem:[%s487 + $0x168] sm:$0xff] %v578
                  %v580 = vld [vmem:[%s486 + $0x2d0] sm:$0xff]
                  %581 = vst [vmem:[%s487 + $0x170] sm:$0xff] %v580
                  %v582 = vld [vmem:[%s486 + $0x2d8] sm:$0xff]
                  %583 = vst [vmem:[%s487 + $0x178] sm:$0xff] %v582
                  %v584 = vld [vmem:[%s486 + $0x300] sm:$0xff]
                  %585 = vst [vmem:[%s487 + $0x180] sm:$0xff] %v584
                  %v586 = vld [vmem:[%s486 + $0x308] sm:$0xff]
                  %587 = vst [vmem:[%s487 + $0x188] sm:$0xff] %v586
                  %v588 = vld [vmem:[%s486 + $0x310] sm:$0xff]
                  %589 = vst [vmem:[%s487 + $0x190] sm:$0xff] %v588
                  %v590 = vld [vmem:[%s486 + $0x318] sm:$0xff]
                  %591 = vst [vmem:[%s487 + $0x198] sm:$0xff] %v590
                  %v592 = vld [vmem:[%s486 + $0x340] sm:$0xff]
                  %593 = vst [vmem:[%s487 + $0x1a0] sm:$0xff] %v592
                  %v594 = vld [vmem:[%s486 + $0x348] sm:$0xff]
                  %595 = vst [vmem:[%s487 + $0x1a8] sm:$0xff] %v594
                  %v596 = vld [vmem:[%s486 + $0x350] sm:$0xff]
                  %597 = vst [vmem:[%s487 + $0x1b0] sm:$0xff] %v596
                  %v598 = vld [vmem:[%s486 + $0x358] sm:$0xff]
                  %599 = vst [vmem:[%s487 + $0x1b8] sm:$0xff] %v598
                  %v600 = vld [vmem:[%s486 + $0x380] sm:$0xff]
                  %601 = vst [vmem:[%s487 + $0x1c0] sm:$0xff] %v600
                  %v602 = vld [vmem:[%s486 + $0x388] sm:$0xff]
                  %603 = vst [vmem:[%s487 + $0x1c8] sm:$0xff] %v602
                  %v604 = vld [vmem:[%s486 + $0x390] sm:$0xff]
                  %605 = vst [vmem:[%s487 + $0x1d0] sm:$0xff] %v604
                  %v606 = vld [vmem:[%s486 + $0x398] sm:$0xff]
                  %607 = vst [vmem:[%s487 + $0x1d8] sm:$0xff] %v606
                  %v608 = vld [vmem:[%s486 + $0x3c0] sm:$0xff]
                  %609 = vst [vmem:[%s487 + $0x1e0] sm:$0xff] %v608
                  %v610 = vld [vmem:[%s486 + $0x3c8] sm:$0xff]
                  %611 = vst [vmem:[%s487 + $0x1e8] sm:$0xff] %v610
                  %v612 = vld [vmem:[%s486 + $0x3d0] sm:$0xff]
                  %613 = vst [vmem:[%s487 + $0x1f0] sm:$0xff] %v612
                  %v614 = vld [vmem:[%s486 + $0x3d8] sm:$0xff]
                  %615 = vst [vmem:[%s487 + $0x1f8] sm:$0xff] %v614
                  %v616 = vld [vmem:[%s486 + $0x400] sm:$0xff]
                  %617 = vst [vmem:[%s487 + $0x200] sm:$0xff] %v616
                  %v618 = vld [vmem:[%s486 + $0x408] sm:$0xff]
                  %619 = vst [vmem:[%s487 + $0x208] sm:$0xff] %v618
                  %v620 = vld [vmem:[%s486 + $0x410] sm:$0xff]
                  %621 = vst [vmem:[%s487 + $0x210] sm:$0xff] %v620
                  %v622 = vld [vmem:[%s486 + $0x418] sm:$0xff]
                  %623 = vst [vmem:[%s487 + $0x218] sm:$0xff] %v622
                  %v624 = vld [vmem:[%s486 + $0x440] sm:$0xff]
                  %625 = vst [vmem:[%s487 + $0x220] sm:$0xff] %v624
                  %v626 = vld [vmem:[%s486 + $0x448] sm:$0xff]
                  %627 = vst [vmem:[%s487 + $0x228] sm:$0xff] %v626
                  %v628 = vld [vmem:[%s486 + $0x450] sm:$0xff]
                  %629 = vst [vmem:[%s487 + $0x230] sm:$0xff] %v628
                  %v630 = vld [vmem:[%s486 + $0x458] sm:$0xff]
                  %631 = vst [vmem:[%s487 + $0x238] sm:$0xff] %v630
                  %v632 = vld [vmem:[%s486 + $0x480] sm:$0xff]
                  %633 = vst [vmem:[%s487 + $0x240] sm:$0xff] %v632
                  %v634 = vld [vmem:[%s486 + $0x488] sm:$0xff]
                  %635 = vst [vmem:[%s487 + $0x248] sm:$0xff] %v634
                  %v636 = vld [vmem:[%s486 + $0x490] sm:$0xff]
                  %637 = vst [vmem:[%s487 + $0x250] sm:$0xff] %v636
                  %v638 = vld [vmem:[%s486 + $0x498] sm:$0xff]
                  %639 = vst [vmem:[%s487 + $0x258] sm:$0xff] %v638
                  %v640 = vld [vmem:[%s486 + $0x4c0] sm:$0xff]
                  %641 = vst [vmem:[%s487 + $0x260] sm:$0xff] %v640
                  %v642 = vld [vmem:[%s486 + $0x4c8] sm:$0xff]
                  %643 = vst [vmem:[%s487 + $0x268] sm:$0xff] %v642
                  %v644 = vld [vmem:[%s486 + $0x4d0] sm:$0xff]
                  %645 = vst [vmem:[%s487 + $0x270] sm:$0xff] %v644
                  %v646 = vld [vmem:[%s486 + $0x4d8] sm:$0xff]
                  %647 = vst [vmem:[%s487 + $0x278] sm:$0xff] %v646
                  %v648 = vld [vmem:[%s486 + $0x500] sm:$0xff]
                  %649 = vst [vmem:[%s487 + $0x280] sm:$0xff] %v648
                  %v650 = vld [vmem:[%s486 + $0x508] sm:$0xff]
                  %651 = vst [vmem:[%s487 + $0x288] sm:$0xff] %v650
                  %v652 = vld [vmem:[%s486 + $0x510] sm:$0xff]
                  %653 = vst [vmem:[%s487 + $0x290] sm:$0xff] %v652
                  %v654 = vld [vmem:[%s486 + $0x518] sm:$0xff]
                  %655 = vst [vmem:[%s487 + $0x298] sm:$0xff] %v654
                  %v656 = vld [vmem:[%s486 + $0x540] sm:$0xff]
                  %657 = vst [vmem:[%s487 + $0x2a0] sm:$0xff] %v656
                  %v658 = vld [vmem:[%s486 + $0x548] sm:$0xff]
                  %659 = vst [vmem:[%s487 + $0x2a8] sm:$0xff] %v658
                  %v660 = vld [vmem:[%s486 + $0x550] sm:$0xff]
                  %661 = vst [vmem:[%s487 + $0x2b0] sm:$0xff] %v660
                  %v662 = vld [vmem:[%s486 + $0x558] sm:$0xff]
                  %663 = vst [vmem:[%s487 + $0x2b8] sm:$0xff] %v662
                  %v664 = vld [vmem:[%s486 + $0x580] sm:$0xff]
                  %665 = vst [vmem:[%s487 + $0x2c0] sm:$0xff] %v664
                  %v666 = vld [vmem:[%s486 + $0x588] sm:$0xff]
                  %667 = vst [vmem:[%s487 + $0x2c8] sm:$0xff] %v666
                  %v668 = vld [vmem:[%s486 + $0x590] sm:$0xff]
                  %669 = vst [vmem:[%s487 + $0x2d0] sm:$0xff] %v668
                  %v670 = vld [vmem:[%s486 + $0x598] sm:$0xff]
                  %671 = vst [vmem:[%s487 + $0x2d8] sm:$0xff] %v670
                  %v672 = vld [vmem:[%s486 + $0x5c0] sm:$0xff]
                  %673 = vst [vmem:[%s487 + $0x2e0] sm:$0xff] %v672
                  %v674 = vld [vmem:[%s486 + $0x5c8] sm:$0xff]
                  %675 = vst [vmem:[%s487 + $0x2e8] sm:$0xff] %v674
                  %v676 = vld [vmem:[%s486 + $0x5d0] sm:$0xff]
                  %677 = vst [vmem:[%s487 + $0x2f0] sm:$0xff] %v676
                  %v678 = vld [vmem:[%s486 + $0x5d8] sm:$0xff]
                  %679 = vst [vmem:[%s487 + $0x2f8] sm:$0xff] %v678
                  %v680 = vld [vmem:[%s486 + $0x600] sm:$0xff]
                  %681 = vst [vmem:[%s487 + $0x300] sm:$0xff] %v680
                  %v682 = vld [vmem:[%s486 + $0x608] sm:$0xff]
                  %683 = vst [vmem:[%s487 + $0x308] sm:$0xff] %v682
                  %v684 = vld [vmem:[%s486 + $0x610] sm:$0xff]
                  %685 = vst [vmem:[%s487 + $0x310] sm:$0xff] %v684
                  %v686 = vld [vmem:[%s486 + $0x618] sm:$0xff]
                  %687 = vst [vmem:[%s487 + $0x318] sm:$0xff] %v686
                  %v688 = vld [vmem:[%s486 + $0x640] sm:$0xff]
                  %689 = vst [vmem:[%s487 + $0x320] sm:$0xff] %v688
                  %v690 = vld [vmem:[%s486 + $0x648] sm:$0xff]
                  %691 = vst [vmem:[%s487 + $0x328] sm:$0xff] %v690
                  %v692 = vld [vmem:[%s486 + $0x650] sm:$0xff]
                  %693 = vst [vmem:[%s487 + $0x330] sm:$0xff] %v692
                  %v694 = vld [vmem:[%s486 + $0x658] sm:$0xff]
                  %695 = vst [vmem:[%s487 + $0x338] sm:$0xff] %v694
                  %v696 = vld [vmem:[%s486 + $0x680] sm:$0xff]
                  %697 = vst [vmem:[%s487 + $0x340] sm:$0xff] %v696
                  %v698 = vld [vmem:[%s486 + $0x688] sm:$0xff]
                  %699 = vst [vmem:[%s487 + $0x348] sm:$0xff] %v698
                  %v700 = vld [vmem:[%s486 + $0x690] sm:$0xff]
                  %701 = vst [vmem:[%s487 + $0x350] sm:$0xff] %v700
                  %v702 = vld [vmem:[%s486 + $0x698] sm:$0xff]
                  %703 = vst [vmem:[%s487 + $0x358] sm:$0xff] %v702
                  %v704 = vld [vmem:[%s486 + $0x6c0] sm:$0xff]
                  %705 = vst [vmem:[%s487 + $0x360] sm:$0xff] %v704
                  %v706 = vld [vmem:[%s486 + $0x6c8] sm:$0xff]
                  %707 = vst [vmem:[%s487 + $0x368] sm:$0xff] %v706
                  %v708 = vld [vmem:[%s486 + $0x6d0] sm:$0xff]
                  %709 = vst [vmem:[%s487 + $0x370] sm:$0xff] %v708
                  %v710 = vld [vmem:[%s486 + $0x6d8] sm:$0xff]
                  %711 = vst [vmem:[%s487 + $0x378] sm:$0xff] %v710
                $region72: #{mnist_forward.1} parent=66 // loop_footer
                  %s485 = sadd.s32 1, %s481
                $region73: #{mnist_forward.1} parent=66 // loop_footer_branch
                  %480 = sbr.rel target = $region69
                $region74: #{mnist_forward.1} parent=66 // loop_exit
                  _
              $region67: #{mnist_forward.1} parent=51 // pred_fallthru
                _
              // Predicated region
              $region75: #{mnist_forward.1} parent=51 // pred_check
                _
              $region76: #{mnist_forward.1} parent=51 // pred_check_branch
                %713 = sbr.rel target = $region78
              $region77: #{mnist_forward.1} parent=51 // pred_region
                _
              $region78: #{mnist_forward.1} parent=51 // pred_fallthru
                _
            $region52: #{mnist_forward.1} parent=47 // pred_fallthru
              _
            // Predicated region
            $region53: #{mnist_forward.1} parent=47 // pred_check
              _
            $region54: #{mnist_forward.1} parent=47 // pred_check_branch
              %243 = sbr.rel target = $region56
            $region55: #{mnist_forward.1} parent=47 // pred_region
              %s245 = ssub.s32 256, 1
              loop: start=0, step=1, limit=1
              $region57: #{mnist_forward.1} parent=55 // loop_pre_header
                _
              $region58: #{mnist_forward.1} parent=55 // loop_header
                %s247 = sphi 0, %s251
                %p248 = scmp.ge.s32.totalorder %s247, 1
                %s252 = sphi %s237, %s237
                %s253 = sphi %s234, %s234
              $region59: #{mnist_forward.1} parent=55 // loop_header_branch
                %250 = sbr.rel (%p248) target = $region63
              $region60: #{mnist_forward.1} parent=55 // loop_body
                %v254 = vld [vmem:[%s252] sm:%s245]
                %255 = vst [vmem:[%s253] sm:%s245] %v254
                %v256 = vld [vmem:[%s252 + $0x8] sm:%s245]
                %257 = vst [vmem:[%s253 + $0x8] sm:%s245] %v256
                %v258 = vld [vmem:[%s252 + $0x10] sm:%s245]
                %259 = vst [vmem:[%s253 + $0x10] sm:%s245] %v258
                %v260 = vld [vmem:[%s252 + $0x18] sm:%s245]
                %261 = vst [vmem:[%s253 + $0x18] sm:%s245] %v260
                %v262 = vld [vmem:[%s252 + $0x40] sm:%s245]
                %263 = vst [vmem:[%s253 + $0x20] sm:%s245] %v262
                %v264 = vld [vmem:[%s252 + $0x48] sm:%s245]
                %265 = vst [vmem:[%s253 + $0x28] sm:%s245] %v264
                %v266 = vld [vmem:[%s252 + $0x50] sm:%s245]
                %267 = vst [vmem:[%s253 + $0x30] sm:%s245] %v266
                %v268 = vld [vmem:[%s252 + $0x58] sm:%s245]
                %269 = vst [vmem:[%s253 + $0x38] sm:%s245] %v268
                %v270 = vld [vmem:[%s252 + $0x80] sm:%s245]
                %271 = vst [vmem:[%s253 + $0x40] sm:%s245] %v270
                %v272 = vld [vmem:[%s252 + $0x88] sm:%s245]
                %273 = vst [vmem:[%s253 + $0x48] sm:%s245] %v272
                %v274 = vld [vmem:[%s252 + $0x90] sm:%s245]
                %275 = vst [vmem:[%s253 + $0x50] sm:%s245] %v274
                %v276 = vld [vmem:[%s252 + $0x98] sm:%s245]
                %277 = vst [vmem:[%s253 + $0x58] sm:%s245] %v276
                %v278 = vld [vmem:[%s252 + $0xc0] sm:%s245]
                %279 = vst [vmem:[%s253 + $0x60] sm:%s245] %v278
                %v280 = vld [vmem:[%s252 + $0xc8] sm:%s245]
                %281 = vst [vmem:[%s253 + $0x68] sm:%s245] %v280
                %v282 = vld [vmem:[%s252 + $0xd0] sm:%s245]
                %283 = vst [vmem:[%s253 + $0x70] sm:%s245] %v282
                %v284 = vld [vmem:[%s252 + $0xd8] sm:%s245]
                %285 = vst [vmem:[%s253 + $0x78] sm:%s245] %v284
                %v286 = vld [vmem:[%s252 + $0x100] sm:%s245]
                %287 = vst [vmem:[%s253 + $0x80] sm:%s245] %v286
                %v288 = vld [vmem:[%s252 + $0x108] sm:%s245]
                %289 = vst [vmem:[%s253 + $0x88] sm:%s245] %v288
                %v290 = vld [vmem:[%s252 + $0x110] sm:%s245]
                %291 = vst [vmem:[%s253 + $0x90] sm:%s245] %v290
                %v292 = vld [vmem:[%s252 + $0x118] sm:%s245]
                %293 = vst [vmem:[%s253 + $0x98] sm:%s245] %v292
                %v294 = vld [vmem:[%s252 + $0x140] sm:%s245]
                %295 = vst [vmem:[%s253 + $0xa0] sm:%s245] %v294
                %v296 = vld [vmem:[%s252 + $0x148] sm:%s245]
                %297 = vst [vmem:[%s253 + $0xa8] sm:%s245] %v296
                %v298 = vld [vmem:[%s252 + $0x150] sm:%s245]
                %299 = vst [vmem:[%s253 + $0xb0] sm:%s245] %v298
                %v300 = vld [vmem:[%s252 + $0x158] sm:%s245]
                %301 = vst [vmem:[%s253 + $0xb8] sm:%s245] %v300
                %v302 = vld [vmem:[%s252 + $0x180] sm:%s245]
                %303 = vst [vmem:[%s253 + $0xc0] sm:%s245] %v302
                %v304 = vld [vmem:[%s252 + $0x188] sm:%s245]
                %305 = vst [vmem:[%s253 + $0xc8] sm:%s245] %v304
                %v306 = vld [vmem:[%s252 + $0x190] sm:%s245]
                %307 = vst [vmem:[%s253 + $0xd0] sm:%s245] %v306
                %v308 = vld [vmem:[%s252 + $0x198] sm:%s245]
                %309 = vst [vmem:[%s253 + $0xd8] sm:%s245] %v308
                %v310 = vld [vmem:[%s252 + $0x1c0] sm:%s245]
                %311 = vst [vmem:[%s253 + $0xe0] sm:%s245] %v310
                %v312 = vld [vmem:[%s252 + $0x1c8] sm:%s245]
                %313 = vst [vmem:[%s253 + $0xe8] sm:%s245] %v312
                %v314 = vld [vmem:[%s252 + $0x1d0] sm:%s245]
                %315 = vst [vmem:[%s253 + $0xf0] sm:%s245] %v314
                %v316 = vld [vmem:[%s252 + $0x1d8] sm:%s245]
                %317 = vst [vmem:[%s253 + $0xf8] sm:%s245] %v316
                %v318 = vld [vmem:[%s252 + $0x200] sm:%s245]
                %319 = vst [vmem:[%s253 + $0x100] sm:%s245] %v318
                %v320 = vld [vmem:[%s252 + $0x208] sm:%s245]
                %321 = vst [vmem:[%s253 + $0x108] sm:%s245] %v320
                %v322 = vld [vmem:[%s252 + $0x210] sm:%s245]
                %323 = vst [vmem:[%s253 + $0x110] sm:%s245] %v322
                %v324 = vld [vmem:[%s252 + $0x218] sm:%s245]
                %325 = vst [vmem:[%s253 + $0x118] sm:%s245] %v324
                %v326 = vld [vmem:[%s252 + $0x240] sm:%s245]
                %327 = vst [vmem:[%s253 + $0x120] sm:%s245] %v326
                %v328 = vld [vmem:[%s252 + $0x248] sm:%s245]
                %329 = vst [vmem:[%s253 + $0x128] sm:%s245] %v328
                %v330 = vld [vmem:[%s252 + $0x250] sm:%s245]
                %331 = vst [vmem:[%s253 + $0x130] sm:%s245] %v330
                %v332 = vld [vmem:[%s252 + $0x258] sm:%s245]
                %333 = vst [vmem:[%s253 + $0x138] sm:%s245] %v332
                %v334 = vld [vmem:[%s252 + $0x280] sm:%s245]
                %335 = vst [vmem:[%s253 + $0x140] sm:%s245] %v334
                %v336 = vld [vmem:[%s252 + $0x288] sm:%s245]
                %337 = vst [vmem:[%s253 + $0x148] sm:%s245] %v336
                %v338 = vld [vmem:[%s252 + $0x290] sm:%s245]
                %339 = vst [vmem:[%s253 + $0x150] sm:%s245] %v338
                %v340 = vld [vmem:[%s252 + $0x298] sm:%s245]
                %341 = vst [vmem:[%s253 + $0x158] sm:%s245] %v340
                %v342 = vld [vmem:[%s252 + $0x2c0] sm:%s245]
                %343 = vst [vmem:[%s253 + $0x160] sm:%s245] %v342
                %v344 = vld [vmem:[%s252 + $0x2c8] sm:%s245]
                %345 = vst [vmem:[%s253 + $0x168] sm:%s245] %v344
                %v346 = vld [vmem:[%s252 + $0x2d0] sm:%s245]
                %347 = vst [vmem:[%s253 + $0x170] sm:%s245] %v346
                %v348 = vld [vmem:[%s252 + $0x2d8] sm:%s245]
                %349 = vst [vmem:[%s253 + $0x178] sm:%s245] %v348
                %v350 = vld [vmem:[%s252 + $0x300] sm:%s245]
                %351 = vst [vmem:[%s253 + $0x180] sm:%s245] %v350
                %v352 = vld [vmem:[%s252 + $0x308] sm:%s245]
                %353 = vst [vmem:[%s253 + $0x188] sm:%s245] %v352
                %v354 = vld [vmem:[%s252 + $0x310] sm:%s245]
                %355 = vst [vmem:[%s253 + $0x190] sm:%s245] %v354
                %v356 = vld [vmem:[%s252 + $0x318] sm:%s245]
                %357 = vst [vmem:[%s253 + $0x198] sm:%s245] %v356
                %v358 = vld [vmem:[%s252 + $0x340] sm:%s245]
                %359 = vst [vmem:[%s253 + $0x1a0] sm:%s245] %v358
                %v360 = vld [vmem:[%s252 + $0x348] sm:%s245]
                %361 = vst [vmem:[%s253 + $0x1a8] sm:%s245] %v360
                %v362 = vld [vmem:[%s252 + $0x350] sm:%s245]
                %363 = vst [vmem:[%s253 + $0x1b0] sm:%s245] %v362
                %v364 = vld [vmem:[%s252 + $0x358] sm:%s245]
                %365 = vst [vmem:[%s253 + $0x1b8] sm:%s245] %v364
                %v366 = vld [vmem:[%s252 + $0x380] sm:%s245]
                %367 = vst [vmem:[%s253 + $0x1c0] sm:%s245] %v366
                %v368 = vld [vmem:[%s252 + $0x388] sm:%s245]
                %369 = vst [vmem:[%s253 + $0x1c8] sm:%s245] %v368
                %v370 = vld [vmem:[%s252 + $0x390] sm:%s245]
                %371 = vst [vmem:[%s253 + $0x1d0] sm:%s245] %v370
                %v372 = vld [vmem:[%s252 + $0x398] sm:%s245]
                %373 = vst [vmem:[%s253 + $0x1d8] sm:%s245] %v372
                %v374 = vld [vmem:[%s252 + $0x3c0] sm:%s245]
                %375 = vst [vmem:[%s253 + $0x1e0] sm:%s245] %v374
                %v376 = vld [vmem:[%s252 + $0x3c8] sm:%s245]
                %377 = vst [vmem:[%s253 + $0x1e8] sm:%s245] %v376
                %v378 = vld [vmem:[%s252 + $0x3d0] sm:%s245]
                %379 = vst [vmem:[%s253 + $0x1f0] sm:%s245] %v378
                %v380 = vld [vmem:[%s252 + $0x3d8] sm:%s245]
                %381 = vst [vmem:[%s253 + $0x1f8] sm:%s245] %v380
                %v382 = vld [vmem:[%s252 + $0x400] sm:%s245]
                %383 = vst [vmem:[%s253 + $0x200] sm:%s245] %v382
                %v384 = vld [vmem:[%s252 + $0x408] sm:%s245]
                %385 = vst [vmem:[%s253 + $0x208] sm:%s245] %v384
                %v386 = vld [vmem:[%s252 + $0x410] sm:%s245]
                %387 = vst [vmem:[%s253 + $0x210] sm:%s245] %v386
                %v388 = vld [vmem:[%s252 + $0x418] sm:%s245]
                %389 = vst [vmem:[%s253 + $0x218] sm:%s245] %v388
                %v390 = vld [vmem:[%s252 + $0x440] sm:%s245]
                %391 = vst [vmem:[%s253 + $0x220] sm:%s245] %v390
                %v392 = vld [vmem:[%s252 + $0x448] sm:%s245]
                %393 = vst [vmem:[%s253 + $0x228] sm:%s245] %v392
                %v394 = vld [vmem:[%s252 + $0x450] sm:%s245]
                %395 = vst [vmem:[%s253 + $0x230] sm:%s245] %v394
                %v396 = vld [vmem:[%s252 + $0x458] sm:%s245]
                %397 = vst [vmem:[%s253 + $0x238] sm:%s245] %v396
                %v398 = vld [vmem:[%s252 + $0x480] sm:%s245]
                %399 = vst [vmem:[%s253 + $0x240] sm:%s245] %v398
                %v400 = vld [vmem:[%s252 + $0x488] sm:%s245]
                %401 = vst [vmem:[%s253 + $0x248] sm:%s245] %v400
                %v402 = vld [vmem:[%s252 + $0x490] sm:%s245]
                %403 = vst [vmem:[%s253 + $0x250] sm:%s245] %v402
                %v404 = vld [vmem:[%s252 + $0x498] sm:%s245]
                %405 = vst [vmem:[%s253 + $0x258] sm:%s245] %v404
                %v406 = vld [vmem:[%s252 + $0x4c0] sm:%s245]
                %407 = vst [vmem:[%s253 + $0x260] sm:%s245] %v406
                %v408 = vld [vmem:[%s252 + $0x4c8] sm:%s245]
                %409 = vst [vmem:[%s253 + $0x268] sm:%s245] %v408
                %v410 = vld [vmem:[%s252 + $0x4d0] sm:%s245]
                %411 = vst [vmem:[%s253 + $0x270] sm:%s245] %v410
                %v412 = vld [vmem:[%s252 + $0x4d8] sm:%s245]
                %413 = vst [vmem:[%s253 + $0x278] sm:%s245] %v412
                %v414 = vld [vmem:[%s252 + $0x500] sm:%s245]
                %415 = vst [vmem:[%s253 + $0x280] sm:%s245] %v414
                %v416 = vld [vmem:[%s252 + $0x508] sm:%s245]
                %417 = vst [vmem:[%s253 + $0x288] sm:%s245] %v416
                %v418 = vld [vmem:[%s252 + $0x510] sm:%s245]
                %419 = vst [vmem:[%s253 + $0x290] sm:%s245] %v418
                %v420 = vld [vmem:[%s252 + $0x518] sm:%s245]
                %421 = vst [vmem:[%s253 + $0x298] sm:%s245] %v420
                %v422 = vld [vmem:[%s252 + $0x540] sm:%s245]
                %423 = vst [vmem:[%s253 + $0x2a0] sm:%s245] %v422
                %v424 = vld [vmem:[%s252 + $0x548] sm:%s245]
                %425 = vst [vmem:[%s253 + $0x2a8] sm:%s245] %v424
                %v426 = vld [vmem:[%s252 + $0x550] sm:%s245]
                %427 = vst [vmem:[%s253 + $0x2b0] sm:%s245] %v426
                %v428 = vld [vmem:[%s252 + $0x558] sm:%s245]
                %429 = vst [vmem:[%s253 + $0x2b8] sm:%s245] %v428
                %v430 = vld [vmem:[%s252 + $0x580] sm:%s245]
                %431 = vst [vmem:[%s253 + $0x2c0] sm:%s245] %v430
                %v432 = vld [vmem:[%s252 + $0x588] sm:%s245]
                %433 = vst [vmem:[%s253 + $0x2c8] sm:%s245] %v432
                %v434 = vld [vmem:[%s252 + $0x590] sm:%s245]
                %435 = vst [vmem:[%s253 + $0x2d0] sm:%s245] %v434
                %v436 = vld [vmem:[%s252 + $0x598] sm:%s245]
                %437 = vst [vmem:[%s253 + $0x2d8] sm:%s245] %v436
                %v438 = vld [vmem:[%s252 + $0x5c0] sm:%s245]
                %439 = vst [vmem:[%s253 + $0x2e0] sm:%s245] %v438
                %v440 = vld [vmem:[%s252 + $0x5c8] sm:%s245]
                %441 = vst [vmem:[%s253 + $0x2e8] sm:%s245] %v440
                %v442 = vld [vmem:[%s252 + $0x5d0] sm:%s245]
                %443 = vst [vmem:[%s253 + $0x2f0] sm:%s245] %v442
                %v444 = vld [vmem:[%s252 + $0x5d8] sm:%s245]
                %445 = vst [vmem:[%s253 + $0x2f8] sm:%s245] %v444
                %v446 = vld [vmem:[%s252 + $0x600] sm:%s245]
                %447 = vst [vmem:[%s253 + $0x300] sm:%s245] %v446
                %v448 = vld [vmem:[%s252 + $0x608] sm:%s245]
                %449 = vst [vmem:[%s253 + $0x308] sm:%s245] %v448
                %v450 = vld [vmem:[%s252 + $0x610] sm:%s245]
                %451 = vst [vmem:[%s253 + $0x310] sm:%s245] %v450
                %v452 = vld [vmem:[%s252 + $0x618] sm:%s245]
                %453 = vst [vmem:[%s253 + $0x318] sm:%s245] %v452
                %v454 = vld [vmem:[%s252 + $0x640] sm:%s245]
                %455 = vst [vmem:[%s253 + $0x320] sm:%s245] %v454
                %v456 = vld [vmem:[%s252 + $0x648] sm:%s245]
                %457 = vst [vmem:[%s253 + $0x328] sm:%s245] %v456
                %v458 = vld [vmem:[%s252 + $0x650] sm:%s245]
                %459 = vst [vmem:[%s253 + $0x330] sm:%s245] %v458
                %v460 = vld [vmem:[%s252 + $0x658] sm:%s245]
                %461 = vst [vmem:[%s253 + $0x338] sm:%s245] %v460
                %v462 = vld [vmem:[%s252 + $0x680] sm:%s245]
                %463 = vst [vmem:[%s253 + $0x340] sm:%s245] %v462
                %v464 = vld [vmem:[%s252 + $0x688] sm:%s245]
                %465 = vst [vmem:[%s253 + $0x348] sm:%s245] %v464
                %v466 = vld [vmem:[%s252 + $0x690] sm:%s245]
                %467 = vst [vmem:[%s253 + $0x350] sm:%s245] %v466
                %v468 = vld [vmem:[%s252 + $0x698] sm:%s245]
                %469 = vst [vmem:[%s253 + $0x358] sm:%s245] %v468
                %v470 = vld [vmem:[%s252 + $0x6c0] sm:%s245]
                %471 = vst [vmem:[%s253 + $0x360] sm:%s245] %v470
                %v472 = vld [vmem:[%s252 + $0x6c8] sm:%s245]
                %473 = vst [vmem:[%s253 + $0x368] sm:%s245] %v472
                %v474 = vld [vmem:[%s252 + $0x6d0] sm:%s245]
                %475 = vst [vmem:[%s253 + $0x370] sm:%s245] %v474
                %v476 = vld [vmem:[%s252 + $0x6d8] sm:%s245]
                %477 = vst [vmem:[%s253 + $0x378] sm:%s245] %v476
              $region61: #{mnist_forward.1} parent=55 // loop_footer
                %s251 = sadd.s32 1, %s247
              $region62: #{mnist_forward.1} parent=55 // loop_footer_branch
                %246 = sbr.rel target = $region58
              $region63: #{mnist_forward.1} parent=55 // loop_exit
                _
            $region56: #{mnist_forward.1} parent=47 // pred_fallthru
              _
          $region48: #{mnist_forward.1} parent=43 // pred_fallthru
            _
          %714 = vnop
        $region44: #{mnist_forward.1} parent=39 // pred_fallthru
          _
      $region40: #{mnist_forward.1} parent=5 // pred_fallthru
        _
      %p715 = scmp.le.s32.totalorder 1, %s13
      %p716 = scmp.lt.s32.totalorder %s13, 3
      %p717 = pnand %p715, %p716
      %p718 = pneg %p717
      // Predicated region
      $region79: #{mnist_forward.1} parent=5 // pred_check
        _
      $region80: #{mnist_forward.1} parent=5 // pred_check_branch
        %720 = sbr.rel (%p717) target = $region82
      $region81: #{mnist_forward.1} parent=5 // pred_region
        %s721 = ssub.s32 %s13, 1
        %s722 = sand.u32 %s26, 1
        %s723 = sand.u32 %s26, 1
        %s724 = smul.addr %s723, 896
        %s725 = scalar_lea.vmem [#allocation2], %s724
        // Predicated region
        $region83: #{mnist_forward.1} parent=81 // pred_check
          %p726 = pneg %p39
        $region84: #{mnist_forward.1} parent=81 // pred_check_branch
          %728 = sbr.rel (%p726) target = $region86
        $region85: #{mnist_forward.1} parent=81 // pred_region
          _
        $region86: #{mnist_forward.1} parent=81 // pred_fallthru
          _
        %s729 = sand.u32 %s26, 1
        %s730 = sand.u32 %s26, 1
        %s731 = smul.addr %s730, 896
        %s732 = scalar_lea.vmem [#allocation2], %s731
        %p733 = pneg %p39
        %p734 = pneg %p36
        %p735 = pneg %p60
        %p736 = pneg %p57
        %p737 = pneg %p81
        %p738 = pneg %p78
        %p739 = pneg %p102
        %p740 = pneg %p99
        %p741 = pneg %p123
        %p742 = pneg %p120
        %p743 = pneg %p144
        %p744 = pneg %p141
        %p745 = pneg %p165
        %p746 = pneg %p162
        %p747 = pneg %p191
        %p748 = pneg %p188
        %s749 = smul.u32 4, %s18
        %p750 = scmp.lt.s32.totalorder %s749, 7
        %s751 = scalar_select %p750, %s749, 7
        %s752 = smul.addr %s751, 8
        %s753 = scalar_lea.vmem %s7, %s752
        %s754 = smul.u32 4, %s18
        %s755 = smul.u32 4, %s18
        %p756 = scmp.lt.s32.totalorder %s755, 7
        %s757 = scalar_select %p756, %s755, 7
        %s758 = smul.addr %s757, 8
        %s759 = scalar_lea.vmem %s7, %s758
        %s760 = smul.u32 4, %s18
        %v761 = vld [vmem:[%s725] sm:$0xff]
        %v762 = vld [vmem:[%s725 + $0x8] sm:$0xff]
        %v763 = vld [vmem:[%s725 + $0x10] sm:$0xff]
        %v764 = vld [vmem:[%s725 + $0x18] sm:$0xff]
        %v765 = vld [vmem:[%s725 + $0x20] sm:$0xff]
        %v766 = vld [vmem:[%s725 + $0x28] sm:$0xff]
        %v767 = vld [vmem:[%s725 + $0x30] sm:$0xff]
        %v768 = vld [vmem:[%s725 + $0x38] sm:$0xff]
        %v769 = vld [vmem:[%s725 + $0x40] sm:$0xff]
        %v770 = vld [vmem:[%s725 + $0x48] sm:$0xff]
        %v771 = vld [vmem:[%s725 + $0x50] sm:$0xff]
        %v772 = vld [vmem:[%s725 + $0x58] sm:$0xff]
        %v773 = vld [vmem:[%s725 + $0x60] sm:$0xff]
        %v774 = vld [vmem:[%s725 + $0x68] sm:$0xff]
        %v775 = vld [vmem:[%s725 + $0x70] sm:$0xff]
        %v776 = vld [vmem:[%s725 + $0x78] sm:$0xff]
        %v777 = vld [vmem:[%s725 + $0x80] sm:$0xff]
        %v778 = vld [vmem:[%s725 + $0x88] sm:$0xff]
        %v779 = vld [vmem:[%s725 + $0x90] sm:$0xff]
        %v780 = vld [vmem:[%s725 + $0x98] sm:$0xff]
        %v781 = vld [vmem:[%s725 + $0xa0] sm:$0xff]
        %v782 = vld [vmem:[%s725 + $0xa8] sm:$0xff]
        %v783 = vld [vmem:[%s725 + $0xb0] sm:$0xff]
        %v784 = vld [vmem:[%s725 + $0xb8] sm:$0xff]
        %v785 = vld [vmem:[%s725 + $0xc0] sm:$0xff]
        %v786 = vld [vmem:[%s725 + $0xc8] sm:$0xff]
        %v787 = vld [vmem:[%s725 + $0xd0] sm:$0xff]
        %v788 = vld [vmem:[%s725 + $0xd8] sm:$0xff]
        %v789 = vld [vmem:[%s725 + $0xe0] sm:$0xff]
        %v790 = vld [vmem:[%s725 + $0xe8] sm:$0xff]
        %v791 = vld [vmem:[%s725 + $0xf0] sm:$0xff]
        %v792 = vld [vmem:[%s725 + $0xf8] sm:$0xff]
        %v793 = vld [vmem:[%s725 + $0x100] sm:$0xff]
        %v794 = vld [vmem:[%s725 + $0x108] sm:$0xff]
        %v795 = vld [vmem:[%s725 + $0x110] sm:$0xff]
        %v796 = vld [vmem:[%s725 + $0x118] sm:$0xff]
        %v797 = vld [vmem:[%s725 + $0x120] sm:$0xff]
        %v798 = vld [vmem:[%s725 + $0x128] sm:$0xff]
        %v799 = vld [vmem:[%s725 + $0x130] sm:$0xff]
        %v800 = vld [vmem:[%s725 + $0x138] sm:$0xff]
        %v801 = vld [vmem:[%s725 + $0x140] sm:$0xff]
        %v802 = vld [vmem:[%s725 + $0x148] sm:$0xff]
        %v803 = vld [vmem:[%s725 + $0x150] sm:$0xff]
        %v804 = vld [vmem:[%s725 + $0x158] sm:$0xff]
        %v805 = vld [vmem:[%s725 + $0x160] sm:$0xff]
        %v806 = vld [vmem:[%s725 + $0x168] sm:$0xff]
        %v807 = vld [vmem:[%s725 + $0x170] sm:$0xff]
        %v808 = vld [vmem:[%s725 + $0x178] sm:$0xff]
        %v809 = vld [vmem:[%s725 + $0x180] sm:$0xff]
        %v810 = vld [vmem:[%s725 + $0x188] sm:$0xff]
        %v811 = vld [vmem:[%s725 + $0x190] sm:$0xff]
        %v812 = vld [vmem:[%s725 + $0x198] sm:$0xff]
        %v813 = vld [vmem:[%s725 + $0x1a0] sm:$0xff]
        %v814 = vld [vmem:[%s725 + $0x1a8] sm:$0xff]
        %v815 = vld [vmem:[%s725 + $0x1b0] sm:$0xff]
        %v816 = vld [vmem:[%s725 + $0x1b8] sm:$0xff]
        %v817 = vld [vmem:[%s725 + $0x1c0] sm:$0xff]
        %v818 = vld [vmem:[%s725 + $0x1c8] sm:$0xff]
        %v819 = vld [vmem:[%s725 + $0x1d0] sm:$0xff]
        %v820 = vld [vmem:[%s725 + $0x1d8] sm:$0xff]
        %v821 = vld [vmem:[%s725 + $0x1e0] sm:$0xff]
        %v822 = vld [vmem:[%s725 + $0x1e8] sm:$0xff]
        %v823 = vld [vmem:[%s725 + $0x1f0] sm:$0xff]
        %v824 = vld [vmem:[%s725 + $0x1f8] sm:$0xff]
        %v825 = vld [vmem:[%s725 + $0x200] sm:$0xff]
        %v826 = vld [vmem:[%s725 + $0x208] sm:$0xff]
        %v827 = vld [vmem:[%s725 + $0x210] sm:$0xff]
        %v828 = vld [vmem:[%s725 + $0x218] sm:$0xff]
        %v829 = vld [vmem:[%s725 + $0x220] sm:$0xff]
        %v830 = vld [vmem:[%s725 + $0x228] sm:$0xff]
        %v831 = vld [vmem:[%s725 + $0x230] sm:$0xff]
        %v832 = vld [vmem:[%s725 + $0x238] sm:$0xff]
        %v833 = vld [vmem:[%s725 + $0x240] sm:$0xff]
        %v834 = vld [vmem:[%s725 + $0x248] sm:$0xff]
        %v835 = vld [vmem:[%s725 + $0x250] sm:$0xff]
        %v836 = vld [vmem:[%s725 + $0x258] sm:$0xff]
        %v837 = vld [vmem:[%s725 + $0x260] sm:$0xff]
        %v838 = vld [vmem:[%s725 + $0x268] sm:$0xff]
        %v839 = vld [vmem:[%s725 + $0x270] sm:$0xff]
        %v840 = vld [vmem:[%s725 + $0x278] sm:$0xff]
        %v841 = vld [vmem:[%s725 + $0x280] sm:$0xff]
        %v842 = vld [vmem:[%s725 + $0x288] sm:$0xff]
        %v843 = vld [vmem:[%s725 + $0x290] sm:$0xff]
        %v844 = vld [vmem:[%s725 + $0x298] sm:$0xff]
        %v845 = vld [vmem:[%s725 + $0x2a0] sm:$0xff]
        %v846 = vld [vmem:[%s725 + $0x2a8] sm:$0xff]
        %v847 = vld [vmem:[%s725 + $0x2b0] sm:$0xff]
        %v848 = vld [vmem:[%s725 + $0x2b8] sm:$0xff]
        %v849 = vld [vmem:[%s725 + $0x2c0] sm:$0xff]
        %v850 = vld [vmem:[%s725 + $0x2c8] sm:$0xff]
        %v851 = vld [vmem:[%s725 + $0x2d0] sm:$0xff]
        %v852 = vld [vmem:[%s725 + $0x2d8] sm:$0xff]
        %v853 = vld [vmem:[%s725 + $0x2e0] sm:$0xff]
        %v854 = vld [vmem:[%s725 + $0x2e8] sm:$0xff]
        %v855 = vld [vmem:[%s725 + $0x2f0] sm:$0xff]
        %v856 = vld [vmem:[%s725 + $0x2f8] sm:$0xff]
        %v857 = vld [vmem:[%s725 + $0x300] sm:$0xff]
        %v858 = vld [vmem:[%s725 + $0x308] sm:$0xff]
        %v859 = vld [vmem:[%s725 + $0x310] sm:$0xff]
        %v860 = vld [vmem:[%s725 + $0x318] sm:$0xff]
        %v861 = vld [vmem:[%s725 + $0x320] sm:$0xff]
        %v862 = vld [vmem:[%s725 + $0x328] sm:$0xff]
        %v863 = vld [vmem:[%s725 + $0x330] sm:$0xff]
        %v864 = vld [vmem:[%s725 + $0x338] sm:$0xff]
        %v865 = vld [vmem:[%s725 + $0x340] sm:$0xff]
        %v866 = vld [vmem:[%s725 + $0x348] sm:$0xff]
        %v867 = vld [vmem:[%s725 + $0x350] sm:$0xff]
        %v868 = vld [vmem:[%s725 + $0x358] sm:$0xff]
        %v869 = vld [vmem:[%s725 + $0x360] sm:$0xff]
        %v870 = vld [vmem:[%s725 + $0x368] sm:$0xff]
        %v871 = vld [vmem:[%s725 + $0x370] sm:$0xff]
        %v872 = vld [vmem:[%s725 + $0x378] sm:$0xff]
        %969 = vrot.lane.b32.xlu0 %v765, 28
        %v970 = vpop.permute.xlu0 %969
        %971 = vrot.lane.b32.xlu0 %v766, 28
        %v972 = vpop.permute.xlu0 %971
        %973 = vrot.lane.b32.xlu0 %v767, 28
        %v974 = vpop.permute.xlu0 %973
        %975 = vrot.lane.b32.xlu0 %v768, 28
        %v976 = vpop.permute.xlu0 %975
        %977 = vrot.lane.b32.xlu0 %v769, 28
        %v978 = vpop.permute.xlu0 %977
        %979 = vrot.lane.b32.xlu0 %v770, 28
        %v980 = vpop.permute.xlu0 %979
        %981 = vrot.lane.b32.xlu0 %v771, 28
        %v982 = vpop.permute.xlu0 %981
        %983 = vrot.lane.b32.xlu0 %v772, 28
        %v984 = vpop.permute.xlu0 %983
        %985 = vrot.lane.b32.xlu0 %v773, 28
        %v986 = vpop.permute.xlu0 %985
        %987 = vrot.lane.b32.xlu0 %v774, 28
        %v988 = vpop.permute.xlu0 %987
        %989 = vrot.lane.b32.xlu0 %v775, 28
        %v990 = vpop.permute.xlu0 %989
        %991 = vrot.lane.b32.xlu0 %v776, 28
        %v992 = vpop.permute.xlu0 %991
        %993 = vrot.lane.b32.xlu0 %v777, 28
        %v994 = vpop.permute.xlu0 %993
        %995 = vrot.lane.b32.xlu0 %v778, 28
        %v996 = vpop.permute.xlu0 %995
        %997 = vrot.lane.b32.xlu0 %v779, 28
        %v998 = vpop.permute.xlu0 %997
        %999 = vrot.lane.b32.xlu0 %v780, 28
        %v1000 = vpop.permute.xlu0 %999
        %1001 = vrot.lane.b32.xlu0 %v781, 28
        %v1002 = vpop.permute.xlu0 %1001
        %1003 = vrot.lane.b32.xlu0 %v782, 28
        %v1004 = vpop.permute.xlu0 %1003
        %1005 = vrot.lane.b32.xlu0 %v783, 28
        %v1006 = vpop.permute.xlu0 %1005
        %1007 = vrot.lane.b32.xlu0 %v784, 28
        %v1008 = vpop.permute.xlu0 %1007
        %1009 = vrot.lane.b32.xlu0 %v785, 28
        %v1010 = vpop.permute.xlu0 %1009
        %1011 = vrot.lane.b32.xlu0 %v786, 28
        %v1012 = vpop.permute.xlu0 %1011
        %1013 = vrot.lane.b32.xlu0 %v787, 28
        %v1014 = vpop.permute.xlu0 %1013
        %1015 = vrot.lane.b32.xlu0 %v788, 28
        %v1016 = vpop.permute.xlu0 %1015
        %1017 = vrot.lane.b32.xlu0 %v789, 28
        %v1018 = vpop.permute.xlu0 %1017
        %1019 = vrot.lane.b32.xlu0 %v790, 28
        %v1020 = vpop.permute.xlu0 %1019
        %1021 = vrot.lane.b32.xlu0 %v791, 28
        %v1022 = vpop.permute.xlu0 %1021
        %1023 = vrot.lane.b32.xlu0 %v792, 28
        %v1024 = vpop.permute.xlu0 %1023
        %1025 = vrot.lane.b32.xlu0 %v793, 28
        %v1026 = vpop.permute.xlu0 %1025
        %1027 = vrot.lane.b32.xlu0 %v794, 28
        %v1028 = vpop.permute.xlu0 %1027
        %1029 = vrot.lane.b32.xlu0 %v795, 28
        %v1030 = vpop.permute.xlu0 %1029
        %1031 = vrot.lane.b32.xlu0 %v796, 28
        %v1032 = vpop.permute.xlu0 %1031
        %1033 = vrot.lane.b32.xlu0 %v797, 28
        %v1034 = vpop.permute.xlu0 %1033
        %1035 = vrot.lane.b32.xlu0 %v798, 28
        %v1036 = vpop.permute.xlu0 %1035
        %1037 = vrot.lane.b32.xlu0 %v799, 28
        %v1038 = vpop.permute.xlu0 %1037
        %1039 = vrot.lane.b32.xlu0 %v800, 28
        %v1040 = vpop.permute.xlu0 %1039
        %1041 = vrot.lane.b32.xlu0 %v801, 28
        %v1042 = vpop.permute.xlu0 %1041
        %1043 = vrot.lane.b32.xlu0 %v802, 28
        %v1044 = vpop.permute.xlu0 %1043
        %1045 = vrot.lane.b32.xlu0 %v803, 28
        %v1046 = vpop.permute.xlu0 %1045
        %1047 = vrot.lane.b32.xlu0 %v804, 28
        %v1048 = vpop.permute.xlu0 %1047
        %1049 = vrot.lane.b32.xlu0 %v805, 28
        %v1050 = vpop.permute.xlu0 %1049
        %1051 = vrot.lane.b32.xlu0 %v806, 28
        %v1052 = vpop.permute.xlu0 %1051
        %1053 = vrot.lane.b32.xlu0 %v807, 28
        %v1054 = vpop.permute.xlu0 %1053
        %1055 = vrot.lane.b32.xlu0 %v808, 28
        %v1056 = vpop.permute.xlu0 %1055
        %1057 = vrot.lane.b32.xlu0 %v809, 28
        %v1058 = vpop.permute.xlu0 %1057
        %1059 = vrot.lane.b32.xlu0 %v810, 28
        %v1060 = vpop.permute.xlu0 %1059
        %1061 = vrot.lane.b32.xlu0 %v811, 28
        %v1062 = vpop.permute.xlu0 %1061
        %1063 = vrot.lane.b32.xlu0 %v812, 28
        %v1064 = vpop.permute.xlu0 %1063
        %1065 = vrot.lane.b32.xlu0 %v813, 28
        %v1066 = vpop.permute.xlu0 %1065
        %1067 = vrot.lane.b32.xlu0 %v814, 28
        %v1068 = vpop.permute.xlu0 %1067
        %1069 = vrot.lane.b32.xlu0 %v815, 28
        %v1070 = vpop.permute.xlu0 %1069
        %1071 = vrot.lane.b32.xlu0 %v816, 28
        %v1072 = vpop.permute.xlu0 %1071
        %1073 = vrot.lane.b32.xlu0 %v817, 28
        %v1074 = vpop.permute.xlu0 %1073
        %1075 = vrot.lane.b32.xlu0 %v818, 28
        %v1076 = vpop.permute.xlu0 %1075
        %1077 = vrot.lane.b32.xlu0 %v819, 28
        %v1078 = vpop.permute.xlu0 %1077
        %1079 = vrot.lane.b32.xlu0 %v820, 28
        %v1080 = vpop.permute.xlu0 %1079
        %1081 = vrot.lane.b32.xlu0 %v821, 28
        %v1082 = vpop.permute.xlu0 %1081
        %1083 = vrot.lane.b32.xlu0 %v822, 28
        %v1084 = vpop.permute.xlu0 %1083
        %1085 = vrot.lane.b32.xlu0 %v823, 28
        %v1086 = vpop.permute.xlu0 %1085
        %1087 = vrot.lane.b32.xlu0 %v824, 28
        %v1088 = vpop.permute.xlu0 %1087
        %1089 = vrot.lane.b32.xlu0 %v825, 28
        %v1090 = vpop.permute.xlu0 %1089
        %1091 = vrot.lane.b32.xlu0 %v826, 28
        %v1092 = vpop.permute.xlu0 %1091
        %1093 = vrot.lane.b32.xlu0 %v827, 28
        %v1094 = vpop.permute.xlu0 %1093
        %1095 = vrot.lane.b32.xlu0 %v828, 28
        %v1096 = vpop.permute.xlu0 %1095
        %1097 = vrot.lane.b32.xlu0 %v829, 28
        %v1098 = vpop.permute.xlu0 %1097
        %1099 = vrot.lane.b32.xlu0 %v830, 28
        %v1100 = vpop.permute.xlu0 %1099
        %1101 = vrot.lane.b32.xlu0 %v831, 28
        %v1102 = vpop.permute.xlu0 %1101
        %1103 = vrot.lane.b32.xlu0 %v832, 28
        %v1104 = vpop.permute.xlu0 %1103
        %1105 = vrot.lane.b32.xlu0 %v833, 28
        %v1106 = vpop.permute.xlu0 %1105
        %1107 = vrot.lane.b32.xlu0 %v834, 28
        %v1108 = vpop.permute.xlu0 %1107
        %1109 = vrot.lane.b32.xlu0 %v835, 28
        %v1110 = vpop.permute.xlu0 %1109
        %1111 = vrot.lane.b32.xlu0 %v836, 28
        %v1112 = vpop.permute.xlu0 %1111
        %1113 = vrot.lane.b32.xlu0 %v837, 28
        %v1114 = vpop.permute.xlu0 %1113
        %1115 = vrot.lane.b32.xlu0 %v838, 28
        %v1116 = vpop.permute.xlu0 %1115
        %1117 = vrot.lane.b32.xlu0 %v839, 28
        %v1118 = vpop.permute.xlu0 %1117
        %1119 = vrot.lane.b32.xlu0 %v840, 28
        %v1120 = vpop.permute.xlu0 %1119
        %1121 = vrot.lane.b32.xlu0 %v841, 28
        %v1122 = vpop.permute.xlu0 %1121
        %1123 = vrot.lane.b32.xlu0 %v842, 28
        %v1124 = vpop.permute.xlu0 %1123
        %1125 = vrot.lane.b32.xlu0 %v843, 28
        %v1126 = vpop.permute.xlu0 %1125
        %1127 = vrot.lane.b32.xlu0 %v844, 28
        %v1128 = vpop.permute.xlu0 %1127
        %1129 = vrot.lane.b32.xlu0 %v845, 28
        %v1130 = vpop.permute.xlu0 %1129
        %1131 = vrot.lane.b32.xlu0 %v846, 28
        %v1132 = vpop.permute.xlu0 %1131
        %1133 = vrot.lane.b32.xlu0 %v847, 28
        %v1134 = vpop.permute.xlu0 %1133
        %1135 = vrot.lane.b32.xlu0 %v848, 28
        %v1136 = vpop.permute.xlu0 %1135
        %1137 = vrot.lane.b32.xlu0 %v849, 28
        %v1138 = vpop.permute.xlu0 %1137
        %1139 = vrot.lane.b32.xlu0 %v850, 28
        %v1140 = vpop.permute.xlu0 %1139
        %1141 = vrot.lane.b32.xlu0 %v851, 28
        %v1142 = vpop.permute.xlu0 %1141
        %1143 = vrot.lane.b32.xlu0 %v852, 28
        %v1144 = vpop.permute.xlu0 %1143
        %1145 = vrot.lane.b32.xlu0 %v853, 28
        %v1146 = vpop.permute.xlu0 %1145
        %1147 = vrot.lane.b32.xlu0 %v854, 28
        %v1148 = vpop.permute.xlu0 %1147
        %1149 = vrot.lane.b32.xlu0 %v855, 28
        %v1150 = vpop.permute.xlu0 %1149
        %1151 = vrot.lane.b32.xlu0 %v856, 28
        %v1152 = vpop.permute.xlu0 %1151
        %1153 = vrot.lane.b32.xlu0 %v857, 28
        %v1154 = vpop.permute.xlu0 %1153
        %1155 = vrot.lane.b32.xlu0 %v858, 28
        %v1156 = vpop.permute.xlu0 %1155
        %1157 = vrot.lane.b32.xlu0 %v859, 28
        %v1158 = vpop.permute.xlu0 %1157
        %1159 = vrot.lane.b32.xlu0 %v860, 28
        %v1160 = vpop.permute.xlu0 %1159
        %1261 = vrot.lane.b32.xlu0 %v769, 56
        %v1262 = vpop.permute.xlu0 %1261
        %1263 = vrot.lane.b32.xlu0 %v770, 56
        %v1264 = vpop.permute.xlu0 %1263
        %1265 = vrot.lane.b32.xlu0 %v771, 56
        %v1266 = vpop.permute.xlu0 %1265
        %1267 = vrot.lane.b32.xlu0 %v772, 56
        %v1268 = vpop.permute.xlu0 %1267
        %1269 = vrot.lane.b32.xlu0 %v773, 56
        %v1270 = vpop.permute.xlu0 %1269
        %1271 = vrot.lane.b32.xlu0 %v774, 56
        %v1272 = vpop.permute.xlu0 %1271
        %1273 = vrot.lane.b32.xlu0 %v775, 56
        %v1274 = vpop.permute.xlu0 %1273
        %1275 = vrot.lane.b32.xlu0 %v776, 56
        %v1276 = vpop.permute.xlu0 %1275
        %1277 = vrot.lane.b32.xlu0 %v777, 56
        %v1278 = vpop.permute.xlu0 %1277
        %1279 = vrot.lane.b32.xlu0 %v778, 56
        %v1280 = vpop.permute.xlu0 %1279
        %1281 = vrot.lane.b32.xlu0 %v779, 56
        %v1282 = vpop.permute.xlu0 %1281
        %1283 = vrot.lane.b32.xlu0 %v780, 56
        %v1284 = vpop.permute.xlu0 %1283
        %1285 = vrot.lane.b32.xlu0 %v781, 56
        %v1286 = vpop.permute.xlu0 %1285
        %1287 = vrot.lane.b32.xlu0 %v782, 56
        %v1288 = vpop.permute.xlu0 %1287
        %1289 = vrot.lane.b32.xlu0 %v783, 56
        %v1290 = vpop.permute.xlu0 %1289
        %1291 = vrot.lane.b32.xlu0 %v784, 56
        %v1292 = vpop.permute.xlu0 %1291
        %1293 = vrot.lane.b32.xlu0 %v785, 56
        %v1294 = vpop.permute.xlu0 %1293
        %1295 = vrot.lane.b32.xlu0 %v786, 56
        %v1296 = vpop.permute.xlu0 %1295
        %1297 = vrot.lane.b32.xlu0 %v787, 56
        %v1298 = vpop.permute.xlu0 %1297
        %1299 = vrot.lane.b32.xlu0 %v788, 56
        %v1300 = vpop.permute.xlu0 %1299
        %1301 = vrot.lane.b32.xlu0 %v789, 56
        %v1302 = vpop.permute.xlu0 %1301
        %1303 = vrot.lane.b32.xlu0 %v790, 56
        %v1304 = vpop.permute.xlu0 %1303
        %1305 = vrot.lane.b32.xlu0 %v791, 56
        %v1306 = vpop.permute.xlu0 %1305
        %1307 = vrot.lane.b32.xlu0 %v792, 56
        %v1308 = vpop.permute.xlu0 %1307
        %1309 = vrot.lane.b32.xlu0 %v793, 56
        %v1310 = vpop.permute.xlu0 %1309
        %1311 = vrot.lane.b32.xlu0 %v794, 56
        %v1312 = vpop.permute.xlu0 %1311
        %1313 = vrot.lane.b32.xlu0 %v795, 56
        %v1314 = vpop.permute.xlu0 %1313
        %1315 = vrot.lane.b32.xlu0 %v796, 56
        %v1316 = vpop.permute.xlu0 %1315
        %1317 = vrot.lane.b32.xlu0 %v797, 56
        %v1318 = vpop.permute.xlu0 %1317
        %1319 = vrot.lane.b32.xlu0 %v798, 56
        %v1320 = vpop.permute.xlu0 %1319
        %1321 = vrot.lane.b32.xlu0 %v799, 56
        %v1322 = vpop.permute.xlu0 %1321
        %1323 = vrot.lane.b32.xlu0 %v800, 56
        %v1324 = vpop.permute.xlu0 %1323
        %1325 = vrot.lane.b32.xlu0 %v801, 56
        %v1326 = vpop.permute.xlu0 %1325
        %1327 = vrot.lane.b32.xlu0 %v802, 56
        %v1328 = vpop.permute.xlu0 %1327
        %1329 = vrot.lane.b32.xlu0 %v803, 56
        %v1330 = vpop.permute.xlu0 %1329
        %1331 = vrot.lane.b32.xlu0 %v804, 56
        %v1332 = vpop.permute.xlu0 %1331
        %1333 = vrot.lane.b32.xlu0 %v805, 56
        %v1334 = vpop.permute.xlu0 %1333
        %1335 = vrot.lane.b32.xlu0 %v806, 56
        %v1336 = vpop.permute.xlu0 %1335
        %1337 = vrot.lane.b32.xlu0 %v807, 56
        %v1338 = vpop.permute.xlu0 %1337
        %1339 = vrot.lane.b32.xlu0 %v808, 56
        %v1340 = vpop.permute.xlu0 %1339
        %1341 = vrot.lane.b32.xlu0 %v809, 56
        %v1342 = vpop.permute.xlu0 %1341
        %1343 = vrot.lane.b32.xlu0 %v810, 56
        %v1344 = vpop.permute.xlu0 %1343
        %1345 = vrot.lane.b32.xlu0 %v811, 56
        %v1346 = vpop.permute.xlu0 %1345
        %1347 = vrot.lane.b32.xlu0 %v812, 56
        %v1348 = vpop.permute.xlu0 %1347
        %1349 = vrot.lane.b32.xlu0 %v813, 56
        %v1350 = vpop.permute.xlu0 %1349
        %1351 = vrot.lane.b32.xlu0 %v814, 56
        %v1352 = vpop.permute.xlu0 %1351
        %1353 = vrot.lane.b32.xlu0 %v815, 56
        %v1354 = vpop.permute.xlu0 %1353
        %1355 = vrot.lane.b32.xlu0 %v816, 56
        %v1356 = vpop.permute.xlu0 %1355
        %1357 = vrot.lane.b32.xlu0 %v817, 56
        %v1358 = vpop.permute.xlu0 %1357
        %1359 = vrot.lane.b32.xlu0 %v818, 56
        %v1360 = vpop.permute.xlu0 %1359
        %1361 = vrot.lane.b32.xlu0 %v819, 56
        %v1362 = vpop.permute.xlu0 %1361
        %1363 = vrot.lane.b32.xlu0 %v820, 56
        %v1364 = vpop.permute.xlu0 %1363
        %1365 = vrot.lane.b32.xlu0 %v821, 56
        %v1366 = vpop.permute.xlu0 %1365
        %1367 = vrot.lane.b32.xlu0 %v822, 56
        %v1368 = vpop.permute.xlu0 %1367
        %1369 = vrot.lane.b32.xlu0 %v823, 56
        %v1370 = vpop.permute.xlu0 %1369
        %1371 = vrot.lane.b32.xlu0 %v824, 56
        %v1372 = vpop.permute.xlu0 %1371
        %1373 = vrot.lane.b32.xlu0 %v825, 56
        %v1374 = vpop.permute.xlu0 %1373
        %1375 = vrot.lane.b32.xlu0 %v826, 56
        %v1376 = vpop.permute.xlu0 %1375
        %1377 = vrot.lane.b32.xlu0 %v827, 56
        %v1378 = vpop.permute.xlu0 %1377
        %1379 = vrot.lane.b32.xlu0 %v828, 56
        %v1380 = vpop.permute.xlu0 %1379
        %1381 = vrot.lane.b32.xlu0 %v829, 56
        %v1382 = vpop.permute.xlu0 %1381
        %1383 = vrot.lane.b32.xlu0 %v830, 56
        %v1384 = vpop.permute.xlu0 %1383
        %1385 = vrot.lane.b32.xlu0 %v831, 56
        %v1386 = vpop.permute.xlu0 %1385
        %1387 = vrot.lane.b32.xlu0 %v832, 56
        %v1388 = vpop.permute.xlu0 %1387
        %1389 = vrot.lane.b32.xlu0 %v833, 56
        %v1390 = vpop.permute.xlu0 %1389
        %1391 = vrot.lane.b32.xlu0 %v834, 56
        %v1392 = vpop.permute.xlu0 %1391
        %1393 = vrot.lane.b32.xlu0 %v835, 56
        %v1394 = vpop.permute.xlu0 %1393
        %1395 = vrot.lane.b32.xlu0 %v836, 56
        %v1396 = vpop.permute.xlu0 %1395
        %1397 = vrot.lane.b32.xlu0 %v837, 56
        %v1398 = vpop.permute.xlu0 %1397
        %1399 = vrot.lane.b32.xlu0 %v838, 56
        %v1400 = vpop.permute.xlu0 %1399
        %1401 = vrot.lane.b32.xlu0 %v839, 56
        %v1402 = vpop.permute.xlu0 %1401
        %1403 = vrot.lane.b32.xlu0 %v840, 56
        %v1404 = vpop.permute.xlu0 %1403
        %1405 = vrot.lane.b32.xlu0 %v841, 56
        %v1406 = vpop.permute.xlu0 %1405
        %1407 = vrot.lane.b32.xlu0 %v842, 56
        %v1408 = vpop.permute.xlu0 %1407
        %1409 = vrot.lane.b32.xlu0 %v843, 56
        %v1410 = vpop.permute.xlu0 %1409
        %1411 = vrot.lane.b32.xlu0 %v844, 56
        %v1412 = vpop.permute.xlu0 %1411
        %1413 = vrot.lane.b32.xlu0 %v845, 56
        %v1414 = vpop.permute.xlu0 %1413
        %1415 = vrot.lane.b32.xlu0 %v846, 56
        %v1416 = vpop.permute.xlu0 %1415
        %1417 = vrot.lane.b32.xlu0 %v847, 56
        %v1418 = vpop.permute.xlu0 %1417
        %1419 = vrot.lane.b32.xlu0 %v848, 56
        %v1420 = vpop.permute.xlu0 %1419
        %1421 = vrot.lane.b32.xlu0 %v849, 56
        %v1422 = vpop.permute.xlu0 %1421
        %1423 = vrot.lane.b32.xlu0 %v850, 56
        %v1424 = vpop.permute.xlu0 %1423
        %1425 = vrot.lane.b32.xlu0 %v851, 56
        %v1426 = vpop.permute.xlu0 %1425
        %1427 = vrot.lane.b32.xlu0 %v852, 56
        %v1428 = vpop.permute.xlu0 %1427
        %1429 = vrot.lane.b32.xlu0 %v853, 56
        %v1430 = vpop.permute.xlu0 %1429
        %1431 = vrot.lane.b32.xlu0 %v854, 56
        %v1432 = vpop.permute.xlu0 %1431
        %1433 = vrot.lane.b32.xlu0 %v855, 56
        %v1434 = vpop.permute.xlu0 %1433
        %1435 = vrot.lane.b32.xlu0 %v856, 56
        %v1436 = vpop.permute.xlu0 %1435
        %1437 = vrot.lane.b32.xlu0 %v857, 56
        %v1438 = vpop.permute.xlu0 %1437
        %1439 = vrot.lane.b32.xlu0 %v858, 56
        %v1440 = vpop.permute.xlu0 %1439
        %1441 = vrot.lane.b32.xlu0 %v859, 56
        %v1442 = vpop.permute.xlu0 %1441
        %1443 = vrot.lane.b32.xlu0 %v860, 56
        %v1444 = vpop.permute.xlu0 %1443
        %1445 = vrot.lane.b32.xlu0 %v861, 56
        %v1446 = vpop.permute.xlu0 %1445
        %1447 = vrot.lane.b32.xlu0 %v862, 56
        %v1448 = vpop.permute.xlu0 %1447
        %1449 = vrot.lane.b32.xlu0 %v863, 56
        %v1450 = vpop.permute.xlu0 %1449
        %1451 = vrot.lane.b32.xlu0 %v864, 56
        %v1452 = vpop.permute.xlu0 %1451
        %1553 = vrot.lane.b32.xlu0 %v773, 84
        %v1554 = vpop.permute.xlu0 %1553
        %1555 = vrot.lane.b32.xlu0 %v774, 84
        %v1556 = vpop.permute.xlu0 %1555
        %1557 = vrot.lane.b32.xlu0 %v775, 84
        %v1558 = vpop.permute.xlu0 %1557
        %1559 = vrot.lane.b32.xlu0 %v776, 84
        %v1560 = vpop.permute.xlu0 %1559
        %1561 = vrot.lane.b32.xlu0 %v777, 84
        %v1562 = vpop.permute.xlu0 %1561
        %1563 = vrot.lane.b32.xlu0 %v778, 84
        %v1564 = vpop.permute.xlu0 %1563
        %1565 = vrot.lane.b32.xlu0 %v779, 84
        %v1566 = vpop.permute.xlu0 %1565
        %1567 = vrot.lane.b32.xlu0 %v780, 84
        %v1568 = vpop.permute.xlu0 %1567
        %1569 = vrot.lane.b32.xlu0 %v781, 84
        %v1570 = vpop.permute.xlu0 %1569
        %1571 = vrot.lane.b32.xlu0 %v782, 84
        %v1572 = vpop.permute.xlu0 %1571
        %1573 = vrot.lane.b32.xlu0 %v783, 84
        %v1574 = vpop.permute.xlu0 %1573
        %1575 = vrot.lane.b32.xlu0 %v784, 84
        %v1576 = vpop.permute.xlu0 %1575
        %1577 = vrot.lane.b32.xlu0 %v785, 84
        %v1578 = vpop.permute.xlu0 %1577
        %1579 = vrot.lane.b32.xlu0 %v786, 84
        %v1580 = vpop.permute.xlu0 %1579
        %1581 = vrot.lane.b32.xlu0 %v787, 84
        %v1582 = vpop.permute.xlu0 %1581
        %1583 = vrot.lane.b32.xlu0 %v788, 84
        %v1584 = vpop.permute.xlu0 %1583
        %1585 = vrot.lane.b32.xlu0 %v789, 84
        %v1586 = vpop.permute.xlu0 %1585
        %1587 = vrot.lane.b32.xlu0 %v790, 84
        %v1588 = vpop.permute.xlu0 %1587
        %1589 = vrot.lane.b32.xlu0 %v791, 84
        %v1590 = vpop.permute.xlu0 %1589
        %1591 = vrot.lane.b32.xlu0 %v792, 84
        %v1592 = vpop.permute.xlu0 %1591
        %1593 = vrot.lane.b32.xlu0 %v793, 84
        %v1594 = vpop.permute.xlu0 %1593
        %1595 = vrot.lane.b32.xlu0 %v794, 84
        %v1596 = vpop.permute.xlu0 %1595
        %1597 = vrot.lane.b32.xlu0 %v795, 84
        %v1598 = vpop.permute.xlu0 %1597
        %1599 = vrot.lane.b32.xlu0 %v796, 84
        %v1600 = vpop.permute.xlu0 %1599
        %1601 = vrot.lane.b32.xlu0 %v797, 84
        %v1602 = vpop.permute.xlu0 %1601
        %1603 = vrot.lane.b32.xlu0 %v798, 84
        %v1604 = vpop.permute.xlu0 %1603
        %1605 = vrot.lane.b32.xlu0 %v799, 84
        %v1606 = vpop.permute.xlu0 %1605
        %1607 = vrot.lane.b32.xlu0 %v800, 84
        %v1608 = vpop.permute.xlu0 %1607
        %1609 = vrot.lane.b32.xlu0 %v801, 84
        %v1610 = vpop.permute.xlu0 %1609
        %1611 = vrot.lane.b32.xlu0 %v802, 84
        %v1612 = vpop.permute.xlu0 %1611
        %1613 = vrot.lane.b32.xlu0 %v803, 84
        %v1614 = vpop.permute.xlu0 %1613
        %1615 = vrot.lane.b32.xlu0 %v804, 84
        %v1616 = vpop.permute.xlu0 %1615
        %1617 = vrot.lane.b32.xlu0 %v805, 84
        %v1618 = vpop.permute.xlu0 %1617
        %1619 = vrot.lane.b32.xlu0 %v806, 84
        %v1620 = vpop.permute.xlu0 %1619
        %1621 = vrot.lane.b32.xlu0 %v807, 84
        %v1622 = vpop.permute.xlu0 %1621
        %1623 = vrot.lane.b32.xlu0 %v808, 84
        %v1624 = vpop.permute.xlu0 %1623
        %1625 = vrot.lane.b32.xlu0 %v809, 84
        %v1626 = vpop.permute.xlu0 %1625
        %1627 = vrot.lane.b32.xlu0 %v810, 84
        %v1628 = vpop.permute.xlu0 %1627
        %1629 = vrot.lane.b32.xlu0 %v811, 84
        %v1630 = vpop.permute.xlu0 %1629
        %1631 = vrot.lane.b32.xlu0 %v812, 84
        %v1632 = vpop.permute.xlu0 %1631
        %1633 = vrot.lane.b32.xlu0 %v813, 84
        %v1634 = vpop.permute.xlu0 %1633
        %1635 = vrot.lane.b32.xlu0 %v814, 84
        %v1636 = vpop.permute.xlu0 %1635
        %1637 = vrot.lane.b32.xlu0 %v815, 84
        %v1638 = vpop.permute.xlu0 %1637
        %1639 = vrot.lane.b32.xlu0 %v816, 84
        %v1640 = vpop.permute.xlu0 %1639
        %1641 = vrot.lane.b32.xlu0 %v817, 84
        %v1642 = vpop.permute.xlu0 %1641
        %1643 = vrot.lane.b32.xlu0 %v818, 84
        %v1644 = vpop.permute.xlu0 %1643
        %1645 = vrot.lane.b32.xlu0 %v819, 84
        %v1646 = vpop.permute.xlu0 %1645
        %1647 = vrot.lane.b32.xlu0 %v820, 84
        %v1648 = vpop.permute.xlu0 %1647
        %1649 = vrot.lane.b32.xlu0 %v821, 84
        %v1650 = vpop.permute.xlu0 %1649
        %1651 = vrot.lane.b32.xlu0 %v822, 84
        %v1652 = vpop.permute.xlu0 %1651
        %1653 = vrot.lane.b32.xlu0 %v823, 84
        %v1654 = vpop.permute.xlu0 %1653
        %1655 = vrot.lane.b32.xlu0 %v824, 84
        %v1656 = vpop.permute.xlu0 %1655
        %1657 = vrot.lane.b32.xlu0 %v825, 84
        %v1658 = vpop.permute.xlu0 %1657
        %1659 = vrot.lane.b32.xlu0 %v826, 84
        %v1660 = vpop.permute.xlu0 %1659
        %1661 = vrot.lane.b32.xlu0 %v827, 84
        %v1662 = vpop.permute.xlu0 %1661
        %1663 = vrot.lane.b32.xlu0 %v828, 84
        %v1664 = vpop.permute.xlu0 %1663
        %1665 = vrot.lane.b32.xlu0 %v829, 84
        %v1666 = vpop.permute.xlu0 %1665
        %1667 = vrot.lane.b32.xlu0 %v830, 84
        %v1668 = vpop.permute.xlu0 %1667
        %1669 = vrot.lane.b32.xlu0 %v831, 84
        %v1670 = vpop.permute.xlu0 %1669
        %1671 = vrot.lane.b32.xlu0 %v832, 84
        %v1672 = vpop.permute.xlu0 %1671
        %1673 = vrot.lane.b32.xlu0 %v833, 84
        %v1674 = vpop.permute.xlu0 %1673
        %1675 = vrot.lane.b32.xlu0 %v834, 84
        %v1676 = vpop.permute.xlu0 %1675
        %1677 = vrot.lane.b32.xlu0 %v835, 84
        %v1678 = vpop.permute.xlu0 %1677
        %1679 = vrot.lane.b32.xlu0 %v836, 84
        %v1680 = vpop.permute.xlu0 %1679
        %1681 = vrot.lane.b32.xlu0 %v837, 84
        %v1682 = vpop.permute.xlu0 %1681
        %1683 = vrot.lane.b32.xlu0 %v838, 84
        %v1684 = vpop.permute.xlu0 %1683
        %1685 = vrot.lane.b32.xlu0 %v839, 84
        %v1686 = vpop.permute.xlu0 %1685
        %1687 = vrot.lane.b32.xlu0 %v840, 84
        %v1688 = vpop.permute.xlu0 %1687
        %1689 = vrot.lane.b32.xlu0 %v841, 84
        %v1690 = vpop.permute.xlu0 %1689
        %1691 = vrot.lane.b32.xlu0 %v842, 84
        %v1692 = vpop.permute.xlu0 %1691
        %1693 = vrot.lane.b32.xlu0 %v843, 84
        %v1694 = vpop.permute.xlu0 %1693
        %1695 = vrot.lane.b32.xlu0 %v844, 84
        %v1696 = vpop.permute.xlu0 %1695
        %1697 = vrot.lane.b32.xlu0 %v845, 84
        %v1698 = vpop.permute.xlu0 %1697
        %1699 = vrot.lane.b32.xlu0 %v846, 84
        %v1700 = vpop.permute.xlu0 %1699
        %1701 = vrot.lane.b32.xlu0 %v847, 84
        %v1702 = vpop.permute.xlu0 %1701
        %1703 = vrot.lane.b32.xlu0 %v848, 84
        %v1704 = vpop.permute.xlu0 %1703
        %1705 = vrot.lane.b32.xlu0 %v849, 84
        %v1706 = vpop.permute.xlu0 %1705
        %1707 = vrot.lane.b32.xlu0 %v850, 84
        %v1708 = vpop.permute.xlu0 %1707
        %1709 = vrot.lane.b32.xlu0 %v851, 84
        %v1710 = vpop.permute.xlu0 %1709
        %1711 = vrot.lane.b32.xlu0 %v852, 84
        %v1712 = vpop.permute.xlu0 %1711
        %1713 = vrot.lane.b32.xlu0 %v853, 84
        %v1714 = vpop.permute.xlu0 %1713
        %1715 = vrot.lane.b32.xlu0 %v854, 84
        %v1716 = vpop.permute.xlu0 %1715
        %1717 = vrot.lane.b32.xlu0 %v855, 84
        %v1718 = vpop.permute.xlu0 %1717
        %1719 = vrot.lane.b32.xlu0 %v856, 84
        %v1720 = vpop.permute.xlu0 %1719
        %1721 = vrot.lane.b32.xlu0 %v857, 84
        %v1722 = vpop.permute.xlu0 %1721
        %1723 = vrot.lane.b32.xlu0 %v858, 84
        %v1724 = vpop.permute.xlu0 %1723
        %1725 = vrot.lane.b32.xlu0 %v859, 84
        %v1726 = vpop.permute.xlu0 %1725
        %1727 = vrot.lane.b32.xlu0 %v860, 84
        %v1728 = vpop.permute.xlu0 %1727
        %1729 = vrot.lane.b32.xlu0 %v861, 84
        %v1730 = vpop.permute.xlu0 %1729
        %1731 = vrot.lane.b32.xlu0 %v862, 84
        %v1732 = vpop.permute.xlu0 %1731
        %1733 = vrot.lane.b32.xlu0 %v863, 84
        %v1734 = vpop.permute.xlu0 %1733
        %1735 = vrot.lane.b32.xlu0 %v864, 84
        %v1736 = vpop.permute.xlu0 %1735
        %1737 = vrot.lane.b32.xlu0 %v865, 84
        %v1738 = vpop.permute.xlu0 %1737
        %1739 = vrot.lane.b32.xlu0 %v866, 84
        %v1740 = vpop.permute.xlu0 %1739
        %1741 = vrot.lane.b32.xlu0 %v867, 84
        %v1742 = vpop.permute.xlu0 %1741
        %1743 = vrot.lane.b32.xlu0 %v868, 84
        %v1744 = vpop.permute.xlu0 %1743
        %1845 = vrot.lane.b32.xlu0 %v777, 112
        %v1846 = vpop.permute.xlu0 %1845
        %1847 = vrot.lane.b32.xlu0 %v778, 112
        %v1848 = vpop.permute.xlu0 %1847
        %1849 = vrot.lane.b32.xlu0 %v779, 112
        %v1850 = vpop.permute.xlu0 %1849
        %1851 = vrot.lane.b32.xlu0 %v780, 112
        %v1852 = vpop.permute.xlu0 %1851
        %1853 = vrot.lane.b32.xlu0 %v781, 112
        %v1854 = vpop.permute.xlu0 %1853
        %1855 = vrot.lane.b32.xlu0 %v782, 112
        %v1856 = vpop.permute.xlu0 %1855
        %1857 = vrot.lane.b32.xlu0 %v783, 112
        %v1858 = vpop.permute.xlu0 %1857
        %1859 = vrot.lane.b32.xlu0 %v784, 112
        %v1860 = vpop.permute.xlu0 %1859
        %1861 = vrot.lane.b32.xlu0 %v785, 112
        %v1862 = vpop.permute.xlu0 %1861
        %1863 = vrot.lane.b32.xlu0 %v786, 112
        %v1864 = vpop.permute.xlu0 %1863
        %1865 = vrot.lane.b32.xlu0 %v787, 112
        %v1866 = vpop.permute.xlu0 %1865
        %1867 = vrot.lane.b32.xlu0 %v788, 112
        %v1868 = vpop.permute.xlu0 %1867
        %1869 = vrot.lane.b32.xlu0 %v789, 112
        %v1870 = vpop.permute.xlu0 %1869
        %1871 = vrot.lane.b32.xlu0 %v790, 112
        %v1872 = vpop.permute.xlu0 %1871
        %1873 = vrot.lane.b32.xlu0 %v791, 112
        %v1874 = vpop.permute.xlu0 %1873
        %1875 = vrot.lane.b32.xlu0 %v792, 112
        %v1876 = vpop.permute.xlu0 %1875
        %1877 = vrot.lane.b32.xlu0 %v793, 112
        %v1878 = vpop.permute.xlu0 %1877
        %1879 = vrot.lane.b32.xlu0 %v794, 112
        %v1880 = vpop.permute.xlu0 %1879
        %1881 = vrot.lane.b32.xlu0 %v795, 112
        %v1882 = vpop.permute.xlu0 %1881
        %1883 = vrot.lane.b32.xlu0 %v796, 112
        %v1884 = vpop.permute.xlu0 %1883
        %1885 = vrot.lane.b32.xlu0 %v797, 112
        %v1886 = vpop.permute.xlu0 %1885
        %1887 = vrot.lane.b32.xlu0 %v798, 112
        %v1888 = vpop.permute.xlu0 %1887
        %1889 = vrot.lane.b32.xlu0 %v799, 112
        %v1890 = vpop.permute.xlu0 %1889
        %1891 = vrot.lane.b32.xlu0 %v800, 112
        %v1892 = vpop.permute.xlu0 %1891
        %1893 = vrot.lane.b32.xlu0 %v801, 112
        %v1894 = vpop.permute.xlu0 %1893
        %1895 = vrot.lane.b32.xlu0 %v802, 112
        %v1896 = vpop.permute.xlu0 %1895
        %1897 = vrot.lane.b32.xlu0 %v803, 112
        %v1898 = vpop.permute.xlu0 %1897
        %1899 = vrot.lane.b32.xlu0 %v804, 112
        %v1900 = vpop.permute.xlu0 %1899
        %1901 = vrot.lane.b32.xlu0 %v805, 112
        %v1902 = vpop.permute.xlu0 %1901
        %1903 = vrot.lane.b32.xlu0 %v806, 112
        %v1904 = vpop.permute.xlu0 %1903
        %1905 = vrot.lane.b32.xlu0 %v807, 112
        %v1906 = vpop.permute.xlu0 %1905
        %1907 = vrot.lane.b32.xlu0 %v808, 112
        %v1908 = vpop.permute.xlu0 %1907
        %1909 = vrot.lane.b32.xlu0 %v809, 112
        %v1910 = vpop.permute.xlu0 %1909
        %1911 = vrot.lane.b32.xlu0 %v810, 112
        %v1912 = vpop.permute.xlu0 %1911
        %1913 = vrot.lane.b32.xlu0 %v811, 112
        %v1914 = vpop.permute.xlu0 %1913
        %1915 = vrot.lane.b32.xlu0 %v812, 112
        %v1916 = vpop.permute.xlu0 %1915
        %1917 = vrot.lane.b32.xlu0 %v813, 112
        %v1918 = vpop.permute.xlu0 %1917
        %1919 = vrot.lane.b32.xlu0 %v814, 112
        %v1920 = vpop.permute.xlu0 %1919
        %1921 = vrot.lane.b32.xlu0 %v815, 112
        %v1922 = vpop.permute.xlu0 %1921
        %1923 = vrot.lane.b32.xlu0 %v816, 112
        %v1924 = vpop.permute.xlu0 %1923
        %1925 = vrot.lane.b32.xlu0 %v817, 112
        %v1926 = vpop.permute.xlu0 %1925
        %1927 = vrot.lane.b32.xlu0 %v818, 112
        %v1928 = vpop.permute.xlu0 %1927
        %1929 = vrot.lane.b32.xlu0 %v819, 112
        %v1930 = vpop.permute.xlu0 %1929
        %1931 = vrot.lane.b32.xlu0 %v820, 112
        %v1932 = vpop.permute.xlu0 %1931
        %1933 = vrot.lane.b32.xlu0 %v821, 112
        %v1934 = vpop.permute.xlu0 %1933
        %1935 = vrot.lane.b32.xlu0 %v822, 112
        %v1936 = vpop.permute.xlu0 %1935
        %1937 = vrot.lane.b32.xlu0 %v823, 112
        %v1938 = vpop.permute.xlu0 %1937
        %1939 = vrot.lane.b32.xlu0 %v824, 112
        %v1940 = vpop.permute.xlu0 %1939
        %1941 = vrot.lane.b32.xlu0 %v825, 112
        %v1942 = vpop.permute.xlu0 %1941
        %1943 = vrot.lane.b32.xlu0 %v826, 112
        %v1944 = vpop.permute.xlu0 %1943
        %1945 = vrot.lane.b32.xlu0 %v827, 112
        %v1946 = vpop.permute.xlu0 %1945
        %1947 = vrot.lane.b32.xlu0 %v828, 112
        %v1948 = vpop.permute.xlu0 %1947
        %1949 = vrot.lane.b32.xlu0 %v829, 112
        %v1950 = vpop.permute.xlu0 %1949
        %1951 = vrot.lane.b32.xlu0 %v830, 112
        %v1952 = vpop.permute.xlu0 %1951
        %1953 = vrot.lane.b32.xlu0 %v831, 112
        %v1954 = vpop.permute.xlu0 %1953
        %1955 = vrot.lane.b32.xlu0 %v832, 112
        %v1956 = vpop.permute.xlu0 %1955
        %1957 = vrot.lane.b32.xlu0 %v833, 112
        %v1958 = vpop.permute.xlu0 %1957
        %1959 = vrot.lane.b32.xlu0 %v834, 112
        %v1960 = vpop.permute.xlu0 %1959
        %1961 = vrot.lane.b32.xlu0 %v835, 112
        %v1962 = vpop.permute.xlu0 %1961
        %1963 = vrot.lane.b32.xlu0 %v836, 112
        %v1964 = vpop.permute.xlu0 %1963
        %1965 = vrot.lane.b32.xlu0 %v837, 112
        %v1966 = vpop.permute.xlu0 %1965
        %1967 = vrot.lane.b32.xlu0 %v838, 112
        %v1968 = vpop.permute.xlu0 %1967
        %1969 = vrot.lane.b32.xlu0 %v839, 112
        %v1970 = vpop.permute.xlu0 %1969
        %1971 = vrot.lane.b32.xlu0 %v840, 112
        %v1972 = vpop.permute.xlu0 %1971
        %1973 = vrot.lane.b32.xlu0 %v841, 112
        %v1974 = vpop.permute.xlu0 %1973
        %1975 = vrot.lane.b32.xlu0 %v842, 112
        %v1976 = vpop.permute.xlu0 %1975
        %1977 = vrot.lane.b32.xlu0 %v843, 112
        %v1978 = vpop.permute.xlu0 %1977
        %1979 = vrot.lane.b32.xlu0 %v844, 112
        %v1980 = vpop.permute.xlu0 %1979
        %1981 = vrot.lane.b32.xlu0 %v845, 112
        %v1982 = vpop.permute.xlu0 %1981
        %1983 = vrot.lane.b32.xlu0 %v846, 112
        %v1984 = vpop.permute.xlu0 %1983
        %1985 = vrot.lane.b32.xlu0 %v847, 112
        %v1986 = vpop.permute.xlu0 %1985
        %1987 = vrot.lane.b32.xlu0 %v848, 112
        %v1988 = vpop.permute.xlu0 %1987
        %1989 = vrot.lane.b32.xlu0 %v849, 112
        %v1990 = vpop.permute.xlu0 %1989
        %1991 = vrot.lane.b32.xlu0 %v850, 112
        %v1992 = vpop.permute.xlu0 %1991
        %1993 = vrot.lane.b32.xlu0 %v851, 112
        %v1994 = vpop.permute.xlu0 %1993
        %1995 = vrot.lane.b32.xlu0 %v852, 112
        %v1996 = vpop.permute.xlu0 %1995
        %1997 = vrot.lane.b32.xlu0 %v853, 112
        %v1998 = vpop.permute.xlu0 %1997
        %1999 = vrot.lane.b32.xlu0 %v854, 112
        %v2000 = vpop.permute.xlu0 %1999
        %2001 = vrot.lane.b32.xlu0 %v855, 112
        %v2002 = vpop.permute.xlu0 %2001
        %2003 = vrot.lane.b32.xlu0 %v856, 112
        %v2004 = vpop.permute.xlu0 %2003
        %2005 = vrot.lane.b32.xlu0 %v857, 112
        %v2006 = vpop.permute.xlu0 %2005
        %2007 = vrot.lane.b32.xlu0 %v858, 112
        %v2008 = vpop.permute.xlu0 %2007
        %2009 = vrot.lane.b32.xlu0 %v859, 112
        %v2010 = vpop.permute.xlu0 %2009
        %2011 = vrot.lane.b32.xlu0 %v860, 112
        %v2012 = vpop.permute.xlu0 %2011
        %2013 = vrot.lane.b32.xlu0 %v861, 112
        %v2014 = vpop.permute.xlu0 %2013
        %2015 = vrot.lane.b32.xlu0 %v862, 112
        %v2016 = vpop.permute.xlu0 %2015
        %2017 = vrot.lane.b32.xlu0 %v863, 112
        %v2018 = vpop.permute.xlu0 %2017
        %2019 = vrot.lane.b32.xlu0 %v864, 112
        %v2020 = vpop.permute.xlu0 %2019
        %2021 = vrot.lane.b32.xlu0 %v865, 112
        %v2022 = vpop.permute.xlu0 %2021
        %2023 = vrot.lane.b32.xlu0 %v866, 112
        %v2024 = vpop.permute.xlu0 %2023
        %2025 = vrot.lane.b32.xlu0 %v867, 112
        %v2026 = vpop.permute.xlu0 %2025
        %2027 = vrot.lane.b32.xlu0 %v868, 112
        %v2028 = vpop.permute.xlu0 %2027
        %2029 = vrot.lane.b32.xlu0 %v869, 112
        %v2030 = vpop.permute.xlu0 %2029
        %2031 = vrot.lane.b32.xlu0 %v870, 112
        %v2032 = vpop.permute.xlu0 %2031
        %2033 = vrot.lane.b32.xlu0 %v871, 112
        %v2034 = vpop.permute.xlu0 %2033
        %2035 = vrot.lane.b32.xlu0 %v872, 112
        %v2036 = vpop.permute.xlu0 %2035
        %vm2133 = vcmask 228352
        %v2134 = vsel %vm2133, %v761, %v970
        %v2135 = vsel %vm2133, %v762, %v972
        %v2136 = vsel %vm2133, %v763, %v974
        %v2137 = vsel %vm2133, %v764, %v976
        %v2138 = vsel %vm2133, %v765, %v978
        %v2139 = vsel %vm2133, %v766, %v980
        %v2140 = vsel %vm2133, %v767, %v982
        %v2141 = vsel %vm2133, %v768, %v984
        %v2142 = vsel %vm2133, %v769, %v986
        %v2143 = vsel %vm2133, %v770, %v988
        %v2144 = vsel %vm2133, %v771, %v990
        %v2145 = vsel %vm2133, %v772, %v992
        %v2146 = vsel %vm2133, %v773, %v994
        %v2147 = vsel %vm2133, %v774, %v996
        %v2148 = vsel %vm2133, %v775, %v998
        %v2149 = vsel %vm2133, %v776, %v1000
        %v2150 = vsel %vm2133, %v777, %v1002
        %v2151 = vsel %vm2133, %v778, %v1004
        %v2152 = vsel %vm2133, %v779, %v1006
        %v2153 = vsel %vm2133, %v780, %v1008
        %v2154 = vsel %vm2133, %v781, %v1010
        %v2155 = vsel %vm2133, %v782, %v1012
        %v2156 = vsel %vm2133, %v783, %v1014
        %v2157 = vsel %vm2133, %v784, %v1016
        %v2158 = vsel %vm2133, %v785, %v1018
        %v2159 = vsel %vm2133, %v786, %v1020
        %v2160 = vsel %vm2133, %v787, %v1022
        %v2161 = vsel %vm2133, %v788, %v1024
        %v2162 = vsel %vm2133, %v789, %v1026
        %v2163 = vsel %vm2133, %v790, %v1028
        %v2164 = vsel %vm2133, %v791, %v1030
        %v2165 = vsel %vm2133, %v792, %v1032
        %v2166 = vsel %vm2133, %v793, %v1034
        %v2167 = vsel %vm2133, %v794, %v1036
        %v2168 = vsel %vm2133, %v795, %v1038
        %v2169 = vsel %vm2133, %v796, %v1040
        %v2170 = vsel %vm2133, %v797, %v1042
        %v2171 = vsel %vm2133, %v798, %v1044
        %v2172 = vsel %vm2133, %v799, %v1046
        %v2173 = vsel %vm2133, %v800, %v1048
        %v2174 = vsel %vm2133, %v801, %v1050
        %v2175 = vsel %vm2133, %v802, %v1052
        %v2176 = vsel %vm2133, %v803, %v1054
        %v2177 = vsel %vm2133, %v804, %v1056
        %v2178 = vsel %vm2133, %v805, %v1058
        %v2179 = vsel %vm2133, %v806, %v1060
        %v2180 = vsel %vm2133, %v807, %v1062
        %v2181 = vsel %vm2133, %v808, %v1064
        %v2182 = vsel %vm2133, %v809, %v1066
        %v2183 = vsel %vm2133, %v810, %v1068
        %v2184 = vsel %vm2133, %v811, %v1070
        %v2185 = vsel %vm2133, %v812, %v1072
        %v2186 = vsel %vm2133, %v813, %v1074
        %v2187 = vsel %vm2133, %v814, %v1076
        %v2188 = vsel %vm2133, %v815, %v1078
        %v2189 = vsel %vm2133, %v816, %v1080
        %v2190 = vsel %vm2133, %v817, %v1082
        %v2191 = vsel %vm2133, %v818, %v1084
        %v2192 = vsel %vm2133, %v819, %v1086
        %v2193 = vsel %vm2133, %v820, %v1088
        %v2194 = vsel %vm2133, %v821, %v1090
        %v2195 = vsel %vm2133, %v822, %v1092
        %v2196 = vsel %vm2133, %v823, %v1094
        %v2197 = vsel %vm2133, %v824, %v1096
        %v2198 = vsel %vm2133, %v825, %v1098
        %v2199 = vsel %vm2133, %v826, %v1100
        %v2200 = vsel %vm2133, %v827, %v1102
        %v2201 = vsel %vm2133, %v828, %v1104
        %v2202 = vsel %vm2133, %v829, %v1106
        %v2203 = vsel %vm2133, %v830, %v1108
        %v2204 = vsel %vm2133, %v831, %v1110
        %v2205 = vsel %vm2133, %v832, %v1112
        %v2206 = vsel %vm2133, %v833, %v1114
        %v2207 = vsel %vm2133, %v834, %v1116
        %v2208 = vsel %vm2133, %v835, %v1118
        %v2209 = vsel %vm2133, %v836, %v1120
        %v2210 = vsel %vm2133, %v837, %v1122
        %v2211 = vsel %vm2133, %v838, %v1124
        %v2212 = vsel %vm2133, %v839, %v1126
        %v2213 = vsel %vm2133, %v840, %v1128
        %v2214 = vsel %vm2133, %v841, %v1130
        %v2215 = vsel %vm2133, %v842, %v1132
        %v2216 = vsel %vm2133, %v843, %v1134
        %v2217 = vsel %vm2133, %v844, %v1136
        %v2218 = vsel %vm2133, %v845, %v1138
        %v2219 = vsel %vm2133, %v846, %v1140
        %v2220 = vsel %vm2133, %v847, %v1142
        %v2221 = vsel %vm2133, %v848, %v1144
        %v2222 = vsel %vm2133, %v849, %v1146
        %v2223 = vsel %vm2133, %v850, %v1148
        %v2224 = vsel %vm2133, %v851, %v1150
        %v2225 = vsel %vm2133, %v852, %v1152
        %v2226 = vsel %vm2133, %v853, %v1154
        %v2227 = vsel %vm2133, %v854, %v1156
        %v2228 = vsel %vm2133, %v855, %v1158
        %v2229 = vsel %vm2133, %v856, %v1160
        %vm2230 = vcmask 457728
        %v2231 = vsel %vm2230, %v2134, %v1262
        %v2232 = vsel %vm2230, %v2135, %v1264
        %v2233 = vsel %vm2230, %v2136, %v1266
        %v2234 = vsel %vm2230, %v2137, %v1268
        %v2235 = vsel %vm2230, %v2138, %v1270
        %v2236 = vsel %vm2230, %v2139, %v1272
        %v2237 = vsel %vm2230, %v2140, %v1274
        %v2238 = vsel %vm2230, %v2141, %v1276
        %v2239 = vsel %vm2230, %v2142, %v1278
        %v2240 = vsel %vm2230, %v2143, %v1280
        %v2241 = vsel %vm2230, %v2144, %v1282
        %v2242 = vsel %vm2230, %v2145, %v1284
        %v2243 = vsel %vm2230, %v2146, %v1286
        %v2244 = vsel %vm2230, %v2147, %v1288
        %v2245 = vsel %vm2230, %v2148, %v1290
        %v2246 = vsel %vm2230, %v2149, %v1292
        %v2247 = vsel %vm2230, %v2150, %v1294
        %v2248 = vsel %vm2230, %v2151, %v1296
        %v2249 = vsel %vm2230, %v2152, %v1298
        %v2250 = vsel %vm2230, %v2153, %v1300
        %v2251 = vsel %vm2230, %v2154, %v1302
        %v2252 = vsel %vm2230, %v2155, %v1304
        %v2253 = vsel %vm2230, %v2156, %v1306
        %v2254 = vsel %vm2230, %v2157, %v1308
        %v2255 = vsel %vm2230, %v2158, %v1310
        %v2256 = vsel %vm2230, %v2159, %v1312
        %v2257 = vsel %vm2230, %v2160, %v1314
        %v2258 = vsel %vm2230, %v2161, %v1316
        %v2259 = vsel %vm2230, %v2162, %v1318
        %v2260 = vsel %vm2230, %v2163, %v1320
        %v2261 = vsel %vm2230, %v2164, %v1322
        %v2262 = vsel %vm2230, %v2165, %v1324
        %v2263 = vsel %vm2230, %v2166, %v1326
        %v2264 = vsel %vm2230, %v2167, %v1328
        %v2265 = vsel %vm2230, %v2168, %v1330
        %v2266 = vsel %vm2230, %v2169, %v1332
        %v2267 = vsel %vm2230, %v2170, %v1334
        %v2268 = vsel %vm2230, %v2171, %v1336
        %v2269 = vsel %vm2230, %v2172, %v1338
        %v2270 = vsel %vm2230, %v2173, %v1340
        %v2271 = vsel %vm2230, %v2174, %v1342
        %v2272 = vsel %vm2230, %v2175, %v1344
        %v2273 = vsel %vm2230, %v2176, %v1346
        %v2274 = vsel %vm2230, %v2177, %v1348
        %v2275 = vsel %vm2230, %v2178, %v1350
        %v2276 = vsel %vm2230, %v2179, %v1352
        %v2277 = vsel %vm2230, %v2180, %v1354
        %v2278 = vsel %vm2230, %v2181, %v1356
        %v2279 = vsel %vm2230, %v2182, %v1358
        %v2280 = vsel %vm2230, %v2183, %v1360
        %v2281 = vsel %vm2230, %v2184, %v1362
        %v2282 = vsel %vm2230, %v2185, %v1364
        %v2283 = vsel %vm2230, %v2186, %v1366
        %v2284 = vsel %vm2230, %v2187, %v1368
        %v2285 = vsel %vm2230, %v2188, %v1370
        %v2286 = vsel %vm2230, %v2189, %v1372
        %v2287 = vsel %vm2230, %v2190, %v1374
        %v2288 = vsel %vm2230, %v2191, %v1376
        %v2289 = vsel %vm2230, %v2192, %v1378
        %v2290 = vsel %vm2230, %v2193, %v1380
        %v2291 = vsel %vm2230, %v2194, %v1382
        %v2292 = vsel %vm2230, %v2195, %v1384
        %v2293 = vsel %vm2230, %v2196, %v1386
        %v2294 = vsel %vm2230, %v2197, %v1388
        %v2295 = vsel %vm2230, %v2198, %v1390
        %v2296 = vsel %vm2230, %v2199, %v1392
        %v2297 = vsel %vm2230, %v2200, %v1394
        %v2298 = vsel %vm2230, %v2201, %v1396
        %v2299 = vsel %vm2230, %v2202, %v1398
        %v2300 = vsel %vm2230, %v2203, %v1400
        %v2301 = vsel %vm2230, %v2204, %v1402
        %v2302 = vsel %vm2230, %v2205, %v1404
        %v2303 = vsel %vm2230, %v2206, %v1406
        %v2304 = vsel %vm2230, %v2207, %v1408
        %v2305 = vsel %vm2230, %v2208, %v1410
        %v2306 = vsel %vm2230, %v2209, %v1412
        %v2307 = vsel %vm2230, %v2210, %v1414
        %v2308 = vsel %vm2230, %v2211, %v1416
        %v2309 = vsel %vm2230, %v2212, %v1418
        %v2310 = vsel %vm2230, %v2213, %v1420
        %v2311 = vsel %vm2230, %v2214, %v1422
        %v2312 = vsel %vm2230, %v2215, %v1424
        %v2313 = vsel %vm2230, %v2216, %v1426
        %v2314 = vsel %vm2230, %v2217, %v1428
        %v2315 = vsel %vm2230, %v2218, %v1430
        %v2316 = vsel %vm2230, %v2219, %v1432
        %v2317 = vsel %vm2230, %v2220, %v1434
        %v2318 = vsel %vm2230, %v2221, %v1436
        %v2319 = vsel %vm2230, %v2222, %v1438
        %v2320 = vsel %vm2230, %v2223, %v1440
        %v2321 = vsel %vm2230, %v2224, %v1442
        %v2322 = vsel %vm2230, %v2225, %v1444
        %v2323 = vsel %vm2230, %v2226, %v1446
        %v2324 = vsel %vm2230, %v2227, %v1448
        %v2325 = vsel %vm2230, %v2228, %v1450
        %v2326 = vsel %vm2230, %v2229, %v1452
        %vm2327 = vcmask 687104
        %v2328 = vsel %vm2327, %v2231, %v1554
        %v2329 = vsel %vm2327, %v2232, %v1556
        %v2330 = vsel %vm2327, %v2233, %v1558
        %v2331 = vsel %vm2327, %v2234, %v1560
        %v2332 = vsel %vm2327, %v2235, %v1562
        %v2333 = vsel %vm2327, %v2236, %v1564
        %v2334 = vsel %vm2327, %v2237, %v1566
        %v2335 = vsel %vm2327, %v2238, %v1568
        %v2336 = vsel %vm2327, %v2239, %v1570
        %v2337 = vsel %vm2327, %v2240, %v1572
        %v2338 = vsel %vm2327, %v2241, %v1574
        %v2339 = vsel %vm2327, %v2242, %v1576
        %v2340 = vsel %vm2327, %v2243, %v1578
        %v2341 = vsel %vm2327, %v2244, %v1580
        %v2342 = vsel %vm2327, %v2245, %v1582
        %v2343 = vsel %vm2327, %v2246, %v1584
        %v2344 = vsel %vm2327, %v2247, %v1586
        %v2345 = vsel %vm2327, %v2248, %v1588
        %v2346 = vsel %vm2327, %v2249, %v1590
        %v2347 = vsel %vm2327, %v2250, %v1592
        %v2348 = vsel %vm2327, %v2251, %v1594
        %v2349 = vsel %vm2327, %v2252, %v1596
        %v2350 = vsel %vm2327, %v2253, %v1598
        %v2351 = vsel %vm2327, %v2254, %v1600
        %v2352 = vsel %vm2327, %v2255, %v1602
        %v2353 = vsel %vm2327, %v2256, %v1604
        %v2354 = vsel %vm2327, %v2257, %v1606
        %v2355 = vsel %vm2327, %v2258, %v1608
        %v2356 = vsel %vm2327, %v2259, %v1610
        %v2357 = vsel %vm2327, %v2260, %v1612
        %v2358 = vsel %vm2327, %v2261, %v1614
        %v2359 = vsel %vm2327, %v2262, %v1616
        %v2360 = vsel %vm2327, %v2263, %v1618
        %v2361 = vsel %vm2327, %v2264, %v1620
        %v2362 = vsel %vm2327, %v2265, %v1622
        %v2363 = vsel %vm2327, %v2266, %v1624
        %v2364 = vsel %vm2327, %v2267, %v1626
        %v2365 = vsel %vm2327, %v2268, %v1628
        %v2366 = vsel %vm2327, %v2269, %v1630
        %v2367 = vsel %vm2327, %v2270, %v1632
        %v2368 = vsel %vm2327, %v2271, %v1634
        %v2369 = vsel %vm2327, %v2272, %v1636
        %v2370 = vsel %vm2327, %v2273, %v1638
        %v2371 = vsel %vm2327, %v2274, %v1640
        %v2372 = vsel %vm2327, %v2275, %v1642
        %v2373 = vsel %vm2327, %v2276, %v1644
        %v2374 = vsel %vm2327, %v2277, %v1646
        %v2375 = vsel %vm2327, %v2278, %v1648
        %v2376 = vsel %vm2327, %v2279, %v1650
        %v2377 = vsel %vm2327, %v2280, %v1652
        %v2378 = vsel %vm2327, %v2281, %v1654
        %v2379 = vsel %vm2327, %v2282, %v1656
        %v2380 = vsel %vm2327, %v2283, %v1658
        %v2381 = vsel %vm2327, %v2284, %v1660
        %v2382 = vsel %vm2327, %v2285, %v1662
        %v2383 = vsel %vm2327, %v2286, %v1664
        %v2384 = vsel %vm2327, %v2287, %v1666
        %v2385 = vsel %vm2327, %v2288, %v1668
        %v2386 = vsel %vm2327, %v2289, %v1670
        %v2387 = vsel %vm2327, %v2290, %v1672
        %v2388 = vsel %vm2327, %v2291, %v1674
        %v2389 = vsel %vm2327, %v2292, %v1676
        %v2390 = vsel %vm2327, %v2293, %v1678
        %v2391 = vsel %vm2327, %v2294, %v1680
        %v2392 = vsel %vm2327, %v2295, %v1682
        %v2393 = vsel %vm2327, %v2296, %v1684
        %v2394 = vsel %vm2327, %v2297, %v1686
        %v2395 = vsel %vm2327, %v2298, %v1688
        %v2396 = vsel %vm2327, %v2299, %v1690
        %v2397 = vsel %vm2327, %v2300, %v1692
        %v2398 = vsel %vm2327, %v2301, %v1694
        %v2399 = vsel %vm2327, %v2302, %v1696
        %v2400 = vsel %vm2327, %v2303, %v1698
        %v2401 = vsel %vm2327, %v2304, %v1700
        %v2402 = vsel %vm2327, %v2305, %v1702
        %v2403 = vsel %vm2327, %v2306, %v1704
        %v2404 = vsel %vm2327, %v2307, %v1706
        %v2405 = vsel %vm2327, %v2308, %v1708
        %v2406 = vsel %vm2327, %v2309, %v1710
        %v2407 = vsel %vm2327, %v2310, %v1712
        %v2408 = vsel %vm2327, %v2311, %v1714
        %v2409 = vsel %vm2327, %v2312, %v1716
        %v2410 = vsel %vm2327, %v2313, %v1718
        %v2411 = vsel %vm2327, %v2314, %v1720
        %v2412 = vsel %vm2327, %v2315, %v1722
        %v2413 = vsel %vm2327, %v2316, %v1724
        %v2414 = vsel %vm2327, %v2317, %v1726
        %v2415 = vsel %vm2327, %v2318, %v1728
        %v2416 = vsel %vm2327, %v2319, %v1730
        %v2417 = vsel %vm2327, %v2320, %v1732
        %v2418 = vsel %vm2327, %v2321, %v1734
        %v2419 = vsel %vm2327, %v2322, %v1736
        %v2420 = vsel %vm2327, %v2323, %v1738
        %v2421 = vsel %vm2327, %v2324, %v1740
        %v2422 = vsel %vm2327, %v2325, %v1742
        %v2423 = vsel %vm2327, %v2326, %v1744
        %vm2424 = vcmask 916480
        %v2425 = vsel %vm2424, %v2328, %v1846
        %v2426 = vsel %vm2424, %v2329, %v1848
        %v2427 = vsel %vm2424, %v2330, %v1850
        %v2428 = vsel %vm2424, %v2331, %v1852
        %v2429 = vsel %vm2424, %v2332, %v1854
        %v2430 = vsel %vm2424, %v2333, %v1856
        %v2431 = vsel %vm2424, %v2334, %v1858
        %v2432 = vsel %vm2424, %v2335, %v1860
        %v2433 = vsel %vm2424, %v2336, %v1862
        %v2434 = vsel %vm2424, %v2337, %v1864
        %v2435 = vsel %vm2424, %v2338, %v1866
        %v2436 = vsel %vm2424, %v2339, %v1868
        %v2437 = vsel %vm2424, %v2340, %v1870
        %v2438 = vsel %vm2424, %v2341, %v1872
        %v2439 = vsel %vm2424, %v2342, %v1874
        %v2440 = vsel %vm2424, %v2343, %v1876
        %v2441 = vsel %vm2424, %v2344, %v1878
        %v2442 = vsel %vm2424, %v2345, %v1880
        %v2443 = vsel %vm2424, %v2346, %v1882
        %v2444 = vsel %vm2424, %v2347, %v1884
        %v2445 = vsel %vm2424, %v2348, %v1886
        %v2446 = vsel %vm2424, %v2349, %v1888
        %v2447 = vsel %vm2424, %v2350, %v1890
        %v2448 = vsel %vm2424, %v2351, %v1892
        %v2449 = vsel %vm2424, %v2352, %v1894
        %v2450 = vsel %vm2424, %v2353, %v1896
        %v2451 = vsel %vm2424, %v2354, %v1898
        %v2452 = vsel %vm2424, %v2355, %v1900
        %v2453 = vsel %vm2424, %v2356, %v1902
        %v2454 = vsel %vm2424, %v2357, %v1904
        %v2455 = vsel %vm2424, %v2358, %v1906
        %v2456 = vsel %vm2424, %v2359, %v1908
        %v2457 = vsel %vm2424, %v2360, %v1910
        %v2458 = vsel %vm2424, %v2361, %v1912
        %v2459 = vsel %vm2424, %v2362, %v1914
        %v2460 = vsel %vm2424, %v2363, %v1916
        %v2461 = vsel %vm2424, %v2364, %v1918
        %v2462 = vsel %vm2424, %v2365, %v1920
        %v2463 = vsel %vm2424, %v2366, %v1922
        %v2464 = vsel %vm2424, %v2367, %v1924
        %v2465 = vsel %vm2424, %v2368, %v1926
        %v2466 = vsel %vm2424, %v2369, %v1928
        %v2467 = vsel %vm2424, %v2370, %v1930
        %v2468 = vsel %vm2424, %v2371, %v1932
        %v2469 = vsel %vm2424, %v2372, %v1934
        %v2470 = vsel %vm2424, %v2373, %v1936
        %v2471 = vsel %vm2424, %v2374, %v1938
        %v2472 = vsel %vm2424, %v2375, %v1940
        %v2473 = vsel %vm2424, %v2376, %v1942
        %v2474 = vsel %vm2424, %v2377, %v1944
        %v2475 = vsel %vm2424, %v2378, %v1946
        %v2476 = vsel %vm2424, %v2379, %v1948
        %v2477 = vsel %vm2424, %v2380, %v1950
        %v2478 = vsel %vm2424, %v2381, %v1952
        %v2479 = vsel %vm2424, %v2382, %v1954
        %v2480 = vsel %vm2424, %v2383, %v1956
        %v2481 = vsel %vm2424, %v2384, %v1958
        %v2482 = vsel %vm2424, %v2385, %v1960
        %v2483 = vsel %vm2424, %v2386, %v1962
        %v2484 = vsel %vm2424, %v2387, %v1964
        %v2485 = vsel %vm2424, %v2388, %v1966
        %v2486 = vsel %vm2424, %v2389, %v1968
        %v2487 = vsel %vm2424, %v2390, %v1970
        %v2488 = vsel %vm2424, %v2391, %v1972
        %v2489 = vsel %vm2424, %v2392, %v1974
        %v2490 = vsel %vm2424, %v2393, %v1976
        %v2491 = vsel %vm2424, %v2394, %v1978
        %v2492 = vsel %vm2424, %v2395, %v1980
        %v2493 = vsel %vm2424, %v2396, %v1982
        %v2494 = vsel %vm2424, %v2397, %v1984
        %v2495 = vsel %vm2424, %v2398, %v1986
        %v2496 = vsel %vm2424, %v2399, %v1988
        %v2497 = vsel %vm2424, %v2400, %v1990
        %v2498 = vsel %vm2424, %v2401, %v1992
        %v2499 = vsel %vm2424, %v2402, %v1994
        %v2500 = vsel %vm2424, %v2403, %v1996
        %v2501 = vsel %vm2424, %v2404, %v1998
        %v2502 = vsel %vm2424, %v2405, %v2000
        %v2503 = vsel %vm2424, %v2406, %v2002
        %v2504 = vsel %vm2424, %v2407, %v2004
        %v2505 = vsel %vm2424, %v2408, %v2006
        %v2506 = vsel %vm2424, %v2409, %v2008
        %v2507 = vsel %vm2424, %v2410, %v2010
        %v2508 = vsel %vm2424, %v2411, %v2012
        %v2509 = vsel %vm2424, %v2412, %v2014
        %v2510 = vsel %vm2424, %v2413, %v2016
        %v2511 = vsel %vm2424, %v2414, %v2018
        %v2512 = vsel %vm2424, %v2415, %v2020
        %v2513 = vsel %vm2424, %v2416, %v2022
        %v2514 = vsel %vm2424, %v2417, %v2024
        %v2515 = vsel %vm2424, %v2418, %v2026
        %v2516 = vsel %vm2424, %v2419, %v2028
        %v2517 = vsel %vm2424, %v2420, %v2030
        %v2518 = vsel %vm2424, %v2421, %v2032
        %v2519 = vsel %vm2424, %v2422, %v2034
        %v2520 = vsel %vm2424, %v2423, %v2036
        %v2521 = vld [vmem:[%s1] sm:$0xff]
        %v2522 = vld [vmem:[%s1 + $0x8] sm:$0xff]
        %v2523 = vld [vmem:[%s1 + $0x10] sm:$0xff]
        %v2524 = vld [vmem:[%s1 + $0x18] sm:$0xff]
        %v2525 = vld [vmem:[%s1 + $0x20] sm:$0xff]
        %v2526 = vld [vmem:[%s1 + $0x28] sm:$0xff]
        %v2527 = vld [vmem:[%s1 + $0x30] sm:$0xff]
        %v2528 = vld [vmem:[%s1 + $0x38] sm:$0xff]
        %v2529 = vld [vmem:[%s1 + $0x40] sm:$0xff]
        %v2530 = vld [vmem:[%s1 + $0x48] sm:$0xff]
        %v2531 = vld [vmem:[%s1 + $0x50] sm:$0xff]
        %v2532 = vld [vmem:[%s1 + $0x58] sm:$0xff]
        %v2533 = vld [vmem:[%s1 + $0x60] sm:$0xff]
        %v2534 = vld [vmem:[%s1 + $0x68] sm:$0xff]
        %v2535 = vld [vmem:[%s1 + $0x70] sm:$0xff]
        %v2536 = vld [vmem:[%s1 + $0x78] sm:$0xff]
        %v2537 = vld [vmem:[%s1 + $0x80] sm:$0xff]
        %v2538 = vld [vmem:[%s1 + $0x88] sm:$0xff]
        %v2539 = vld [vmem:[%s1 + $0x90] sm:$0xff]
        %v2540 = vld [vmem:[%s1 + $0x98] sm:$0xff]
        %v2541 = vld [vmem:[%s1 + $0xa0] sm:$0xff]
        %v2542 = vld [vmem:[%s1 + $0xa8] sm:$0xff]
        %v2543 = vld [vmem:[%s1 + $0xb0] sm:$0xff]
        %v2544 = vld [vmem:[%s1 + $0xb8] sm:$0xff]
        %v2545 = vld [vmem:[%s1 + $0xc0] sm:$0xff]
        %v2546 = vld [vmem:[%s1 + $0xc8] sm:$0xff]
        %v2547 = vld [vmem:[%s1 + $0xd0] sm:$0xff]
        %v2548 = vld [vmem:[%s1 + $0xd8] sm:$0xff]
        %v2549 = vld [vmem:[%s1 + $0xe0] sm:$0xff]
        %v2550 = vld [vmem:[%s1 + $0xe8] sm:$0xff]
        %v2551 = vld [vmem:[%s1 + $0xf0] sm:$0xff]
        %v2552 = vld [vmem:[%s1 + $0xf8] sm:$0xff]
        %v2553 = vld [vmem:[%s1 + $0x100] sm:$0xff]
        %v2554 = vld [vmem:[%s1 + $0x108] sm:$0xff]
        %v2555 = vld [vmem:[%s1 + $0x110] sm:$0xf]
        %v2556 = vld [vmem:[%s1 + $0x118] sm:$0xf]
        %v2557 = vld [vmem:[%s2] sm:$0x3]
        %v2559 = vperm.slane %v2557, 0
        %v2560 = vperm.slane %v2557, 1
        %vm2563 = vcmask 97280
        %v2564 = vsel %vm2563, %v1846, 0
        %v2566 = vsel %vm2563, %v1848, 0
        %v2568 = vsel %vm2563, %v1850, 0
        %v2570 = vsel %vm2563, %v1852, 0
        %v2572 = vsel %vm2563, %v1854, 0
        %v2574 = vsel %vm2563, %v1856, 0
        %v2576 = vsel %vm2563, %v1858, 0
        %v2578 = vsel %vm2563, %v1860, 0
        %v2580 = vsel %vm2563, %v1862, 0
        %v2582 = vsel %vm2563, %v1864, 0
        %v2584 = vsel %vm2563, %v1866, 0
        %v2586 = vsel %vm2563, %v1868, 0
        %v2588 = vsel %vm2563, %v1870, 0
        %v2590 = vsel %vm2563, %v1872, 0
        %v2592 = vsel %vm2563, %v1874, 0
        %v2594 = vsel %vm2563, %v1876, 0
        %v2596 = vsel %vm2563, %v1878, 0
        %v2598 = vsel %vm2563, %v1880, 0
        %v2600 = vsel %vm2563, %v1882, 0
        %v2602 = vsel %vm2563, %v1884, 0
        %v2604 = vsel %vm2563, %v1886, 0
        %v2606 = vsel %vm2563, %v1888, 0
        %v2608 = vsel %vm2563, %v1890, 0
        %v2610 = vsel %vm2563, %v1892, 0
        %v2612 = vsel %vm2563, %v1894, 0
        %v2614 = vsel %vm2563, %v1896, 0
        %v2616 = vsel %vm2563, %v1898, 0
        %v2618 = vsel %vm2563, %v1900, 0
        %v2620 = vsel %vm2563, %v1902, 0
        %v2622 = vsel %vm2563, %v1904, 0
        %v2624 = vsel %vm2563, %v1906, 0
        %v2626 = vsel %vm2563, %v1908, 0
        %v2628 = vsel %vm2563, %v1910, 0
        %v2630 = vsel %vm2563, %v1912, 0
        %v2632 = vsel %vm2563, %v1914, 0
        %v2634 = vsel %vm2563, %v1916, 0
        %v2636 = vsel %vm2563, %v1918, 0
        %v2638 = vsel %vm2563, %v1920, 0
        %v2640 = vsel %vm2563, %v1922, 0
        %v2642 = vsel %vm2563, %v1924, 0
        %v2644 = vsel %vm2563, %v1926, 0
        %v2646 = vsel %vm2563, %v1928, 0
        %v2648 = vsel %vm2563, %v1930, 0
        %v2650 = vsel %vm2563, %v1932, 0
        %v2652 = vsel %vm2563, %v1934, 0
        %v2654 = vsel %vm2563, %v1936, 0
        %v2656 = vsel %vm2563, %v1938, 0
        %v2658 = vsel %vm2563, %v1940, 0
        %v2660 = vsel %vm2563, %v1942, 0
        %v2662 = vsel %vm2563, %v1944, 0
        %v2664 = vsel %vm2563, %v1946, 0
        %v2666 = vsel %vm2563, %v1948, 0
        %v2668 = vsel %vm2563, %v1950, 0
        %v2670 = vsel %vm2563, %v1952, 0
        %v2672 = vsel %vm2563, %v1954, 0
        %v2674 = vsel %vm2563, %v1956, 0
        %v2676 = vsel %vm2563, %v1958, 0
        %v2678 = vsel %vm2563, %v1960, 0
        %v2680 = vsel %vm2563, %v1962, 0
        %v2682 = vsel %vm2563, %v1964, 0
        %v2684 = vsel %vm2563, %v1966, 0
        %v2686 = vsel %vm2563, %v1968, 0
        %v2688 = vsel %vm2563, %v1970, 0
        %v2690 = vsel %vm2563, %v1972, 0
        %v2692 = vsel %vm2563, %v1974, 0
        %v2694 = vsel %vm2563, %v1976, 0
        %v2696 = vsel %vm2563, %v1978, 0
        %v2698 = vsel %vm2563, %v1980, 0
        %v2700 = vsel %vm2563, %v1982, 0
        %v2702 = vsel %vm2563, %v1984, 0
        %v2704 = vsel %vm2563, %v1986, 0
        %v2706 = vsel %vm2563, %v1988, 0
        %v2708 = vsel %vm2563, %v1990, 0
        %v2710 = vsel %vm2563, %v1992, 0
        %v2712 = vsel %vm2563, %v1994, 0
        %v2714 = vsel %vm2563, %v1996, 0
        %v2716 = vsel %vm2563, %v1998, 0
        %v2718 = vsel %vm2563, %v2000, 0
        %v2720 = vsel %vm2563, %v2002, 0
        %v2722 = vsel %vm2563, %v2004, 0
        %v2724 = vsel %vm2563, %v2006, 0
        %v2726 = vsel %vm2563, %v2008, 0
        %v2728 = vsel %vm2563, %v2010, 0
        %v2730 = vsel %vm2563, %v2012, 0
        %v2732 = vsel %vm2563, %v2014, 0
        %v2734 = vsel %vm2563, %v2016, 0
        %v2736 = vsel %vm2563, %v2018, 0
        %v2738 = vsel %vm2563, %v2020, 0
        %v2740 = vsel %vm2563, %v2022, 0
        %v2742 = vsel %vm2563, %v2024, 0
        %v2744 = vsel %vm2563, %v2026, 0
        %v2746 = vsel %vm2563, %v2028, 0
        %v2748 = vsel %vm2563, %v2030, 0
        %v2750 = vsel %vm2563, %v2032, 0
        %v2752 = vsel %vm2563, %v2034, 0
        %v2754 = vsel %vm2563, %v2036, 0
        %vm2756 = vcmask 1043456
        %v2758 = vsel %vm2756, %v2555, 0
        %v2761 = vsel %vm2756, %v2556, 0
        %2763 = vmatpush.msra.mxu0 %v2551
        %2764 = vmatpush.msra.mxu0 %v2549
        %2765 = vmatpush.msra.mxu0 %v2547
        %2766 = vmatpush.msra.mxu0 %v2545
        %2767 = vmatpush.msra.mxu0 %v2543
        %2768 = vmatpush.msra.mxu0 %v2541
        %2769 = vmatpush.msra.mxu0 %v2539
        %2770 = vmatpush.msra.mxu0 %v2537
        %2771 = vmatpush.msra.mxu0 %v2535
        %2772 = vmatpush.msra.mxu0 %v2533
        %2773 = vmatpush.msra.mxu0 %v2531
        %2774 = vmatpush.msra.mxu0 %v2529
        %2775 = vmatpush.msra.mxu0 %v2527
        %2776 = vmatpush.msra.mxu0 %v2525
        %2777 = vmatpush.msra.mxu0 %v2523
        %2778 = vmatpush.msra.mxu0 %v2521
        %2779 = vmatmul.f32.gmra.mxu0 %v2425
        %v2780 = vpop.f32.mrf.mxu0
        %v2781 = vadd.f32 %v2559, %v2780
        %2782 = vmatmul.f32.gmra.mxu0 %v2426
        %v2783 = vpop.f32.mrf.mxu0
        %v2784 = vadd.f32 %v2559, %v2783
        %2785 = vmatmul.f32.gmra.mxu0 %v2427
        %v2786 = vpop.f32.mrf.mxu0
        %v2787 = vadd.f32 %v2559, %v2786
        %2788 = vmatmul.f32.gmra.mxu0 %v2428
        %v2789 = vpop.f32.mrf.mxu0
        %v2790 = vadd.f32 %v2559, %v2789
        %2791 = vmatmul.f32.gmra.mxu0 %v2429
        %v2792 = vpop.f32.mrf.mxu0
        %v2793 = vadd.f32 %v2559, %v2792
        %2794 = vmatmul.f32.gmra.mxu0 %v2430
        %v2795 = vpop.f32.mrf.mxu0
        %v2796 = vadd.f32 %v2559, %v2795
        %2797 = vmatmul.f32.gmra.mxu0 %v2431
        %v2798 = vpop.f32.mrf.mxu0
        %v2799 = vadd.f32 %v2559, %v2798
        %2800 = vmatmul.f32.gmra.mxu0 %v2432
        %v2801 = vpop.f32.mrf.mxu0
        %v2802 = vadd.f32 %v2559, %v2801
        %2803 = vmatmul.f32.gmra.mxu0 %v2433
        %v2804 = vpop.f32.mrf.mxu0
        %v2805 = vadd.f32 %v2559, %v2804
        %2806 = vmatmul.f32.gmra.mxu0 %v2434
        %v2807 = vpop.f32.mrf.mxu0
        %v2808 = vadd.f32 %v2559, %v2807
        %2809 = vmatmul.f32.gmra.mxu0 %v2435
        %v2810 = vpop.f32.mrf.mxu0
        %v2811 = vadd.f32 %v2559, %v2810
        %2812 = vmatmul.f32.gmra.mxu0 %v2436
        %v2813 = vpop.f32.mrf.mxu0
        %v2814 = vadd.f32 %v2559, %v2813
        %2815 = vmatmul.f32.gmra.mxu0 %v2437
        %v2816 = vpop.f32.mrf.mxu0
        %v2817 = vadd.f32 %v2559, %v2816
        %2818 = vmatmul.f32.gmra.mxu0 %v2438
        %v2819 = vpop.f32.mrf.mxu0
        %v2820 = vadd.f32 %v2559, %v2819
        %2821 = vmatmul.f32.gmra.mxu0 %v2439
        %v2822 = vpop.f32.mrf.mxu0
        %v2823 = vadd.f32 %v2559, %v2822
        %2824 = vmatmul.f32.gmra.mxu0 %v2440
        %v2825 = vpop.f32.mrf.mxu0
        %v2826 = vadd.f32 %v2559, %v2825
        %2827 = vmatmul.f32.gmra.mxu0 %v2441
        %v2828 = vpop.f32.mrf.mxu0
        %v2829 = vadd.f32 %v2559, %v2828
        %2830 = vmatmul.f32.gmra.mxu0 %v2442
        %v2831 = vpop.f32.mrf.mxu0
        %v2832 = vadd.f32 %v2559, %v2831
        %2833 = vmatmul.f32.gmra.mxu0 %v2443
        %v2834 = vpop.f32.mrf.mxu0
        %v2835 = vadd.f32 %v2559, %v2834
        %2836 = vmatmul.f32.gmra.mxu0 %v2444
        %v2837 = vpop.f32.mrf.mxu0
        %v2838 = vadd.f32 %v2559, %v2837
        %2839 = vmatmul.f32.gmra.mxu0 %v2445
        %v2840 = vpop.f32.mrf.mxu0
        %v2841 = vadd.f32 %v2559, %v2840
        %2842 = vmatmul.f32.gmra.mxu0 %v2446
        %v2843 = vpop.f32.mrf.mxu0
        %v2844 = vadd.f32 %v2559, %v2843
        %2845 = vmatmul.f32.gmra.mxu0 %v2447
        %v2846 = vpop.f32.mrf.mxu0
        %v2847 = vadd.f32 %v2559, %v2846
        %2848 = vmatmul.f32.gmra.mxu0 %v2448
        %v2849 = vpop.f32.mrf.mxu0
        %v2850 = vadd.f32 %v2559, %v2849
        %2851 = vmatmul.f32.gmra.mxu0 %v2449
        %v2852 = vpop.f32.mrf.mxu0
        %v2853 = vadd.f32 %v2559, %v2852
        %2854 = vmatmul.f32.gmra.mxu0 %v2450
        %v2855 = vpop.f32.mrf.mxu0
        %v2856 = vadd.f32 %v2559, %v2855
        %2857 = vmatmul.f32.gmra.mxu0 %v2451
        %v2858 = vpop.f32.mrf.mxu0
        %v2859 = vadd.f32 %v2559, %v2858
        %2860 = vmatmul.f32.gmra.mxu0 %v2452
        %v2861 = vpop.f32.mrf.mxu0
        %v2862 = vadd.f32 %v2559, %v2861
        %2863 = vmatmul.f32.gmra.mxu0 %v2453
        %v2864 = vpop.f32.mrf.mxu0
        %v2865 = vadd.f32 %v2559, %v2864
        %2866 = vmatmul.f32.gmra.mxu0 %v2454
        %v2867 = vpop.f32.mrf.mxu0
        %v2868 = vadd.f32 %v2559, %v2867
        %2869 = vmatmul.f32.gmra.mxu0 %v2455
        %v2870 = vpop.f32.mrf.mxu0
        %v2871 = vadd.f32 %v2559, %v2870
        %2872 = vmatmul.f32.gmra.mxu0 %v2456
        %v2873 = vpop.f32.mrf.mxu0
        %v2874 = vadd.f32 %v2559, %v2873
        %2875 = vmatmul.f32.gmra.mxu0 %v2457
        %v2876 = vpop.f32.mrf.mxu0
        %v2877 = vadd.f32 %v2559, %v2876
        %2878 = vmatmul.f32.gmra.mxu0 %v2458
        %v2879 = vpop.f32.mrf.mxu0
        %v2880 = vadd.f32 %v2559, %v2879
        %2881 = vmatmul.f32.gmra.mxu0 %v2459
        %v2882 = vpop.f32.mrf.mxu0
        %v2883 = vadd.f32 %v2559, %v2882
        %2884 = vmatmul.f32.gmra.mxu0 %v2460
        %v2885 = vpop.f32.mrf.mxu0
        %v2886 = vadd.f32 %v2559, %v2885
        %2887 = vmatmul.f32.gmra.mxu0 %v2461
        %v2888 = vpop.f32.mrf.mxu0
        %v2889 = vadd.f32 %v2559, %v2888
        %2890 = vmatmul.f32.gmra.mxu0 %v2462
        %v2891 = vpop.f32.mrf.mxu0
        %v2892 = vadd.f32 %v2559, %v2891
        %2893 = vmatmul.f32.gmra.mxu0 %v2463
        %v2894 = vpop.f32.mrf.mxu0
        %v2895 = vadd.f32 %v2559, %v2894
        %2896 = vmatmul.f32.gmra.mxu0 %v2464
        %v2897 = vpop.f32.mrf.mxu0
        %v2898 = vadd.f32 %v2559, %v2897
        %2899 = vmatmul.f32.gmra.mxu0 %v2465
        %v2900 = vpop.f32.mrf.mxu0
        %v2901 = vadd.f32 %v2559, %v2900
        %2902 = vmatmul.f32.gmra.mxu0 %v2466
        %v2903 = vpop.f32.mrf.mxu0
        %v2904 = vadd.f32 %v2559, %v2903
        %2905 = vmatmul.f32.gmra.mxu0 %v2467
        %v2906 = vpop.f32.mrf.mxu0
        %v2907 = vadd.f32 %v2559, %v2906
        %2908 = vmatmul.f32.gmra.mxu0 %v2468
        %v2909 = vpop.f32.mrf.mxu0
        %v2910 = vadd.f32 %v2559, %v2909
        %2911 = vmatmul.f32.gmra.mxu0 %v2469
        %v2912 = vpop.f32.mrf.mxu0
        %v2913 = vadd.f32 %v2559, %v2912
        %2914 = vmatmul.f32.gmra.mxu0 %v2470
        %v2915 = vpop.f32.mrf.mxu0
        %v2916 = vadd.f32 %v2559, %v2915
        %2917 = vmatmul.f32.gmra.mxu0 %v2471
        %v2918 = vpop.f32.mrf.mxu0
        %v2919 = vadd.f32 %v2559, %v2918
        %2920 = vmatmul.f32.gmra.mxu0 %v2472
        %v2921 = vpop.f32.mrf.mxu0
        %v2922 = vadd.f32 %v2559, %v2921
        %2923 = vmatmul.f32.gmra.mxu0 %v2473
        %v2924 = vpop.f32.mrf.mxu0
        %v2925 = vadd.f32 %v2559, %v2924
        %2926 = vmatmul.f32.gmra.mxu0 %v2474
        %v2927 = vpop.f32.mrf.mxu0
        %v2928 = vadd.f32 %v2559, %v2927
        %2929 = vmatmul.f32.gmra.mxu0 %v2475
        %v2930 = vpop.f32.mrf.mxu0
        %v2931 = vadd.f32 %v2559, %v2930
        %2932 = vmatmul.f32.gmra.mxu0 %v2476
        %v2933 = vpop.f32.mrf.mxu0
        %v2934 = vadd.f32 %v2559, %v2933
        %2935 = vmatmul.f32.gmra.mxu0 %v2477
        %v2936 = vpop.f32.mrf.mxu0
        %v2937 = vadd.f32 %v2559, %v2936
        %2938 = vmatmul.f32.gmra.mxu0 %v2478
        %v2939 = vpop.f32.mrf.mxu0
        %v2940 = vadd.f32 %v2559, %v2939
        %2941 = vmatmul.f32.gmra.mxu0 %v2479
        %v2942 = vpop.f32.mrf.mxu0
        %v2943 = vadd.f32 %v2559, %v2942
        %2944 = vmatmul.f32.gmra.mxu0 %v2480
        %v2945 = vpop.f32.mrf.mxu0
        %v2946 = vadd.f32 %v2559, %v2945
        %2947 = vmatmul.f32.gmra.mxu0 %v2481
        %v2948 = vpop.f32.mrf.mxu0
        %v2949 = vadd.f32 %v2559, %v2948
        %2950 = vmatmul.f32.gmra.mxu0 %v2482
        %v2951 = vpop.f32.mrf.mxu0
        %v2952 = vadd.f32 %v2559, %v2951
        %2953 = vmatmul.f32.gmra.mxu0 %v2483
        %v2954 = vpop.f32.mrf.mxu0
        %v2955 = vadd.f32 %v2559, %v2954
        %2956 = vmatmul.f32.gmra.mxu0 %v2484
        %v2957 = vpop.f32.mrf.mxu0
        %v2958 = vadd.f32 %v2559, %v2957
        %2959 = vmatmul.f32.gmra.mxu0 %v2485
        %v2960 = vpop.f32.mrf.mxu0
        %v2961 = vadd.f32 %v2559, %v2960
        %2962 = vmatmul.f32.gmra.mxu0 %v2486
        %v2963 = vpop.f32.mrf.mxu0
        %v2964 = vadd.f32 %v2559, %v2963
        %2965 = vmatmul.f32.gmra.mxu0 %v2487
        %v2966 = vpop.f32.mrf.mxu0
        %v2967 = vadd.f32 %v2559, %v2966
        %2968 = vmatmul.f32.gmra.mxu0 %v2488
        %v2969 = vpop.f32.mrf.mxu0
        %v2970 = vadd.f32 %v2559, %v2969
        %2971 = vmatmul.f32.gmra.mxu0 %v2489
        %v2972 = vpop.f32.mrf.mxu0
        %v2973 = vadd.f32 %v2559, %v2972
        %2974 = vmatmul.f32.gmra.mxu0 %v2490
        %v2975 = vpop.f32.mrf.mxu0
        %v2976 = vadd.f32 %v2559, %v2975
        %2977 = vmatmul.f32.gmra.mxu0 %v2491
        %v2978 = vpop.f32.mrf.mxu0
        %v2979 = vadd.f32 %v2559, %v2978
        %2980 = vmatmul.f32.gmra.mxu0 %v2492
        %v2981 = vpop.f32.mrf.mxu0
        %v2982 = vadd.f32 %v2559, %v2981
        %2983 = vmatmul.f32.gmra.mxu0 %v2493
        %v2984 = vpop.f32.mrf.mxu0
        %v2985 = vadd.f32 %v2559, %v2984
        %2986 = vmatmul.f32.gmra.mxu0 %v2494
        %v2987 = vpop.f32.mrf.mxu0
        %v2988 = vadd.f32 %v2559, %v2987
        %2989 = vmatmul.f32.gmra.mxu0 %v2495
        %v2990 = vpop.f32.mrf.mxu0
        %v2991 = vadd.f32 %v2559, %v2990
        %2992 = vmatmul.f32.gmra.mxu0 %v2496
        %v2993 = vpop.f32.mrf.mxu0
        %v2994 = vadd.f32 %v2559, %v2993
        %2995 = vmatmul.f32.gmra.mxu0 %v2497
        %v2996 = vpop.f32.mrf.mxu0
        %v2997 = vadd.f32 %v2559, %v2996
        %2998 = vmatmul.f32.gmra.mxu0 %v2498
        %v2999 = vpop.f32.mrf.mxu0
        %v3000 = vadd.f32 %v2559, %v2999
        %3001 = vmatmul.f32.gmra.mxu0 %v2499
        %v3002 = vpop.f32.mrf.mxu0
        %v3003 = vadd.f32 %v2559, %v3002
        %3004 = vmatmul.f32.gmra.mxu0 %v2500
        %v3005 = vpop.f32.mrf.mxu0
        %v3006 = vadd.f32 %v2559, %v3005
        %3007 = vmatmul.f32.gmra.mxu0 %v2501
        %v3008 = vpop.f32.mrf.mxu0
        %v3009 = vadd.f32 %v2559, %v3008
        %3010 = vmatmul.f32.gmra.mxu0 %v2502
        %v3011 = vpop.f32.mrf.mxu0
        %v3012 = vadd.f32 %v2559, %v3011
        %3013 = vmatmul.f32.gmra.mxu0 %v2503
        %v3014 = vpop.f32.mrf.mxu0
        %v3015 = vadd.f32 %v2559, %v3014
        %3016 = vmatmul.f32.gmra.mxu0 %v2504
        %v3017 = vpop.f32.mrf.mxu0
        %v3018 = vadd.f32 %v2559, %v3017
        %3019 = vmatmul.f32.gmra.mxu0 %v2505
        %v3020 = vpop.f32.mrf.mxu0
        %v3021 = vadd.f32 %v2559, %v3020
        %3022 = vmatmul.f32.gmra.mxu0 %v2506
        %v3023 = vpop.f32.mrf.mxu0
        %v3024 = vadd.f32 %v2559, %v3023
        %3025 = vmatmul.f32.gmra.mxu0 %v2507
        %v3026 = vpop.f32.mrf.mxu0
        %v3027 = vadd.f32 %v2559, %v3026
        %3028 = vmatmul.f32.gmra.mxu0 %v2508
        %v3029 = vpop.f32.mrf.mxu0
        %v3030 = vadd.f32 %v2559, %v3029
        %3031 = vmatmul.f32.gmra.mxu0 %v2509
        %v3032 = vpop.f32.mrf.mxu0
        %v3033 = vadd.f32 %v2559, %v3032
        %3034 = vmatmul.f32.gmra.mxu0 %v2510
        %v3035 = vpop.f32.mrf.mxu0
        %v3036 = vadd.f32 %v2559, %v3035
        %3037 = vmatmul.f32.gmra.mxu0 %v2511
        %v3038 = vpop.f32.mrf.mxu0
        %v3039 = vadd.f32 %v2559, %v3038
        %3040 = vmatmul.f32.gmra.mxu0 %v2512
        %v3041 = vpop.f32.mrf.mxu0
        %v3042 = vadd.f32 %v2559, %v3041
        %3043 = vmatmul.f32.gmra.mxu0 %v2513
        %v3044 = vpop.f32.mrf.mxu0
        %v3045 = vadd.f32 %v2559, %v3044
        %3046 = vmatmul.f32.gmra.mxu0 %v2514
        %v3047 = vpop.f32.mrf.mxu0
        %v3048 = vadd.f32 %v2559, %v3047
        %3049 = vmatmul.f32.gmra.mxu0 %v2515
        %v3050 = vpop.f32.mrf.mxu0
        %v3051 = vadd.f32 %v2559, %v3050
        %3052 = vmatmul.f32.gmra.mxu0 %v2516
        %v3053 = vpop.f32.mrf.mxu0
        %v3054 = vadd.f32 %v2559, %v3053
        %3055 = vmatmul.f32.gmra.mxu0 %v2517
        %v3056 = vpop.f32.mrf.mxu0
        %v3057 = vadd.f32 %v2559, %v3056
        %3058 = vmatmul.f32.gmra.mxu0 %v2518
        %v3059 = vpop.f32.mrf.mxu0
        %v3060 = vadd.f32 %v2559, %v3059
        %3061 = vmatmul.f32.gmra.mxu0 %v2519
        %v3062 = vpop.f32.mrf.mxu0
        %v3063 = vadd.f32 %v2559, %v3062
        %3064 = vmatmul.f32.gmra.mxu0 %v2520
        %v3065 = vpop.f32.mrf.mxu0
        %v3066 = vadd.f32 %v2559, %v3065
        %3067 = vdwg.mxu0
        %3068 = vmatpush.msra.mxu0 0.0
        %3069 = vmatpush.msra.mxu0 0.0
        %3070 = vmatpush.msra.mxu0 0.0
        %3071 = vmatpush.msra.mxu0 0.0
        %3072 = vmatpush.msra.mxu0 0.0
        %3073 = vmatpush.msra.mxu0 0.0
        %3074 = vmatpush.msra.mxu0 0.0
        %3075 = vmatpush.msra.mxu0 0.0
        %3076 = vmatpush.msra.mxu0 0.0
        %3077 = vmatpush.msra.mxu0 0.0
        %3078 = vmatpush.msra.mxu0 0.0
        %3079 = vmatpush.msra.mxu0 0.0
        %3080 = vmatpush.msra.mxu0 0.0
        %3081 = vmatpush.msra.mxu0 0.0
        %3082 = vmatpush.msra.mxu0 %v2758
        %3083 = vmatpush.msra.mxu0 %v2553
        %3084 = vmatmul.f32.gmra.mxu0 %v2564
        %v3085 = vpop.f32.mrf.mxu0
        %v3086 = vadd.f32 %v2781, %v3085
        %3087 = vmatmul.f32.gmra.mxu0 %v2566
        %v3088 = vpop.f32.mrf.mxu0
        %v3089 = vadd.f32 %v2784, %v3088
        %3090 = vmatmul.f32.gmra.mxu0 %v2568
        %v3091 = vpop.f32.mrf.mxu0
        %v3092 = vadd.f32 %v2787, %v3091
        %3093 = vmatmul.f32.gmra.mxu0 %v2570
        %v3094 = vpop.f32.mrf.mxu0
        %v3095 = vadd.f32 %v2790, %v3094
        %3096 = vmatmul.f32.gmra.mxu0 %v2572
        %v3097 = vpop.f32.mrf.mxu0
        %v3098 = vadd.f32 %v2793, %v3097
        %3099 = vmatmul.f32.gmra.mxu0 %v2574
        %v3100 = vpop.f32.mrf.mxu0
        %v3101 = vadd.f32 %v2796, %v3100
        %3102 = vmatmul.f32.gmra.mxu0 %v2576
        %v3103 = vpop.f32.mrf.mxu0
        %v3104 = vadd.f32 %v2799, %v3103
        %3105 = vmatmul.f32.gmra.mxu0 %v2578
        %v3106 = vpop.f32.mrf.mxu0
        %v3107 = vadd.f32 %v2802, %v3106
        %3108 = vmatmul.f32.gmra.mxu0 %v2580
        %v3109 = vpop.f32.mrf.mxu0
        %v3110 = vadd.f32 %v2805, %v3109
        %3111 = vmatmul.f32.gmra.mxu0 %v2582
        %v3112 = vpop.f32.mrf.mxu0
        %v3113 = vadd.f32 %v2808, %v3112
        %3114 = vmatmul.f32.gmra.mxu0 %v2584
        %v3115 = vpop.f32.mrf.mxu0
        %v3116 = vadd.f32 %v2811, %v3115
        %3117 = vmatmul.f32.gmra.mxu0 %v2586
        %v3118 = vpop.f32.mrf.mxu0
        %v3119 = vadd.f32 %v2814, %v3118
        %3120 = vmatmul.f32.gmra.mxu0 %v2588
        %v3121 = vpop.f32.mrf.mxu0
        %v3122 = vadd.f32 %v2817, %v3121
        %3123 = vmatmul.f32.gmra.mxu0 %v2590
        %v3124 = vpop.f32.mrf.mxu0
        %v3125 = vadd.f32 %v2820, %v3124
        %3126 = vmatmul.f32.gmra.mxu0 %v2592
        %v3127 = vpop.f32.mrf.mxu0
        %v3128 = vadd.f32 %v2823, %v3127
        %3129 = vmatmul.f32.gmra.mxu0 %v2594
        %v3130 = vpop.f32.mrf.mxu0
        %v3131 = vadd.f32 %v2826, %v3130
        %3132 = vmatmul.f32.gmra.mxu0 %v2596
        %v3133 = vpop.f32.mrf.mxu0
        %v3134 = vadd.f32 %v2829, %v3133
        %3135 = vmatmul.f32.gmra.mxu0 %v2598
        %v3136 = vpop.f32.mrf.mxu0
        %v3137 = vadd.f32 %v2832, %v3136
        %3138 = vmatmul.f32.gmra.mxu0 %v2600
        %v3139 = vpop.f32.mrf.mxu0
        %v3140 = vadd.f32 %v2835, %v3139
        %3141 = vmatmul.f32.gmra.mxu0 %v2602
        %v3142 = vpop.f32.mrf.mxu0
        %v3143 = vadd.f32 %v2838, %v3142
        %3144 = vmatmul.f32.gmra.mxu0 %v2604
        %v3145 = vpop.f32.mrf.mxu0
        %v3146 = vadd.f32 %v2841, %v3145
        %3147 = vmatmul.f32.gmra.mxu0 %v2606
        %v3148 = vpop.f32.mrf.mxu0
        %v3149 = vadd.f32 %v2844, %v3148
        %3150 = vmatmul.f32.gmra.mxu0 %v2608
        %v3151 = vpop.f32.mrf.mxu0
        %v3152 = vadd.f32 %v2847, %v3151
        %3153 = vmatmul.f32.gmra.mxu0 %v2610
        %v3154 = vpop.f32.mrf.mxu0
        %v3155 = vadd.f32 %v2850, %v3154
        %3156 = vmatmul.f32.gmra.mxu0 %v2612
        %v3157 = vpop.f32.mrf.mxu0
        %v3158 = vadd.f32 %v2853, %v3157
        %3159 = vmatmul.f32.gmra.mxu0 %v2614
        %v3160 = vpop.f32.mrf.mxu0
        %v3161 = vadd.f32 %v2856, %v3160
        %3162 = vmatmul.f32.gmra.mxu0 %v2616
        %v3163 = vpop.f32.mrf.mxu0
        %v3164 = vadd.f32 %v2859, %v3163
        %3165 = vmatmul.f32.gmra.mxu0 %v2618
        %v3166 = vpop.f32.mrf.mxu0
        %v3167 = vadd.f32 %v2862, %v3166
        %3168 = vmatmul.f32.gmra.mxu0 %v2620
        %v3169 = vpop.f32.mrf.mxu0
        %v3170 = vadd.f32 %v2865, %v3169
        %3171 = vmatmul.f32.gmra.mxu0 %v2622
        %v3172 = vpop.f32.mrf.mxu0
        %v3173 = vadd.f32 %v2868, %v3172
        %3174 = vmatmul.f32.gmra.mxu0 %v2624
        %v3175 = vpop.f32.mrf.mxu0
        %v3176 = vadd.f32 %v2871, %v3175
        %3177 = vmatmul.f32.gmra.mxu0 %v2626
        %v3178 = vpop.f32.mrf.mxu0
        %v3179 = vadd.f32 %v2874, %v3178
        %3180 = vmatmul.f32.gmra.mxu0 %v2628
        %v3181 = vpop.f32.mrf.mxu0
        %v3182 = vadd.f32 %v2877, %v3181
        %3183 = vmatmul.f32.gmra.mxu0 %v2630
        %v3184 = vpop.f32.mrf.mxu0
        %v3185 = vadd.f32 %v2880, %v3184
        %3186 = vmatmul.f32.gmra.mxu0 %v2632
        %v3187 = vpop.f32.mrf.mxu0
        %v3188 = vadd.f32 %v2883, %v3187
        %3189 = vmatmul.f32.gmra.mxu0 %v2634
        %v3190 = vpop.f32.mrf.mxu0
        %v3191 = vadd.f32 %v2886, %v3190
        %3192 = vmatmul.f32.gmra.mxu0 %v2636
        %v3193 = vpop.f32.mrf.mxu0
        %v3194 = vadd.f32 %v2889, %v3193
        %3195 = vmatmul.f32.gmra.mxu0 %v2638
        %v3196 = vpop.f32.mrf.mxu0
        %v3197 = vadd.f32 %v2892, %v3196
        %3198 = vmatmul.f32.gmra.mxu0 %v2640
        %v3199 = vpop.f32.mrf.mxu0
        %v3200 = vadd.f32 %v2895, %v3199
        %3201 = vmatmul.f32.gmra.mxu0 %v2642
        %v3202 = vpop.f32.mrf.mxu0
        %v3203 = vadd.f32 %v2898, %v3202
        %3204 = vmatmul.f32.gmra.mxu0 %v2644
        %v3205 = vpop.f32.mrf.mxu0
        %v3206 = vadd.f32 %v2901, %v3205
        %3207 = vmatmul.f32.gmra.mxu0 %v2646
        %v3208 = vpop.f32.mrf.mxu0
        %v3209 = vadd.f32 %v2904, %v3208
        %3210 = vmatmul.f32.gmra.mxu0 %v2648
        %v3211 = vpop.f32.mrf.mxu0
        %v3212 = vadd.f32 %v2907, %v3211
        %3213 = vmatmul.f32.gmra.mxu0 %v2650
        %v3214 = vpop.f32.mrf.mxu0
        %v3215 = vadd.f32 %v2910, %v3214
        %3216 = vmatmul.f32.gmra.mxu0 %v2652
        %v3217 = vpop.f32.mrf.mxu0
        %v3218 = vadd.f32 %v2913, %v3217
        %3219 = vmatmul.f32.gmra.mxu0 %v2654
        %v3220 = vpop.f32.mrf.mxu0
        %v3221 = vadd.f32 %v2916, %v3220
        %3222 = vmatmul.f32.gmra.mxu0 %v2656
        %v3223 = vpop.f32.mrf.mxu0
        %v3224 = vadd.f32 %v2919, %v3223
        %3225 = vmatmul.f32.gmra.mxu0 %v2658
        %v3226 = vpop.f32.mrf.mxu0
        %v3227 = vadd.f32 %v2922, %v3226
        %3228 = vmatmul.f32.gmra.mxu0 %v2660
        %v3229 = vpop.f32.mrf.mxu0
        %v3230 = vadd.f32 %v2925, %v3229
        %3231 = vmatmul.f32.gmra.mxu0 %v2662
        %v3232 = vpop.f32.mrf.mxu0
        %v3233 = vadd.f32 %v2928, %v3232
        %3234 = vmatmul.f32.gmra.mxu0 %v2664
        %v3235 = vpop.f32.mrf.mxu0
        %v3236 = vadd.f32 %v2931, %v3235
        %3237 = vmatmul.f32.gmra.mxu0 %v2666
        %v3238 = vpop.f32.mrf.mxu0
        %v3239 = vadd.f32 %v2934, %v3238
        %3240 = vmatmul.f32.gmra.mxu0 %v2668
        %v3241 = vpop.f32.mrf.mxu0
        %v3242 = vadd.f32 %v2937, %v3241
        %3243 = vmatmul.f32.gmra.mxu0 %v2670
        %v3244 = vpop.f32.mrf.mxu0
        %v3245 = vadd.f32 %v2940, %v3244
        %3246 = vmatmul.f32.gmra.mxu0 %v2672
        %v3247 = vpop.f32.mrf.mxu0
        %v3248 = vadd.f32 %v2943, %v3247
        %3249 = vmatmul.f32.gmra.mxu0 %v2674
        %v3250 = vpop.f32.mrf.mxu0
        %v3251 = vadd.f32 %v2946, %v3250
        %3252 = vmatmul.f32.gmra.mxu0 %v2676
        %v3253 = vpop.f32.mrf.mxu0
        %v3254 = vadd.f32 %v2949, %v3253
        %3255 = vmatmul.f32.gmra.mxu0 %v2678
        %v3256 = vpop.f32.mrf.mxu0
        %v3257 = vadd.f32 %v2952, %v3256
        %3258 = vmatmul.f32.gmra.mxu0 %v2680
        %v3259 = vpop.f32.mrf.mxu0
        %v3260 = vadd.f32 %v2955, %v3259
        %3261 = vmatmul.f32.gmra.mxu0 %v2682
        %v3262 = vpop.f32.mrf.mxu0
        %v3263 = vadd.f32 %v2958, %v3262
        %3264 = vmatmul.f32.gmra.mxu0 %v2684
        %v3265 = vpop.f32.mrf.mxu0
        %v3266 = vadd.f32 %v2961, %v3265
        %3267 = vmatmul.f32.gmra.mxu0 %v2686
        %v3268 = vpop.f32.mrf.mxu0
        %v3269 = vadd.f32 %v2964, %v3268
        %3270 = vmatmul.f32.gmra.mxu0 %v2688
        %v3271 = vpop.f32.mrf.mxu0
        %v3272 = vadd.f32 %v2967, %v3271
        %3273 = vmatmul.f32.gmra.mxu0 %v2690
        %v3274 = vpop.f32.mrf.mxu0
        %v3275 = vadd.f32 %v2970, %v3274
        %3276 = vmatmul.f32.gmra.mxu0 %v2692
        %v3277 = vpop.f32.mrf.mxu0
        %v3278 = vadd.f32 %v2973, %v3277
        %3279 = vmatmul.f32.gmra.mxu0 %v2694
        %v3280 = vpop.f32.mrf.mxu0
        %v3281 = vadd.f32 %v2976, %v3280
        %3282 = vmatmul.f32.gmra.mxu0 %v2696
        %v3283 = vpop.f32.mrf.mxu0
        %v3284 = vadd.f32 %v2979, %v3283
        %3285 = vmatmul.f32.gmra.mxu0 %v2698
        %v3286 = vpop.f32.mrf.mxu0
        %v3287 = vadd.f32 %v2982, %v3286
        %3288 = vmatmul.f32.gmra.mxu0 %v2700
        %v3289 = vpop.f32.mrf.mxu0
        %v3290 = vadd.f32 %v2985, %v3289
        %3291 = vmatmul.f32.gmra.mxu0 %v2702
        %v3292 = vpop.f32.mrf.mxu0
        %v3293 = vadd.f32 %v2988, %v3292
        %3294 = vmatmul.f32.gmra.mxu0 %v2704
        %v3295 = vpop.f32.mrf.mxu0
        %v3296 = vadd.f32 %v2991, %v3295
        %3297 = vmatmul.f32.gmra.mxu0 %v2706
        %v3298 = vpop.f32.mrf.mxu0
        %v3299 = vadd.f32 %v2994, %v3298
        %3300 = vmatmul.f32.gmra.mxu0 %v2708
        %v3301 = vpop.f32.mrf.mxu0
        %v3302 = vadd.f32 %v2997, %v3301
        %3303 = vmatmul.f32.gmra.mxu0 %v2710
        %v3304 = vpop.f32.mrf.mxu0
        %v3305 = vadd.f32 %v3000, %v3304
        %3306 = vmatmul.f32.gmra.mxu0 %v2712
        %v3307 = vpop.f32.mrf.mxu0
        %v3308 = vadd.f32 %v3003, %v3307
        %3309 = vmatmul.f32.gmra.mxu0 %v2714
        %v3310 = vpop.f32.mrf.mxu0
        %v3311 = vadd.f32 %v3006, %v3310
        %3312 = vmatmul.f32.gmra.mxu0 %v2716
        %v3313 = vpop.f32.mrf.mxu0
        %v3314 = vadd.f32 %v3009, %v3313
        %3315 = vmatmul.f32.gmra.mxu0 %v2718
        %v3316 = vpop.f32.mrf.mxu0
        %v3317 = vadd.f32 %v3012, %v3316
        %3318 = vmatmul.f32.gmra.mxu0 %v2720
        %v3319 = vpop.f32.mrf.mxu0
        %v3320 = vadd.f32 %v3015, %v3319
        %3321 = vmatmul.f32.gmra.mxu0 %v2722
        %v3322 = vpop.f32.mrf.mxu0
        %v3323 = vadd.f32 %v3018, %v3322
        %3324 = vmatmul.f32.gmra.mxu0 %v2724
        %v3325 = vpop.f32.mrf.mxu0
        %v3326 = vadd.f32 %v3021, %v3325
        %3327 = vmatmul.f32.gmra.mxu0 %v2726
        %v3328 = vpop.f32.mrf.mxu0
        %v3329 = vadd.f32 %v3024, %v3328
        %3330 = vmatmul.f32.gmra.mxu0 %v2728
        %v3331 = vpop.f32.mrf.mxu0
        %v3332 = vadd.f32 %v3027, %v3331
        %3333 = vmatmul.f32.gmra.mxu0 %v2730
        %v3334 = vpop.f32.mrf.mxu0
        %v3335 = vadd.f32 %v3030, %v3334
        %3336 = vmatmul.f32.gmra.mxu0 %v2732
        %v3337 = vpop.f32.mrf.mxu0
        %v3338 = vadd.f32 %v3033, %v3337
        %3339 = vmatmul.f32.gmra.mxu0 %v2734
        %v3340 = vpop.f32.mrf.mxu0
        %v3341 = vadd.f32 %v3036, %v3340
        %3342 = vmatmul.f32.gmra.mxu0 %v2736
        %v3343 = vpop.f32.mrf.mxu0
        %v3344 = vadd.f32 %v3039, %v3343
        %3345 = vmatmul.f32.gmra.mxu0 %v2738
        %v3346 = vpop.f32.mrf.mxu0
        %v3347 = vadd.f32 %v3042, %v3346
        %3348 = vmatmul.f32.gmra.mxu0 %v2740
        %v3349 = vpop.f32.mrf.mxu0
        %v3350 = vadd.f32 %v3045, %v3349
        %3351 = vmatmul.f32.gmra.mxu0 %v2742
        %v3352 = vpop.f32.mrf.mxu0
        %v3353 = vadd.f32 %v3048, %v3352
        %3354 = vmatmul.f32.gmra.mxu0 %v2744
        %v3355 = vpop.f32.mrf.mxu0
        %v3356 = vadd.f32 %v3051, %v3355
        %3357 = vmatmul.f32.gmra.mxu0 %v2746
        %v3358 = vpop.f32.mrf.mxu0
        %v3359 = vadd.f32 %v3054, %v3358
        %3360 = vmatmul.f32.gmra.mxu0 %v2748
        %v3361 = vpop.f32.mrf.mxu0
        %v3362 = vadd.f32 %v3057, %v3361
        %3363 = vmatmul.f32.gmra.mxu0 %v2750
        %v3364 = vpop.f32.mrf.mxu0
        %v3365 = vadd.f32 %v3060, %v3364
        %3366 = vmatmul.f32.gmra.mxu0 %v2752
        %v3367 = vpop.f32.mrf.mxu0
        %v3368 = vadd.f32 %v3063, %v3367
        %3369 = vmatmul.f32.gmra.mxu0 %v2754
        %v3370 = vpop.f32.mrf.mxu0
        %v3371 = vadd.f32 %v3066, %v3370
        %3372 = vdwg.mxu0
        %3373 = vmatpush.msra.mxu0 %v2552
        %3374 = vmatpush.msra.mxu0 %v2550
        %3375 = vmatpush.msra.mxu0 %v2548
        %3376 = vmatpush.msra.mxu0 %v2546
        %3377 = vmatpush.msra.mxu0 %v2544
        %3378 = vmatpush.msra.mxu0 %v2542
        %3379 = vmatpush.msra.mxu0 %v2540
        %3380 = vmatpush.msra.mxu0 %v2538
        %3381 = vmatpush.msra.mxu0 %v2536
        %3382 = vmatpush.msra.mxu0 %v2534
        %3383 = vmatpush.msra.mxu0 %v2532
        %3384 = vmatpush.msra.mxu0 %v2530
        %3385 = vmatpush.msra.mxu0 %v2528
        %3386 = vmatpush.msra.mxu0 %v2526
        %3387 = vmatpush.msra.mxu0 %v2524
        %3388 = vmatpush.msra.mxu0 %v2522
        %3389 = vmatmul.f32.gmra.mxu0 %v2425
        %v3390 = vpop.f32.mrf.mxu0
        %v3391 = vadd.f32 %v2560, %v3390
        %3392 = vmatmul.f32.gmra.mxu0 %v2426
        %v3393 = vpop.f32.mrf.mxu0
        %v3394 = vadd.f32 %v2560, %v3393
        %3395 = vmatmul.f32.gmra.mxu0 %v2427
        %v3396 = vpop.f32.mrf.mxu0
        %v3397 = vadd.f32 %v2560, %v3396
        %3398 = vmatmul.f32.gmra.mxu0 %v2428
        %v3399 = vpop.f32.mrf.mxu0
        %v3400 = vadd.f32 %v2560, %v3399
        %3401 = vmatmul.f32.gmra.mxu0 %v2429
        %v3402 = vpop.f32.mrf.mxu0
        %v3403 = vadd.f32 %v2560, %v3402
        %3404 = vmatmul.f32.gmra.mxu0 %v2430
        %v3405 = vpop.f32.mrf.mxu0
        %v3406 = vadd.f32 %v2560, %v3405
        %3407 = vmatmul.f32.gmra.mxu0 %v2431
        %v3408 = vpop.f32.mrf.mxu0
        %v3409 = vadd.f32 %v2560, %v3408
        %3410 = vmatmul.f32.gmra.mxu0 %v2432
        %v3411 = vpop.f32.mrf.mxu0
        %v3412 = vadd.f32 %v2560, %v3411
        %3413 = vmatmul.f32.gmra.mxu0 %v2433
        %v3414 = vpop.f32.mrf.mxu0
        %v3415 = vadd.f32 %v2560, %v3414
        %3416 = vmatmul.f32.gmra.mxu0 %v2434
        %v3417 = vpop.f32.mrf.mxu0
        %v3418 = vadd.f32 %v2560, %v3417
        %3419 = vmatmul.f32.gmra.mxu0 %v2435
        %v3420 = vpop.f32.mrf.mxu0
        %v3421 = vadd.f32 %v2560, %v3420
        %3422 = vmatmul.f32.gmra.mxu0 %v2436
        %v3423 = vpop.f32.mrf.mxu0
        %v3424 = vadd.f32 %v2560, %v3423
        %3425 = vmatmul.f32.gmra.mxu0 %v2437
        %v3426 = vpop.f32.mrf.mxu0
        %v3427 = vadd.f32 %v2560, %v3426
        %3428 = vmatmul.f32.gmra.mxu0 %v2438
        %v3429 = vpop.f32.mrf.mxu0
        %v3430 = vadd.f32 %v2560, %v3429
        %3431 = vmatmul.f32.gmra.mxu0 %v2439
        %v3432 = vpop.f32.mrf.mxu0
        %v3433 = vadd.f32 %v2560, %v3432
        %3434 = vmatmul.f32.gmra.mxu0 %v2440
        %v3435 = vpop.f32.mrf.mxu0
        %v3436 = vadd.f32 %v2560, %v3435
        %3437 = vmatmul.f32.gmra.mxu0 %v2441
        %v3438 = vpop.f32.mrf.mxu0
        %v3439 = vadd.f32 %v2560, %v3438
        %3440 = vmatmul.f32.gmra.mxu0 %v2442
        %v3441 = vpop.f32.mrf.mxu0
        %v3442 = vadd.f32 %v2560, %v3441
        %3443 = vmatmul.f32.gmra.mxu0 %v2443
        %v3444 = vpop.f32.mrf.mxu0
        %v3445 = vadd.f32 %v2560, %v3444
        %3446 = vmatmul.f32.gmra.mxu0 %v2444
        %v3447 = vpop.f32.mrf.mxu0
        %v3448 = vadd.f32 %v2560, %v3447
        %3449 = vmatmul.f32.gmra.mxu0 %v2445
        %v3450 = vpop.f32.mrf.mxu0
        %v3451 = vadd.f32 %v2560, %v3450
        %3452 = vmatmul.f32.gmra.mxu0 %v2446
        %v3453 = vpop.f32.mrf.mxu0
        %v3454 = vadd.f32 %v2560, %v3453
        %3455 = vmatmul.f32.gmra.mxu0 %v2447
        %v3456 = vpop.f32.mrf.mxu0
        %v3457 = vadd.f32 %v2560, %v3456
        %3458 = vmatmul.f32.gmra.mxu0 %v2448
        %v3459 = vpop.f32.mrf.mxu0
        %v3460 = vadd.f32 %v2560, %v3459
        %3461 = vmatmul.f32.gmra.mxu0 %v2449
        %v3462 = vpop.f32.mrf.mxu0
        %v3463 = vadd.f32 %v2560, %v3462
        %3464 = vmatmul.f32.gmra.mxu0 %v2450
        %v3465 = vpop.f32.mrf.mxu0
        %v3466 = vadd.f32 %v2560, %v3465
        %3467 = vmatmul.f32.gmra.mxu0 %v2451
        %v3468 = vpop.f32.mrf.mxu0
        %v3469 = vadd.f32 %v2560, %v3468
        %3470 = vmatmul.f32.gmra.mxu0 %v2452
        %v3471 = vpop.f32.mrf.mxu0
        %v3472 = vadd.f32 %v2560, %v3471
        %3473 = vmatmul.f32.gmra.mxu0 %v2453
        %v3474 = vpop.f32.mrf.mxu0
        %v3475 = vadd.f32 %v2560, %v3474
        %3476 = vmatmul.f32.gmra.mxu0 %v2454
        %v3477 = vpop.f32.mrf.mxu0
        %v3478 = vadd.f32 %v2560, %v3477
        %3479 = vmatmul.f32.gmra.mxu0 %v2455
        %v3480 = vpop.f32.mrf.mxu0
        %v3481 = vadd.f32 %v2560, %v3480
        %3482 = vmatmul.f32.gmra.mxu0 %v2456
        %v3483 = vpop.f32.mrf.mxu0
        %v3484 = vadd.f32 %v2560, %v3483
        %3485 = vmatmul.f32.gmra.mxu0 %v2457
        %v3486 = vpop.f32.mrf.mxu0
        %v3487 = vadd.f32 %v2560, %v3486
        %3488 = vmatmul.f32.gmra.mxu0 %v2458
        %v3489 = vpop.f32.mrf.mxu0
        %v3490 = vadd.f32 %v2560, %v3489
        %3491 = vmatmul.f32.gmra.mxu0 %v2459
        %v3492 = vpop.f32.mrf.mxu0
        %v3493 = vadd.f32 %v2560, %v3492
        %3494 = vmatmul.f32.gmra.mxu0 %v2460
        %v3495 = vpop.f32.mrf.mxu0
        %v3496 = vadd.f32 %v2560, %v3495
        %3497 = vmatmul.f32.gmra.mxu0 %v2461
        %v3498 = vpop.f32.mrf.mxu0
        %v3499 = vadd.f32 %v2560, %v3498
        %3500 = vmatmul.f32.gmra.mxu0 %v2462
        %v3501 = vpop.f32.mrf.mxu0
        %v3502 = vadd.f32 %v2560, %v3501
        %3503 = vmatmul.f32.gmra.mxu0 %v2463
        %v3504 = vpop.f32.mrf.mxu0
        %v3505 = vadd.f32 %v2560, %v3504
        %3506 = vmatmul.f32.gmra.mxu0 %v2464
        %v3507 = vpop.f32.mrf.mxu0
        %v3508 = vadd.f32 %v2560, %v3507
        %3509 = vmatmul.f32.gmra.mxu0 %v2465
        %v3510 = vpop.f32.mrf.mxu0
        %v3511 = vadd.f32 %v2560, %v3510
        %3512 = vmatmul.f32.gmra.mxu0 %v2466
        %v3513 = vpop.f32.mrf.mxu0
        %v3514 = vadd.f32 %v2560, %v3513
        %3515 = vmatmul.f32.gmra.mxu0 %v2467
        %v3516 = vpop.f32.mrf.mxu0
        %v3517 = vadd.f32 %v2560, %v3516
        %3518 = vmatmul.f32.gmra.mxu0 %v2468
        %v3519 = vpop.f32.mrf.mxu0
        %v3520 = vadd.f32 %v2560, %v3519
        %3521 = vmatmul.f32.gmra.mxu0 %v2469
        %v3522 = vpop.f32.mrf.mxu0
        %v3523 = vadd.f32 %v2560, %v3522
        %3524 = vmatmul.f32.gmra.mxu0 %v2470
        %v3525 = vpop.f32.mrf.mxu0
        %v3526 = vadd.f32 %v2560, %v3525
        %3527 = vmatmul.f32.gmra.mxu0 %v2471
        %v3528 = vpop.f32.mrf.mxu0
        %v3529 = vadd.f32 %v2560, %v3528
        %3530 = vmatmul.f32.gmra.mxu0 %v2472
        %v3531 = vpop.f32.mrf.mxu0
        %v3532 = vadd.f32 %v2560, %v3531
        %3533 = vmatmul.f32.gmra.mxu0 %v2473
        %v3534 = vpop.f32.mrf.mxu0
        %v3535 = vadd.f32 %v2560, %v3534
        %3536 = vmatmul.f32.gmra.mxu0 %v2474
        %v3537 = vpop.f32.mrf.mxu0
        %v3538 = vadd.f32 %v2560, %v3537
        %3539 = vmatmul.f32.gmra.mxu0 %v2475
        %v3540 = vpop.f32.mrf.mxu0
        %v3541 = vadd.f32 %v2560, %v3540
        %3542 = vmatmul.f32.gmra.mxu0 %v2476
        %v3543 = vpop.f32.mrf.mxu0
        %v3544 = vadd.f32 %v2560, %v3543
        %3545 = vmatmul.f32.gmra.mxu0 %v2477
        %v3546 = vpop.f32.mrf.mxu0
        %v3547 = vadd.f32 %v2560, %v3546
        %3548 = vmatmul.f32.gmra.mxu0 %v2478
        %v3549 = vpop.f32.mrf.mxu0
        %v3550 = vadd.f32 %v2560, %v3549
        %3551 = vmatmul.f32.gmra.mxu0 %v2479
        %v3552 = vpop.f32.mrf.mxu0
        %v3553 = vadd.f32 %v2560, %v3552
        %3554 = vmatmul.f32.gmra.mxu0 %v2480
        %v3555 = vpop.f32.mrf.mxu0
        %v3556 = vadd.f32 %v2560, %v3555
        %3557 = vmatmul.f32.gmra.mxu0 %v2481
        %v3558 = vpop.f32.mrf.mxu0
        %v3559 = vadd.f32 %v2560, %v3558
        %3560 = vmatmul.f32.gmra.mxu0 %v2482
        %v3561 = vpop.f32.mrf.mxu0
        %v3562 = vadd.f32 %v2560, %v3561
        %3563 = vmatmul.f32.gmra.mxu0 %v2483
        %v3564 = vpop.f32.mrf.mxu0
        %v3565 = vadd.f32 %v2560, %v3564
        %3566 = vmatmul.f32.gmra.mxu0 %v2484
        %v3567 = vpop.f32.mrf.mxu0
        %v3568 = vadd.f32 %v2560, %v3567
        %3569 = vmatmul.f32.gmra.mxu0 %v2485
        %v3570 = vpop.f32.mrf.mxu0
        %v3571 = vadd.f32 %v2560, %v3570
        %3572 = vmatmul.f32.gmra.mxu0 %v2486
        %v3573 = vpop.f32.mrf.mxu0
        %v3574 = vadd.f32 %v2560, %v3573
        %3575 = vmatmul.f32.gmra.mxu0 %v2487
        %v3576 = vpop.f32.mrf.mxu0
        %v3577 = vadd.f32 %v2560, %v3576
        %3578 = vmatmul.f32.gmra.mxu0 %v2488
        %v3579 = vpop.f32.mrf.mxu0
        %v3580 = vadd.f32 %v2560, %v3579
        %3581 = vmatmul.f32.gmra.mxu0 %v2489
        %v3582 = vpop.f32.mrf.mxu0
        %v3583 = vadd.f32 %v2560, %v3582
        %3584 = vmatmul.f32.gmra.mxu0 %v2490
        %v3585 = vpop.f32.mrf.mxu0
        %v3586 = vadd.f32 %v2560, %v3585
        %3587 = vmatmul.f32.gmra.mxu0 %v2491
        %v3588 = vpop.f32.mrf.mxu0
        %v3589 = vadd.f32 %v2560, %v3588
        %3590 = vmatmul.f32.gmra.mxu0 %v2492
        %v3591 = vpop.f32.mrf.mxu0
        %v3592 = vadd.f32 %v2560, %v3591
        %3593 = vmatmul.f32.gmra.mxu0 %v2493
        %v3594 = vpop.f32.mrf.mxu0
        %v3595 = vadd.f32 %v2560, %v3594
        %3596 = vmatmul.f32.gmra.mxu0 %v2494
        %v3597 = vpop.f32.mrf.mxu0
        %v3598 = vadd.f32 %v2560, %v3597
        %3599 = vmatmul.f32.gmra.mxu0 %v2495
        %v3600 = vpop.f32.mrf.mxu0
        %v3601 = vadd.f32 %v2560, %v3600
        %3602 = vmatmul.f32.gmra.mxu0 %v2496
        %v3603 = vpop.f32.mrf.mxu0
        %v3604 = vadd.f32 %v2560, %v3603
        %3605 = vmatmul.f32.gmra.mxu0 %v2497
        %v3606 = vpop.f32.mrf.mxu0
        %v3607 = vadd.f32 %v2560, %v3606
        %3608 = vmatmul.f32.gmra.mxu0 %v2498
        %v3609 = vpop.f32.mrf.mxu0
        %v3610 = vadd.f32 %v2560, %v3609
        %3611 = vmatmul.f32.gmra.mxu0 %v2499
        %v3612 = vpop.f32.mrf.mxu0
        %v3613 = vadd.f32 %v2560, %v3612
        %3614 = vmatmul.f32.gmra.mxu0 %v2500
        %v3615 = vpop.f32.mrf.mxu0
        %v3616 = vadd.f32 %v2560, %v3615
        %3617 = vmatmul.f32.gmra.mxu0 %v2501
        %v3618 = vpop.f32.mrf.mxu0
        %v3619 = vadd.f32 %v2560, %v3618
        %3620 = vmatmul.f32.gmra.mxu0 %v2502
        %v3621 = vpop.f32.mrf.mxu0
        %v3622 = vadd.f32 %v2560, %v3621
        %3623 = vmatmul.f32.gmra.mxu0 %v2503
        %v3624 = vpop.f32.mrf.mxu0
        %v3625 = vadd.f32 %v2560, %v3624
        %3626 = vmatmul.f32.gmra.mxu0 %v2504
        %v3627 = vpop.f32.mrf.mxu0
        %v3628 = vadd.f32 %v2560, %v3627
        %3629 = vmatmul.f32.gmra.mxu0 %v2505
        %v3630 = vpop.f32.mrf.mxu0
        %v3631 = vadd.f32 %v2560, %v3630
        %3632 = vmatmul.f32.gmra.mxu0 %v2506
        %v3633 = vpop.f32.mrf.mxu0
        %v3634 = vadd.f32 %v2560, %v3633
        %3635 = vmatmul.f32.gmra.mxu0 %v2507
        %v3636 = vpop.f32.mrf.mxu0
        %v3637 = vadd.f32 %v2560, %v3636
        %3638 = vmatmul.f32.gmra.mxu0 %v2508
        %v3639 = vpop.f32.mrf.mxu0
        %v3640 = vadd.f32 %v2560, %v3639
        %3641 = vmatmul.f32.gmra.mxu0 %v2509
        %v3642 = vpop.f32.mrf.mxu0
        %v3643 = vadd.f32 %v2560, %v3642
        %3644 = vmatmul.f32.gmra.mxu0 %v2510
        %v3645 = vpop.f32.mrf.mxu0
        %v3646 = vadd.f32 %v2560, %v3645
        %3647 = vmatmul.f32.gmra.mxu0 %v2511
        %v3648 = vpop.f32.mrf.mxu0
        %v3649 = vadd.f32 %v2560, %v3648
        %3650 = vmatmul.f32.gmra.mxu0 %v2512
        %v3651 = vpop.f32.mrf.mxu0
        %v3652 = vadd.f32 %v2560, %v3651
        %3653 = vmatmul.f32.gmra.mxu0 %v2513
        %v3654 = vpop.f32.mrf.mxu0
        %v3655 = vadd.f32 %v2560, %v3654
        %3656 = vmatmul.f32.gmra.mxu0 %v2514
        %v3657 = vpop.f32.mrf.mxu0
        %v3658 = vadd.f32 %v2560, %v3657
        %3659 = vmatmul.f32.gmra.mxu0 %v2515
        %v3660 = vpop.f32.mrf.mxu0
        %v3661 = vadd.f32 %v2560, %v3660
        %3662 = vmatmul.f32.gmra.mxu0 %v2516
        %v3663 = vpop.f32.mrf.mxu0
        %v3664 = vadd.f32 %v2560, %v3663
        %3665 = vmatmul.f32.gmra.mxu0 %v2517
        %v3666 = vpop.f32.mrf.mxu0
        %v3667 = vadd.f32 %v2560, %v3666
        %3668 = vmatmul.f32.gmra.mxu0 %v2518
        %v3669 = vpop.f32.mrf.mxu0
        %v3670 = vadd.f32 %v2560, %v3669
        %3671 = vmatmul.f32.gmra.mxu0 %v2519
        %v3672 = vpop.f32.mrf.mxu0
        %v3673 = vadd.f32 %v2560, %v3672
        %3674 = vmatmul.f32.gmra.mxu0 %v2520
        %v3675 = vpop.f32.mrf.mxu0
        %v3676 = vadd.f32 %v2560, %v3675
        %3677 = vdwg.mxu0
        %3678 = vmatpush.msra.mxu0 0.0
        %3679 = vmatpush.msra.mxu0 0.0
        %3680 = vmatpush.msra.mxu0 0.0
        %3681 = vmatpush.msra.mxu0 0.0
        %3682 = vmatpush.msra.mxu0 0.0
        %3683 = vmatpush.msra.mxu0 0.0
        %3684 = vmatpush.msra.mxu0 0.0
        %3685 = vmatpush.msra.mxu0 0.0
        %3686 = vmatpush.msra.mxu0 0.0
        %3687 = vmatpush.msra.mxu0 0.0
        %3688 = vmatpush.msra.mxu0 0.0
        %3689 = vmatpush.msra.mxu0 0.0
        %3690 = vmatpush.msra.mxu0 0.0
        %3691 = vmatpush.msra.mxu0 0.0
        %3692 = vmatpush.msra.mxu0 %v2761
        %3693 = vmatpush.msra.mxu0 %v2554
        %3694 = vmatmul.f32.gmra.mxu0 %v2564
        %v3695 = vpop.f32.mrf.mxu0
        %v3696 = vadd.f32 %v3391, %v3695
        %3697 = vmatmul.f32.gmra.mxu0 %v2566
        %v3698 = vpop.f32.mrf.mxu0
        %v3699 = vadd.f32 %v3394, %v3698
        %3700 = vmatmul.f32.gmra.mxu0 %v2568
        %v3701 = vpop.f32.mrf.mxu0
        %v3702 = vadd.f32 %v3397, %v3701
        %3703 = vmatmul.f32.gmra.mxu0 %v2570
        %v3704 = vpop.f32.mrf.mxu0
        %v3705 = vadd.f32 %v3400, %v3704
        %3706 = vmatmul.f32.gmra.mxu0 %v2572
        %v3707 = vpop.f32.mrf.mxu0
        %v3708 = vadd.f32 %v3403, %v3707
        %3709 = vmatmul.f32.gmra.mxu0 %v2574
        %v3710 = vpop.f32.mrf.mxu0
        %v3711 = vadd.f32 %v3406, %v3710
        %3712 = vmatmul.f32.gmra.mxu0 %v2576
        %v3713 = vpop.f32.mrf.mxu0
        %v3714 = vadd.f32 %v3409, %v3713
        %3715 = vmatmul.f32.gmra.mxu0 %v2578
        %v3716 = vpop.f32.mrf.mxu0
        %v3717 = vadd.f32 %v3412, %v3716
        %3718 = vmatmul.f32.gmra.mxu0 %v2580
        %v3719 = vpop.f32.mrf.mxu0
        %v3720 = vadd.f32 %v3415, %v3719
        %3721 = vmatmul.f32.gmra.mxu0 %v2582
        %v3722 = vpop.f32.mrf.mxu0
        %v3723 = vadd.f32 %v3418, %v3722
        %3724 = vmatmul.f32.gmra.mxu0 %v2584
        %v3725 = vpop.f32.mrf.mxu0
        %v3726 = vadd.f32 %v3421, %v3725
        %3727 = vmatmul.f32.gmra.mxu0 %v2586
        %v3728 = vpop.f32.mrf.mxu0
        %v3729 = vadd.f32 %v3424, %v3728
        %3730 = vmatmul.f32.gmra.mxu0 %v2588
        %v3731 = vpop.f32.mrf.mxu0
        %v3732 = vadd.f32 %v3427, %v3731
        %3733 = vmatmul.f32.gmra.mxu0 %v2590
        %v3734 = vpop.f32.mrf.mxu0
        %v3735 = vadd.f32 %v3430, %v3734
        %3736 = vmatmul.f32.gmra.mxu0 %v2592
        %v3737 = vpop.f32.mrf.mxu0
        %v3738 = vadd.f32 %v3433, %v3737
        %3739 = vmatmul.f32.gmra.mxu0 %v2594
        %v3740 = vpop.f32.mrf.mxu0
        %v3741 = vadd.f32 %v3436, %v3740
        %3742 = vmatmul.f32.gmra.mxu0 %v2596
        %v3743 = vpop.f32.mrf.mxu0
        %v3744 = vadd.f32 %v3439, %v3743
        %3745 = vmatmul.f32.gmra.mxu0 %v2598
        %v3746 = vpop.f32.mrf.mxu0
        %v3747 = vadd.f32 %v3442, %v3746
        %3748 = vmatmul.f32.gmra.mxu0 %v2600
        %v3749 = vpop.f32.mrf.mxu0
        %v3750 = vadd.f32 %v3445, %v3749
        %3751 = vmatmul.f32.gmra.mxu0 %v2602
        %v3752 = vpop.f32.mrf.mxu0
        %v3753 = vadd.f32 %v3448, %v3752
        %3754 = vmatmul.f32.gmra.mxu0 %v2604
        %v3755 = vpop.f32.mrf.mxu0
        %v3756 = vadd.f32 %v3451, %v3755
        %3757 = vmatmul.f32.gmra.mxu0 %v2606
        %v3758 = vpop.f32.mrf.mxu0
        %v3759 = vadd.f32 %v3454, %v3758
        %3760 = vmatmul.f32.gmra.mxu0 %v2608
        %v3761 = vpop.f32.mrf.mxu0
        %v3762 = vadd.f32 %v3457, %v3761
        %3763 = vmatmul.f32.gmra.mxu0 %v2610
        %v3764 = vpop.f32.mrf.mxu0
        %v3765 = vadd.f32 %v3460, %v3764
        %3766 = vmatmul.f32.gmra.mxu0 %v2612
        %v3767 = vpop.f32.mrf.mxu0
        %v3768 = vadd.f32 %v3463, %v3767
        %3769 = vmatmul.f32.gmra.mxu0 %v2614
        %v3770 = vpop.f32.mrf.mxu0
        %v3771 = vadd.f32 %v3466, %v3770
        %3772 = vmatmul.f32.gmra.mxu0 %v2616
        %v3773 = vpop.f32.mrf.mxu0
        %v3774 = vadd.f32 %v3469, %v3773
        %3775 = vmatmul.f32.gmra.mxu0 %v2618
        %v3776 = vpop.f32.mrf.mxu0
        %v3777 = vadd.f32 %v3472, %v3776
        %3778 = vmatmul.f32.gmra.mxu0 %v2620
        %v3779 = vpop.f32.mrf.mxu0
        %v3780 = vadd.f32 %v3475, %v3779
        %3781 = vmatmul.f32.gmra.mxu0 %v2622
        %v3782 = vpop.f32.mrf.mxu0
        %v3783 = vadd.f32 %v3478, %v3782
        %3784 = vmatmul.f32.gmra.mxu0 %v2624
        %v3785 = vpop.f32.mrf.mxu0
        %v3786 = vadd.f32 %v3481, %v3785
        %3787 = vmatmul.f32.gmra.mxu0 %v2626
        %v3788 = vpop.f32.mrf.mxu0
        %v3789 = vadd.f32 %v3484, %v3788
        %3790 = vmatmul.f32.gmra.mxu0 %v2628
        %v3791 = vpop.f32.mrf.mxu0
        %v3792 = vadd.f32 %v3487, %v3791
        %3793 = vmatmul.f32.gmra.mxu0 %v2630
        %v3794 = vpop.f32.mrf.mxu0
        %v3795 = vadd.f32 %v3490, %v3794
        %3796 = vmatmul.f32.gmra.mxu0 %v2632
        %v3797 = vpop.f32.mrf.mxu0
        %v3798 = vadd.f32 %v3493, %v3797
        %3799 = vmatmul.f32.gmra.mxu0 %v2634
        %v3800 = vpop.f32.mrf.mxu0
        %v3801 = vadd.f32 %v3496, %v3800
        %3802 = vmatmul.f32.gmra.mxu0 %v2636
        %v3803 = vpop.f32.mrf.mxu0
        %v3804 = vadd.f32 %v3499, %v3803
        %3805 = vmatmul.f32.gmra.mxu0 %v2638
        %v3806 = vpop.f32.mrf.mxu0
        %v3807 = vadd.f32 %v3502, %v3806
        %3808 = vmatmul.f32.gmra.mxu0 %v2640
        %v3809 = vpop.f32.mrf.mxu0
        %v3810 = vadd.f32 %v3505, %v3809
        %3811 = vmatmul.f32.gmra.mxu0 %v2642
        %v3812 = vpop.f32.mrf.mxu0
        %v3813 = vadd.f32 %v3508, %v3812
        %3814 = vmatmul.f32.gmra.mxu0 %v2644
        %v3815 = vpop.f32.mrf.mxu0
        %v3816 = vadd.f32 %v3511, %v3815
        %3817 = vmatmul.f32.gmra.mxu0 %v2646
        %v3818 = vpop.f32.mrf.mxu0
        %v3819 = vadd.f32 %v3514, %v3818
        %3820 = vmatmul.f32.gmra.mxu0 %v2648
        %v3821 = vpop.f32.mrf.mxu0
        %v3822 = vadd.f32 %v3517, %v3821
        %3823 = vmatmul.f32.gmra.mxu0 %v2650
        %v3824 = vpop.f32.mrf.mxu0
        %v3825 = vadd.f32 %v3520, %v3824
        %3826 = vmatmul.f32.gmra.mxu0 %v2652
        %v3827 = vpop.f32.mrf.mxu0
        %v3828 = vadd.f32 %v3523, %v3827
        %3829 = vmatmul.f32.gmra.mxu0 %v2654
        %v3830 = vpop.f32.mrf.mxu0
        %v3831 = vadd.f32 %v3526, %v3830
        %3832 = vmatmul.f32.gmra.mxu0 %v2656
        %v3833 = vpop.f32.mrf.mxu0
        %v3834 = vadd.f32 %v3529, %v3833
        %3835 = vmatmul.f32.gmra.mxu0 %v2658
        %v3836 = vpop.f32.mrf.mxu0
        %v3837 = vadd.f32 %v3532, %v3836
        %3838 = vmatmul.f32.gmra.mxu0 %v2660
        %v3839 = vpop.f32.mrf.mxu0
        %v3840 = vadd.f32 %v3535, %v3839
        %3841 = vmatmul.f32.gmra.mxu0 %v2662
        %v3842 = vpop.f32.mrf.mxu0
        %v3843 = vadd.f32 %v3538, %v3842
        %3844 = vmatmul.f32.gmra.mxu0 %v2664
        %v3845 = vpop.f32.mrf.mxu0
        %v3846 = vadd.f32 %v3541, %v3845
        %3847 = vmatmul.f32.gmra.mxu0 %v2666
        %v3848 = vpop.f32.mrf.mxu0
        %v3849 = vadd.f32 %v3544, %v3848
        %3850 = vmatmul.f32.gmra.mxu0 %v2668
        %v3851 = vpop.f32.mrf.mxu0
        %v3852 = vadd.f32 %v3547, %v3851
        %3853 = vmatmul.f32.gmra.mxu0 %v2670
        %v3854 = vpop.f32.mrf.mxu0
        %v3855 = vadd.f32 %v3550, %v3854
        %3856 = vmatmul.f32.gmra.mxu0 %v2672
        %v3857 = vpop.f32.mrf.mxu0
        %v3858 = vadd.f32 %v3553, %v3857
        %3859 = vmatmul.f32.gmra.mxu0 %v2674
        %v3860 = vpop.f32.mrf.mxu0
        %v3861 = vadd.f32 %v3556, %v3860
        %3862 = vmatmul.f32.gmra.mxu0 %v2676
        %v3863 = vpop.f32.mrf.mxu0
        %v3864 = vadd.f32 %v3559, %v3863
        %3865 = vmatmul.f32.gmra.mxu0 %v2678
        %v3866 = vpop.f32.mrf.mxu0
        %v3867 = vadd.f32 %v3562, %v3866
        %3868 = vmatmul.f32.gmra.mxu0 %v2680
        %v3869 = vpop.f32.mrf.mxu0
        %v3870 = vadd.f32 %v3565, %v3869
        %3871 = vmatmul.f32.gmra.mxu0 %v2682
        %v3872 = vpop.f32.mrf.mxu0
        %v3873 = vadd.f32 %v3568, %v3872
        %3874 = vmatmul.f32.gmra.mxu0 %v2684
        %v3875 = vpop.f32.mrf.mxu0
        %v3876 = vadd.f32 %v3571, %v3875
        %3877 = vmatmul.f32.gmra.mxu0 %v2686
        %v3878 = vpop.f32.mrf.mxu0
        %v3879 = vadd.f32 %v3574, %v3878
        %3880 = vmatmul.f32.gmra.mxu0 %v2688
        %v3881 = vpop.f32.mrf.mxu0
        %v3882 = vadd.f32 %v3577, %v3881
        %3883 = vmatmul.f32.gmra.mxu0 %v2690
        %v3884 = vpop.f32.mrf.mxu0
        %v3885 = vadd.f32 %v3580, %v3884
        %3886 = vmatmul.f32.gmra.mxu0 %v2692
        %v3887 = vpop.f32.mrf.mxu0
        %v3888 = vadd.f32 %v3583, %v3887
        %3889 = vmatmul.f32.gmra.mxu0 %v2694
        %v3890 = vpop.f32.mrf.mxu0
        %v3891 = vadd.f32 %v3586, %v3890
        %3892 = vmatmul.f32.gmra.mxu0 %v2696
        %v3893 = vpop.f32.mrf.mxu0
        %v3894 = vadd.f32 %v3589, %v3893
        %3895 = vmatmul.f32.gmra.mxu0 %v2698
        %v3896 = vpop.f32.mrf.mxu0
        %v3897 = vadd.f32 %v3592, %v3896
        %3898 = vmatmul.f32.gmra.mxu0 %v2700
        %v3899 = vpop.f32.mrf.mxu0
        %v3900 = vadd.f32 %v3595, %v3899
        %3901 = vmatmul.f32.gmra.mxu0 %v2702
        %v3902 = vpop.f32.mrf.mxu0
        %v3903 = vadd.f32 %v3598, %v3902
        %3904 = vmatmul.f32.gmra.mxu0 %v2704
        %v3905 = vpop.f32.mrf.mxu0
        %v3906 = vadd.f32 %v3601, %v3905
        %3907 = vmatmul.f32.gmra.mxu0 %v2706
        %v3908 = vpop.f32.mrf.mxu0
        %v3909 = vadd.f32 %v3604, %v3908
        %3910 = vmatmul.f32.gmra.mxu0 %v2708
        %v3911 = vpop.f32.mrf.mxu0
        %v3912 = vadd.f32 %v3607, %v3911
        %3913 = vmatmul.f32.gmra.mxu0 %v2710
        %v3914 = vpop.f32.mrf.mxu0
        %v3915 = vadd.f32 %v3610, %v3914
        %3916 = vmatmul.f32.gmra.mxu0 %v2712
        %v3917 = vpop.f32.mrf.mxu0
        %v3918 = vadd.f32 %v3613, %v3917
        %3919 = vmatmul.f32.gmra.mxu0 %v2714
        %v3920 = vpop.f32.mrf.mxu0
        %v3921 = vadd.f32 %v3616, %v3920
        %3922 = vmatmul.f32.gmra.mxu0 %v2716
        %v3923 = vpop.f32.mrf.mxu0
        %v3924 = vadd.f32 %v3619, %v3923
        %3925 = vmatmul.f32.gmra.mxu0 %v2718
        %v3926 = vpop.f32.mrf.mxu0
        %v3927 = vadd.f32 %v3622, %v3926
        %3928 = vmatmul.f32.gmra.mxu0 %v2720
        %v3929 = vpop.f32.mrf.mxu0
        %v3930 = vadd.f32 %v3625, %v3929
        %3931 = vmatmul.f32.gmra.mxu0 %v2722
        %v3932 = vpop.f32.mrf.mxu0
        %v3933 = vadd.f32 %v3628, %v3932
        %3934 = vmatmul.f32.gmra.mxu0 %v2724
        %v3935 = vpop.f32.mrf.mxu0
        %v3936 = vadd.f32 %v3631, %v3935
        %3937 = vmatmul.f32.gmra.mxu0 %v2726
        %v3938 = vpop.f32.mrf.mxu0
        %v3939 = vadd.f32 %v3634, %v3938
        %3940 = vmatmul.f32.gmra.mxu0 %v2728
        %v3941 = vpop.f32.mrf.mxu0
        %v3942 = vadd.f32 %v3637, %v3941
        %3943 = vmatmul.f32.gmra.mxu0 %v2730
        %v3944 = vpop.f32.mrf.mxu0
        %v3945 = vadd.f32 %v3640, %v3944
        %3946 = vmatmul.f32.gmra.mxu0 %v2732
        %v3947 = vpop.f32.mrf.mxu0
        %v3948 = vadd.f32 %v3643, %v3947
        %3949 = vmatmul.f32.gmra.mxu0 %v2734
        %v3950 = vpop.f32.mrf.mxu0
        %v3951 = vadd.f32 %v3646, %v3950
        %3952 = vmatmul.f32.gmra.mxu0 %v2736
        %v3953 = vpop.f32.mrf.mxu0
        %v3954 = vadd.f32 %v3649, %v3953
        %3955 = vmatmul.f32.gmra.mxu0 %v2738
        %v3956 = vpop.f32.mrf.mxu0
        %v3957 = vadd.f32 %v3652, %v3956
        %3958 = vmatmul.f32.gmra.mxu0 %v2740
        %v3959 = vpop.f32.mrf.mxu0
        %v3960 = vadd.f32 %v3655, %v3959
        %3961 = vmatmul.f32.gmra.mxu0 %v2742
        %v3962 = vpop.f32.mrf.mxu0
        %v3963 = vadd.f32 %v3658, %v3962
        %3964 = vmatmul.f32.gmra.mxu0 %v2744
        %v3965 = vpop.f32.mrf.mxu0
        %v3966 = vadd.f32 %v3661, %v3965
        %3967 = vmatmul.f32.gmra.mxu0 %v2746
        %v3968 = vpop.f32.mrf.mxu0
        %v3969 = vadd.f32 %v3664, %v3968
        %3970 = vmatmul.f32.gmra.mxu0 %v2748
        %v3971 = vpop.f32.mrf.mxu0
        %v3972 = vadd.f32 %v3667, %v3971
        %3973 = vmatmul.f32.gmra.mxu0 %v2750
        %v3974 = vpop.f32.mrf.mxu0
        %v3975 = vadd.f32 %v3670, %v3974
        %3976 = vmatmul.f32.gmra.mxu0 %v2752
        %v3977 = vpop.f32.mrf.mxu0
        %v3978 = vadd.f32 %v3673, %v3977
        %3979 = vmatmul.f32.gmra.mxu0 %v2754
        %v3980 = vpop.f32.mrf.mxu0
        %v3981 = vadd.f32 %v3676, %v3980
        %3982 = vdwg.mxu0
        %v3983 = vmax.f32 %v3086, 0.0
        %v3984 = vmax.f32 %v3696, 0.0
        %v3985 = vmax.f32 %v3089, 0.0
        %v3986 = vmax.f32 %v3699, 0.0
        %v3987 = vmax.f32 %v3092, 0.0
        %v3988 = vmax.f32 %v3702, 0.0
        %v3989 = vmax.f32 %v3095, 0.0
        %v3990 = vmax.f32 %v3705, 0.0
        %v3991 = vmax.f32 %v3098, 0.0
        %v3992 = vmax.f32 %v3708, 0.0
        %v3993 = vmax.f32 %v3101, 0.0
        %v3994 = vmax.f32 %v3711, 0.0
        %v3995 = vmax.f32 %v3104, 0.0
        %v3996 = vmax.f32 %v3714, 0.0
        %v3997 = vmax.f32 %v3107, 0.0
        %v3998 = vmax.f32 %v3717, 0.0
        %v3999 = vmax.f32 %v3110, 0.0
        %v4000 = vmax.f32 %v3720, 0.0
        %v4001 = vmax.f32 %v3113, 0.0
        %v4002 = vmax.f32 %v3723, 0.0
        %v4003 = vmax.f32 %v3116, 0.0
        %v4004 = vmax.f32 %v3726, 0.0
        %v4005 = vmax.f32 %v3119, 0.0
        %v4006 = vmax.f32 %v3729, 0.0
        %v4007 = vmax.f32 %v3122, 0.0
        %v4008 = vmax.f32 %v3732, 0.0
        %v4009 = vmax.f32 %v3125, 0.0
        %v4010 = vmax.f32 %v3735, 0.0
        %v4011 = vmax.f32 %v3128, 0.0
        %v4012 = vmax.f32 %v3738, 0.0
        %v4013 = vmax.f32 %v3131, 0.0
        %v4014 = vmax.f32 %v3741, 0.0
        %v4015 = vmax.f32 %v3134, 0.0
        %v4016 = vmax.f32 %v3744, 0.0
        %v4017 = vmax.f32 %v3137, 0.0
        %v4018 = vmax.f32 %v3747, 0.0
        %v4019 = vmax.f32 %v3140, 0.0
        %v4020 = vmax.f32 %v3750, 0.0
        %v4021 = vmax.f32 %v3143, 0.0
        %v4022 = vmax.f32 %v3753, 0.0
        %v4023 = vmax.f32 %v3146, 0.0
        %v4024 = vmax.f32 %v3756, 0.0
        %v4025 = vmax.f32 %v3149, 0.0
        %v4026 = vmax.f32 %v3759, 0.0
        %v4027 = vmax.f32 %v3152, 0.0
        %v4028 = vmax.f32 %v3762, 0.0
        %v4029 = vmax.f32 %v3155, 0.0
        %v4030 = vmax.f32 %v3765, 0.0
        %v4031 = vmax.f32 %v3158, 0.0
        %v4032 = vmax.f32 %v3768, 0.0
        %v4033 = vmax.f32 %v3161, 0.0
        %v4034 = vmax.f32 %v3771, 0.0
        %v4035 = vmax.f32 %v3164, 0.0
        %v4036 = vmax.f32 %v3774, 0.0
        %v4037 = vmax.f32 %v3167, 0.0
        %v4038 = vmax.f32 %v3777, 0.0
        %v4039 = vmax.f32 %v3170, 0.0
        %v4040 = vmax.f32 %v3780, 0.0
        %v4041 = vmax.f32 %v3173, 0.0
        %v4042 = vmax.f32 %v3783, 0.0
        %v4043 = vmax.f32 %v3176, 0.0
        %v4044 = vmax.f32 %v3786, 0.0
        %v4045 = vmax.f32 %v3179, 0.0
        %v4046 = vmax.f32 %v3789, 0.0
        %v4047 = vmax.f32 %v3182, 0.0
        %v4048 = vmax.f32 %v3792, 0.0
        %v4049 = vmax.f32 %v3185, 0.0
        %v4050 = vmax.f32 %v3795, 0.0
        %v4051 = vmax.f32 %v3188, 0.0
        %v4052 = vmax.f32 %v3798, 0.0
        %v4053 = vmax.f32 %v3191, 0.0
        %v4054 = vmax.f32 %v3801, 0.0
        %v4055 = vmax.f32 %v3194, 0.0
        %v4056 = vmax.f32 %v3804, 0.0
        %v4057 = vmax.f32 %v3197, 0.0
        %v4058 = vmax.f32 %v3807, 0.0
        %v4059 = vmax.f32 %v3200, 0.0
        %v4060 = vmax.f32 %v3810, 0.0
        %v4061 = vmax.f32 %v3203, 0.0
        %v4062 = vmax.f32 %v3813, 0.0
        %v4063 = vmax.f32 %v3206, 0.0
        %v4064 = vmax.f32 %v3816, 0.0
        %v4065 = vmax.f32 %v3209, 0.0
        %v4066 = vmax.f32 %v3819, 0.0
        %v4067 = vmax.f32 %v3212, 0.0
        %v4068 = vmax.f32 %v3822, 0.0
        %v4069 = vmax.f32 %v3215, 0.0
        %v4070 = vmax.f32 %v3825, 0.0
        %v4071 = vmax.f32 %v3218, 0.0
        %v4072 = vmax.f32 %v3828, 0.0
        %v4073 = vmax.f32 %v3221, 0.0
        %v4074 = vmax.f32 %v3831, 0.0
        %v4075 = vmax.f32 %v3224, 0.0
        %v4076 = vmax.f32 %v3834, 0.0
        %v4077 = vmax.f32 %v3227, 0.0
        %v4078 = vmax.f32 %v3837, 0.0
        %v4079 = vmax.f32 %v3230, 0.0
        %v4080 = vmax.f32 %v3840, 0.0
        %v4081 = vmax.f32 %v3233, 0.0
        %v4082 = vmax.f32 %v3843, 0.0
        %v4083 = vmax.f32 %v3236, 0.0
        %v4084 = vmax.f32 %v3846, 0.0
        %v4085 = vmax.f32 %v3239, 0.0
        %v4086 = vmax.f32 %v3849, 0.0
        %v4087 = vmax.f32 %v3242, 0.0
        %v4088 = vmax.f32 %v3852, 0.0
        %v4089 = vmax.f32 %v3245, 0.0
        %v4090 = vmax.f32 %v3855, 0.0
        %v4091 = vmax.f32 %v3248, 0.0
        %v4092 = vmax.f32 %v3858, 0.0
        %v4093 = vmax.f32 %v3251, 0.0
        %v4094 = vmax.f32 %v3861, 0.0
        %v4095 = vmax.f32 %v3254, 0.0
        %v4096 = vmax.f32 %v3864, 0.0
        %v4097 = vmax.f32 %v3257, 0.0
        %v4098 = vmax.f32 %v3867, 0.0
        %v4099 = vmax.f32 %v3260, 0.0
        %v4100 = vmax.f32 %v3870, 0.0
        %v4101 = vmax.f32 %v3263, 0.0
        %v4102 = vmax.f32 %v3873, 0.0
        %v4103 = vmax.f32 %v3266, 0.0
        %v4104 = vmax.f32 %v3876, 0.0
        %v4105 = vmax.f32 %v3269, 0.0
        %v4106 = vmax.f32 %v3879, 0.0
        %v4107 = vmax.f32 %v3272, 0.0
        %v4108 = vmax.f32 %v3882, 0.0
        %v4109 = vmax.f32 %v3275, 0.0
        %v4110 = vmax.f32 %v3885, 0.0
        %v4111 = vmax.f32 %v3278, 0.0
        %v4112 = vmax.f32 %v3888, 0.0
        %v4113 = vmax.f32 %v3281, 0.0
        %v4114 = vmax.f32 %v3891, 0.0
        %v4115 = vmax.f32 %v3284, 0.0
        %v4116 = vmax.f32 %v3894, 0.0
        %v4117 = vmax.f32 %v3287, 0.0
        %v4118 = vmax.f32 %v3897, 0.0
        %v4119 = vmax.f32 %v3290, 0.0
        %v4120 = vmax.f32 %v3900, 0.0
        %v4121 = vmax.f32 %v3293, 0.0
        %v4122 = vmax.f32 %v3903, 0.0
        %v4123 = vmax.f32 %v3296, 0.0
        %v4124 = vmax.f32 %v3906, 0.0
        %v4125 = vmax.f32 %v3299, 0.0
        %v4126 = vmax.f32 %v3909, 0.0
        %v4127 = vmax.f32 %v3302, 0.0
        %v4128 = vmax.f32 %v3912, 0.0
        %v4129 = vmax.f32 %v3305, 0.0
        %v4130 = vmax.f32 %v3915, 0.0
        %v4131 = vmax.f32 %v3308, 0.0
        %v4132 = vmax.f32 %v3918, 0.0
        %v4133 = vmax.f32 %v3311, 0.0
        %v4134 = vmax.f32 %v3921, 0.0
        %v4135 = vmax.f32 %v3314, 0.0
        %v4136 = vmax.f32 %v3924, 0.0
        %v4137 = vmax.f32 %v3317, 0.0
        %v4138 = vmax.f32 %v3927, 0.0
        %v4139 = vmax.f32 %v3320, 0.0
        %v4140 = vmax.f32 %v3930, 0.0
        %v4141 = vmax.f32 %v3323, 0.0
        %v4142 = vmax.f32 %v3933, 0.0
        %v4143 = vmax.f32 %v3326, 0.0
        %v4144 = vmax.f32 %v3936, 0.0
        %v4145 = vmax.f32 %v3329, 0.0
        %v4146 = vmax.f32 %v3939, 0.0
        %v4147 = vmax.f32 %v3332, 0.0
        %v4148 = vmax.f32 %v3942, 0.0
        %v4149 = vmax.f32 %v3335, 0.0
        %v4150 = vmax.f32 %v3945, 0.0
        %v4151 = vmax.f32 %v3338, 0.0
        %v4152 = vmax.f32 %v3948, 0.0
        %v4153 = vmax.f32 %v3341, 0.0
        %v4154 = vmax.f32 %v3951, 0.0
        %v4155 = vmax.f32 %v3344, 0.0
        %v4156 = vmax.f32 %v3954, 0.0
        %v4157 = vmax.f32 %v3347, 0.0
        %v4158 = vmax.f32 %v3957, 0.0
        %v4159 = vmax.f32 %v3350, 0.0
        %v4160 = vmax.f32 %v3960, 0.0
        %v4161 = vmax.f32 %v3353, 0.0
        %v4162 = vmax.f32 %v3963, 0.0
        %v4163 = vmax.f32 %v3356, 0.0
        %v4164 = vmax.f32 %v3966, 0.0
        %v4165 = vmax.f32 %v3359, 0.0
        %v4166 = vmax.f32 %v3969, 0.0
        %v4167 = vmax.f32 %v3362, 0.0
        %v4168 = vmax.f32 %v3972, 0.0
        %v4169 = vmax.f32 %v3365, 0.0
        %v4170 = vmax.f32 %v3975, 0.0
        %v4171 = vmax.f32 %v3368, 0.0
        %v4172 = vmax.f32 %v3978, 0.0
        %v4173 = vmax.f32 %v3371, 0.0
        %v4174 = vmax.f32 %v3981, 0.0
        %v4175 = vmax.f32 %v3983, %v3991
        %vm4176 = vcmask 523264
        %v4177 = vsel %vm4176, %v3984, -inf
        %v4178 = vsel %vm4176, %v3992, -inf
        %v4179 = vmax.f32 %v4177, %v4178
        %v4180 = vmax.f32 %v3985, %v3993
        %v4181 = vsel %vm4176, %v3986, -inf
        %v4182 = vsel %vm4176, %v3994, -inf
        %v4183 = vmax.f32 %v4181, %v4182
        %v4184 = vmax.f32 %v3987, %v3995
        %v4185 = vsel %vm4176, %v3988, -inf
        %v4186 = vsel %vm4176, %v3996, -inf
        %v4187 = vmax.f32 %v4185, %v4186
        %v4188 = vmax.f32 %v3989, %v3997
        %v4189 = vsel %vm4176, %v3990, -inf
        %v4190 = vsel %vm4176, %v3998, -inf
        %v4191 = vmax.f32 %v4189, %v4190
        %v4192 = vmax.f32 %v3999, %v4007
        %v4193 = vsel %vm4176, %v4000, -inf
        %v4194 = vsel %vm4176, %v4008, -inf
        %v4195 = vmax.f32 %v4193, %v4194
        %v4196 = vmax.f32 %v4001, %v4009
        %v4197 = vsel %vm4176, %v4002, -inf
        %v4198 = vsel %vm4176, %v4010, -inf
        %v4199 = vmax.f32 %v4197, %v4198
        %v4200 = vmax.f32 %v4003, %v4011
        %v4201 = vsel %vm4176, %v4004, -inf
        %v4202 = vsel %vm4176, %v4012, -inf
        %v4203 = vmax.f32 %v4201, %v4202
        %v4204 = vmax.f32 %v4005, %v4013
        %v4205 = vsel %vm4176, %v4006, -inf
        %v4206 = vsel %vm4176, %v4014, -inf
        %v4207 = vmax.f32 %v4205, %v4206
        %v4208 = vmax.f32 %v4015, %v4023
        %v4209 = vsel %vm4176, %v4016, -inf
        %v4210 = vsel %vm4176, %v4024, -inf
        %v4211 = vmax.f32 %v4209, %v4210
        %v4212 = vmax.f32 %v4017, %v4025
        %v4213 = vsel %vm4176, %v4018, -inf
        %v4214 = vsel %vm4176, %v4026, -inf
        %v4215 = vmax.f32 %v4213, %v4214
        %v4216 = vmax.f32 %v4019, %v4027
        %v4217 = vsel %vm4176, %v4020, -inf
        %v4218 = vsel %vm4176, %v4028, -inf
        %v4219 = vmax.f32 %v4217, %v4218
        %v4220 = vmax.f32 %v4021, %v4029
        %v4221 = vsel %vm4176, %v4022, -inf
        %v4222 = vsel %vm4176, %v4030, -inf
        %v4223 = vmax.f32 %v4221, %v4222
        %v4224 = vmax.f32 %v4031, %v4039
        %v4225 = vsel %vm4176, %v4032, -inf
        %v4226 = vsel %vm4176, %v4040, -inf
        %v4227 = vmax.f32 %v4225, %v4226
        %v4228 = vmax.f32 %v4033, %v4041
        %v4229 = vsel %vm4176, %v4034, -inf
        %v4230 = vsel %vm4176, %v4042, -inf
        %v4231 = vmax.f32 %v4229, %v4230
        %v4232 = vmax.f32 %v4035, %v4043
        %v4233 = vsel %vm4176, %v4036, -inf
        %v4234 = vsel %vm4176, %v4044, -inf
        %v4235 = vmax.f32 %v4233, %v4234
        %v4236 = vmax.f32 %v4037, %v4045
        %v4237 = vsel %vm4176, %v4038, -inf
        %v4238 = vsel %vm4176, %v4046, -inf
        %v4239 = vmax.f32 %v4237, %v4238
        %v4240 = vmax.f32 %v4047, %v4055
        %v4241 = vsel %vm4176, %v4048, -inf
        %v4242 = vsel %vm4176, %v4056, -inf
        %v4243 = vmax.f32 %v4241, %v4242
        %v4244 = vmax.f32 %v4049, %v4057
        %v4245 = vsel %vm4176, %v4050, -inf
        %v4246 = vsel %vm4176, %v4058, -inf
        %v4247 = vmax.f32 %v4245, %v4246
        %v4248 = vmax.f32 %v4051, %v4059
        %v4249 = vsel %vm4176, %v4052, -inf
        %v4250 = vsel %vm4176, %v4060, -inf
        %v4251 = vmax.f32 %v4249, %v4250
        %v4252 = vmax.f32 %v4053, %v4061
        %v4253 = vsel %vm4176, %v4054, -inf
        %v4254 = vsel %vm4176, %v4062, -inf
        %v4255 = vmax.f32 %v4253, %v4254
        %v4256 = vmax.f32 %v4063, %v4071
        %v4257 = vsel %vm4176, %v4064, -inf
        %v4258 = vsel %vm4176, %v4072, -inf
        %v4259 = vmax.f32 %v4257, %v4258
        %v4260 = vmax.f32 %v4065, %v4073
        %v4261 = vsel %vm4176, %v4066, -inf
        %v4262 = vsel %vm4176, %v4074, -inf
        %v4263 = vmax.f32 %v4261, %v4262
        %v4264 = vmax.f32 %v4067, %v4075
        %v4265 = vsel %vm4176, %v4068, -inf
        %v4266 = vsel %vm4176, %v4076, -inf
        %v4267 = vmax.f32 %v4265, %v4266
        %v4268 = vmax.f32 %v4069, %v4077
        %v4269 = vsel %vm4176, %v4070, -inf
        %v4270 = vsel %vm4176, %v4078, -inf
        %v4271 = vmax.f32 %v4269, %v4270
        %v4272 = vmax.f32 %v4079, %v4087
        %v4273 = vsel %vm4176, %v4080, -inf
        %v4274 = vsel %vm4176, %v4088, -inf
        %v4275 = vmax.f32 %v4273, %v4274
        %v4276 = vmax.f32 %v4081, %v4089
        %v4277 = vsel %vm4176, %v4082, -inf
        %v4278 = vsel %vm4176, %v4090, -inf
        %v4279 = vmax.f32 %v4277, %v4278
        %v4280 = vmax.f32 %v4083, %v4091
        %v4281 = vsel %vm4176, %v4084, -inf
        %v4282 = vsel %vm4176, %v4092, -inf
        %v4283 = vmax.f32 %v4281, %v4282
        %v4284 = vmax.f32 %v4085, %v4093
        %v4285 = vsel %vm4176, %v4086, -inf
        %v4286 = vsel %vm4176, %v4094, -inf
        %v4287 = vmax.f32 %v4285, %v4286
        %v4288 = vmax.f32 %v4095, %v4103
        %v4289 = vsel %vm4176, %v4096, -inf
        %v4290 = vsel %vm4176, %v4104, -inf
        %v4291 = vmax.f32 %v4289, %v4290
        %v4292 = vmax.f32 %v4097, %v4105
        %v4293 = vsel %vm4176, %v4098, -inf
        %v4294 = vsel %vm4176, %v4106, -inf
        %v4295 = vmax.f32 %v4293, %v4294
        %v4296 = vmax.f32 %v4099, %v4107
        %v4297 = vsel %vm4176, %v4100, -inf
        %v4298 = vsel %vm4176, %v4108, -inf
        %v4299 = vmax.f32 %v4297, %v4298
        %v4300 = vmax.f32 %v4101, %v4109
        %v4301 = vsel %vm4176, %v4102, -inf
        %v4302 = vsel %vm4176, %v4110, -inf
        %v4303 = vmax.f32 %v4301, %v4302
        %v4304 = vmax.f32 %v4111, %v4119
        %v4305 = vsel %vm4176, %v4112, -inf
        %v4306 = vsel %vm4176, %v4120, -inf
        %v4307 = vmax.f32 %v4305, %v4306
        %v4308 = vmax.f32 %v4113, %v4121
        %v4309 = vsel %vm4176, %v4114, -inf
        %v4310 = vsel %vm4176, %v4122, -inf
        %v4311 = vmax.f32 %v4309, %v4310
        %v4312 = vmax.f32 %v4115, %v4123
        %v4313 = vsel %vm4176, %v4116, -inf
        %v4314 = vsel %vm4176, %v4124, -inf
        %v4315 = vmax.f32 %v4313, %v4314
        %v4316 = vmax.f32 %v4117, %v4125
        %v4317 = vsel %vm4176, %v4118, -inf
        %v4318 = vsel %vm4176, %v4126, -inf
        %v4319 = vmax.f32 %v4317, %v4318
        %v4320 = vmax.f32 %v4127, %v4135
        %v4321 = vsel %vm4176, %v4128, -inf
        %v4322 = vsel %vm4176, %v4136, -inf
        %v4323 = vmax.f32 %v4321, %v4322
        %v4324 = vmax.f32 %v4129, %v4137
        %v4325 = vsel %vm4176, %v4130, -inf
        %v4326 = vsel %vm4176, %v4138, -inf
        %v4327 = vmax.f32 %v4325, %v4326
        %v4328 = vmax.f32 %v4131, %v4139
        %v4329 = vsel %vm4176, %v4132, -inf
        %v4330 = vsel %vm4176, %v4140, -inf
        %v4331 = vmax.f32 %v4329, %v4330
        %v4332 = vmax.f32 %v4133, %v4141
        %v4333 = vsel %vm4176, %v4134, -inf
        %v4334 = vsel %vm4176, %v4142, -inf
        %v4335 = vmax.f32 %v4333, %v4334
        %v4336 = vmax.f32 %v4143, %v4151
        %v4337 = vsel %vm4176, %v4144, -inf
        %v4338 = vsel %vm4176, %v4152, -inf
        %v4339 = vmax.f32 %v4337, %v4338
        %v4340 = vmax.f32 %v4145, %v4153
        %v4341 = vsel %vm4176, %v4146, -inf
        %v4342 = vsel %vm4176, %v4154, -inf
        %v4343 = vmax.f32 %v4341, %v4342
        %v4344 = vmax.f32 %v4147, %v4155
        %v4345 = vsel %vm4176, %v4148, -inf
        %v4346 = vsel %vm4176, %v4156, -inf
        %v4347 = vmax.f32 %v4345, %v4346
        %v4348 = vmax.f32 %v4149, %v4157
        %v4349 = vsel %vm4176, %v4150, -inf
        %v4350 = vsel %vm4176, %v4158, -inf
        %v4351 = vmax.f32 %v4349, %v4350
        %v4352 = vmax.f32 %v4159, %v4167
        %v4353 = vsel %vm4176, %v4160, -inf
        %v4354 = vsel %vm4176, %v4168, -inf
        %v4355 = vmax.f32 %v4353, %v4354
        %v4356 = vmax.f32 %v4161, %v4169
        %v4357 = vsel %vm4176, %v4162, -inf
        %v4358 = vsel %vm4176, %v4170, -inf
        %v4359 = vmax.f32 %v4357, %v4358
        %v4360 = vmax.f32 %v4163, %v4171
        %v4361 = vsel %vm4176, %v4164, -inf
        %v4362 = vsel %vm4176, %v4172, -inf
        %v4363 = vmax.f32 %v4361, %v4362
        %v4364 = vmax.f32 %v4165, %v4173
        %v4365 = vsel %vm4176, %v4166, -inf
        %v4366 = vsel %vm4176, %v4174, -inf
        %v4367 = vmax.f32 %v4365, %v4366
        %4464 = vrot.lane.b32.xlu0 %v4175, 120
        %v4465 = vpop.permute.xlu0 %4464
        %4466 = vrot.lane.b32.xlu0 %v4179, 120
        %v4467 = vpop.permute.xlu0 %4466
        %4468 = vrot.lane.b32.xlu0 %v4180, 120
        %v4469 = vpop.permute.xlu0 %4468
        %4470 = vrot.lane.b32.xlu0 %v4183, 120
        %v4471 = vpop.permute.xlu0 %4470
        %4472 = vrot.lane.b32.xlu0 %v4184, 120
        %v4473 = vpop.permute.xlu0 %4472
        %4474 = vrot.lane.b32.xlu0 %v4187, 120
        %v4475 = vpop.permute.xlu0 %4474
        %4476 = vrot.lane.b32.xlu0 %v4188, 120
        %v4477 = vpop.permute.xlu0 %4476
        %4478 = vrot.lane.b32.xlu0 %v4191, 120
        %v4479 = vpop.permute.xlu0 %4478
        %4480 = vrot.lane.b32.xlu0 %v4192, 120
        %v4481 = vpop.permute.xlu0 %4480
        %4482 = vrot.lane.b32.xlu0 %v4195, 120
        %v4483 = vpop.permute.xlu0 %4482
        %4484 = vrot.lane.b32.xlu0 %v4196, 120
        %v4485 = vpop.permute.xlu0 %4484
        %4486 = vrot.lane.b32.xlu0 %v4199, 120
        %v4487 = vpop.permute.xlu0 %4486
        %4488 = vrot.lane.b32.xlu0 %v4200, 120
        %v4489 = vpop.permute.xlu0 %4488
        %4490 = vrot.lane.b32.xlu0 %v4203, 120
        %v4491 = vpop.permute.xlu0 %4490
        %4492 = vrot.lane.b32.xlu0 %v4204, 120
        %v4493 = vpop.permute.xlu0 %4492
        %4494 = vrot.lane.b32.xlu0 %v4207, 120
        %v4495 = vpop.permute.xlu0 %4494
        %4496 = vrot.lane.b32.xlu0 %v4208, 120
        %v4497 = vpop.permute.xlu0 %4496
        %4498 = vrot.lane.b32.xlu0 %v4211, 120
        %v4499 = vpop.permute.xlu0 %4498
        %4500 = vrot.lane.b32.xlu0 %v4212, 120
        %v4501 = vpop.permute.xlu0 %4500
        %4502 = vrot.lane.b32.xlu0 %v4215, 120
        %v4503 = vpop.permute.xlu0 %4502
        %4504 = vrot.lane.b32.xlu0 %v4216, 120
        %v4505 = vpop.permute.xlu0 %4504
        %4506 = vrot.lane.b32.xlu0 %v4219, 120
        %v4507 = vpop.permute.xlu0 %4506
        %4508 = vrot.lane.b32.xlu0 %v4220, 120
        %v4509 = vpop.permute.xlu0 %4508
        %4510 = vrot.lane.b32.xlu0 %v4223, 120
        %v4511 = vpop.permute.xlu0 %4510
        %4512 = vrot.lane.b32.xlu0 %v4224, 120
        %v4513 = vpop.permute.xlu0 %4512
        %4514 = vrot.lane.b32.xlu0 %v4227, 120
        %v4515 = vpop.permute.xlu0 %4514
        %4516 = vrot.lane.b32.xlu0 %v4228, 120
        %v4517 = vpop.permute.xlu0 %4516
        %4518 = vrot.lane.b32.xlu0 %v4231, 120
        %v4519 = vpop.permute.xlu0 %4518
        %4520 = vrot.lane.b32.xlu0 %v4232, 120
        %v4521 = vpop.permute.xlu0 %4520
        %4522 = vrot.lane.b32.xlu0 %v4235, 120
        %v4523 = vpop.permute.xlu0 %4522
        %4524 = vrot.lane.b32.xlu0 %v4236, 120
        %v4525 = vpop.permute.xlu0 %4524
        %4526 = vrot.lane.b32.xlu0 %v4239, 120
        %v4527 = vpop.permute.xlu0 %4526
        %4528 = vrot.lane.b32.xlu0 %v4240, 120
        %v4529 = vpop.permute.xlu0 %4528
        %4530 = vrot.lane.b32.xlu0 %v4243, 120
        %v4531 = vpop.permute.xlu0 %4530
        %4532 = vrot.lane.b32.xlu0 %v4244, 120
        %v4533 = vpop.permute.xlu0 %4532
        %4534 = vrot.lane.b32.xlu0 %v4247, 120
        %v4535 = vpop.permute.xlu0 %4534
        %4536 = vrot.lane.b32.xlu0 %v4248, 120
        %v4537 = vpop.permute.xlu0 %4536
        %4538 = vrot.lane.b32.xlu0 %v4251, 120
        %v4539 = vpop.permute.xlu0 %4538
        %4540 = vrot.lane.b32.xlu0 %v4252, 120
        %v4541 = vpop.permute.xlu0 %4540
        %4542 = vrot.lane.b32.xlu0 %v4255, 120
        %v4543 = vpop.permute.xlu0 %4542
        %4544 = vrot.lane.b32.xlu0 %v4256, 120
        %v4545 = vpop.permute.xlu0 %4544
        %4546 = vrot.lane.b32.xlu0 %v4259, 120
        %v4547 = vpop.permute.xlu0 %4546
        %4548 = vrot.lane.b32.xlu0 %v4260, 120
        %v4549 = vpop.permute.xlu0 %4548
        %4550 = vrot.lane.b32.xlu0 %v4263, 120
        %v4551 = vpop.permute.xlu0 %4550
        %4552 = vrot.lane.b32.xlu0 %v4264, 120
        %v4553 = vpop.permute.xlu0 %4552
        %4554 = vrot.lane.b32.xlu0 %v4267, 120
        %v4555 = vpop.permute.xlu0 %4554
        %4556 = vrot.lane.b32.xlu0 %v4268, 120
        %v4557 = vpop.permute.xlu0 %4556
        %4558 = vrot.lane.b32.xlu0 %v4271, 120
        %v4559 = vpop.permute.xlu0 %4558
        %4560 = vrot.lane.b32.xlu0 %v4272, 120
        %v4561 = vpop.permute.xlu0 %4560
        %4562 = vrot.lane.b32.xlu0 %v4275, 120
        %v4563 = vpop.permute.xlu0 %4562
        %4564 = vrot.lane.b32.xlu0 %v4276, 120
        %v4565 = vpop.permute.xlu0 %4564
        %4566 = vrot.lane.b32.xlu0 %v4279, 120
        %v4567 = vpop.permute.xlu0 %4566
        %4568 = vrot.lane.b32.xlu0 %v4280, 120
        %v4569 = vpop.permute.xlu0 %4568
        %4570 = vrot.lane.b32.xlu0 %v4283, 120
        %v4571 = vpop.permute.xlu0 %4570
        %4572 = vrot.lane.b32.xlu0 %v4284, 120
        %v4573 = vpop.permute.xlu0 %4572
        %4574 = vrot.lane.b32.xlu0 %v4287, 120
        %v4575 = vpop.permute.xlu0 %4574
        %4576 = vrot.lane.b32.xlu0 %v4288, 120
        %v4577 = vpop.permute.xlu0 %4576
        %4578 = vrot.lane.b32.xlu0 %v4291, 120
        %v4579 = vpop.permute.xlu0 %4578
        %4580 = vrot.lane.b32.xlu0 %v4292, 120
        %v4581 = vpop.permute.xlu0 %4580
        %4582 = vrot.lane.b32.xlu0 %v4295, 120
        %v4583 = vpop.permute.xlu0 %4582
        %4584 = vrot.lane.b32.xlu0 %v4296, 120
        %v4585 = vpop.permute.xlu0 %4584
        %4586 = vrot.lane.b32.xlu0 %v4299, 120
        %v4587 = vpop.permute.xlu0 %4586
        %4588 = vrot.lane.b32.xlu0 %v4300, 120
        %v4589 = vpop.permute.xlu0 %4588
        %4590 = vrot.lane.b32.xlu0 %v4303, 120
        %v4591 = vpop.permute.xlu0 %4590
        %4592 = vrot.lane.b32.xlu0 %v4304, 120
        %v4593 = vpop.permute.xlu0 %4592
        %4594 = vrot.lane.b32.xlu0 %v4307, 120
        %v4595 = vpop.permute.xlu0 %4594
        %4596 = vrot.lane.b32.xlu0 %v4308, 120
        %v4597 = vpop.permute.xlu0 %4596
        %4598 = vrot.lane.b32.xlu0 %v4311, 120
        %v4599 = vpop.permute.xlu0 %4598
        %4600 = vrot.lane.b32.xlu0 %v4312, 120
        %v4601 = vpop.permute.xlu0 %4600
        %4602 = vrot.lane.b32.xlu0 %v4315, 120
        %v4603 = vpop.permute.xlu0 %4602
        %4604 = vrot.lane.b32.xlu0 %v4316, 120
        %v4605 = vpop.permute.xlu0 %4604
        %4606 = vrot.lane.b32.xlu0 %v4319, 120
        %v4607 = vpop.permute.xlu0 %4606
        %4608 = vrot.lane.b32.xlu0 %v4320, 120
        %v4609 = vpop.permute.xlu0 %4608
        %4610 = vrot.lane.b32.xlu0 %v4323, 120
        %v4611 = vpop.permute.xlu0 %4610
        %4612 = vrot.lane.b32.xlu0 %v4324, 120
        %v4613 = vpop.permute.xlu0 %4612
        %4614 = vrot.lane.b32.xlu0 %v4327, 120
        %v4615 = vpop.permute.xlu0 %4614
        %4616 = vrot.lane.b32.xlu0 %v4328, 120
        %v4617 = vpop.permute.xlu0 %4616
        %4618 = vrot.lane.b32.xlu0 %v4331, 120
        %v4619 = vpop.permute.xlu0 %4618
        %4620 = vrot.lane.b32.xlu0 %v4332, 120
        %v4621 = vpop.permute.xlu0 %4620
        %4622 = vrot.lane.b32.xlu0 %v4335, 120
        %v4623 = vpop.permute.xlu0 %4622
        %4624 = vrot.lane.b32.xlu0 %v4336, 120
        %v4625 = vpop.permute.xlu0 %4624
        %4626 = vrot.lane.b32.xlu0 %v4339, 120
        %v4627 = vpop.permute.xlu0 %4626
        %4628 = vrot.lane.b32.xlu0 %v4340, 120
        %v4629 = vpop.permute.xlu0 %4628
        %4630 = vrot.lane.b32.xlu0 %v4343, 120
        %v4631 = vpop.permute.xlu0 %4630
        %4632 = vrot.lane.b32.xlu0 %v4344, 120
        %v4633 = vpop.permute.xlu0 %4632
        %4634 = vrot.lane.b32.xlu0 %v4347, 120
        %v4635 = vpop.permute.xlu0 %4634
        %4636 = vrot.lane.b32.xlu0 %v4348, 120
        %v4637 = vpop.permute.xlu0 %4636
        %4638 = vrot.lane.b32.xlu0 %v4351, 120
        %v4639 = vpop.permute.xlu0 %4638
        %4640 = vrot.lane.b32.xlu0 %v4352, 120
        %v4641 = vpop.permute.xlu0 %4640
        %4642 = vrot.lane.b32.xlu0 %v4355, 120
        %v4643 = vpop.permute.xlu0 %4642
        %4644 = vrot.lane.b32.xlu0 %v4356, 120
        %v4645 = vpop.permute.xlu0 %4644
        %4646 = vrot.lane.b32.xlu0 %v4359, 120
        %v4647 = vpop.permute.xlu0 %4646
        %4648 = vrot.lane.b32.xlu0 %v4360, 120
        %v4649 = vpop.permute.xlu0 %4648
        %4650 = vrot.lane.b32.xlu0 %v4363, 120
        %v4651 = vpop.permute.xlu0 %4650
        %4652 = vrot.lane.b32.xlu0 %v4364, 120
        %v4653 = vpop.permute.xlu0 %4652
        %4654 = vrot.lane.b32.xlu0 %v4367, 120
        %v4655 = vpop.permute.xlu0 %4654
        %vm4656 = vcmask 982016
        %v4657 = vsel %vm4656, %v4465, %v4467
        %v4658 = vsel %vm4656, %v4469, %v4471
        %v4659 = vsel %vm4656, %v4473, %v4475
        %v4660 = vsel %vm4656, %v4477, %v4479
        %v4661 = vsel %vm4656, %v4481, %v4483
        %v4662 = vsel %vm4656, %v4485, %v4487
        %v4663 = vsel %vm4656, %v4489, %v4491
        %v4664 = vsel %vm4656, %v4493, %v4495
        %v4665 = vsel %vm4656, %v4497, %v4499
        %v4666 = vsel %vm4656, %v4501, %v4503
        %v4667 = vsel %vm4656, %v4505, %v4507
        %v4668 = vsel %vm4656, %v4509, %v4511
        %v4669 = vsel %vm4656, %v4513, %v4515
        %v4670 = vsel %vm4656, %v4517, %v4519
        %v4671 = vsel %vm4656, %v4521, %v4523
        %v4672 = vsel %vm4656, %v4525, %v4527
        %v4673 = vsel %vm4656, %v4529, %v4531
        %v4674 = vsel %vm4656, %v4533, %v4535
        %v4675 = vsel %vm4656, %v4537, %v4539
        %v4676 = vsel %vm4656, %v4541, %v4543
        %v4677 = vsel %vm4656, %v4545, %v4547
        %v4678 = vsel %vm4656, %v4549, %v4551
        %v4679 = vsel %vm4656, %v4553, %v4555
        %v4680 = vsel %vm4656, %v4557, %v4559
        %v4681 = vsel %vm4656, %v4561, %v4563
        %v4682 = vsel %vm4656, %v4565, %v4567
        %v4683 = vsel %vm4656, %v4569, %v4571
        %v4684 = vsel %vm4656, %v4573, %v4575
        %v4685 = vsel %vm4656, %v4577, %v4579
        %v4686 = vsel %vm4656, %v4581, %v4583
        %v4687 = vsel %vm4656, %v4585, %v4587
        %v4688 = vsel %vm4656, %v4589, %v4591
        %v4689 = vsel %vm4656, %v4593, %v4595
        %v4690 = vsel %vm4656, %v4597, %v4599
        %v4691 = vsel %vm4656, %v4601, %v4603
        %v4692 = vsel %vm4656, %v4605, %v4607
        %v4693 = vsel %vm4656, %v4609, %v4611
        %v4694 = vsel %vm4656, %v4613, %v4615
        %v4695 = vsel %vm4656, %v4617, %v4619
        %v4696 = vsel %vm4656, %v4621, %v4623
        %v4697 = vsel %vm4656, %v4625, %v4627
        %v4698 = vsel %vm4656, %v4629, %v4631
        %v4699 = vsel %vm4656, %v4633, %v4635
        %v4700 = vsel %vm4656, %v4637, %v4639
        %v4701 = vsel %vm4656, %v4641, %v4643
        %v4702 = vsel %vm4656, %v4645, %v4647
        %v4703 = vsel %vm4656, %v4649, %v4651
        %v4704 = vsel %vm4656, %v4653, %v4655
        %v4801 = vmax.f32 %v4175, %v4657
        %v4802 = vmax.f32 %v4179, %v4467
        %v4803 = vmax.f32 %v4180, %v4658
        %v4804 = vmax.f32 %v4183, %v4471
        %v4805 = vmax.f32 %v4184, %v4659
        %v4806 = vmax.f32 %v4187, %v4475
        %v4807 = vmax.f32 %v4188, %v4660
        %v4808 = vmax.f32 %v4191, %v4479
        %v4809 = vmax.f32 %v4192, %v4661
        %v4810 = vmax.f32 %v4195, %v4483
        %v4811 = vmax.f32 %v4196, %v4662
        %v4812 = vmax.f32 %v4199, %v4487
        %v4813 = vmax.f32 %v4200, %v4663
        %v4814 = vmax.f32 %v4203, %v4491
        %v4815 = vmax.f32 %v4204, %v4664
        %v4816 = vmax.f32 %v4207, %v4495
        %v4817 = vmax.f32 %v4208, %v4665
        %v4818 = vmax.f32 %v4211, %v4499
        %v4819 = vmax.f32 %v4212, %v4666
        %v4820 = vmax.f32 %v4215, %v4503
        %v4821 = vmax.f32 %v4216, %v4667
        %v4822 = vmax.f32 %v4219, %v4507
        %v4823 = vmax.f32 %v4220, %v4668
        %v4824 = vmax.f32 %v4223, %v4511
        %v4825 = vmax.f32 %v4224, %v4669
        %v4826 = vmax.f32 %v4227, %v4515
        %v4827 = vmax.f32 %v4228, %v4670
        %v4828 = vmax.f32 %v4231, %v4519
        %v4829 = vmax.f32 %v4232, %v4671
        %v4830 = vmax.f32 %v4235, %v4523
        %v4831 = vmax.f32 %v4236, %v4672
        %v4832 = vmax.f32 %v4239, %v4527
        %v4833 = vmax.f32 %v4240, %v4673
        %v4834 = vmax.f32 %v4243, %v4531
        %v4835 = vmax.f32 %v4244, %v4674
        %v4836 = vmax.f32 %v4247, %v4535
        %v4837 = vmax.f32 %v4248, %v4675
        %v4838 = vmax.f32 %v4251, %v4539
        %v4839 = vmax.f32 %v4252, %v4676
        %v4840 = vmax.f32 %v4255, %v4543
        %v4841 = vmax.f32 %v4256, %v4677
        %v4842 = vmax.f32 %v4259, %v4547
        %v4843 = vmax.f32 %v4260, %v4678
        %v4844 = vmax.f32 %v4263, %v4551
        %v4845 = vmax.f32 %v4264, %v4679
        %v4846 = vmax.f32 %v4267, %v4555
        %v4847 = vmax.f32 %v4268, %v4680
        %v4848 = vmax.f32 %v4271, %v4559
        %v4849 = vmax.f32 %v4272, %v4681
        %v4850 = vmax.f32 %v4275, %v4563
        %v4851 = vmax.f32 %v4276, %v4682
        %v4852 = vmax.f32 %v4279, %v4567
        %v4853 = vmax.f32 %v4280, %v4683
        %v4854 = vmax.f32 %v4283, %v4571
        %v4855 = vmax.f32 %v4284, %v4684
        %v4856 = vmax.f32 %v4287, %v4575
        %v4857 = vmax.f32 %v4288, %v4685
        %v4858 = vmax.f32 %v4291, %v4579
        %v4859 = vmax.f32 %v4292, %v4686
        %v4860 = vmax.f32 %v4295, %v4583
        %v4861 = vmax.f32 %v4296, %v4687
        %v4862 = vmax.f32 %v4299, %v4587
        %v4863 = vmax.f32 %v4300, %v4688
        %v4864 = vmax.f32 %v4303, %v4591
        %v4865 = vmax.f32 %v4304, %v4689
        %v4866 = vmax.f32 %v4307, %v4595
        %v4867 = vmax.f32 %v4308, %v4690
        %v4868 = vmax.f32 %v4311, %v4599
        %v4869 = vmax.f32 %v4312, %v4691
        %v4870 = vmax.f32 %v4315, %v4603
        %v4871 = vmax.f32 %v4316, %v4692
        %v4872 = vmax.f32 %v4319, %v4607
        %v4873 = vmax.f32 %v4320, %v4693
        %v4874 = vmax.f32 %v4323, %v4611
        %v4875 = vmax.f32 %v4324, %v4694
        %v4876 = vmax.f32 %v4327, %v4615
        %v4877 = vmax.f32 %v4328, %v4695
        %v4878 = vmax.f32 %v4331, %v4619
        %v4879 = vmax.f32 %v4332, %v4696
        %v4880 = vmax.f32 %v4335, %v4623
        %v4881 = vmax.f32 %v4336, %v4697
        %v4882 = vmax.f32 %v4339, %v4627
        %v4883 = vmax.f32 %v4340, %v4698
        %v4884 = vmax.f32 %v4343, %v4631
        %v4885 = vmax.f32 %v4344, %v4699
        %v4886 = vmax.f32 %v4347, %v4635
        %v4887 = vmax.f32 %v4348, %v4700
        %v4888 = vmax.f32 %v4351, %v4639
        %v4889 = vmax.f32 %v4352, %v4701
        %v4890 = vmax.f32 %v4355, %v4643
        %v4891 = vmax.f32 %v4356, %v4702
        %v4892 = vmax.f32 %v4359, %v4647
        %v4893 = vmax.f32 %v4360, %v4703
        %v4894 = vmax.f32 %v4363, %v4651
        %v4895 = vmax.f32 %v4364, %v4704
        %v4896 = vmax.f32 %v4367, %v4655
        %4961 = vrot.lane.b32.xlu0 %v4809, 56
        %v4962 = vpop.permute.xlu0 %4961
        %4963 = vrot.lane.b32.xlu0 %v4810, 56
        %v4964 = vpop.permute.xlu0 %4963
        %4965 = vrot.lane.b32.xlu0 %v4811, 56
        %v4966 = vpop.permute.xlu0 %4965
        %4967 = vrot.lane.b32.xlu0 %v4812, 56
        %v4968 = vpop.permute.xlu0 %4967
        %4969 = vrot.lane.b32.xlu0 %v4813, 56
        %v4970 = vpop.permute.xlu0 %4969
        %4971 = vrot.lane.b32.xlu0 %v4814, 56
        %v4972 = vpop.permute.xlu0 %4971
        %4973 = vrot.lane.b32.xlu0 %v4815, 56
        %v4974 = vpop.permute.xlu0 %4973
        %4975 = vrot.lane.b32.xlu0 %v4816, 56
        %v4976 = vpop.permute.xlu0 %4975
        %4977 = vrot.lane.b32.xlu0 %v4817, 56
        %v4978 = vpop.permute.xlu0 %4977
        %4979 = vrot.lane.b32.xlu0 %v4818, 56
        %v4980 = vpop.permute.xlu0 %4979
        %4981 = vrot.lane.b32.xlu0 %v4819, 56
        %v4982 = vpop.permute.xlu0 %4981
        %4983 = vrot.lane.b32.xlu0 %v4820, 56
        %v4984 = vpop.permute.xlu0 %4983
        %4985 = vrot.lane.b32.xlu0 %v4821, 56
        %v4986 = vpop.permute.xlu0 %4985
        %4987 = vrot.lane.b32.xlu0 %v4822, 56
        %v4988 = vpop.permute.xlu0 %4987
        %4989 = vrot.lane.b32.xlu0 %v4823, 56
        %v4990 = vpop.permute.xlu0 %4989
        %4991 = vrot.lane.b32.xlu0 %v4824, 56
        %v4992 = vpop.permute.xlu0 %4991
        %4993 = vrot.lane.b32.xlu0 %v4825, 56
        %v4994 = vpop.permute.xlu0 %4993
        %4995 = vrot.lane.b32.xlu0 %v4826, 56
        %v4996 = vpop.permute.xlu0 %4995
        %4997 = vrot.lane.b32.xlu0 %v4827, 56
        %v4998 = vpop.permute.xlu0 %4997
        %4999 = vrot.lane.b32.xlu0 %v4828, 56
        %v5000 = vpop.permute.xlu0 %4999
        %5001 = vrot.lane.b32.xlu0 %v4829, 56
        %v5002 = vpop.permute.xlu0 %5001
        %5003 = vrot.lane.b32.xlu0 %v4830, 56
        %v5004 = vpop.permute.xlu0 %5003
        %5005 = vrot.lane.b32.xlu0 %v4831, 56
        %v5006 = vpop.permute.xlu0 %5005
        %5007 = vrot.lane.b32.xlu0 %v4832, 56
        %v5008 = vpop.permute.xlu0 %5007
        %5009 = vrot.lane.b32.xlu0 %v4833, 56
        %v5010 = vpop.permute.xlu0 %5009
        %5011 = vrot.lane.b32.xlu0 %v4834, 56
        %v5012 = vpop.permute.xlu0 %5011
        %5013 = vrot.lane.b32.xlu0 %v4835, 56
        %v5014 = vpop.permute.xlu0 %5013
        %5015 = vrot.lane.b32.xlu0 %v4836, 56
        %v5016 = vpop.permute.xlu0 %5015
        %5017 = vrot.lane.b32.xlu0 %v4837, 56
        %v5018 = vpop.permute.xlu0 %5017
        %5019 = vrot.lane.b32.xlu0 %v4838, 56
        %v5020 = vpop.permute.xlu0 %5019
        %5021 = vrot.lane.b32.xlu0 %v4839, 56
        %v5022 = vpop.permute.xlu0 %5021
        %5023 = vrot.lane.b32.xlu0 %v4840, 56
        %v5024 = vpop.permute.xlu0 %5023
        %5025 = vrot.lane.b32.xlu0 %v4841, 56
        %v5026 = vpop.permute.xlu0 %5025
        %5027 = vrot.lane.b32.xlu0 %v4842, 56
        %v5028 = vpop.permute.xlu0 %5027
        %5029 = vrot.lane.b32.xlu0 %v4843, 56
        %v5030 = vpop.permute.xlu0 %5029
        %5031 = vrot.lane.b32.xlu0 %v4844, 56
        %v5032 = vpop.permute.xlu0 %5031
        %5033 = vrot.lane.b32.xlu0 %v4845, 56
        %v5034 = vpop.permute.xlu0 %5033
        %5035 = vrot.lane.b32.xlu0 %v4846, 56
        %v5036 = vpop.permute.xlu0 %5035
        %5037 = vrot.lane.b32.xlu0 %v4847, 56
        %v5038 = vpop.permute.xlu0 %5037
        %5039 = vrot.lane.b32.xlu0 %v4848, 56
        %v5040 = vpop.permute.xlu0 %5039
        %5041 = vrot.lane.b32.xlu0 %v4849, 56
        %v5042 = vpop.permute.xlu0 %5041
        %5043 = vrot.lane.b32.xlu0 %v4850, 56
        %v5044 = vpop.permute.xlu0 %5043
        %5045 = vrot.lane.b32.xlu0 %v4851, 56
        %v5046 = vpop.permute.xlu0 %5045
        %5047 = vrot.lane.b32.xlu0 %v4852, 56
        %v5048 = vpop.permute.xlu0 %5047
        %5049 = vrot.lane.b32.xlu0 %v4853, 56
        %v5050 = vpop.permute.xlu0 %5049
        %5051 = vrot.lane.b32.xlu0 %v4854, 56
        %v5052 = vpop.permute.xlu0 %5051
        %5053 = vrot.lane.b32.xlu0 %v4855, 56
        %v5054 = vpop.permute.xlu0 %5053
        %5055 = vrot.lane.b32.xlu0 %v4856, 56
        %v5056 = vpop.permute.xlu0 %5055
        %5057 = vrot.lane.b32.xlu0 %v4857, 56
        %v5058 = vpop.permute.xlu0 %5057
        %5059 = vrot.lane.b32.xlu0 %v4858, 56
        %v5060 = vpop.permute.xlu0 %5059
        %5061 = vrot.lane.b32.xlu0 %v4859, 56
        %v5062 = vpop.permute.xlu0 %5061
        %5063 = vrot.lane.b32.xlu0 %v4860, 56
        %v5064 = vpop.permute.xlu0 %5063
        %5065 = vrot.lane.b32.xlu0 %v4861, 56
        %v5066 = vpop.permute.xlu0 %5065
        %5067 = vrot.lane.b32.xlu0 %v4862, 56
        %v5068 = vpop.permute.xlu0 %5067
        %5069 = vrot.lane.b32.xlu0 %v4863, 56
        %v5070 = vpop.permute.xlu0 %5069
        %5071 = vrot.lane.b32.xlu0 %v4864, 56
        %v5072 = vpop.permute.xlu0 %5071
        %5073 = vrot.lane.b32.xlu0 %v4865, 56
        %v5074 = vpop.permute.xlu0 %5073
        %5075 = vrot.lane.b32.xlu0 %v4866, 56
        %v5076 = vpop.permute.xlu0 %5075
        %5077 = vrot.lane.b32.xlu0 %v4867, 56
        %v5078 = vpop.permute.xlu0 %5077
        %5079 = vrot.lane.b32.xlu0 %v4868, 56
        %v5080 = vpop.permute.xlu0 %5079
        %5081 = vrot.lane.b32.xlu0 %v4869, 56
        %v5082 = vpop.permute.xlu0 %5081
        %5083 = vrot.lane.b32.xlu0 %v4870, 56
        %v5084 = vpop.permute.xlu0 %5083
        %5085 = vrot.lane.b32.xlu0 %v4871, 56
        %v5086 = vpop.permute.xlu0 %5085
        %5087 = vrot.lane.b32.xlu0 %v4872, 56
        %v5088 = vpop.permute.xlu0 %5087
        %v5089 = vsel %vm2230, %v4962, %v4964
        %v5090 = vsel %vm2230, %v4966, %v4968
        %v5091 = vsel %vm2230, %v4970, %v4972
        %v5092 = vsel %vm2230, %v4974, %v4976
        %v5093 = vsel %vm2230, %v4978, %v4980
        %v5094 = vsel %vm2230, %v4982, %v4984
        %v5095 = vsel %vm2230, %v4986, %v4988
        %v5096 = vsel %vm2230, %v4990, %v4992
        %v5097 = vsel %vm2230, %v4994, %v4996
        %v5098 = vsel %vm2230, %v4998, %v5000
        %v5099 = vsel %vm2230, %v5002, %v5004
        %v5100 = vsel %vm2230, %v5006, %v5008
        %v5101 = vsel %vm2230, %v5010, %v5012
        %v5102 = vsel %vm2230, %v5014, %v5016
        %v5103 = vsel %vm2230, %v5018, %v5020
        %v5104 = vsel %vm2230, %v5022, %v5024
        %v5105 = vsel %vm2230, %v5026, %v5028
        %v5106 = vsel %vm2230, %v5030, %v5032
        %v5107 = vsel %vm2230, %v5034, %v5036
        %v5108 = vsel %vm2230, %v5038, %v5040
        %v5109 = vsel %vm2230, %v5042, %v5044
        %v5110 = vsel %vm2230, %v5046, %v5048
        %v5111 = vsel %vm2230, %v5050, %v5052
        %v5112 = vsel %vm2230, %v5054, %v5056
        %v5113 = vsel %vm2230, %v5058, %v5060
        %v5114 = vsel %vm2230, %v5062, %v5064
        %v5115 = vsel %vm2230, %v5066, %v5068
        %v5116 = vsel %vm2230, %v5070, %v5072
        %v5117 = vsel %vm2230, %v5074, %v5076
        %v5118 = vsel %vm2230, %v5078, %v5080
        %v5119 = vsel %vm2230, %v5082, %v5084
        %v5120 = vsel %vm2230, %v5086, %v5088
        %5193 = vrot.lane.b32.xlu0 %v4817, 112
        %v5194 = vpop.permute.xlu0 %5193
        %5195 = vrot.lane.b32.xlu0 %v4818, 112
        %v5196 = vpop.permute.xlu0 %5195
        %5197 = vrot.lane.b32.xlu0 %v4819, 112
        %v5198 = vpop.permute.xlu0 %5197
        %5199 = vrot.lane.b32.xlu0 %v4820, 112
        %v5200 = vpop.permute.xlu0 %5199
        %5201 = vrot.lane.b32.xlu0 %v4821, 112
        %v5202 = vpop.permute.xlu0 %5201
        %5203 = vrot.lane.b32.xlu0 %v4822, 112
        %v5204 = vpop.permute.xlu0 %5203
        %5205 = vrot.lane.b32.xlu0 %v4823, 112
        %v5206 = vpop.permute.xlu0 %5205
        %5207 = vrot.lane.b32.xlu0 %v4824, 112
        %v5208 = vpop.permute.xlu0 %5207
        %5209 = vrot.lane.b32.xlu0 %v4825, 112
        %v5210 = vpop.permute.xlu0 %5209
        %5211 = vrot.lane.b32.xlu0 %v4826, 112
        %v5212 = vpop.permute.xlu0 %5211
        %5213 = vrot.lane.b32.xlu0 %v4827, 112
        %v5214 = vpop.permute.xlu0 %5213
        %5215 = vrot.lane.b32.xlu0 %v4828, 112
        %v5216 = vpop.permute.xlu0 %5215
        %5217 = vrot.lane.b32.xlu0 %v4829, 112
        %v5218 = vpop.permute.xlu0 %5217
        %5219 = vrot.lane.b32.xlu0 %v4830, 112
        %v5220 = vpop.permute.xlu0 %5219
        %5221 = vrot.lane.b32.xlu0 %v4831, 112
        %v5222 = vpop.permute.xlu0 %5221
        %5223 = vrot.lane.b32.xlu0 %v4832, 112
        %v5224 = vpop.permute.xlu0 %5223
        %5225 = vrot.lane.b32.xlu0 %v4833, 112
        %v5226 = vpop.permute.xlu0 %5225
        %5227 = vrot.lane.b32.xlu0 %v4834, 112
        %v5228 = vpop.permute.xlu0 %5227
        %5229 = vrot.lane.b32.xlu0 %v4835, 112
        %v5230 = vpop.permute.xlu0 %5229
        %5231 = vrot.lane.b32.xlu0 %v4836, 112
        %v5232 = vpop.permute.xlu0 %5231
        %5233 = vrot.lane.b32.xlu0 %v4837, 112
        %v5234 = vpop.permute.xlu0 %5233
        %5235 = vrot.lane.b32.xlu0 %v4838, 112
        %v5236 = vpop.permute.xlu0 %5235
        %5237 = vrot.lane.b32.xlu0 %v4839, 112
        %v5238 = vpop.permute.xlu0 %5237
        %5239 = vrot.lane.b32.xlu0 %v4840, 112
        %v5240 = vpop.permute.xlu0 %5239
        %5241 = vrot.lane.b32.xlu0 %v4841, 112
        %v5242 = vpop.permute.xlu0 %5241
        %5243 = vrot.lane.b32.xlu0 %v4842, 112
        %v5244 = vpop.permute.xlu0 %5243
        %5245 = vrot.lane.b32.xlu0 %v4843, 112
        %v5246 = vpop.permute.xlu0 %5245
        %5247 = vrot.lane.b32.xlu0 %v4844, 112
        %v5248 = vpop.permute.xlu0 %5247
        %5249 = vrot.lane.b32.xlu0 %v4845, 112
        %v5250 = vpop.permute.xlu0 %5249
        %5251 = vrot.lane.b32.xlu0 %v4846, 112
        %v5252 = vpop.permute.xlu0 %5251
        %5253 = vrot.lane.b32.xlu0 %v4847, 112
        %v5254 = vpop.permute.xlu0 %5253
        %5255 = vrot.lane.b32.xlu0 %v4848, 112
        %v5256 = vpop.permute.xlu0 %5255
        %5257 = vrot.lane.b32.xlu0 %v4849, 112
        %v5258 = vpop.permute.xlu0 %5257
        %5259 = vrot.lane.b32.xlu0 %v4850, 112
        %v5260 = vpop.permute.xlu0 %5259
        %5261 = vrot.lane.b32.xlu0 %v4851, 112
        %v5262 = vpop.permute.xlu0 %5261
        %5263 = vrot.lane.b32.xlu0 %v4852, 112
        %v5264 = vpop.permute.xlu0 %5263
        %5265 = vrot.lane.b32.xlu0 %v4853, 112
        %v5266 = vpop.permute.xlu0 %5265
        %5267 = vrot.lane.b32.xlu0 %v4854, 112
        %v5268 = vpop.permute.xlu0 %5267
        %5269 = vrot.lane.b32.xlu0 %v4855, 112
        %v5270 = vpop.permute.xlu0 %5269
        %5271 = vrot.lane.b32.xlu0 %v4856, 112
        %v5272 = vpop.permute.xlu0 %5271
        %5273 = vrot.lane.b32.xlu0 %v4857, 112
        %v5274 = vpop.permute.xlu0 %5273
        %5275 = vrot.lane.b32.xlu0 %v4858, 112
        %v5276 = vpop.permute.xlu0 %5275
        %5277 = vrot.lane.b32.xlu0 %v4859, 112
        %v5278 = vpop.permute.xlu0 %5277
        %5279 = vrot.lane.b32.xlu0 %v4860, 112
        %v5280 = vpop.permute.xlu0 %5279
        %5281 = vrot.lane.b32.xlu0 %v4861, 112
        %v5282 = vpop.permute.xlu0 %5281
        %5283 = vrot.lane.b32.xlu0 %v4862, 112
        %v5284 = vpop.permute.xlu0 %5283
        %5285 = vrot.lane.b32.xlu0 %v4863, 112
        %v5286 = vpop.permute.xlu0 %5285
        %5287 = vrot.lane.b32.xlu0 %v4864, 112
        %v5288 = vpop.permute.xlu0 %5287
        %5289 = vrot.lane.b32.xlu0 %v4865, 112
        %v5290 = vpop.permute.xlu0 %5289
        %5291 = vrot.lane.b32.xlu0 %v4866, 112
        %v5292 = vpop.permute.xlu0 %5291
        %5293 = vrot.lane.b32.xlu0 %v4867, 112
        %v5294 = vpop.permute.xlu0 %5293
        %5295 = vrot.lane.b32.xlu0 %v4868, 112
        %v5296 = vpop.permute.xlu0 %5295
        %5297 = vrot.lane.b32.xlu0 %v4869, 112
        %v5298 = vpop.permute.xlu0 %5297
        %5299 = vrot.lane.b32.xlu0 %v4870, 112
        %v5300 = vpop.permute.xlu0 %5299
        %5301 = vrot.lane.b32.xlu0 %v4871, 112
        %v5302 = vpop.permute.xlu0 %5301
        %5303 = vrot.lane.b32.xlu0 %v4872, 112
        %v5304 = vpop.permute.xlu0 %5303
        %5305 = vrot.lane.b32.xlu0 %v4873, 112
        %v5306 = vpop.permute.xlu0 %5305
        %5307 = vrot.lane.b32.xlu0 %v4874, 112
        %v5308 = vpop.permute.xlu0 %5307
        %5309 = vrot.lane.b32.xlu0 %v4875, 112
        %v5310 = vpop.permute.xlu0 %5309
        %5311 = vrot.lane.b32.xlu0 %v4876, 112
        %v5312 = vpop.permute.xlu0 %5311
        %5313 = vrot.lane.b32.xlu0 %v4877, 112
        %v5314 = vpop.permute.xlu0 %5313
        %5315 = vrot.lane.b32.xlu0 %v4878, 112
        %v5316 = vpop.permute.xlu0 %5315
        %5317 = vrot.lane.b32.xlu0 %v4879, 112
        %v5318 = vpop.permute.xlu0 %5317
        %5319 = vrot.lane.b32.xlu0 %v4880, 112
        %v5320 = vpop.permute.xlu0 %5319
        %v5321 = vsel %vm2424, %v5194, %v5196
        %v5322 = vsel %vm2424, %v5198, %v5200
        %v5323 = vsel %vm2424, %v5202, %v5204
        %v5324 = vsel %vm2424, %v5206, %v5208
        %v5325 = vsel %vm2424, %v5210, %v5212
        %v5326 = vsel %vm2424, %v5214, %v5216
        %v5327 = vsel %vm2424, %v5218, %v5220
        %v5328 = vsel %vm2424, %v5222, %v5224
        %v5329 = vsel %vm2424, %v5226, %v5228
        %v5330 = vsel %vm2424, %v5230, %v5232
        %v5331 = vsel %vm2424, %v5234, %v5236
        %v5332 = vsel %vm2424, %v5238, %v5240
        %v5333 = vsel %vm2424, %v5242, %v5244
        %v5334 = vsel %vm2424, %v5246, %v5248
        %v5335 = vsel %vm2424, %v5250, %v5252
        %v5336 = vsel %vm2424, %v5254, %v5256
        %v5337 = vsel %vm2424, %v5258, %v5260
        %v5338 = vsel %vm2424, %v5262, %v5264
        %v5339 = vsel %vm2424, %v5266, %v5268
        %v5340 = vsel %vm2424, %v5270, %v5272
        %v5341 = vsel %vm2424, %v5274, %v5276
        %v5342 = vsel %vm2424, %v5278, %v5280
        %v5343 = vsel %vm2424, %v5282, %v5284
        %v5344 = vsel %vm2424, %v5286, %v5288
        %v5345 = vsel %vm2424, %v5290, %v5292
        %v5346 = vsel %vm2424, %v5294, %v5296
        %v5347 = vsel %vm2424, %v5298, %v5300
        %v5348 = vsel %vm2424, %v5302, %v5304
        %v5349 = vsel %vm2424, %v5306, %v5308
        %v5350 = vsel %vm2424, %v5310, %v5312
        %v5351 = vsel %vm2424, %v5314, %v5316
        %v5352 = vsel %vm2424, %v5318, %v5320
        %5457 = vrot.lane.b32.xlu0 %v4825, 40
        %v5458 = vpop.permute.xlu0 %5457
        %5459 = vrot.lane.b32.xlu0 %v4826, 40
        %v5460 = vpop.permute.xlu0 %5459
        %5461 = vrot.lane.b32.xlu0 %v4827, 40
        %v5462 = vpop.permute.xlu0 %5461
        %5463 = vrot.lane.b32.xlu0 %v4828, 40
        %v5464 = vpop.permute.xlu0 %5463
        %5465 = vrot.lane.b32.xlu0 %v4829, 40
        %v5466 = vpop.permute.xlu0 %5465
        %5467 = vrot.lane.b32.xlu0 %v4830, 40
        %v5468 = vpop.permute.xlu0 %5467
        %5469 = vrot.lane.b32.xlu0 %v4831, 40
        %v5470 = vpop.permute.xlu0 %5469
        %5471 = vrot.lane.b32.xlu0 %v4832, 40
        %v5472 = vpop.permute.xlu0 %5471
        %5473 = vrot.lane.b32.xlu0 %v4833, 40
        %v5474 = vpop.permute.xlu0 %5473
        %5475 = vrot.lane.b32.xlu0 %v4834, 40
        %v5476 = vpop.permute.xlu0 %5475
        %5477 = vrot.lane.b32.xlu0 %v4835, 40
        %v5478 = vpop.permute.xlu0 %5477
        %5479 = vrot.lane.b32.xlu0 %v4836, 40
        %v5480 = vpop.permute.xlu0 %5479
        %5481 = vrot.lane.b32.xlu0 %v4837, 40
        %v5482 = vpop.permute.xlu0 %5481
        %5483 = vrot.lane.b32.xlu0 %v4838, 40
        %v5484 = vpop.permute.xlu0 %5483
        %5485 = vrot.lane.b32.xlu0 %v4839, 40
        %v5486 = vpop.permute.xlu0 %5485
        %5487 = vrot.lane.b32.xlu0 %v4840, 40
        %v5488 = vpop.permute.xlu0 %5487
        %5489 = vrot.lane.b32.xlu0 %v4841, 40
        %v5490 = vpop.permute.xlu0 %5489
        %5491 = vrot.lane.b32.xlu0 %v4842, 40
        %v5492 = vpop.permute.xlu0 %5491
        %5493 = vrot.lane.b32.xlu0 %v4843, 40
        %v5494 = vpop.permute.xlu0 %5493
        %5495 = vrot.lane.b32.xlu0 %v4844, 40
        %v5496 = vpop.permute.xlu0 %5495
        %5497 = vrot.lane.b32.xlu0 %v4845, 40
        %v5498 = vpop.permute.xlu0 %5497
        %5499 = vrot.lane.b32.xlu0 %v4846, 40
        %v5500 = vpop.permute.xlu0 %5499
        %5501 = vrot.lane.b32.xlu0 %v4847, 40
        %v5502 = vpop.permute.xlu0 %5501
        %5503 = vrot.lane.b32.xlu0 %v4848, 40
        %v5504 = vpop.permute.xlu0 %5503
        %5505 = vrot.lane.b32.xlu0 %v4849, 40
        %v5506 = vpop.permute.xlu0 %5505
        %5507 = vrot.lane.b32.xlu0 %v4850, 40
        %v5508 = vpop.permute.xlu0 %5507
        %5509 = vrot.lane.b32.xlu0 %v4851, 40
        %v5510 = vpop.permute.xlu0 %5509
        %5511 = vrot.lane.b32.xlu0 %v4852, 40
        %v5512 = vpop.permute.xlu0 %5511
        %5513 = vrot.lane.b32.xlu0 %v4853, 40
        %v5514 = vpop.permute.xlu0 %5513
        %5515 = vrot.lane.b32.xlu0 %v4854, 40
        %v5516 = vpop.permute.xlu0 %5515
        %5517 = vrot.lane.b32.xlu0 %v4855, 40
        %v5518 = vpop.permute.xlu0 %5517
        %5519 = vrot.lane.b32.xlu0 %v4856, 40
        %v5520 = vpop.permute.xlu0 %5519
        %5521 = vrot.lane.b32.xlu0 %v4857, 40
        %v5522 = vpop.permute.xlu0 %5521
        %5523 = vrot.lane.b32.xlu0 %v4858, 40
        %v5524 = vpop.permute.xlu0 %5523
        %5525 = vrot.lane.b32.xlu0 %v4859, 40
        %v5526 = vpop.permute.xlu0 %5525
        %5527 = vrot.lane.b32.xlu0 %v4860, 40
        %v5528 = vpop.permute.xlu0 %5527
        %5529 = vrot.lane.b32.xlu0 %v4861, 40
        %v5530 = vpop.permute.xlu0 %5529
        %5531 = vrot.lane.b32.xlu0 %v4862, 40
        %v5532 = vpop.permute.xlu0 %5531
        %5533 = vrot.lane.b32.xlu0 %v4863, 40
        %v5534 = vpop.permute.xlu0 %5533
        %5535 = vrot.lane.b32.xlu0 %v4864, 40
        %v5536 = vpop.permute.xlu0 %5535
        %5537 = vrot.lane.b32.xlu0 %v4865, 40
        %v5538 = vpop.permute.xlu0 %5537
        %5539 = vrot.lane.b32.xlu0 %v4866, 40
        %v5540 = vpop.permute.xlu0 %5539
        %5541 = vrot.lane.b32.xlu0 %v4867, 40
        %v5542 = vpop.permute.xlu0 %5541
        %5543 = vrot.lane.b32.xlu0 %v4868, 40
        %v5544 = vpop.permute.xlu0 %5543
        %5545 = vrot.lane.b32.xlu0 %v4869, 40
        %v5546 = vpop.permute.xlu0 %5545
        %5547 = vrot.lane.b32.xlu0 %v4870, 40
        %v5548 = vpop.permute.xlu0 %5547
        %5549 = vrot.lane.b32.xlu0 %v4871, 40
        %v5550 = vpop.permute.xlu0 %5549
        %5551 = vrot.lane.b32.xlu0 %v4872, 40
        %v5552 = vpop.permute.xlu0 %5551
        %5553 = vrot.lane.b32.xlu0 %v4873, 40
        %v5554 = vpop.permute.xlu0 %5553
        %5555 = vrot.lane.b32.xlu0 %v4874, 40
        %v5556 = vpop.permute.xlu0 %5555
        %5557 = vrot.lane.b32.xlu0 %v4875, 40
        %v5558 = vpop.permute.xlu0 %5557
        %5559 = vrot.lane.b32.xlu0 %v4876, 40
        %v5560 = vpop.permute.xlu0 %5559
        %5561 = vrot.lane.b32.xlu0 %v4877, 40
        %v5562 = vpop.permute.xlu0 %5561
        %5563 = vrot.lane.b32.xlu0 %v4878, 40
        %v5564 = vpop.permute.xlu0 %5563
        %5565 = vrot.lane.b32.xlu0 %v4879, 40
        %v5566 = vpop.permute.xlu0 %5565
        %5567 = vrot.lane.b32.xlu0 %v4880, 40
        %v5568 = vpop.permute.xlu0 %5567
        %5569 = vrot.lane.b32.xlu0 %v4881, 40
        %v5570 = vpop.permute.xlu0 %5569
        %5571 = vrot.lane.b32.xlu0 %v4882, 40
        %v5572 = vpop.permute.xlu0 %5571
        %5573 = vrot.lane.b32.xlu0 %v4883, 40
        %v5574 = vpop.permute.xlu0 %5573
        %5575 = vrot.lane.b32.xlu0 %v4884, 40
        %v5576 = vpop.permute.xlu0 %5575
        %5577 = vrot.lane.b32.xlu0 %v4885, 40
        %v5578 = vpop.permute.xlu0 %5577
        %5579 = vrot.lane.b32.xlu0 %v4886, 40
        %v5580 = vpop.permute.xlu0 %5579
        %5581 = vrot.lane.b32.xlu0 %v4887, 40
        %v5582 = vpop.permute.xlu0 %5581
        %5583 = vrot.lane.b32.xlu0 %v4888, 40
        %v5584 = vpop.permute.xlu0 %5583
        %vm5585 = vcmask 326656
        %v5586 = vsel %vm5585, %v5458, %v5460
        %v5587 = vsel %vm5585, %v5462, %v5464
        %v5588 = vsel %vm5585, %v5466, %v5468
        %v5589 = vsel %vm5585, %v5470, %v5472
        %v5590 = vsel %vm5585, %v5474, %v5476
        %v5591 = vsel %vm5585, %v5478, %v5480
        %v5592 = vsel %vm5585, %v5482, %v5484
        %v5593 = vsel %vm5585, %v5486, %v5488
        %v5594 = vsel %vm5585, %v5490, %v5492
        %v5595 = vsel %vm5585, %v5494, %v5496
        %v5596 = vsel %vm5585, %v5498, %v5500
        %v5597 = vsel %vm5585, %v5502, %v5504
        %v5598 = vsel %vm5585, %v5506, %v5508
        %v5599 = vsel %vm5585, %v5510, %v5512
        %v5600 = vsel %vm5585, %v5514, %v5516
        %v5601 = vsel %vm5585, %v5518, %v5520
        %v5602 = vsel %vm5585, %v5522, %v5524
        %v5603 = vsel %vm5585, %v5526, %v5528
        %v5604 = vsel %vm5585, %v5530, %v5532
        %v5605 = vsel %vm5585, %v5534, %v5536
        %v5606 = vsel %vm5585, %v5538, %v5540
        %v5607 = vsel %vm5585, %v5542, %v5544
        %v5608 = vsel %vm5585, %v5546, %v5548
        %v5609 = vsel %vm5585, %v5550, %v5552
        %v5610 = vsel %vm5585, %v5554, %v5556
        %v5611 = vsel %vm5585, %v5558, %v5560
        %v5612 = vsel %vm5585, %v5562, %v5564
        %v5613 = vsel %vm5585, %v5566, %v5568
        %v5614 = vsel %vm5585, %v5570, %v5572
        %v5615 = vsel %vm5585, %v5574, %v5576
        %v5616 = vsel %vm5585, %v5578, %v5580
        %v5617 = vsel %vm5585, %v5582, %v5584
        %5690 = vrot.lane.b32.xlu0 %v4833, 96
        %v5691 = vpop.permute.xlu0 %5690
        %5692 = vrot.lane.b32.xlu0 %v4834, 96
        %v5693 = vpop.permute.xlu0 %5692
        %5694 = vrot.lane.b32.xlu0 %v4835, 96
        %v5695 = vpop.permute.xlu0 %5694
        %5696 = vrot.lane.b32.xlu0 %v4836, 96
        %v5697 = vpop.permute.xlu0 %5696
        %5698 = vrot.lane.b32.xlu0 %v4837, 96
        %v5699 = vpop.permute.xlu0 %5698
        %5700 = vrot.lane.b32.xlu0 %v4838, 96
        %v5701 = vpop.permute.xlu0 %5700
        %5702 = vrot.lane.b32.xlu0 %v4839, 96
        %v5703 = vpop.permute.xlu0 %5702
        %5704 = vrot.lane.b32.xlu0 %v4840, 96
        %v5705 = vpop.permute.xlu0 %5704
        %5706 = vrot.lane.b32.xlu0 %v4841, 96
        %v5707 = vpop.permute.xlu0 %5706
        %5708 = vrot.lane.b32.xlu0 %v4842, 96
        %v5709 = vpop.permute.xlu0 %5708
        %5710 = vrot.lane.b32.xlu0 %v4843, 96
        %v5711 = vpop.permute.xlu0 %5710
        %5712 = vrot.lane.b32.xlu0 %v4844, 96
        %v5713 = vpop.permute.xlu0 %5712
        %5714 = vrot.lane.b32.xlu0 %v4845, 96
        %v5715 = vpop.permute.xlu0 %5714
        %5716 = vrot.lane.b32.xlu0 %v4846, 96
        %v5717 = vpop.permute.xlu0 %5716
        %5718 = vrot.lane.b32.xlu0 %v4847, 96
        %v5719 = vpop.permute.xlu0 %5718
        %5720 = vrot.lane.b32.xlu0 %v4848, 96
        %v5721 = vpop.permute.xlu0 %5720
        %5722 = vrot.lane.b32.xlu0 %v4849, 96
        %v5723 = vpop.permute.xlu0 %5722
        %5724 = vrot.lane.b32.xlu0 %v4850, 96
        %v5725 = vpop.permute.xlu0 %5724
        %5726 = vrot.lane.b32.xlu0 %v4851, 96
        %v5727 = vpop.permute.xlu0 %5726
        %5728 = vrot.lane.b32.xlu0 %v4852, 96
        %v5729 = vpop.permute.xlu0 %5728
        %5730 = vrot.lane.b32.xlu0 %v4853, 96
        %v5731 = vpop.permute.xlu0 %5730
        %5732 = vrot.lane.b32.xlu0 %v4854, 96
        %v5733 = vpop.permute.xlu0 %5732
        %5734 = vrot.lane.b32.xlu0 %v4855, 96
        %v5735 = vpop.permute.xlu0 %5734
        %5736 = vrot.lane.b32.xlu0 %v4856, 96
        %v5737 = vpop.permute.xlu0 %5736
        %5738 = vrot.lane.b32.xlu0 %v4857, 96
        %v5739 = vpop.permute.xlu0 %5738
        %5740 = vrot.lane.b32.xlu0 %v4858, 96
        %v5741 = vpop.permute.xlu0 %5740
        %5742 = vrot.lane.b32.xlu0 %v4859, 96
        %v5743 = vpop.permute.xlu0 %5742
        %5744 = vrot.lane.b32.xlu0 %v4860, 96
        %v5745 = vpop.permute.xlu0 %5744
        %5746 = vrot.lane.b32.xlu0 %v4861, 96
        %v5747 = vpop.permute.xlu0 %5746
        %5748 = vrot.lane.b32.xlu0 %v4862, 96
        %v5749 = vpop.permute.xlu0 %5748
        %5750 = vrot.lane.b32.xlu0 %v4863, 96
        %v5751 = vpop.permute.xlu0 %5750
        %5752 = vrot.lane.b32.xlu0 %v4864, 96
        %v5753 = vpop.permute.xlu0 %5752
        %5754 = vrot.lane.b32.xlu0 %v4865, 96
        %v5755 = vpop.permute.xlu0 %5754
        %5756 = vrot.lane.b32.xlu0 %v4866, 96
        %v5757 = vpop.permute.xlu0 %5756
        %5758 = vrot.lane.b32.xlu0 %v4867, 96
        %v5759 = vpop.permute.xlu0 %5758
        %5760 = vrot.lane.b32.xlu0 %v4868, 96
        %v5761 = vpop.permute.xlu0 %5760
        %5762 = vrot.lane.b32.xlu0 %v4869, 96
        %v5763 = vpop.permute.xlu0 %5762
        %5764 = vrot.lane.b32.xlu0 %v4870, 96
        %v5765 = vpop.permute.xlu0 %5764
        %5766 = vrot.lane.b32.xlu0 %v4871, 96
        %v5767 = vpop.permute.xlu0 %5766
        %5768 = vrot.lane.b32.xlu0 %v4872, 96
        %v5769 = vpop.permute.xlu0 %5768
        %5770 = vrot.lane.b32.xlu0 %v4873, 96
        %v5771 = vpop.permute.xlu0 %5770
        %5772 = vrot.lane.b32.xlu0 %v4874, 96
        %v5773 = vpop.permute.xlu0 %5772
        %5774 = vrot.lane.b32.xlu0 %v4875, 96
        %v5775 = vpop.permute.xlu0 %5774
        %5776 = vrot.lane.b32.xlu0 %v4876, 96
        %v5777 = vpop.permute.xlu0 %5776
        %5778 = vrot.lane.b32.xlu0 %v4877, 96
        %v5779 = vpop.permute.xlu0 %5778
        %5780 = vrot.lane.b32.xlu0 %v4878, 96
        %v5781 = vpop.permute.xlu0 %5780
        %5782 = vrot.lane.b32.xlu0 %v4879, 96
        %v5783 = vpop.permute.xlu0 %5782
        %5784 = vrot.lane.b32.xlu0 %v4880, 96
        %v5785 = vpop.permute.xlu0 %5784
        %5786 = vrot.lane.b32.xlu0 %v4881, 96
        %v5787 = vpop.permute.xlu0 %5786
        %5788 = vrot.lane.b32.xlu0 %v4882, 96
        %v5789 = vpop.permute.xlu0 %5788
        %5790 = vrot.lane.b32.xlu0 %v4883, 96
        %v5791 = vpop.permute.xlu0 %5790
        %5792 = vrot.lane.b32.xlu0 %v4884, 96
        %v5793 = vpop.permute.xlu0 %5792
        %5794 = vrot.lane.b32.xlu0 %v4885, 96
        %v5795 = vpop.permute.xlu0 %5794
        %5796 = vrot.lane.b32.xlu0 %v4886, 96
        %v5797 = vpop.permute.xlu0 %5796
        %5798 = vrot.lane.b32.xlu0 %v4887, 96
        %v5799 = vpop.permute.xlu0 %5798
        %5800 = vrot.lane.b32.xlu0 %v4888, 96
        %v5801 = vpop.permute.xlu0 %5800
        %5802 = vrot.lane.b32.xlu0 %v4889, 96
        %v5803 = vpop.permute.xlu0 %5802
        %5804 = vrot.lane.b32.xlu0 %v4890, 96
        %v5805 = vpop.permute.xlu0 %5804
        %5806 = vrot.lane.b32.xlu0 %v4891, 96
        %v5807 = vpop.permute.xlu0 %5806
        %5808 = vrot.lane.b32.xlu0 %v4892, 96
        %v5809 = vpop.permute.xlu0 %5808
        %5810 = vrot.lane.b32.xlu0 %v4893, 96
        %v5811 = vpop.permute.xlu0 %5810
        %5812 = vrot.lane.b32.xlu0 %v4894, 96
        %v5813 = vpop.permute.xlu0 %5812
        %5814 = vrot.lane.b32.xlu0 %v4895, 96
        %v5815 = vpop.permute.xlu0 %5814
        %5816 = vrot.lane.b32.xlu0 %v4896, 96
        %v5817 = vpop.permute.xlu0 %5816
        %vm5818 = vcmask 785408
        %v5819 = vsel %vm5818, %v5691, %v5693
        %v5820 = vsel %vm5818, %v5695, %v5697
        %v5821 = vsel %vm5818, %v5699, %v5701
        %v5822 = vsel %vm5818, %v5703, %v5705
        %v5823 = vsel %vm5818, %v5707, %v5709
        %v5824 = vsel %vm5818, %v5711, %v5713
        %v5825 = vsel %vm5818, %v5715, %v5717
        %v5826 = vsel %vm5818, %v5719, %v5721
        %v5827 = vsel %vm5818, %v5723, %v5725
        %v5828 = vsel %vm5818, %v5727, %v5729
        %v5829 = vsel %vm5818, %v5731, %v5733
        %v5830 = vsel %vm5818, %v5735, %v5737
        %v5831 = vsel %vm5818, %v5739, %v5741
        %v5832 = vsel %vm5818, %v5743, %v5745
        %v5833 = vsel %vm5818, %v5747, %v5749
        %v5834 = vsel %vm5818, %v5751, %v5753
        %v5835 = vsel %vm5818, %v5755, %v5757
        %v5836 = vsel %vm5818, %v5759, %v5761
        %v5837 = vsel %vm5818, %v5763, %v5765
        %v5838 = vsel %vm5818, %v5767, %v5769
        %v5839 = vsel %vm5818, %v5771, %v5773
        %v5840 = vsel %vm5818, %v5775, %v5777
        %v5841 = vsel %vm5818, %v5779, %v5781
        %v5842 = vsel %vm5818, %v5783, %v5785
        %v5843 = vsel %vm5818, %v5787, %v5789
        %v5844 = vsel %vm5818, %v5791, %v5793
        %v5845 = vsel %vm5818, %v5795, %v5797
        %v5846 = vsel %vm5818, %v5799, %v5801
        %v5847 = vsel %vm5818, %v5803, %v5805
        %v5848 = vsel %vm5818, %v5807, %v5809
        %v5849 = vsel %vm5818, %v5811, %v5813
        %v5850 = vsel %vm5818, %v5815, %v5817
        %v5915 = vsel %vm2230, %v4802, %v4962
        %v5916 = vsel %vm2230, %v4804, %v4966
        %v5917 = vsel %vm2230, %v4806, %v4970
        %v5918 = vsel %vm2230, %v4808, %v4974
        %v5919 = vsel %vm2230, %v4810, %v4978
        %v5920 = vsel %vm2230, %v4812, %v4982
        %v5921 = vsel %vm2230, %v4814, %v4986
        %v5922 = vsel %vm2230, %v4816, %v4990
        %v5923 = vsel %vm2230, %v4818, %v4994
        %v5924 = vsel %vm2230, %v4820, %v4998
        %v5925 = vsel %vm2230, %v4822, %v5002
        %v5926 = vsel %vm2230, %v4824, %v5006
        %v5927 = vsel %vm2230, %v4826, %v5010
        %v5928 = vsel %vm2230, %v4828, %v5014
        %v5929 = vsel %vm2230, %v4830, %v5018
        %v5930 = vsel %vm2230, %v4832, %v5022
        %v5931 = vsel %vm2230, %v4834, %v5026
        %v5932 = vsel %vm2230, %v4836, %v5030
        %v5933 = vsel %vm2230, %v4838, %v5034
        %v5934 = vsel %vm2230, %v4840, %v5038
        %v5935 = vsel %vm2230, %v4842, %v5042
        %v5936 = vsel %vm2230, %v4844, %v5046
        %v5937 = vsel %vm2230, %v4846, %v5050
        %v5938 = vsel %vm2230, %v4848, %v5054
        %v5939 = vsel %vm2230, %v4850, %v5058
        %v5940 = vsel %vm2230, %v4852, %v5062
        %v5941 = vsel %vm2230, %v4854, %v5066
        %v5942 = vsel %vm2230, %v4856, %v5070
        %v5943 = vsel %vm2230, %v4858, %v5074
        %v5944 = vsel %vm2230, %v4860, %v5078
        %v5945 = vsel %vm2230, %v4862, %v5082
        %v5946 = vsel %vm2230, %v4864, %v5086
        %v5947 = vsel %vm2424, %v5089, %v5194
        %v5948 = vsel %vm2424, %v5090, %v5198
        %v5949 = vsel %vm2424, %v5091, %v5202
        %v5950 = vsel %vm2424, %v5092, %v5206
        %v5951 = vsel %vm2424, %v5093, %v5210
        %v5952 = vsel %vm2424, %v5094, %v5214
        %v5953 = vsel %vm2424, %v5095, %v5218
        %v5954 = vsel %vm2424, %v5096, %v5222
        %v5955 = vsel %vm2424, %v5097, %v5226
        %v5956 = vsel %vm2424, %v5098, %v5230
        %v5957 = vsel %vm2424, %v5099, %v5234
        %v5958 = vsel %vm2424, %v5100, %v5238
        %v5959 = vsel %vm2424, %v5101, %v5242
        %v5960 = vsel %vm2424, %v5102, %v5246
        %v5961 = vsel %vm2424, %v5103, %v5250
        %v5962 = vsel %vm2424, %v5104, %v5254
        %v5963 = vsel %vm2424, %v5105, %v5258
        %v5964 = vsel %vm2424, %v5106, %v5262
        %v5965 = vsel %vm2424, %v5107, %v5266
        %v5966 = vsel %vm2424, %v5108, %v5270
        %v5967 = vsel %vm2424, %v5109, %v5274
        %v5968 = vsel %vm2424, %v5110, %v5278
        %v5969 = vsel %vm2424, %v5111, %v5282
        %v5970 = vsel %vm2424, %v5112, %v5286
        %v5971 = vsel %vm2424, %v5113, %v5290
        %v5972 = vsel %vm2424, %v5114, %v5294
        %v5973 = vsel %vm2424, %v5115, %v5298
        %v5974 = vsel %vm2424, %v5116, %v5302
        %v5975 = vsel %vm2424, %v5117, %v5306
        %v5976 = vsel %vm2424, %v5118, %v5310
        %v5977 = vsel %vm2424, %v5119, %v5314
        %v5978 = vsel %vm2424, %v5120, %v5318
        %v5979 = vsel %vm5585, %v5196, %v5458
        %v5980 = vsel %vm5585, %v5200, %v5462
        %v5981 = vsel %vm5585, %v5204, %v5466
        %v5982 = vsel %vm5585, %v5208, %v5470
        %v5983 = vsel %vm5585, %v5212, %v5474
        %v5984 = vsel %vm5585, %v5216, %v5478
        %v5985 = vsel %vm5585, %v5220, %v5482
        %v5986 = vsel %vm5585, %v5224, %v5486
        %v5987 = vsel %vm5585, %v5228, %v5490
        %v5988 = vsel %vm5585, %v5232, %v5494
        %v5989 = vsel %vm5585, %v5236, %v5498
        %v5990 = vsel %vm5585, %v5240, %v5502
        %v5991 = vsel %vm5585, %v5244, %v5506
        %v5992 = vsel %vm5585, %v5248, %v5510
        %v5993 = vsel %vm5585, %v5252, %v5514
        %v5994 = vsel %vm5585, %v5256, %v5518
        %v5995 = vsel %vm5585, %v5260, %v5522
        %v5996 = vsel %vm5585, %v5264, %v5526
        %v5997 = vsel %vm5585, %v5268, %v5530
        %v5998 = vsel %vm5585, %v5272, %v5534
        %v5999 = vsel %vm5585, %v5276, %v5538
        %v6000 = vsel %vm5585, %v5280, %v5542
        %v6001 = vsel %vm5585, %v5284, %v5546
        %v6002 = vsel %vm5585, %v5288, %v5550
        %v6003 = vsel %vm5585, %v5292, %v5554
        %v6004 = vsel %vm5585, %v5296, %v5558
        %v6005 = vsel %vm5585, %v5300, %v5562
        %v6006 = vsel %vm5585, %v5304, %v5566
        %v6007 = vsel %vm5585, %v5308, %v5570
        %v6008 = vsel %vm5585, %v5312, %v5574
        %v6009 = vsel %vm5585, %v5316, %v5578
        %v6010 = vsel %vm5585, %v5320, %v5582
        %v6011 = vsel %vm5818, %v5586, %v5691
        %v6012 = vsel %vm5818, %v5587, %v5695
        %v6013 = vsel %vm5818, %v5588, %v5699
        %v6014 = vsel %vm5818, %v5589, %v5703
        %v6015 = vsel %vm5818, %v5590, %v5707
        %v6016 = vsel %vm5818, %v5591, %v5711
        %v6017 = vsel %vm5818, %v5592, %v5715
        %v6018 = vsel %vm5818, %v5593, %v5719
        %v6019 = vsel %vm5818, %v5594, %v5723
        %v6020 = vsel %vm5818, %v5595, %v5727
        %v6021 = vsel %vm5818, %v5596, %v5731
        %v6022 = vsel %vm5818, %v5597, %v5735
        %v6023 = vsel %vm5818, %v5598, %v5739
        %v6024 = vsel %vm5818, %v5599, %v5743
        %v6025 = vsel %vm5818, %v5600, %v5747
        %v6026 = vsel %vm5818, %v5601, %v5751
        %v6027 = vsel %vm5818, %v5602, %v5755
        %v6028 = vsel %vm5818, %v5603, %v5759
        %v6029 = vsel %vm5818, %v5604, %v5763
        %v6030 = vsel %vm5818, %v5605, %v5767
        %v6031 = vsel %vm5818, %v5606, %v5771
        %v6032 = vsel %vm5818, %v5607, %v5775
        %v6033 = vsel %vm5818, %v5608, %v5779
        %v6034 = vsel %vm5818, %v5609, %v5783
        %v6035 = vsel %vm5818, %v5610, %v5787
        %v6036 = vsel %vm5818, %v5611, %v5791
        %v6037 = vsel %vm5818, %v5612, %v5795
        %v6038 = vsel %vm5818, %v5613, %v5799
        %v6039 = vsel %vm5818, %v5614, %v5803
        %v6040 = vsel %vm5818, %v5615, %v5807
        %v6041 = vsel %vm5818, %v5616, %v5811
        %v6042 = vsel %vm5818, %v5617, %v5815
        %v6043 = vld [vmem:[%s3] sm:$0xff]
        %v6044 = vld [vmem:[%s3 + $0x8] sm:$0xff]
        %v6045 = vld [vmem:[%s3 + $0x10] sm:$0xff]
        %v6046 = vld [vmem:[%s3 + $0x18] sm:$0xff]
        %v6047 = vld [vmem:[%s3 + $0x20] sm:$0xff]
        %v6048 = vld [vmem:[%s3 + $0x28] sm:$0xff]
        %v6049 = vld [vmem:[%s3 + $0x30] sm:$0xff]
        %v6050 = vld [vmem:[%s3 + $0x38] sm:$0xff]
        %v6051 = vld [vmem:[%s3 + $0x40] sm:$0xff]
        %v6052 = vld [vmem:[%s3 + $0x48] sm:$0xff]
        %v6053 = vld [vmem:[%s3 + $0x50] sm:$0xff]
        %v6054 = vld [vmem:[%s3 + $0x58] sm:$0xff]
        %v6055 = vld [vmem:[%s3 + $0x60] sm:$0xff]
        %v6056 = vld [vmem:[%s3 + $0x68] sm:$0xff]
        %v6057 = vld [vmem:[%s3 + $0x70] sm:$0xff]
        %v6058 = vld [vmem:[%s3 + $0x78] sm:$0xff]
        %v6059 = vld [vmem:[%s3 + $0x80] sm:$0xff]
        %v6060 = vld [vmem:[%s3 + $0x88] sm:$0xff]
        %v6061 = vld [vmem:[%s3 + $0x90] sm:$0xff]
        %v6062 = vld [vmem:[%s3 + $0x98] sm:$0xff]
        %v6063 = vld [vmem:[%s3 + $0xa0] sm:$0xff]
        %v6064 = vld [vmem:[%s3 + $0xa8] sm:$0xff]
        %v6065 = vld [vmem:[%s3 + $0xb0] sm:$0xff]
        %v6066 = vld [vmem:[%s3 + $0xb8] sm:$0xff]
        %v6067 = vld [vmem:[%s3 + $0xc0] sm:$0xff]
        %v6068 = vld [vmem:[%s3 + $0xc8] sm:$0xff]
        %v6069 = vld [vmem:[%s3 + $0xd0] sm:$0xff]
        %v6070 = vld [vmem:[%s3 + $0xd8] sm:$0xff]
        %v6071 = vld [vmem:[%s3 + $0xe0] sm:$0xff]
        %v6072 = vld [vmem:[%s3 + $0xe8] sm:$0xff]
        %v6073 = vld [vmem:[%s3 + $0xf0] sm:$0xff]
        %v6074 = vld [vmem:[%s3 + $0xf8] sm:$0xff]
        %v6075 = vld [vmem:[%s3 + $0x100] sm:$0xff]
        %v6076 = vld [vmem:[%s3 + $0x108] sm:$0xff]
        %v6077 = vld [vmem:[%s3 + $0x110] sm:$0xff]
        %v6078 = vld [vmem:[%s3 + $0x118] sm:$0xff]
        %v6079 = vld [vmem:[%s3 + $0x120] sm:$0xff]
        %v6080 = vld [vmem:[%s3 + $0x128] sm:$0xff]
        %v6081 = vld [vmem:[%s3 + $0x130] sm:$0xff]
        %v6082 = vld [vmem:[%s3 + $0x138] sm:$0xff]
        %v6083 = vld [vmem:[%s3 + $0x140] sm:$0xff]
        %v6084 = vld [vmem:[%s3 + $0x148] sm:$0xff]
        %v6085 = vld [vmem:[%s3 + $0x150] sm:$0xff]
        %v6086 = vld [vmem:[%s3 + $0x158] sm:$0xff]
        %v6087 = vld [vmem:[%s3 + $0x160] sm:$0xff]
        %v6088 = vld [vmem:[%s3 + $0x168] sm:$0xff]
        %v6089 = vld [vmem:[%s3 + $0x170] sm:$0xff]
        %v6090 = vld [vmem:[%s3 + $0x178] sm:$0xff]
        %v6091 = vld [vmem:[%s3 + $0x180] sm:$0xff]
        %v6092 = vld [vmem:[%s3 + $0x188] sm:$0xff]
        %v6093 = vld [vmem:[%s3 + $0x190] sm:$0xff]
        %v6094 = vld [vmem:[%s3 + $0x198] sm:$0xff]
        %v6095 = vld [vmem:[%s3 + $0x1a0] sm:$0xff]
        %v6096 = vld [vmem:[%s3 + $0x1a8] sm:$0xff]
        %v6097 = vld [vmem:[%s3 + $0x1b0] sm:$0xff]
        %v6098 = vld [vmem:[%s3 + $0x1b8] sm:$0xff]
        %v6099 = vld [vmem:[%s3 + $0x1c0] sm:$0xff]
        %v6100 = vld [vmem:[%s3 + $0x1c8] sm:$0xff]
        %v6101 = vld [vmem:[%s3 + $0x1d0] sm:$0xff]
        %v6102 = vld [vmem:[%s3 + $0x1d8] sm:$0xff]
        %v6103 = vld [vmem:[%s3 + $0x1e0] sm:$0xff]
        %v6104 = vld [vmem:[%s3 + $0x1e8] sm:$0xff]
        %v6105 = vld [vmem:[%s3 + $0x1f0] sm:$0xff]
        %v6106 = vld [vmem:[%s3 + $0x1f8] sm:$0xff]
        %v6107 = vld [vmem:[%s3 + $0x200] sm:$0xff]
        %v6108 = vld [vmem:[%s3 + $0x208] sm:$0xff]
        %v6109 = vld [vmem:[%s3 + $0x210] sm:$0xff]
        %v6110 = vld [vmem:[%s3 + $0x218] sm:$0xff]
        %v6111 = vld [vmem:[%s3 + $0x220] sm:$0xff]
        %v6112 = vld [vmem:[%s3 + $0x228] sm:$0xff]
        %v6113 = vld [vmem:[%s3 + $0x230] sm:$0xff]
        %v6114 = vld [vmem:[%s3 + $0x238] sm:$0xff]
        %v6115 = vld [vmem:[%s3 + $0x240] sm:$0xff]
        %v6116 = vld [vmem:[%s3 + $0x248] sm:$0xff]
        %v6117 = vld [vmem:[%s3 + $0x250] sm:$0xff]
        %v6118 = vld [vmem:[%s3 + $0x258] sm:$0xff]
        %v6119 = vld [vmem:[%s3 + $0x260] sm:$0xff]
        %v6120 = vld [vmem:[%s3 + $0x268] sm:$0xff]
        %v6121 = vld [vmem:[%s3 + $0x270] sm:$0xff]
        %v6122 = vld [vmem:[%s3 + $0x278] sm:$0xff]
        %v6123 = vld [vmem:[%s3 + $0x280] sm:$0xff]
        %v6124 = vld [vmem:[%s3 + $0x288] sm:$0xff]
        %v6125 = vld [vmem:[%s3 + $0x290] sm:$0xff]
        %v6126 = vld [vmem:[%s3 + $0x298] sm:$0xff]
        %v6127 = vld [vmem:[%s3 + $0x2a0] sm:$0xff]
        %v6128 = vld [vmem:[%s3 + $0x2a8] sm:$0xff]
        %v6129 = vld [vmem:[%s3 + $0x2b0] sm:$0xff]
        %v6130 = vld [vmem:[%s3 + $0x2b8] sm:$0xff]
        %v6131 = vld [vmem:[%s3 + $0x2c0] sm:$0xff]
        %v6132 = vld [vmem:[%s3 + $0x2c8] sm:$0xff]
        %v6133 = vld [vmem:[%s3 + $0x2d0] sm:$0xff]
        %v6134 = vld [vmem:[%s3 + $0x2d8] sm:$0xff]
        %v6135 = vld [vmem:[%s3 + $0x2e0] sm:$0xff]
        %v6136 = vld [vmem:[%s3 + $0x2e8] sm:$0xff]
        %v6137 = vld [vmem:[%s3 + $0x2f0] sm:$0xff]
        %v6138 = vld [vmem:[%s3 + $0x2f8] sm:$0xff]
        %v6139 = vld [vmem:[%s3 + $0x300] sm:$0xff]
        %v6140 = vld [vmem:[%s3 + $0x308] sm:$0xff]
        %v6141 = vld [vmem:[%s3 + $0x310] sm:$0xff]
        %v6142 = vld [vmem:[%s3 + $0x318] sm:$0xff]
        %v6143 = vld [vmem:[%s3 + $0x320] sm:$0xff]
        %v6144 = vld [vmem:[%s3 + $0x328] sm:$0xff]
        %v6145 = vld [vmem:[%s3 + $0x330] sm:$0xff]
        %v6146 = vld [vmem:[%s3 + $0x338] sm:$0xff]
        %v6147 = vld [vmem:[%s3 + $0x340] sm:$0xff]
        %v6148 = vld [vmem:[%s3 + $0x348] sm:$0xff]
        %v6149 = vld [vmem:[%s3 + $0x350] sm:$0xff]
        %v6150 = vld [vmem:[%s3 + $0x358] sm:$0xff]
        %v6151 = vld [vmem:[%s3 + $0x360] sm:$0xff]
        %v6152 = vld [vmem:[%s3 + $0x368] sm:$0xff]
        %v6153 = vld [vmem:[%s3 + $0x370] sm:$0xff]
        %v6154 = vld [vmem:[%s3 + $0x378] sm:$0xff]
        %v6155 = vld [vmem:[%s3 + $0x380] sm:$0xff]
        %v6156 = vld [vmem:[%s3 + $0x388] sm:$0xff]
        %v6157 = vld [vmem:[%s3 + $0x390] sm:$0xff]
        %v6158 = vld [vmem:[%s4] sm:$0x1]
        %v6160 = vperm.slane %v6158, 0
        %vm6162 = vcmask 195584
        %v6163 = vsel %vm6162, %v5693, 0
        %v6165 = vsel %vm6162, %v5697, 0
        %v6167 = vsel %vm6162, %v5701, 0
        %v6169 = vsel %vm6162, %v5705, 0
        %v6171 = vsel %vm6162, %v5709, 0
        %v6173 = vsel %vm6162, %v5713, 0
        %v6175 = vsel %vm6162, %v5717, 0
        %v6177 = vsel %vm6162, %v5721, 0
        %v6179 = vsel %vm6162, %v5725, 0
        %v6181 = vsel %vm6162, %v5729, 0
        %v6183 = vsel %vm6162, %v5733, 0
        %v6185 = vsel %vm6162, %v5737, 0
        %v6187 = vsel %vm6162, %v5741, 0
        %v6189 = vsel %vm6162, %v5745, 0
        %v6191 = vsel %vm6162, %v5749, 0
        %v6193 = vsel %vm6162, %v5753, 0
        %v6195 = vsel %vm6162, %v5757, 0
        %v6197 = vsel %vm6162, %v5761, 0
        %v6199 = vsel %vm6162, %v5765, 0
        %v6201 = vsel %vm6162, %v5769, 0
        %v6203 = vsel %vm6162, %v5773, 0
        %v6205 = vsel %vm6162, %v5777, 0
        %v6207 = vsel %vm6162, %v5781, 0
        %v6209 = vsel %vm6162, %v5785, 0
        %v6211 = vsel %vm6162, %v5789, 0
        %v6213 = vsel %vm6162, %v5793, 0
        %v6215 = vsel %vm6162, %v5797, 0
        %v6217 = vsel %vm6162, %v5801, 0
        %v6219 = vsel %vm6162, %v5805, 0
        %v6221 = vsel %vm6162, %v5809, 0
        %v6223 = vsel %vm6162, %v5813, 0
        %v6225 = vsel %vm6162, %v5817, 0
        %6227 = vmatpush.msra.mxu0 %v6058
        %6228 = vmatpush.msra.mxu0 %v6057
        %6229 = vmatpush.msra.mxu0 %v6056
        %6230 = vmatpush.msra.mxu0 %v6055
        %6231 = vmatpush.msra.mxu0 %v6054
        %6232 = vmatpush.msra.mxu0 %v6053
        %6233 = vmatpush.msra.mxu0 %v6052
        %6234 = vmatpush.msra.mxu0 %v6051
        %6235 = vmatpush.msra.mxu0 %v6050
        %6236 = vmatpush.msra.mxu0 %v6049
        %6237 = vmatpush.msra.mxu0 %v6048
        %6238 = vmatpush.msra.mxu0 %v6047
        %6239 = vmatpush.msra.mxu0 %v6046
        %6240 = vmatpush.msra.mxu0 %v6045
        %6241 = vmatpush.msra.mxu0 %v6044
        %6242 = vmatpush.msra.mxu0 %v6043
        %6243 = vmatmul.f32.gmra.mxu0 %v4801
        %v6244 = vpop.f32.mrf.mxu0
        %v6245 = vadd.f32 %v6160, %v6244
        %6246 = vmatmul.f32.gmra.mxu0 %v4803
        %v6247 = vpop.f32.mrf.mxu0
        %v6248 = vadd.f32 %v6160, %v6247
        %6249 = vmatmul.f32.gmra.mxu0 %v4805
        %v6250 = vpop.f32.mrf.mxu0
        %v6251 = vadd.f32 %v6160, %v6250
        %6252 = vmatmul.f32.gmra.mxu0 %v4807
        %v6253 = vpop.f32.mrf.mxu0
        %v6254 = vadd.f32 %v6160, %v6253
        %6255 = vmatmul.f32.gmra.mxu0 %v4809
        %v6256 = vpop.f32.mrf.mxu0
        %v6257 = vadd.f32 %v6160, %v6256
        %6258 = vmatmul.f32.gmra.mxu0 %v4811
        %v6259 = vpop.f32.mrf.mxu0
        %v6260 = vadd.f32 %v6160, %v6259
        %6261 = vmatmul.f32.gmra.mxu0 %v4813
        %v6262 = vpop.f32.mrf.mxu0
        %v6263 = vadd.f32 %v6160, %v6262
        %6264 = vmatmul.f32.gmra.mxu0 %v4815
        %v6265 = vpop.f32.mrf.mxu0
        %v6266 = vadd.f32 %v6160, %v6265
        %6267 = vmatmul.f32.gmra.mxu0 %v4817
        %v6268 = vpop.f32.mrf.mxu0
        %v6269 = vadd.f32 %v6160, %v6268
        %6270 = vmatmul.f32.gmra.mxu0 %v4819
        %v6271 = vpop.f32.mrf.mxu0
        %v6272 = vadd.f32 %v6160, %v6271
        %6273 = vmatmul.f32.gmra.mxu0 %v4821
        %v6274 = vpop.f32.mrf.mxu0
        %v6275 = vadd.f32 %v6160, %v6274
        %6276 = vmatmul.f32.gmra.mxu0 %v4823
        %v6277 = vpop.f32.mrf.mxu0
        %v6278 = vadd.f32 %v6160, %v6277
        %6279 = vmatmul.f32.gmra.mxu0 %v4825
        %v6280 = vpop.f32.mrf.mxu0
        %v6281 = vadd.f32 %v6160, %v6280
        %6282 = vmatmul.f32.gmra.mxu0 %v4827
        %v6283 = vpop.f32.mrf.mxu0
        %v6284 = vadd.f32 %v6160, %v6283
        %6285 = vmatmul.f32.gmra.mxu0 %v4829
        %v6286 = vpop.f32.mrf.mxu0
        %v6287 = vadd.f32 %v6160, %v6286
        %6288 = vmatmul.f32.gmra.mxu0 %v4831
        %v6289 = vpop.f32.mrf.mxu0
        %v6290 = vadd.f32 %v6160, %v6289
        %6291 = vmatmul.f32.gmra.mxu0 %v4833
        %v6292 = vpop.f32.mrf.mxu0
        %v6293 = vadd.f32 %v6160, %v6292
        %6294 = vmatmul.f32.gmra.mxu0 %v4835
        %v6295 = vpop.f32.mrf.mxu0
        %v6296 = vadd.f32 %v6160, %v6295
        %6297 = vmatmul.f32.gmra.mxu0 %v4837
        %v6298 = vpop.f32.mrf.mxu0
        %v6299 = vadd.f32 %v6160, %v6298
        %6300 = vmatmul.f32.gmra.mxu0 %v4839
        %v6301 = vpop.f32.mrf.mxu0
        %v6302 = vadd.f32 %v6160, %v6301
        %6303 = vmatmul.f32.gmra.mxu0 %v4841
        %v6304 = vpop.f32.mrf.mxu0
        %v6305 = vadd.f32 %v6160, %v6304
        %6306 = vmatmul.f32.gmra.mxu0 %v4843
        %v6307 = vpop.f32.mrf.mxu0
        %v6308 = vadd.f32 %v6160, %v6307
        %6309 = vmatmul.f32.gmra.mxu0 %v4845
        %v6310 = vpop.f32.mrf.mxu0
        %v6311 = vadd.f32 %v6160, %v6310
        %6312 = vmatmul.f32.gmra.mxu0 %v4847
        %v6313 = vpop.f32.mrf.mxu0
        %v6314 = vadd.f32 %v6160, %v6313
        %6315 = vmatmul.f32.gmra.mxu0 %v4849
        %v6316 = vpop.f32.mrf.mxu0
        %v6317 = vadd.f32 %v6160, %v6316
        %6318 = vmatmul.f32.gmra.mxu0 %v4851
        %v6319 = vpop.f32.mrf.mxu0
        %v6320 = vadd.f32 %v6160, %v6319
        %6321 = vmatmul.f32.gmra.mxu0 %v4853
        %v6322 = vpop.f32.mrf.mxu0
        %v6323 = vadd.f32 %v6160, %v6322
        %6324 = vmatmul.f32.gmra.mxu0 %v4855
        %v6325 = vpop.f32.mrf.mxu0
        %v6326 = vadd.f32 %v6160, %v6325
        %6327 = vmatmul.f32.gmra.mxu0 %v4857
        %v6328 = vpop.f32.mrf.mxu0
        %v6329 = vadd.f32 %v6160, %v6328
        %6330 = vmatmul.f32.gmra.mxu0 %v4859
        %v6331 = vpop.f32.mrf.mxu0
        %v6332 = vadd.f32 %v6160, %v6331
        %6333 = vmatmul.f32.gmra.mxu0 %v4861
        %v6334 = vpop.f32.mrf.mxu0
        %v6335 = vadd.f32 %v6160, %v6334
        %6336 = vmatmul.f32.gmra.mxu0 %v4863
        %v6337 = vpop.f32.mrf.mxu0
        %v6338 = vadd.f32 %v6160, %v6337
        %6339 = vdwg.mxu0
        %6340 = vmatpush.msra.mxu0 %v6074
        %6341 = vmatpush.msra.mxu0 %v6073
        %6342 = vmatpush.msra.mxu0 %v6072
        %6343 = vmatpush.msra.mxu0 %v6071
        %6344 = vmatpush.msra.mxu0 %v6070
        %6345 = vmatpush.msra.mxu0 %v6069
        %6346 = vmatpush.msra.mxu0 %v6068
        %6347 = vmatpush.msra.mxu0 %v6067
        %6348 = vmatpush.msra.mxu0 %v6066
        %6349 = vmatpush.msra.mxu0 %v6065
        %6350 = vmatpush.msra.mxu0 %v6064
        %6351 = vmatpush.msra.mxu0 %v6063
        %6352 = vmatpush.msra.mxu0 %v6062
        %6353 = vmatpush.msra.mxu0 %v6061
        %6354 = vmatpush.msra.mxu0 %v6060
        %6355 = vmatpush.msra.mxu0 %v6059
        %6356 = vmatmul.f32.gmra.mxu0 %v5915
        %v6357 = vpop.f32.mrf.mxu0
        %v6358 = vadd.f32 %v6245, %v6357
        %6359 = vmatmul.f32.gmra.mxu0 %v5916
        %v6360 = vpop.f32.mrf.mxu0
        %v6361 = vadd.f32 %v6248, %v6360
        %6362 = vmatmul.f32.gmra.mxu0 %v5917
        %v6363 = vpop.f32.mrf.mxu0
        %v6364 = vadd.f32 %v6251, %v6363
        %6365 = vmatmul.f32.gmra.mxu0 %v5918
        %v6366 = vpop.f32.mrf.mxu0
        %v6367 = vadd.f32 %v6254, %v6366
        %6368 = vmatmul.f32.gmra.mxu0 %v5919
        %v6369 = vpop.f32.mrf.mxu0
        %v6370 = vadd.f32 %v6257, %v6369
        %6371 = vmatmul.f32.gmra.mxu0 %v5920
        %v6372 = vpop.f32.mrf.mxu0
        %v6373 = vadd.f32 %v6260, %v6372
        %6374 = vmatmul.f32.gmra.mxu0 %v5921
        %v6375 = vpop.f32.mrf.mxu0
        %v6376 = vadd.f32 %v6263, %v6375
        %6377 = vmatmul.f32.gmra.mxu0 %v5922
        %v6378 = vpop.f32.mrf.mxu0
        %v6379 = vadd.f32 %v6266, %v6378
        %6380 = vmatmul.f32.gmra.mxu0 %v5923
        %v6381 = vpop.f32.mrf.mxu0
        %v6382 = vadd.f32 %v6269, %v6381
        %6383 = vmatmul.f32.gmra.mxu0 %v5924
        %v6384 = vpop.f32.mrf.mxu0
        %v6385 = vadd.f32 %v6272, %v6384
        %6386 = vmatmul.f32.gmra.mxu0 %v5925
        %v6387 = vpop.f32.mrf.mxu0
        %v6388 = vadd.f32 %v6275, %v6387
        %6389 = vmatmul.f32.gmra.mxu0 %v5926
        %v6390 = vpop.f32.mrf.mxu0
        %v6391 = vadd.f32 %v6278, %v6390
        %6392 = vmatmul.f32.gmra.mxu0 %v5927
        %v6393 = vpop.f32.mrf.mxu0
        %v6394 = vadd.f32 %v6281, %v6393
        %6395 = vmatmul.f32.gmra.mxu0 %v5928
        %v6396 = vpop.f32.mrf.mxu0
        %v6397 = vadd.f32 %v6284, %v6396
        %6398 = vmatmul.f32.gmra.mxu0 %v5929
        %v6399 = vpop.f32.mrf.mxu0
        %v6400 = vadd.f32 %v6287, %v6399
        %6401 = vmatmul.f32.gmra.mxu0 %v5930
        %v6402 = vpop.f32.mrf.mxu0
        %v6403 = vadd.f32 %v6290, %v6402
        %6404 = vmatmul.f32.gmra.mxu0 %v5931
        %v6405 = vpop.f32.mrf.mxu0
        %v6406 = vadd.f32 %v6293, %v6405
        %6407 = vmatmul.f32.gmra.mxu0 %v5932
        %v6408 = vpop.f32.mrf.mxu0
        %v6409 = vadd.f32 %v6296, %v6408
        %6410 = vmatmul.f32.gmra.mxu0 %v5933
        %v6411 = vpop.f32.mrf.mxu0
        %v6412 = vadd.f32 %v6299, %v6411
        %6413 = vmatmul.f32.gmra.mxu0 %v5934
        %v6414 = vpop.f32.mrf.mxu0
        %v6415 = vadd.f32 %v6302, %v6414
        %6416 = vmatmul.f32.gmra.mxu0 %v5935
        %v6417 = vpop.f32.mrf.mxu0
        %v6418 = vadd.f32 %v6305, %v6417
        %6419 = vmatmul.f32.gmra.mxu0 %v5936
        %v6420 = vpop.f32.mrf.mxu0
        %v6421 = vadd.f32 %v6308, %v6420
        %6422 = vmatmul.f32.gmra.mxu0 %v5937
        %v6423 = vpop.f32.mrf.mxu0
        %v6424 = vadd.f32 %v6311, %v6423
        %6425 = vmatmul.f32.gmra.mxu0 %v5938
        %v6426 = vpop.f32.mrf.mxu0
        %v6427 = vadd.f32 %v6314, %v6426
        %6428 = vmatmul.f32.gmra.mxu0 %v5939
        %v6429 = vpop.f32.mrf.mxu0
        %v6430 = vadd.f32 %v6317, %v6429
        %6431 = vmatmul.f32.gmra.mxu0 %v5940
        %v6432 = vpop.f32.mrf.mxu0
        %v6433 = vadd.f32 %v6320, %v6432
        %6434 = vmatmul.f32.gmra.mxu0 %v5941
        %v6435 = vpop.f32.mrf.mxu0
        %v6436 = vadd.f32 %v6323, %v6435
        %6437 = vmatmul.f32.gmra.mxu0 %v5942
        %v6438 = vpop.f32.mrf.mxu0
        %v6439 = vadd.f32 %v6326, %v6438
        %6440 = vmatmul.f32.gmra.mxu0 %v5943
        %v6441 = vpop.f32.mrf.mxu0
        %v6442 = vadd.f32 %v6329, %v6441
        %6443 = vmatmul.f32.gmra.mxu0 %v5944
        %v6444 = vpop.f32.mrf.mxu0
        %v6445 = vadd.f32 %v6332, %v6444
        %6446 = vmatmul.f32.gmra.mxu0 %v5945
        %v6447 = vpop.f32.mrf.mxu0
        %v6448 = vadd.f32 %v6335, %v6447
        %6449 = vmatmul.f32.gmra.mxu0 %v5946
        %v6450 = vpop.f32.mrf.mxu0
        %v6451 = vadd.f32 %v6338, %v6450
        %6452 = vdwg.mxu0
        %6453 = vmatpush.msra.mxu0 %v6090
        %6454 = vmatpush.msra.mxu0 %v6089
        %6455 = vmatpush.msra.mxu0 %v6088
        %6456 = vmatpush.msra.mxu0 %v6087
        %6457 = vmatpush.msra.mxu0 %v6086
        %6458 = vmatpush.msra.mxu0 %v6085
        %6459 = vmatpush.msra.mxu0 %v6084
        %6460 = vmatpush.msra.mxu0 %v6083
        %6461 = vmatpush.msra.mxu0 %v6082
        %6462 = vmatpush.msra.mxu0 %v6081
        %6463 = vmatpush.msra.mxu0 %v6080
        %6464 = vmatpush.msra.mxu0 %v6079
        %6465 = vmatpush.msra.mxu0 %v6078
        %6466 = vmatpush.msra.mxu0 %v6077
        %6467 = vmatpush.msra.mxu0 %v6076
        %6468 = vmatpush.msra.mxu0 %v6075
        %6469 = vmatmul.f32.gmra.mxu0 %v5947
        %v6470 = vpop.f32.mrf.mxu0
        %v6471 = vadd.f32 %v6358, %v6470
        %6472 = vmatmul.f32.gmra.mxu0 %v5948
        %v6473 = vpop.f32.mrf.mxu0
        %v6474 = vadd.f32 %v6361, %v6473
        %6475 = vmatmul.f32.gmra.mxu0 %v5949
        %v6476 = vpop.f32.mrf.mxu0
        %v6477 = vadd.f32 %v6364, %v6476
        %6478 = vmatmul.f32.gmra.mxu0 %v5950
        %v6479 = vpop.f32.mrf.mxu0
        %v6480 = vadd.f32 %v6367, %v6479
        %6481 = vmatmul.f32.gmra.mxu0 %v5951
        %v6482 = vpop.f32.mrf.mxu0
        %v6483 = vadd.f32 %v6370, %v6482
        %6484 = vmatmul.f32.gmra.mxu0 %v5952
        %v6485 = vpop.f32.mrf.mxu0
        %v6486 = vadd.f32 %v6373, %v6485
        %6487 = vmatmul.f32.gmra.mxu0 %v5953
        %v6488 = vpop.f32.mrf.mxu0
        %v6489 = vadd.f32 %v6376, %v6488
        %6490 = vmatmul.f32.gmra.mxu0 %v5954
        %v6491 = vpop.f32.mrf.mxu0
        %v6492 = vadd.f32 %v6379, %v6491
        %6493 = vmatmul.f32.gmra.mxu0 %v5955
        %v6494 = vpop.f32.mrf.mxu0
        %v6495 = vadd.f32 %v6382, %v6494
        %6496 = vmatmul.f32.gmra.mxu0 %v5956
        %v6497 = vpop.f32.mrf.mxu0
        %v6498 = vadd.f32 %v6385, %v6497
        %6499 = vmatmul.f32.gmra.mxu0 %v5957
        %v6500 = vpop.f32.mrf.mxu0
        %v6501 = vadd.f32 %v6388, %v6500
        %6502 = vmatmul.f32.gmra.mxu0 %v5958
        %v6503 = vpop.f32.mrf.mxu0
        %v6504 = vadd.f32 %v6391, %v6503
        %6505 = vmatmul.f32.gmra.mxu0 %v5959
        %v6506 = vpop.f32.mrf.mxu0
        %v6507 = vadd.f32 %v6394, %v6506
        %6508 = vmatmul.f32.gmra.mxu0 %v5960
        %v6509 = vpop.f32.mrf.mxu0
        %v6510 = vadd.f32 %v6397, %v6509
        %6511 = vmatmul.f32.gmra.mxu0 %v5961
        %v6512 = vpop.f32.mrf.mxu0
        %v6513 = vadd.f32 %v6400, %v6512
        %6514 = vmatmul.f32.gmra.mxu0 %v5962
        %v6515 = vpop.f32.mrf.mxu0
        %v6516 = vadd.f32 %v6403, %v6515
        %6517 = vmatmul.f32.gmra.mxu0 %v5963
        %v6518 = vpop.f32.mrf.mxu0
        %v6519 = vadd.f32 %v6406, %v6518
        %6520 = vmatmul.f32.gmra.mxu0 %v5964
        %v6521 = vpop.f32.mrf.mxu0
        %v6522 = vadd.f32 %v6409, %v6521
        %6523 = vmatmul.f32.gmra.mxu0 %v5965
        %v6524 = vpop.f32.mrf.mxu0
        %v6525 = vadd.f32 %v6412, %v6524
        %6526 = vmatmul.f32.gmra.mxu0 %v5966
        %v6527 = vpop.f32.mrf.mxu0
        %v6528 = vadd.f32 %v6415, %v6527
        %6529 = vmatmul.f32.gmra.mxu0 %v5967
        %v6530 = vpop.f32.mrf.mxu0
        %v6531 = vadd.f32 %v6418, %v6530
        %6532 = vmatmul.f32.gmra.mxu0 %v5968
        %v6533 = vpop.f32.mrf.mxu0
        %v6534 = vadd.f32 %v6421, %v6533
        %6535 = vmatmul.f32.gmra.mxu0 %v5969
        %v6536 = vpop.f32.mrf.mxu0
        %v6537 = vadd.f32 %v6424, %v6536
        %6538 = vmatmul.f32.gmra.mxu0 %v5970
        %v6539 = vpop.f32.mrf.mxu0
        %v6540 = vadd.f32 %v6427, %v6539
        %6541 = vmatmul.f32.gmra.mxu0 %v5971
        %v6542 = vpop.f32.mrf.mxu0
        %v6543 = vadd.f32 %v6430, %v6542
        %6544 = vmatmul.f32.gmra.mxu0 %v5972
        %v6545 = vpop.f32.mrf.mxu0
        %v6546 = vadd.f32 %v6433, %v6545
        %6547 = vmatmul.f32.gmra.mxu0 %v5973
        %v6548 = vpop.f32.mrf.mxu0
        %v6549 = vadd.f32 %v6436, %v6548
        %6550 = vmatmul.f32.gmra.mxu0 %v5974
        %v6551 = vpop.f32.mrf.mxu0
        %v6552 = vadd.f32 %v6439, %v6551
        %6553 = vmatmul.f32.gmra.mxu0 %v5975
        %v6554 = vpop.f32.mrf.mxu0
        %v6555 = vadd.f32 %v6442, %v6554
        %6556 = vmatmul.f32.gmra.mxu0 %v5976
        %v6557 = vpop.f32.mrf.mxu0
        %v6558 = vadd.f32 %v6445, %v6557
        %6559 = vmatmul.f32.gmra.mxu0 %v5977
        %v6560 = vpop.f32.mrf.mxu0
        %v6561 = vadd.f32 %v6448, %v6560
        %6562 = vmatmul.f32.gmra.mxu0 %v5978
        %v6563 = vpop.f32.mrf.mxu0
        %v6564 = vadd.f32 %v6451, %v6563
        %6565 = vdwg.mxu0
        %6566 = vmatpush.msra.mxu0 %v6106
        %6567 = vmatpush.msra.mxu0 %v6105
        %6568 = vmatpush.msra.mxu0 %v6104
        %6569 = vmatpush.msra.mxu0 %v6103
        %6570 = vmatpush.msra.mxu0 %v6102
        %6571 = vmatpush.msra.mxu0 %v6101
        %6572 = vmatpush.msra.mxu0 %v6100
        %6573 = vmatpush.msra.mxu0 %v6099
        %6574 = vmatpush.msra.mxu0 %v6098
        %6575 = vmatpush.msra.mxu0 %v6097
        %6576 = vmatpush.msra.mxu0 %v6096
        %6577 = vmatpush.msra.mxu0 %v6095
        %6578 = vmatpush.msra.mxu0 %v6094
        %6579 = vmatpush.msra.mxu0 %v6093
        %6580 = vmatpush.msra.mxu0 %v6092
        %6581 = vmatpush.msra.mxu0 %v6091
        %6582 = vmatmul.f32.gmra.mxu0 %v5321
        %v6583 = vpop.f32.mrf.mxu0
        %v6584 = vadd.f32 %v6471, %v6583
        %6585 = vmatmul.f32.gmra.mxu0 %v5322
        %v6586 = vpop.f32.mrf.mxu0
        %v6587 = vadd.f32 %v6474, %v6586
        %6588 = vmatmul.f32.gmra.mxu0 %v5323
        %v6589 = vpop.f32.mrf.mxu0
        %v6590 = vadd.f32 %v6477, %v6589
        %6591 = vmatmul.f32.gmra.mxu0 %v5324
        %v6592 = vpop.f32.mrf.mxu0
        %v6593 = vadd.f32 %v6480, %v6592
        %6594 = vmatmul.f32.gmra.mxu0 %v5325
        %v6595 = vpop.f32.mrf.mxu0
        %v6596 = vadd.f32 %v6483, %v6595
        %6597 = vmatmul.f32.gmra.mxu0 %v5326
        %v6598 = vpop.f32.mrf.mxu0
        %v6599 = vadd.f32 %v6486, %v6598
        %6600 = vmatmul.f32.gmra.mxu0 %v5327
        %v6601 = vpop.f32.mrf.mxu0
        %v6602 = vadd.f32 %v6489, %v6601
        %6603 = vmatmul.f32.gmra.mxu0 %v5328
        %v6604 = vpop.f32.mrf.mxu0
        %v6605 = vadd.f32 %v6492, %v6604
        %6606 = vmatmul.f32.gmra.mxu0 %v5329
        %v6607 = vpop.f32.mrf.mxu0
        %v6608 = vadd.f32 %v6495, %v6607
        %6609 = vmatmul.f32.gmra.mxu0 %v5330
        %v6610 = vpop.f32.mrf.mxu0
        %v6611 = vadd.f32 %v6498, %v6610
        %6612 = vmatmul.f32.gmra.mxu0 %v5331
        %v6613 = vpop.f32.mrf.mxu0
        %v6614 = vadd.f32 %v6501, %v6613
        %6615 = vmatmul.f32.gmra.mxu0 %v5332
        %v6616 = vpop.f32.mrf.mxu0
        %v6617 = vadd.f32 %v6504, %v6616
        %6618 = vmatmul.f32.gmra.mxu0 %v5333
        %v6619 = vpop.f32.mrf.mxu0
        %v6620 = vadd.f32 %v6507, %v6619
        %6621 = vmatmul.f32.gmra.mxu0 %v5334
        %v6622 = vpop.f32.mrf.mxu0
        %v6623 = vadd.f32 %v6510, %v6622
        %6624 = vmatmul.f32.gmra.mxu0 %v5335
        %v6625 = vpop.f32.mrf.mxu0
        %v6626 = vadd.f32 %v6513, %v6625
        %6627 = vmatmul.f32.gmra.mxu0 %v5336
        %v6628 = vpop.f32.mrf.mxu0
        %v6629 = vadd.f32 %v6516, %v6628
        %6630 = vmatmul.f32.gmra.mxu0 %v5337
        %v6631 = vpop.f32.mrf.mxu0
        %v6632 = vadd.f32 %v6519, %v6631
        %6633 = vmatmul.f32.gmra.mxu0 %v5338
        %v6634 = vpop.f32.mrf.mxu0
        %v6635 = vadd.f32 %v6522, %v6634
        %6636 = vmatmul.f32.gmra.mxu0 %v5339
        %v6637 = vpop.f32.mrf.mxu0
        %v6638 = vadd.f32 %v6525, %v6637
        %6639 = vmatmul.f32.gmra.mxu0 %v5340
        %v6640 = vpop.f32.mrf.mxu0
        %v6641 = vadd.f32 %v6528, %v6640
        %6642 = vmatmul.f32.gmra.mxu0 %v5341
        %v6643 = vpop.f32.mrf.mxu0
        %v6644 = vadd.f32 %v6531, %v6643
        %6645 = vmatmul.f32.gmra.mxu0 %v5342
        %v6646 = vpop.f32.mrf.mxu0
        %v6647 = vadd.f32 %v6534, %v6646
        %6648 = vmatmul.f32.gmra.mxu0 %v5343
        %v6649 = vpop.f32.mrf.mxu0
        %v6650 = vadd.f32 %v6537, %v6649
        %6651 = vmatmul.f32.gmra.mxu0 %v5344
        %v6652 = vpop.f32.mrf.mxu0
        %v6653 = vadd.f32 %v6540, %v6652
        %6654 = vmatmul.f32.gmra.mxu0 %v5345
        %v6655 = vpop.f32.mrf.mxu0
        %v6656 = vadd.f32 %v6543, %v6655
        %6657 = vmatmul.f32.gmra.mxu0 %v5346
        %v6658 = vpop.f32.mrf.mxu0
        %v6659 = vadd.f32 %v6546, %v6658
        %6660 = vmatmul.f32.gmra.mxu0 %v5347
        %v6661 = vpop.f32.mrf.mxu0
        %v6662 = vadd.f32 %v6549, %v6661
        %6663 = vmatmul.f32.gmra.mxu0 %v5348
        %v6664 = vpop.f32.mrf.mxu0
        %v6665 = vadd.f32 %v6552, %v6664
        %6666 = vmatmul.f32.gmra.mxu0 %v5349
        %v6667 = vpop.f32.mrf.mxu0
        %v6668 = vadd.f32 %v6555, %v6667
        %6669 = vmatmul.f32.gmra.mxu0 %v5350
        %v6670 = vpop.f32.mrf.mxu0
        %v6671 = vadd.f32 %v6558, %v6670
        %6672 = vmatmul.f32.gmra.mxu0 %v5351
        %v6673 = vpop.f32.mrf.mxu0
        %v6674 = vadd.f32 %v6561, %v6673
        %6675 = vmatmul.f32.gmra.mxu0 %v5352
        %v6676 = vpop.f32.mrf.mxu0
        %v6677 = vadd.f32 %v6564, %v6676
        %6678 = vdwg.mxu0
        %6679 = vmatpush.msra.mxu0 %v6122
        %6680 = vmatpush.msra.mxu0 %v6121
        %6681 = vmatpush.msra.mxu0 %v6120
        %6682 = vmatpush.msra.mxu0 %v6119
        %6683 = vmatpush.msra.mxu0 %v6118
        %6684 = vmatpush.msra.mxu0 %v6117
        %6685 = vmatpush.msra.mxu0 %v6116
        %6686 = vmatpush.msra.mxu0 %v6115
        %6687 = vmatpush.msra.mxu0 %v6114
        %6688 = vmatpush.msra.mxu0 %v6113
        %6689 = vmatpush.msra.mxu0 %v6112
        %6690 = vmatpush.msra.mxu0 %v6111
        %6691 = vmatpush.msra.mxu0 %v6110
        %6692 = vmatpush.msra.mxu0 %v6109
        %6693 = vmatpush.msra.mxu0 %v6108
        %6694 = vmatpush.msra.mxu0 %v6107
        %6695 = vmatmul.f32.gmra.mxu0 %v5979
        %v6696 = vpop.f32.mrf.mxu0
        %v6697 = vadd.f32 %v6584, %v6696
        %6698 = vmatmul.f32.gmra.mxu0 %v5980
        %v6699 = vpop.f32.mrf.mxu0
        %v6700 = vadd.f32 %v6587, %v6699
        %6701 = vmatmul.f32.gmra.mxu0 %v5981
        %v6702 = vpop.f32.mrf.mxu0
        %v6703 = vadd.f32 %v6590, %v6702
        %6704 = vmatmul.f32.gmra.mxu0 %v5982
        %v6705 = vpop.f32.mrf.mxu0
        %v6706 = vadd.f32 %v6593, %v6705
        %6707 = vmatmul.f32.gmra.mxu0 %v5983
        %v6708 = vpop.f32.mrf.mxu0
        %v6709 = vadd.f32 %v6596, %v6708
        %6710 = vmatmul.f32.gmra.mxu0 %v5984
        %v6711 = vpop.f32.mrf.mxu0
        %v6712 = vadd.f32 %v6599, %v6711
        %6713 = vmatmul.f32.gmra.mxu0 %v5985
        %v6714 = vpop.f32.mrf.mxu0
        %v6715 = vadd.f32 %v6602, %v6714
        %6716 = vmatmul.f32.gmra.mxu0 %v5986
        %v6717 = vpop.f32.mrf.mxu0
        %v6718 = vadd.f32 %v6605, %v6717
        %6719 = vmatmul.f32.gmra.mxu0 %v5987
        %v6720 = vpop.f32.mrf.mxu0
        %v6721 = vadd.f32 %v6608, %v6720
        %6722 = vmatmul.f32.gmra.mxu0 %v5988
        %v6723 = vpop.f32.mrf.mxu0
        %v6724 = vadd.f32 %v6611, %v6723
        %6725 = vmatmul.f32.gmra.mxu0 %v5989
        %v6726 = vpop.f32.mrf.mxu0
        %v6727 = vadd.f32 %v6614, %v6726
        %6728 = vmatmul.f32.gmra.mxu0 %v5990
        %v6729 = vpop.f32.mrf.mxu0
        %v6730 = vadd.f32 %v6617, %v6729
        %6731 = vmatmul.f32.gmra.mxu0 %v5991
        %v6732 = vpop.f32.mrf.mxu0
        %v6733 = vadd.f32 %v6620, %v6732
        %6734 = vmatmul.f32.gmra.mxu0 %v5992
        %v6735 = vpop.f32.mrf.mxu0
        %v6736 = vadd.f32 %v6623, %v6735
        %6737 = vmatmul.f32.gmra.mxu0 %v5993
        %v6738 = vpop.f32.mrf.mxu0
        %v6739 = vadd.f32 %v6626, %v6738
        %6740 = vmatmul.f32.gmra.mxu0 %v5994
        %v6741 = vpop.f32.mrf.mxu0
        %v6742 = vadd.f32 %v6629, %v6741
        %6743 = vmatmul.f32.gmra.mxu0 %v5995
        %v6744 = vpop.f32.mrf.mxu0
        %v6745 = vadd.f32 %v6632, %v6744
        %6746 = vmatmul.f32.gmra.mxu0 %v5996
        %v6747 = vpop.f32.mrf.mxu0
        %v6748 = vadd.f32 %v6635, %v6747
        %6749 = vmatmul.f32.gmra.mxu0 %v5997
        %v6750 = vpop.f32.mrf.mxu0
        %v6751 = vadd.f32 %v6638, %v6750
        %6752 = vmatmul.f32.gmra.mxu0 %v5998
        %v6753 = vpop.f32.mrf.mxu0
        %v6754 = vadd.f32 %v6641, %v6753
        %6755 = vmatmul.f32.gmra.mxu0 %v5999
        %v6756 = vpop.f32.mrf.mxu0
        %v6757 = vadd.f32 %v6644, %v6756
        %6758 = vmatmul.f32.gmra.mxu0 %v6000
        %v6759 = vpop.f32.mrf.mxu0
        %v6760 = vadd.f32 %v6647, %v6759
        %6761 = vmatmul.f32.gmra.mxu0 %v6001
        %v6762 = vpop.f32.mrf.mxu0
        %v6763 = vadd.f32 %v6650, %v6762
        %6764 = vmatmul.f32.gmra.mxu0 %v6002
        %v6765 = vpop.f32.mrf.mxu0
        %v6766 = vadd.f32 %v6653, %v6765
        %6767 = vmatmul.f32.gmra.mxu0 %v6003
        %v6768 = vpop.f32.mrf.mxu0
        %v6769 = vadd.f32 %v6656, %v6768
        %6770 = vmatmul.f32.gmra.mxu0 %v6004
        %v6771 = vpop.f32.mrf.mxu0
        %v6772 = vadd.f32 %v6659, %v6771
        %6773 = vmatmul.f32.gmra.mxu0 %v6005
        %v6774 = vpop.f32.mrf.mxu0
        %v6775 = vadd.f32 %v6662, %v6774
        %6776 = vmatmul.f32.gmra.mxu0 %v6006
        %v6777 = vpop.f32.mrf.mxu0
        %v6778 = vadd.f32 %v6665, %v6777
        %6779 = vmatmul.f32.gmra.mxu0 %v6007
        %v6780 = vpop.f32.mrf.mxu0
        %v6781 = vadd.f32 %v6668, %v6780
        %6782 = vmatmul.f32.gmra.mxu0 %v6008
        %v6783 = vpop.f32.mrf.mxu0
        %v6784 = vadd.f32 %v6671, %v6783
        %6785 = vmatmul.f32.gmra.mxu0 %v6009
        %v6786 = vpop.f32.mrf.mxu0
        %v6787 = vadd.f32 %v6674, %v6786
        %6788 = vmatmul.f32.gmra.mxu0 %v6010
        %v6789 = vpop.f32.mrf.mxu0
        %v6790 = vadd.f32 %v6677, %v6789
        %6791 = vdwg.mxu0
        %6792 = vmatpush.msra.mxu0 %v6138
        %6793 = vmatpush.msra.mxu0 %v6137
        %6794 = vmatpush.msra.mxu0 %v6136
        %6795 = vmatpush.msra.mxu0 %v6135
        %6796 = vmatpush.msra.mxu0 %v6134
        %6797 = vmatpush.msra.mxu0 %v6133
        %6798 = vmatpush.msra.mxu0 %v6132
        %6799 = vmatpush.msra.mxu0 %v6131
        %6800 = vmatpush.msra.mxu0 %v6130
        %6801 = vmatpush.msra.mxu0 %v6129
        %6802 = vmatpush.msra.mxu0 %v6128
        %6803 = vmatpush.msra.mxu0 %v6127
        %6804 = vmatpush.msra.mxu0 %v6126
        %6805 = vmatpush.msra.mxu0 %v6125
        %6806 = vmatpush.msra.mxu0 %v6124
        %6807 = vmatpush.msra.mxu0 %v6123
        %6808 = vmatmul.f32.gmra.mxu0 %v6011
        %v6809 = vpop.f32.mrf.mxu0
        %v6810 = vadd.f32 %v6697, %v6809
        %6811 = vmatmul.f32.gmra.mxu0 %v6012
        %v6812 = vpop.f32.mrf.mxu0
        %v6813 = vadd.f32 %v6700, %v6812
        %6814 = vmatmul.f32.gmra.mxu0 %v6013
        %v6815 = vpop.f32.mrf.mxu0
        %v6816 = vadd.f32 %v6703, %v6815
        %6817 = vmatmul.f32.gmra.mxu0 %v6014
        %v6818 = vpop.f32.mrf.mxu0
        %v6819 = vadd.f32 %v6706, %v6818
        %6820 = vmatmul.f32.gmra.mxu0 %v6015
        %v6821 = vpop.f32.mrf.mxu0
        %v6822 = vadd.f32 %v6709, %v6821
        %6823 = vmatmul.f32.gmra.mxu0 %v6016
        %v6824 = vpop.f32.mrf.mxu0
        %v6825 = vadd.f32 %v6712, %v6824
        %6826 = vmatmul.f32.gmra.mxu0 %v6017
        %v6827 = vpop.f32.mrf.mxu0
        %v6828 = vadd.f32 %v6715, %v6827
        %6829 = vmatmul.f32.gmra.mxu0 %v6018
        %v6830 = vpop.f32.mrf.mxu0
        %v6831 = vadd.f32 %v6718, %v6830
        %6832 = vmatmul.f32.gmra.mxu0 %v6019
        %v6833 = vpop.f32.mrf.mxu0
        %v6834 = vadd.f32 %v6721, %v6833
        %6835 = vmatmul.f32.gmra.mxu0 %v6020
        %v6836 = vpop.f32.mrf.mxu0
        %v6837 = vadd.f32 %v6724, %v6836
        %6838 = vmatmul.f32.gmra.mxu0 %v6021
        %v6839 = vpop.f32.mrf.mxu0
        %v6840 = vadd.f32 %v6727, %v6839
        %6841 = vmatmul.f32.gmra.mxu0 %v6022
        %v6842 = vpop.f32.mrf.mxu0
        %v6843 = vadd.f32 %v6730, %v6842
        %6844 = vmatmul.f32.gmra.mxu0 %v6023
        %v6845 = vpop.f32.mrf.mxu0
        %v6846 = vadd.f32 %v6733, %v6845
        %6847 = vmatmul.f32.gmra.mxu0 %v6024
        %v6848 = vpop.f32.mrf.mxu0
        %v6849 = vadd.f32 %v6736, %v6848
        %6850 = vmatmul.f32.gmra.mxu0 %v6025
        %v6851 = vpop.f32.mrf.mxu0
        %v6852 = vadd.f32 %v6739, %v6851
        %6853 = vmatmul.f32.gmra.mxu0 %v6026
        %v6854 = vpop.f32.mrf.mxu0
        %v6855 = vadd.f32 %v6742, %v6854
        %6856 = vmatmul.f32.gmra.mxu0 %v6027
        %v6857 = vpop.f32.mrf.mxu0
        %v6858 = vadd.f32 %v6745, %v6857
        %6859 = vmatmul.f32.gmra.mxu0 %v6028
        %v6860 = vpop.f32.mrf.mxu0
        %v6861 = vadd.f32 %v6748, %v6860
        %6862 = vmatmul.f32.gmra.mxu0 %v6029
        %v6863 = vpop.f32.mrf.mxu0
        %v6864 = vadd.f32 %v6751, %v6863
        %6865 = vmatmul.f32.gmra.mxu0 %v6030
        %v6866 = vpop.f32.mrf.mxu0
        %v6867 = vadd.f32 %v6754, %v6866
        %6868 = vmatmul.f32.gmra.mxu0 %v6031
        %v6869 = vpop.f32.mrf.mxu0
        %v6870 = vadd.f32 %v6757, %v6869
        %6871 = vmatmul.f32.gmra.mxu0 %v6032
        %v6872 = vpop.f32.mrf.mxu0
        %v6873 = vadd.f32 %v6760, %v6872
        %6874 = vmatmul.f32.gmra.mxu0 %v6033
        %v6875 = vpop.f32.mrf.mxu0
        %v6876 = vadd.f32 %v6763, %v6875
        %6877 = vmatmul.f32.gmra.mxu0 %v6034
        %v6878 = vpop.f32.mrf.mxu0
        %v6879 = vadd.f32 %v6766, %v6878
        %6880 = vmatmul.f32.gmra.mxu0 %v6035
        %v6881 = vpop.f32.mrf.mxu0
        %v6882 = vadd.f32 %v6769, %v6881
        %6883 = vmatmul.f32.gmra.mxu0 %v6036
        %v6884 = vpop.f32.mrf.mxu0
        %v6885 = vadd.f32 %v6772, %v6884
        %6886 = vmatmul.f32.gmra.mxu0 %v6037
        %v6887 = vpop.f32.mrf.mxu0
        %v6888 = vadd.f32 %v6775, %v6887
        %6889 = vmatmul.f32.gmra.mxu0 %v6038
        %v6890 = vpop.f32.mrf.mxu0
        %v6891 = vadd.f32 %v6778, %v6890
        %6892 = vmatmul.f32.gmra.mxu0 %v6039
        %v6893 = vpop.f32.mrf.mxu0
        %v6894 = vadd.f32 %v6781, %v6893
        %6895 = vmatmul.f32.gmra.mxu0 %v6040
        %v6896 = vpop.f32.mrf.mxu0
        %v6897 = vadd.f32 %v6784, %v6896
        %6898 = vmatmul.f32.gmra.mxu0 %v6041
        %v6899 = vpop.f32.mrf.mxu0
        %v6900 = vadd.f32 %v6787, %v6899
        %6901 = vmatmul.f32.gmra.mxu0 %v6042
        %v6902 = vpop.f32.mrf.mxu0
        %v6903 = vadd.f32 %v6790, %v6902
        %6904 = vdwg.mxu0
        %6905 = vmatpush.msra.mxu0 %v6154
        %6906 = vmatpush.msra.mxu0 %v6153
        %6907 = vmatpush.msra.mxu0 %v6152
        %6908 = vmatpush.msra.mxu0 %v6151
        %6909 = vmatpush.msra.mxu0 %v6150
        %6910 = vmatpush.msra.mxu0 %v6149
        %6911 = vmatpush.msra.mxu0 %v6148
        %6912 = vmatpush.msra.mxu0 %v6147
        %6913 = vmatpush.msra.mxu0 %v6146
        %6914 = vmatpush.msra.mxu0 %v6145
        %6915 = vmatpush.msra.mxu0 %v6144
        %6916 = vmatpush.msra.mxu0 %v6143
        %6917 = vmatpush.msra.mxu0 %v6142
        %6918 = vmatpush.msra.mxu0 %v6141
        %6919 = vmatpush.msra.mxu0 %v6140
        %6920 = vmatpush.msra.mxu0 %v6139
        %6921 = vmatmul.f32.gmra.mxu0 %v5819
        %v6922 = vpop.f32.mrf.mxu0
        %v6923 = vadd.f32 %v6810, %v6922
        %6924 = vmatmul.f32.gmra.mxu0 %v5820
        %v6925 = vpop.f32.mrf.mxu0
        %v6926 = vadd.f32 %v6813, %v6925
        %6927 = vmatmul.f32.gmra.mxu0 %v5821
        %v6928 = vpop.f32.mrf.mxu0
        %v6929 = vadd.f32 %v6816, %v6928
        %6930 = vmatmul.f32.gmra.mxu0 %v5822
        %v6931 = vpop.f32.mrf.mxu0
        %v6932 = vadd.f32 %v6819, %v6931
        %6933 = vmatmul.f32.gmra.mxu0 %v5823
        %v6934 = vpop.f32.mrf.mxu0
        %v6935 = vadd.f32 %v6822, %v6934
        %6936 = vmatmul.f32.gmra.mxu0 %v5824
        %v6937 = vpop.f32.mrf.mxu0
        %v6938 = vadd.f32 %v6825, %v6937
        %6939 = vmatmul.f32.gmra.mxu0 %v5825
        %v6940 = vpop.f32.mrf.mxu0
        %v6941 = vadd.f32 %v6828, %v6940
        %6942 = vmatmul.f32.gmra.mxu0 %v5826
        %v6943 = vpop.f32.mrf.mxu0
        %v6944 = vadd.f32 %v6831, %v6943
        %6945 = vmatmul.f32.gmra.mxu0 %v5827
        %v6946 = vpop.f32.mrf.mxu0
        %v6947 = vadd.f32 %v6834, %v6946
        %6948 = vmatmul.f32.gmra.mxu0 %v5828
        %v6949 = vpop.f32.mrf.mxu0
        %v6950 = vadd.f32 %v6837, %v6949
        %6951 = vmatmul.f32.gmra.mxu0 %v5829
        %v6952 = vpop.f32.mrf.mxu0
        %v6953 = vadd.f32 %v6840, %v6952
        %6954 = vmatmul.f32.gmra.mxu0 %v5830
        %v6955 = vpop.f32.mrf.mxu0
        %v6956 = vadd.f32 %v6843, %v6955
        %6957 = vmatmul.f32.gmra.mxu0 %v5831
        %v6958 = vpop.f32.mrf.mxu0
        %v6959 = vadd.f32 %v6846, %v6958
        %6960 = vmatmul.f32.gmra.mxu0 %v5832
        %v6961 = vpop.f32.mrf.mxu0
        %v6962 = vadd.f32 %v6849, %v6961
        %6963 = vmatmul.f32.gmra.mxu0 %v5833
        %v6964 = vpop.f32.mrf.mxu0
        %v6965 = vadd.f32 %v6852, %v6964
        %6966 = vmatmul.f32.gmra.mxu0 %v5834
        %v6967 = vpop.f32.mrf.mxu0
        %v6968 = vadd.f32 %v6855, %v6967
        %6969 = vmatmul.f32.gmra.mxu0 %v5835
        %v6970 = vpop.f32.mrf.mxu0
        %v6971 = vadd.f32 %v6858, %v6970
        %6972 = vmatmul.f32.gmra.mxu0 %v5836
        %v6973 = vpop.f32.mrf.mxu0
        %v6974 = vadd.f32 %v6861, %v6973
        %6975 = vmatmul.f32.gmra.mxu0 %v5837
        %v6976 = vpop.f32.mrf.mxu0
        %v6977 = vadd.f32 %v6864, %v6976
        %6978 = vmatmul.f32.gmra.mxu0 %v5838
        %v6979 = vpop.f32.mrf.mxu0
        %v6980 = vadd.f32 %v6867, %v6979
        %6981 = vmatmul.f32.gmra.mxu0 %v5839
        %v6982 = vpop.f32.mrf.mxu0
        %v6983 = vadd.f32 %v6870, %v6982
        %6984 = vmatmul.f32.gmra.mxu0 %v5840
        %v6985 = vpop.f32.mrf.mxu0
        %v6986 = vadd.f32 %v6873, %v6985
        %6987 = vmatmul.f32.gmra.mxu0 %v5841
        %v6988 = vpop.f32.mrf.mxu0
        %v6989 = vadd.f32 %v6876, %v6988
        %6990 = vmatmul.f32.gmra.mxu0 %v5842
        %v6991 = vpop.f32.mrf.mxu0
        %v6992 = vadd.f32 %v6879, %v6991
        %6993 = vmatmul.f32.gmra.mxu0 %v5843
        %v6994 = vpop.f32.mrf.mxu0
        %v6995 = vadd.f32 %v6882, %v6994
        %6996 = vmatmul.f32.gmra.mxu0 %v5844
        %v6997 = vpop.f32.mrf.mxu0
        %v6998 = vadd.f32 %v6885, %v6997
        %6999 = vmatmul.f32.gmra.mxu0 %v5845
        %v7000 = vpop.f32.mrf.mxu0
        %v7001 = vadd.f32 %v6888, %v7000
        %7002 = vmatmul.f32.gmra.mxu0 %v5846
        %v7003 = vpop.f32.mrf.mxu0
        %v7004 = vadd.f32 %v6891, %v7003
        %7005 = vmatmul.f32.gmra.mxu0 %v5847
        %v7006 = vpop.f32.mrf.mxu0
        %v7007 = vadd.f32 %v6894, %v7006
        %7008 = vmatmul.f32.gmra.mxu0 %v5848
        %v7009 = vpop.f32.mrf.mxu0
        %v7010 = vadd.f32 %v6897, %v7009
        %7011 = vmatmul.f32.gmra.mxu0 %v5849
        %v7012 = vpop.f32.mrf.mxu0
        %v7013 = vadd.f32 %v6900, %v7012
        %7014 = vmatmul.f32.gmra.mxu0 %v5850
        %v7015 = vpop.f32.mrf.mxu0
        %v7016 = vadd.f32 %v6903, %v7015
        %7017 = vdwg.mxu0
        %7018 = vmatpush.msra.mxu0 0.0
        %7019 = vmatpush.msra.mxu0 0.0
        %7020 = vmatpush.msra.mxu0 0.0
        %7021 = vmatpush.msra.mxu0 0.0
        %7022 = vmatpush.msra.mxu0 0.0
        %7023 = vmatpush.msra.mxu0 0.0
        %7024 = vmatpush.msra.mxu0 0.0
        %7025 = vmatpush.msra.mxu0 0.0
        %7026 = vmatpush.msra.mxu0 0.0
        %7027 = vmatpush.msra.mxu0 0.0
        %7028 = vmatpush.msra.mxu0 0.0
        %7029 = vmatpush.msra.mxu0 0.0
        %7030 = vmatpush.msra.mxu0 0.0
        %7031 = vmatpush.msra.mxu0 %v6157
        %7032 = vmatpush.msra.mxu0 %v6156
        %7033 = vmatpush.msra.mxu0 %v6155
        %7034 = vmatmul.f32.gmra.mxu0 %v6163
        %v7035 = vpop.f32.mrf.mxu0
        %v7036 = vadd.f32 %v6923, %v7035
        %7037 = vmatmul.f32.gmra.mxu0 %v6165
        %v7038 = vpop.f32.mrf.mxu0
        %v7039 = vadd.f32 %v6926, %v7038
        %7040 = vmatmul.f32.gmra.mxu0 %v6167
        %v7041 = vpop.f32.mrf.mxu0
        %v7042 = vadd.f32 %v6929, %v7041
        %7043 = vmatmul.f32.gmra.mxu0 %v6169
        %v7044 = vpop.f32.mrf.mxu0
        %v7045 = vadd.f32 %v6932, %v7044
        %7046 = vmatmul.f32.gmra.mxu0 %v6171
        %v7047 = vpop.f32.mrf.mxu0
        %v7048 = vadd.f32 %v6935, %v7047
        %7049 = vmatmul.f32.gmra.mxu0 %v6173
        %v7050 = vpop.f32.mrf.mxu0
        %v7051 = vadd.f32 %v6938, %v7050
        %7052 = vmatmul.f32.gmra.mxu0 %v6175
        %v7053 = vpop.f32.mrf.mxu0
        %v7054 = vadd.f32 %v6941, %v7053
        %7055 = vmatmul.f32.gmra.mxu0 %v6177
        %v7056 = vpop.f32.mrf.mxu0
        %v7057 = vadd.f32 %v6944, %v7056
        %7058 = vmatmul.f32.gmra.mxu0 %v6179
        %v7059 = vpop.f32.mrf.mxu0
        %v7060 = vadd.f32 %v6947, %v7059
        %7061 = vmatmul.f32.gmra.mxu0 %v6181
        %v7062 = vpop.f32.mrf.mxu0
        %v7063 = vadd.f32 %v6950, %v7062
        %7064 = vmatmul.f32.gmra.mxu0 %v6183
        %v7065 = vpop.f32.mrf.mxu0
        %v7066 = vadd.f32 %v6953, %v7065
        %7067 = vmatmul.f32.gmra.mxu0 %v6185
        %v7068 = vpop.f32.mrf.mxu0
        %v7069 = vadd.f32 %v6956, %v7068
        %7070 = vmatmul.f32.gmra.mxu0 %v6187
        %v7071 = vpop.f32.mrf.mxu0
        %v7072 = vadd.f32 %v6959, %v7071
        %7073 = vmatmul.f32.gmra.mxu0 %v6189
        %v7074 = vpop.f32.mrf.mxu0
        %v7075 = vadd.f32 %v6962, %v7074
        %7076 = vmatmul.f32.gmra.mxu0 %v6191
        %v7077 = vpop.f32.mrf.mxu0
        %v7078 = vadd.f32 %v6965, %v7077
        %7079 = vmatmul.f32.gmra.mxu0 %v6193
        %v7080 = vpop.f32.mrf.mxu0
        %v7081 = vadd.f32 %v6968, %v7080
        %7082 = vmatmul.f32.gmra.mxu0 %v6195
        %v7083 = vpop.f32.mrf.mxu0
        %v7084 = vadd.f32 %v6971, %v7083
        %7085 = vmatmul.f32.gmra.mxu0 %v6197
        %v7086 = vpop.f32.mrf.mxu0
        %v7087 = vadd.f32 %v6974, %v7086
        %7088 = vmatmul.f32.gmra.mxu0 %v6199
        %v7089 = vpop.f32.mrf.mxu0
        %v7090 = vadd.f32 %v6977, %v7089
        %7091 = vmatmul.f32.gmra.mxu0 %v6201
        %v7092 = vpop.f32.mrf.mxu0
        %v7093 = vadd.f32 %v6980, %v7092
        %7094 = vmatmul.f32.gmra.mxu0 %v6203
        %v7095 = vpop.f32.mrf.mxu0
        %v7096 = vadd.f32 %v6983, %v7095
        %7097 = vmatmul.f32.gmra.mxu0 %v6205
        %v7098 = vpop.f32.mrf.mxu0
        %v7099 = vadd.f32 %v6986, %v7098
        %7100 = vmatmul.f32.gmra.mxu0 %v6207
        %v7101 = vpop.f32.mrf.mxu0
        %v7102 = vadd.f32 %v6989, %v7101
        %7103 = vmatmul.f32.gmra.mxu0 %v6209
        %v7104 = vpop.f32.mrf.mxu0
        %v7105 = vadd.f32 %v6992, %v7104
        %7106 = vmatmul.f32.gmra.mxu0 %v6211
        %v7107 = vpop.f32.mrf.mxu0
        %v7108 = vadd.f32 %v6995, %v7107
        %7109 = vmatmul.f32.gmra.mxu0 %v6213
        %v7110 = vpop.f32.mrf.mxu0
        %v7111 = vadd.f32 %v6998, %v7110
        %7112 = vmatmul.f32.gmra.mxu0 %v6215
        %v7113 = vpop.f32.mrf.mxu0
        %v7114 = vadd.f32 %v7001, %v7113
        %7115 = vmatmul.f32.gmra.mxu0 %v6217
        %v7116 = vpop.f32.mrf.mxu0
        %v7117 = vadd.f32 %v7004, %v7116
        %7118 = vmatmul.f32.gmra.mxu0 %v6219
        %v7119 = vpop.f32.mrf.mxu0
        %v7120 = vadd.f32 %v7007, %v7119
        %7121 = vmatmul.f32.gmra.mxu0 %v6221
        %v7122 = vpop.f32.mrf.mxu0
        %v7123 = vadd.f32 %v7010, %v7122
        %7124 = vmatmul.f32.gmra.mxu0 %v6223
        %v7125 = vpop.f32.mrf.mxu0
        %v7126 = vadd.f32 %v7013, %v7125
        %7127 = vmatmul.f32.gmra.mxu0 %v6225
        %v7128 = vpop.f32.mrf.mxu0
        %v7129 = vadd.f32 %v7016, %v7128
        %7130 = vdwg.mxu0
        %v7131 = vmax.f32 %v7036, 0.0
        %v7132 = vmax.f32 %v7039, 0.0
        %v7133 = vmax.f32 %v7042, 0.0
        %v7134 = vmax.f32 %v7045, 0.0
        %v7135 = vmax.f32 %v7048, 0.0
        %v7136 = vmax.f32 %v7051, 0.0
        %v7137 = vmax.f32 %v7054, 0.0
        %v7138 = vmax.f32 %v7057, 0.0
        %v7139 = vmax.f32 %v7060, 0.0
        %v7140 = vmax.f32 %v7063, 0.0
        %v7141 = vmax.f32 %v7066, 0.0
        %v7142 = vmax.f32 %v7069, 0.0
        %v7143 = vmax.f32 %v7072, 0.0
        %v7144 = vmax.f32 %v7075, 0.0
        %v7145 = vmax.f32 %v7078, 0.0
        %v7146 = vmax.f32 %v7081, 0.0
        %v7147 = vmax.f32 %v7084, 0.0
        %v7148 = vmax.f32 %v7087, 0.0
        %v7149 = vmax.f32 %v7090, 0.0
        %v7150 = vmax.f32 %v7093, 0.0
        %v7151 = vmax.f32 %v7096, 0.0
        %v7152 = vmax.f32 %v7099, 0.0
        %v7153 = vmax.f32 %v7102, 0.0
        %v7154 = vmax.f32 %v7105, 0.0
        %v7155 = vmax.f32 %v7108, 0.0
        %v7156 = vmax.f32 %v7111, 0.0
        %v7157 = vmax.f32 %v7114, 0.0
        %v7158 = vmax.f32 %v7117, 0.0
        %v7159 = vmax.f32 %v7120, 0.0
        %v7160 = vmax.f32 %v7123, 0.0
        %v7161 = vmax.f32 %v7126, 0.0
        %v7162 = vmax.f32 %v7129, 0.0
        %v7163 = vmax.f32 %v7131, %v7135
        %v7164 = vmax.f32 %v7132, %v7136
        %v7165 = vmax.f32 %v7133, %v7137
        %v7166 = vmax.f32 %v7134, %v7138
        %v7167 = vmax.f32 %v7139, %v7143
        %v7168 = vmax.f32 %v7140, %v7144
        %v7169 = vmax.f32 %v7141, %v7145
        %v7170 = vmax.f32 %v7142, %v7146
        %v7171 = vmax.f32 %v7147, %v7151
        %v7172 = vmax.f32 %v7148, %v7152
        %v7173 = vmax.f32 %v7149, %v7153
        %v7174 = vmax.f32 %v7150, %v7154
        %v7175 = vmax.f32 %v7155, %v7159
        %v7176 = vmax.f32 %v7156, %v7160
        %v7177 = vmax.f32 %v7157, %v7161
        %v7178 = vmax.f32 %v7158, %v7162
        %7195 = vrot.lane.b32.xlu0 %v7163, 112
        %v7196 = vpop.permute.xlu0 %7195
        %7197 = vrot.lane.b32.xlu0 %v7164, 112
        %v7198 = vpop.permute.xlu0 %7197
        %7199 = vrot.lane.b32.xlu0 %v7165, 112
        %v7200 = vpop.permute.xlu0 %7199
        %7201 = vrot.lane.b32.xlu0 %v7166, 112
        %v7202 = vpop.permute.xlu0 %7201
        %7203 = vrot.lane.b32.xlu0 %v7167, 112
        %v7204 = vpop.permute.xlu0 %7203
        %7205 = vrot.lane.b32.xlu0 %v7168, 112
        %v7206 = vpop.permute.xlu0 %7205
        %7207 = vrot.lane.b32.xlu0 %v7169, 112
        %v7208 = vpop.permute.xlu0 %7207
        %7209 = vrot.lane.b32.xlu0 %v7170, 112
        %v7210 = vpop.permute.xlu0 %7209
        %7211 = vrot.lane.b32.xlu0 %v7171, 112
        %v7212 = vpop.permute.xlu0 %7211
        %7213 = vrot.lane.b32.xlu0 %v7172, 112
        %v7214 = vpop.permute.xlu0 %7213
        %7215 = vrot.lane.b32.xlu0 %v7173, 112
        %v7216 = vpop.permute.xlu0 %7215
        %7217 = vrot.lane.b32.xlu0 %v7174, 112
        %v7218 = vpop.permute.xlu0 %7217
        %7219 = vrot.lane.b32.xlu0 %v7175, 112
        %v7220 = vpop.permute.xlu0 %7219
        %7221 = vrot.lane.b32.xlu0 %v7176, 112
        %v7222 = vpop.permute.xlu0 %7221
        %7223 = vrot.lane.b32.xlu0 %v7177, 112
        %v7224 = vpop.permute.xlu0 %7223
        %7225 = vrot.lane.b32.xlu0 %v7178, 112
        %v7226 = vpop.permute.xlu0 %7225
        %v7243 = vmax.f32 %v7163, %v7196
        %v7244 = vmax.f32 %v7164, %v7198
        %v7245 = vmax.f32 %v7165, %v7200
        %v7246 = vmax.f32 %v7166, %v7202
        %v7247 = vmax.f32 %v7167, %v7204
        %v7248 = vmax.f32 %v7168, %v7206
        %v7249 = vmax.f32 %v7169, %v7208
        %v7250 = vmax.f32 %v7170, %v7210
        %v7251 = vmax.f32 %v7171, %v7212
        %v7252 = vmax.f32 %v7172, %v7214
        %v7253 = vmax.f32 %v7173, %v7216
        %v7254 = vmax.f32 %v7174, %v7218
        %v7255 = vmax.f32 %v7175, %v7220
        %v7256 = vmax.f32 %v7176, %v7222
        %v7257 = vmax.f32 %v7177, %v7224
        %v7258 = vmax.f32 %v7178, %v7226
        %7263 = vrot.lane.b32.xlu0 %v7247, 112
        %v7264 = vpop.permute.xlu0 %7263
        %7265 = vrot.lane.b32.xlu0 %v7248, 112
        %v7266 = vpop.permute.xlu0 %7265
        %7267 = vrot.lane.b32.xlu0 %v7249, 112
        %v7268 = vpop.permute.xlu0 %7267
        %7269 = vrot.lane.b32.xlu0 %v7250, 112
        %v7270 = vpop.permute.xlu0 %7269
        %7279 = vrot.lane.b32.xlu0 %v7251, 96
        %v7280 = vpop.permute.xlu0 %7279
        %7281 = vrot.lane.b32.xlu0 %v7252, 96
        %v7282 = vpop.permute.xlu0 %7281
        %7283 = vrot.lane.b32.xlu0 %v7253, 96
        %v7284 = vpop.permute.xlu0 %7283
        %7285 = vrot.lane.b32.xlu0 %v7254, 96
        %v7286 = vpop.permute.xlu0 %7285
        %7295 = vrot.lane.b32.xlu0 %v7255, 80
        %v7296 = vpop.permute.xlu0 %7295
        %7297 = vrot.lane.b32.xlu0 %v7256, 80
        %v7298 = vpop.permute.xlu0 %7297
        %7299 = vrot.lane.b32.xlu0 %v7257, 80
        %v7300 = vpop.permute.xlu0 %7299
        %7301 = vrot.lane.b32.xlu0 %v7258, 80
        %v7302 = vpop.permute.xlu0 %7301
        %v7307 = vsel %vm2424, %v7243, %v7264
        %v7308 = vsel %vm2424, %v7244, %v7266
        %v7309 = vsel %vm2424, %v7245, %v7268
        %v7310 = vsel %vm2424, %v7246, %v7270
        %v7311 = vsel %vm5818, %v7264, %v7280
        %v7312 = vsel %vm5818, %v7266, %v7282
        %v7313 = vsel %vm5818, %v7268, %v7284
        %v7314 = vsel %vm5818, %v7270, %v7286
        %vm7315 = vcmask 654336
        %v7316 = vsel %vm7315, %v7280, %v7296
        %v7317 = vsel %vm7315, %v7282, %v7298
        %v7318 = vsel %vm7315, %v7284, %v7300
        %v7319 = vsel %vm7315, %v7286, %v7302
        %v7320 = vld [vmem:[%s5] sm:$0xff]
        %v7321 = vld [vmem:[%s5 + $0x8] sm:$0xff]
        %v7322 = vld [vmem:[%s5 + $0x10] sm:$0xff]
        %v7323 = vld [vmem:[%s5 + $0x18] sm:$0xff]
        %v7324 = vld [vmem:[%s5 + $0x20] sm:$0xff]
        %v7325 = vld [vmem:[%s5 + $0x28] sm:$0xff]
        %v7326 = vld [vmem:[%s5 + $0x30] sm:$0xff]
        %v7327 = vld [vmem:[%s5 + $0x38] sm:$0xff]
        %v7328 = vld [vmem:[%s5 + $0x40] sm:$0xff]
        %v7329 = vld [vmem:[%s5 + $0x48] sm:$0xff]
        %v7330 = vld [vmem:[%s5 + $0x50] sm:$0xff]
        %v7331 = vld [vmem:[%s5 + $0x58] sm:$0xff]
        %v7332 = vld [vmem:[%s5 + $0x60] sm:$0xff]
        %v7333 = vld [vmem:[%s5 + $0x68] sm:$0xff]
        %v7334 = vld [vmem:[%s5 + $0x70] sm:$0xff]
        %v7335 = vld [vmem:[%s5 + $0x78] sm:$0xff]
        %v7336 = vld [vmem:[%s5 + $0x80] sm:$0xff]
        %v7337 = vld [vmem:[%s5 + $0x88] sm:$0xff]
        %v7338 = vld [vmem:[%s5 + $0x90] sm:$0xff]
        %v7339 = vld [vmem:[%s5 + $0x98] sm:$0xff]
        %v7340 = vld [vmem:[%s5 + $0xa0] sm:$0xff]
        %v7341 = vld [vmem:[%s5 + $0xa8] sm:$0xff]
        %v7342 = vld [vmem:[%s5 + $0xb0] sm:$0xff]
        %v7343 = vld [vmem:[%s5 + $0xb8] sm:$0xff]
        %v7344 = vld [vmem:[%s5 + $0xc0] sm:$0xff]
        %v7345 = vld [vmem:[%s5 + $0xc8] sm:$0xff]
        %v7346 = vld [vmem:[%s5 + $0xd0] sm:$0xff]
        %v7347 = vld [vmem:[%s5 + $0xd8] sm:$0xff]
        %v7348 = vld [vmem:[%s5 + $0xe0] sm:$0xff]
        %v7349 = vld [vmem:[%s5 + $0xe8] sm:$0xff]
        %v7350 = vld [vmem:[%s5 + $0xf0] sm:$0xff]
        %v7351 = vld [vmem:[%s5 + $0xf8] sm:$0xff]
        %v7352 = vld [vmem:[%s5 + $0x100] sm:$0xff]
        %v7353 = vld [vmem:[%s5 + $0x108] sm:$0xff]
        %v7354 = vld [vmem:[%s5 + $0x110] sm:$0xff]
        %v7355 = vld [vmem:[%s5 + $0x118] sm:$0xff]
        %v7356 = vld [vmem:[%s5 + $0x120] sm:$0xff]
        %v7357 = vld [vmem:[%s5 + $0x128] sm:$0xff]
        %v7358 = vld [vmem:[%s5 + $0x130] sm:$0xff]
        %v7359 = vld [vmem:[%s5 + $0x138] sm:$0xff]
        %v7360 = vld [vmem:[%s5 + $0x140] sm:$0xff]
        %v7361 = vld [vmem:[%s5 + $0x148] sm:$0xff]
        %v7362 = vld [vmem:[%s5 + $0x150] sm:$0xff]
        %v7363 = vld [vmem:[%s5 + $0x158] sm:$0xff]
        %v7364 = vld [vmem:[%s5 + $0x160] sm:$0xff]
        %v7365 = vld [vmem:[%s5 + $0x168] sm:$0xff]
        %v7366 = vld [vmem:[%s5 + $0x170] sm:$0xff]
        %v7367 = vld [vmem:[%s5 + $0x178] sm:$0xff]
        %v7368 = vld [vmem:[%s5 + $0x180] sm:$0xff]
        %v7369 = vld [vmem:[%s5 + $0x188] sm:$0xff]
        %v7370 = vld [vmem:[%s5 + $0x190] sm:$0xff]
        %v7371 = vld [vmem:[%s5 + $0x198] sm:$0xff]
        %v7372 = vld [vmem:[%s5 + $0x1a0] sm:$0xff]
        %v7373 = vld [vmem:[%s5 + $0x1a8] sm:$0xff]
        %v7374 = vld [vmem:[%s5 + $0x1b0] sm:$0xff]
        %v7375 = vld [vmem:[%s5 + $0x1b8] sm:$0xff]
        %v7376 = vld [vmem:[%s6] sm:$0x1]
        %v7378 = vperm.slane %v7376, 0
        %v7380 = vsel %vm4176, %v7296, 0
        %v7382 = vsel %vm4176, %v7298, 0
        %v7384 = vsel %vm4176, %v7300, 0
        %v7386 = vsel %vm4176, %v7302, 0
        %7388 = vmatpush.msra.mxu0 %v7335
        %7389 = vmatpush.msra.mxu0 %v7334
        %7390 = vmatpush.msra.mxu0 %v7333
        %7391 = vmatpush.msra.mxu0 %v7332
        %7392 = vmatpush.msra.mxu0 %v7331
        %7393 = vmatpush.msra.mxu0 %v7330
        %7394 = vmatpush.msra.mxu0 %v7329
        %7395 = vmatpush.msra.mxu0 %v7328
        %7396 = vmatpush.msra.mxu0 %v7327
        %7397 = vmatpush.msra.mxu0 %v7326
        %7398 = vmatpush.msra.mxu0 %v7325
        %7399 = vmatpush.msra.mxu0 %v7324
        %7400 = vmatpush.msra.mxu0 %v7323
        %7401 = vmatpush.msra.mxu0 %v7322
        %7402 = vmatpush.msra.mxu0 %v7321
        %7403 = vmatpush.msra.mxu0 %v7320
        %7404 = vmatmul.f32.gmra.mxu0 %v7307
        %v7405 = vpop.f32.mrf.mxu0
        %v7406 = vadd.f32 %v7378, %v7405
        %7407 = vmatmul.f32.gmra.mxu0 %v7308
        %v7408 = vpop.f32.mrf.mxu0
        %v7409 = vadd.f32 %v7378, %v7408
        %7410 = vmatmul.f32.gmra.mxu0 %v7309
        %v7411 = vpop.f32.mrf.mxu0
        %v7412 = vadd.f32 %v7378, %v7411
        %7413 = vmatmul.f32.gmra.mxu0 %v7310
        %v7414 = vpop.f32.mrf.mxu0
        %v7415 = vadd.f32 %v7378, %v7414
        %7416 = vdwg.mxu0
        %7417 = vmatpush.msra.mxu0 %v7351
        %7418 = vmatpush.msra.mxu0 %v7350
        %7419 = vmatpush.msra.mxu0 %v7349
        %7420 = vmatpush.msra.mxu0 %v7348
        %7421 = vmatpush.msra.mxu0 %v7347
        %7422 = vmatpush.msra.mxu0 %v7346
        %7423 = vmatpush.msra.mxu0 %v7345
        %7424 = vmatpush.msra.mxu0 %v7344
        %7425 = vmatpush.msra.mxu0 %v7343
        %7426 = vmatpush.msra.mxu0 %v7342
        %7427 = vmatpush.msra.mxu0 %v7341
        %7428 = vmatpush.msra.mxu0 %v7340
        %7429 = vmatpush.msra.mxu0 %v7339
        %7430 = vmatpush.msra.mxu0 %v7338
        %7431 = vmatpush.msra.mxu0 %v7337
        %7432 = vmatpush.msra.mxu0 %v7336
        %7433 = vmatmul.f32.gmra.mxu0 %v7311
        %v7434 = vpop.f32.mrf.mxu0
        %v7435 = vadd.f32 %v7406, %v7434
        %7436 = vmatmul.f32.gmra.mxu0 %v7312
        %v7437 = vpop.f32.mrf.mxu0
        %v7438 = vadd.f32 %v7409, %v7437
        %7439 = vmatmul.f32.gmra.mxu0 %v7313
        %v7440 = vpop.f32.mrf.mxu0
        %v7441 = vadd.f32 %v7412, %v7440
        %7442 = vmatmul.f32.gmra.mxu0 %v7314
        %v7443 = vpop.f32.mrf.mxu0
        %v7444 = vadd.f32 %v7415, %v7443
        %7445 = vdwg.mxu0
        %7446 = vmatpush.msra.mxu0 %v7367
        %7447 = vmatpush.msra.mxu0 %v7366
        %7448 = vmatpush.msra.mxu0 %v7365
        %7449 = vmatpush.msra.mxu0 %v7364
        %7450 = vmatpush.msra.mxu0 %v7363
        %7451 = vmatpush.msra.mxu0 %v7362
        %7452 = vmatpush.msra.mxu0 %v7361
        %7453 = vmatpush.msra.mxu0 %v7360
        %7454 = vmatpush.msra.mxu0 %v7359
        %7455 = vmatpush.msra.mxu0 %v7358
        %7456 = vmatpush.msra.mxu0 %v7357
        %7457 = vmatpush.msra.mxu0 %v7356
        %7458 = vmatpush.msra.mxu0 %v7355
        %7459 = vmatpush.msra.mxu0 %v7354
        %7460 = vmatpush.msra.mxu0 %v7353
        %7461 = vmatpush.msra.mxu0 %v7352
        %7462 = vmatmul.f32.gmra.mxu0 %v7316
        %v7463 = vpop.f32.mrf.mxu0
        %v7464 = vadd.f32 %v7435, %v7463
        %7465 = vmatmul.f32.gmra.mxu0 %v7317
        %v7466 = vpop.f32.mrf.mxu0
        %v7467 = vadd.f32 %v7438, %v7466
        %7468 = vmatmul.f32.gmra.mxu0 %v7318
        %v7469 = vpop.f32.mrf.mxu0
        %v7470 = vadd.f32 %v7441, %v7469
        %7471 = vmatmul.f32.gmra.mxu0 %v7319
        %v7472 = vpop.f32.mrf.mxu0
        %v7473 = vadd.f32 %v7444, %v7472
        %7474 = vdwg.mxu0
        %7475 = vmatpush.msra.mxu0 0.0
        %7476 = vmatpush.msra.mxu0 0.0
        %7477 = vmatpush.msra.mxu0 0.0
        %7478 = vmatpush.msra.mxu0 0.0
        %7479 = vmatpush.msra.mxu0 0.0
        %7480 = vmatpush.msra.mxu0 0.0
        %7481 = vmatpush.msra.mxu0 0.0
        %7482 = vmatpush.msra.mxu0 0.0
        %7483 = vmatpush.msra.mxu0 %v7375
        %7484 = vmatpush.msra.mxu0 %v7374
        %7485 = vmatpush.msra.mxu0 %v7373
        %7486 = vmatpush.msra.mxu0 %v7372
        %7487 = vmatpush.msra.mxu0 %v7371
        %7488 = vmatpush.msra.mxu0 %v7370
        %7489 = vmatpush.msra.mxu0 %v7369
        %7490 = vmatpush.msra.mxu0 %v7368
        %7491 = vmatmul.f32.gmra.mxu0 %v7380
        %v7492 = vpop.f32.mrf.mxu0
        %v7493 = vadd.f32 %v7464, %v7492
        %7494 = vmatmul.f32.gmra.mxu0 %v7382
        %v7495 = vpop.f32.mrf.mxu0
        %v7496 = vadd.f32 %v7467, %v7495
        %7497 = vmatmul.f32.gmra.mxu0 %v7384
        %v7498 = vpop.f32.mrf.mxu0
        %v7499 = vadd.f32 %v7470, %v7498
        %7500 = vmatmul.f32.gmra.mxu0 %v7386
        %v7501 = vpop.f32.mrf.mxu0
        %v7502 = vadd.f32 %v7473, %v7501
        %7503 = vdwg.mxu0
        %7504 = vst [vmem:[%s759] sm:$0xff] %v7493
        %7505 = vst [vmem:[%s759 + $0x8] sm:$0xff] %v7496
        %7506 = vst [vmem:[%s759 + $0x10] sm:$0xff] %v7499
        %7507 = vst [vmem:[%s759 + $0x18] sm:$0xff] %v7502
        %s7508 = smul.u32 4, %s18
        %p7509 = scmp.lt.s32.totalorder %s7508, 7
        %s7510 = scalar_select %p7509, %s7508, 7
        %s7511 = smul.addr %s7510, 8
        %s7512 = scalar_lea.vmem %s7, %s7511
        // Predicated region
        $region87: #{mnist_forward.1} parent=81 // pred_check
          %p7513 = pneg %p188
        $region88: #{mnist_forward.1} parent=81 // pred_check_branch
          %7515 = sbr.rel (%p7513) target = $region90
        $region89: #{mnist_forward.1} parent=81 // pred_region
          %s7516 = smul.u32 4, %s18
        $region90: #{mnist_forward.1} parent=81 // pred_fallthru
          _
      $region82: #{mnist_forward.1} parent=5 // pred_fallthru
        _
      %p7517 = scmp.le.s32.totalorder 2, %s13
      // Predicated region
      $region91: #{mnist_forward.1} parent=5 // pred_check
        %p7518 = pneg %p7517
      $region92: #{mnist_forward.1} parent=5 // pred_check_branch
        %7520 = sbr.rel (%p7518) target = $region94
      $region93: #{mnist_forward.1} parent=5 // pred_region
        %s7521 = ssub.s32 %s13, 2
        // Predicated region
        $region95: #{mnist_forward.1} parent=93 // pred_check
          %p7522 = pneg %p194
        $region96: #{mnist_forward.1} parent=93 // pred_check_branch
          %7524 = sbr.rel (%p7522) target = $region98
        $region97: #{mnist_forward.1} parent=93 // pred_region
          %s7525 = smul.u32 4, %s19
          %p7526 = scmp.lt.s32.totalorder %s7525, 7
          %s7527 = scalar_select %p7526, %s7525, 7
          %s7528 = smul.addr %s7527, 8
          %s7529 = scalar_lea.vmem %s7, %s7528
        $region98: #{mnist_forward.1} parent=93 // pred_fallthru
          _
      $region94: #{mnist_forward.1} parent=5 // pred_fallthru
        _
    $region6: #{mnist_forward.1} parent=1 // loop_footer
      %s17 = sadd.s32 1, %s13
    $region7: #{mnist_forward.1} parent=1 // loop_footer_branch
      %12 = sbr.rel target = $region3
    $region8: #{mnist_forward.1} parent=1 // loop_exit
      _

</llo_original>
